<compile_context>
chip_gen: v5e
topology: v5e:2x2
jax: 0.10.0
libtpu: 0.0.40
codegen_flags: <defaults>
</compile_context>

<pallas_src>
import functools

import jax
import jax.numpy as jnp
import numpy as np
from jax import lax
from jax.experimental import pallas as pl
from jax.experimental.pallas import tpu as pltpu

_LANE = 128


def _round_up(x, m):
    return ((x + m - 1) // m) * m


def _meta_block_kernel(alpha, num_updates, inv_ns, inv_nq,
                       sx_ref, sy_ref, qx_ref, qy_ref,
                       w1_ref, b1_ref, w2_ref, b2_ref,
                       out_ref):
    tb = sx_ref.shape[0]
    din = sx_ref.shape[2]
    hdim = w1_ref.shape[1]
    odim = w2_ref.shape[1]

    sx = sx_ref[...]                    # (TB, Ns, Din)
    sy = sy_ref[...]                    # (TB, Ns, Dout)

    w1t = w1_ref[...]                   # (Din, H)   shared theta
    b1t = b1_ref[...]                   # (1, H)
    w2t = w2_ref[...]                   # (H, Dout)
    b2t = b2_ref[...]                   # (1, Dout)

    g_scale = 2.0 * inv_ns              # dMSE/dpred scale (mean over Ns*Dout)

    # --- inner-loop SGD on the support set (MSE loss, manual backprop) ---
    # Step 0: all TB tasks still share theta, so the per-task fast weights are only
    # materialized by the "theta - alpha * grad" subtraction (no explicit broadcast).
    # TODO(synk): the PyTorch Learner breaks early on a NaN support loss; that
    # data-dependent early exit is not replicated (all num_updates steps always run).
    if num_updates >= 1:
        pre = jnp.einsum('tnd,tdh->tnh', sx, w1t[None],
                         preferred_element_type=jnp.float32) + b1t
        h = jnp.maximum(pre, 0.0)
        pred = jnp.einsum('tnh,tho->tno', h, w2t[None],
                          preferred_element_type=jnp.float32) + b2t
        g_pred = g_scale * (pred - sy)                                    # (TB, Ns, Dout)
        g_w2 = jnp.einsum('tnh,tno->tho', h, g_pred,
                          preferred_element_type=jnp.float32)
        g_b2 = jnp.sum(g_pred, axis=1, keepdims=True)
        g_h = jnp.einsum('tno,tho->tnh', g_pred, w2t[None],
                         preferred_element_type=jnp.float32)
        g_pre = jnp.where(pre > 0.0, g_h, 0.0)
        g_w1 = jnp.einsum('tnd,tnh->tdh', sx, g_pre,
                          preferred_element_type=jnp.float32)
        g_b1 = jnp.sum(g_pre, axis=1, keepdims=True)
        carry = (w1t[None] - alpha * g_w1, b1t[None] - alpha * g_b1,
                 w2t[None] - alpha * g_w2, b2t[None] - alpha * g_b2)
    else:
        carry = (jnp.broadcast_to(w1t[None], (tb, din, hdim)),
                 jnp.broadcast_to(b1t[None], (tb, 1, hdim)),
                 jnp.broadcast_to(w2t[None], (tb, hdim, odim)),
                 jnp.broadcast_to(b2t[None], (tb, 1, odim)))

    # Steps 1..num_updates-1: per-task fast weights carried as loop values (registers),
    # unrolled so the LLO scheduler sees the whole chain.
    def inner(_, c):
        w1v, b1v, w2v, b2v = c
        pre = jnp.einsum('tnd,tdh->tnh', sx, w1v,
                         preferred_element_type=jnp.float32) + b1v
        h = jnp.maximum(pre, 0.0)
        pred = jnp.einsum('tnh,tho->tno', h, w2v,
                          preferred_element_type=jnp.float32) + b2v
        g_pred = g_scale * (pred - sy)
        g_w2 = jnp.einsum('tnh,tno->tho', h, g_pred,
                          preferred_element_type=jnp.float32)
        g_b2 = jnp.sum(g_pred, axis=1, keepdims=True)
        g_h = jnp.einsum('tno,tho->tnh', g_pred, w2v,
                         preferred_element_type=jnp.float32)
        g_pre = jnp.where(pre > 0.0, g_h, 0.0)
        g_w1 = jnp.einsum('tnd,tnh->tdh', sx, g_pre,
                          preferred_element_type=jnp.float32)
        g_b1 = jnp.sum(g_pre, axis=1, keepdims=True)
        return (w1v - alpha * g_w1, b1v - alpha * g_b1,
                w2v - alpha * g_w2, b2v - alpha * g_b2)

    if num_updates > 1:
        w1f, b1f, w2f, b2f = lax.fori_loop(1, num_updates, inner, carry,
                                           unroll=True)
    else:
        w1f, b1f, w2f, b2f = carry

    # --- query evaluation with the adapted weights ---
    qx = qx_ref[...]                    # (TB, Nq, Din)
    qy = qy_ref[...]                    # (TB, Nq, Dout)
    pre = jnp.einsum('tnd,tdh->tnh', qx, w1f,
                     preferred_element_type=jnp.float32) + b1f
    h = jnp.maximum(pre, 0.0)
    pred = jnp.einsum('tnh,tho->tno', h, w2f,
                      preferred_element_type=jnp.float32) + b2f
    diff = pred - qy
    # per-task sums (lane reduce then sublane reduce, keep everything >=2D)
    se = jnp.sum(jnp.sum(diff * diff, axis=2), axis=1, keepdims=True)     # (TB, 1)
    ae = jnp.sum(jnp.sum(jnp.abs(diff), axis=2), axis=1, keepdims=True)   # (TB, 1)

    # lane-dense scatter: task t -> lane t; single merged (2, 128) store
    # (row 0 = MSELoss, row 1 = L1Loss).
    lane_id = lax.broadcasted_iota(jnp.int32, (tb, _LANE), 1)
    task_id = lax.broadcasted_iota(jnp.int32, (tb, _LANE), 0)
    onehot = lane_id == task_id
    loss_row = jnp.sum(jnp.where(onehot, se * inv_nq, 0.0), axis=0, keepdims=True)
    mae_row = jnp.sum(jnp.where(onehot, ae * inv_nq, 0.0), axis=0, keepdims=True)
    out_ref[0] = jnp.concatenate([loss_row, mae_row], axis=0)             # (2, 128)


def meta_learner_forward(support_x, support_y, query_x, query_y, params,
                         *, alpha, num_updates, tasks_per_block=4):
    """Returns (loss_values, loss_values_mae), each of shape [B].

    tasks_per_block: tasks processed per grid step.  Default 4 keeps the grid
    length even (sharding across v7x's 2 TensorCores); on single-TC v5e/v6e it
    can be swept up to 8, and down to 2 on v5e if spills appear.
    """
    w1, b1, w2, b2 = params
    B, Ns, Din = support_x.shape
    Dout = support_y.shape[-1]
    Nq = query_x.shape[1]
    H = w1.shape[1]

    TB = max(1, min(int(tasks_per_block), B, _LANE))
    B_pad = _round_up(B, TB)
    G = B_pad // TB

    f32 = jnp.float32

    def pad_tasks(x):
        x = x.astype(f32)
        if B_pad == B:
            return x
        # Padded tasks run on all-zero data and their losses are discarded.
        return jnp.pad(x, ((0, B_pad - B), (0, 0), (0, 0)))

    sx = pad_tasks(support_x)
    sy = pad_tasks(support_y)
    qx = pad_tasks(query_x)
    qy = pad_tasks(query_y)
    w1p = w1.astype(f32)
    b1p = b1.astype(f32).reshape(1, H)
    w2p = w2.astype(f32)
    b2p = b2.astype(f32).reshape(1, Dout)

    inv_ns = 1.0 / float(Ns * Dout)
    inv_nq = 1.0 / float(Nq * Dout)

    kernel = functools.partial(_meta_block_kernel, float(alpha),
                               int(num_updates), inv_ns, inv_nq)

    def build_call(single_buffer_weights):
        # Weights have a constant block index across the grid; single-buffer them
        # when the build supports pl.Buffered(1) (saves the second VMEM buffer).
        wkw = dict(pipeline_mode=pl.Buffered(1)) if single_buffer_weights else {}
        in_specs = [
            pl.BlockSpec((TB, Ns, Din), lambda g: (g, 0, 0)),
            pl.BlockSpec((TB, Ns, Dout), lambda g: (g, 0, 0)),
            pl.BlockSpec((TB, Nq, Din), lambda g: (g, 0, 0)),
            pl.BlockSpec((TB, Nq, Dout), lambda g: (g, 0, 0)),
            pl.BlockSpec((Din, H), lambda g: (0, 0), **wkw),
            pl.BlockSpec((1, H), lambda g: (0, 0), **wkw),
            pl.BlockSpec((H, Dout), lambda g: (0, 0), **wkw),
            pl.BlockSpec((1, Dout), lambda g: (0, 0), **wkw),
        ]
        return pl.pallas_call(
            kernel,
            out_shape=jax.ShapeDtypeStruct((G, 2, _LANE), f32),
            grid_spec=pltpu.PrefetchScalarGridSpec(
                num_scalar_prefetch=0,
                grid=(G,),
                in_specs=in_specs,
                out_specs=pl.BlockSpec((1, 2, _LANE), lambda g: (g, 0, 0)),
            ),
            compiler_params=pltpu.CompilerParams(
                dimension_semantics=("parallel",)),
        )

    args = (sx, sy, qx, qy, w1p, b1p, w2p, b2p)
    try:
        out = build_call(True)(*args)
    except Exception:
        # pipeline_mode=pl.Buffered(1) not accepted by this jax/libtpu build:
        # fall back to default double buffering (few-KB VMEM difference only).
        out = build_call(False)(*args)

    per_task = out[:, :, :TB]                       # (G, 2, TB)
    loss_values = per_task[:, 0, :].reshape(-1)[:B]      # MSELoss per task
    loss_values_mae = per_task[:, 1, :].reshape(-1)[:B]  # L1Loss per task
    return loss_values, loss_values_mae


# ---------------- pure-JAX reference (same math) ----------------
def _ref_forward(support_x, support_y, query_x, query_y, params, alpha, num_updates):
    w1, b1, w2, b2 = params

    def fwd(x, w1, b1, w2, b2):
        hp = x @ w1 + b1
        h = jnp.maximum(hp, 0.0)
        return h @ w2 + b2, hp, h

    def one_task(sx, sy, qx, qy):
        p = (w1, b1, w2, b2)
        for _ in range(num_updates):
            pw1, pb1, pw2, pb2 = p
            pred, hp, h = fwd(sx, pw1, pb1, pw2, pb2)
            diff = pred - sy
            g_pred = 2.0 * diff / diff.size
            gw2 = h.T @ g_pred
            gb2 = g_pred.sum(0, keepdims=True)
            gh = g_pred @ pw2.T
            ghp = jnp.where(hp > 0.0, gh, 0.0)
            gw1 = sx.T @ ghp
            gb1 = ghp.sum(0, keepdims=True)
            p = (pw1 - alpha * gw1, pb1 - alpha * gb1,
                 pw2 - alpha * gw2, pb2 - alpha * gb2)
        pred, _, _ = fwd(qx, *p)
        diff = pred - qy
        return jnp.mean(diff * diff), jnp.mean(jnp.abs(diff))

    return jax.vmap(one_task)(support_x, support_y, query_x, query_y)


if __name__ == "__main__":
    # meta_batch_size=8, n_way=1, k_shot=8 -> 8 support / 8 query examples per task
    B, Ns, Nq, Din, H, Dout = 8, 8, 8, 32, 32, 4
    alpha, num_updates = 0.01, 3

    key = jax.random.PRNGKey(0)
    k_sx, k_sy, k_qx, k_qy, k_w1, k_b1, k_w2, k_b2 = jax.random.split(key, 8)

    support_x = jax.random.normal(k_sx, (B, Ns, Din), jnp.float32)
    support_y = jax.random.normal(k_sy, (B, Ns, Dout), jnp.float32)
    query_x = jax.random.normal(k_qx, (B, Nq, Din), jnp.float32)
    query_y = jax.random.normal(k_qy, (B, Nq, Dout), jnp.float32)

    # deterministic "theta" init, matching PyTorch Linear default U(-1/sqrt(fan_in), ...)
    lim1 = 1.0 / np.sqrt(Din)
    lim2 = 1.0 / np.sqrt(H)
    w1 = jax.random.uniform(k_w1, (Din, H), jnp.float32, -lim1, lim1)
    b1 = jax.random.uniform(k_b1, (1, H), jnp.float32, -lim1, lim1)
    w2 = jax.random.uniform(k_w2, (H, Dout), jnp.float32, -lim2, lim2)
    b2 = jax.random.uniform(k_b2, (1, Dout), jnp.float32, -lim2, lim2)
    params = (w1, b1, w2, b2)

    loss_values, loss_values_mae = meta_learner_forward(
        support_x, support_y, query_x, query_y, params,
        alpha=alpha, num_updates=num_updates, tasks_per_block=4)
    jax.block_until_ready((loss_values, loss_values_mae))

    ref_loss, ref_mae = _ref_forward(support_x, support_y, query_x, query_y,
                                     params, alpha, num_updates)
    np.testing.assert_allclose(np.asarray(loss_values), np.asarray(ref_loss),
                               rtol=2e-3, atol=2e-3)
    np.testing.assert_allclose(np.asarray(loss_values_mae), np.asarray(ref_mae),
                               rtol=2e-3, atol=2e-3)
    print("KERNEL_OK")
</pallas_src>

<mosaic_0001>
module attributes {stable_mosaic.version = 11 : i64} {
  func.func @_meta_block_kernel(%arg0: i32, %arg1: memref<4x8x32xf32, #tpu.memory_space<vmem>>, %arg2: memref<4x8x4xf32, #tpu.memory_space<vmem>>, %arg3: memref<4x8x32xf32, #tpu.memory_space<vmem>>, %arg4: memref<4x8x4xf32, #tpu.memory_space<vmem>>, %arg5: memref<32x32xf32, #tpu.memory_space<vmem>>, %arg6: memref<1x32xf32, #tpu.memory_space<vmem>>, %arg7: memref<32x4xf32, #tpu.memory_space<vmem>>, %arg8: memref<1x4xf32, #tpu.memory_space<vmem>>, %arg9: memref<1x2x128xf32, #tpu.memory_space<vmem>>) attributes {dimension_semantics = [#tpu.dimension_semantics<parallel>], iteration_bounds = array<i64: 2>, scalar_prefetch = 0 : i64, scratch_operands = 0 : i64, tpu.core_type = #tpu.core_type<tc>, window_params = [{transform_indices = @transform_0, window_bounds = array<i64: 4, 8, 32>}, {transform_indices = @transform_1, window_bounds = array<i64: 4, 8, 4>}, {transform_indices = @transform_2, window_bounds = array<i64: 4, 8, 32>}, {transform_indices = @transform_3, window_bounds = array<i64: 4, 8, 4>}, {pipeline_mode = #tpu.pipeline_mode<synchronous>, transform_indices = @transform_4, window_bounds = array<i64: 32, 32>}, {pipeline_mode = #tpu.pipeline_mode<synchronous>, transform_indices = @transform_5, window_bounds = array<i64: 1, 32>}, {pipeline_mode = #tpu.pipeline_mode<synchronous>, transform_indices = @transform_6, window_bounds = array<i64: 32, 4>}, {pipeline_mode = #tpu.pipeline_mode<synchronous>, transform_indices = @transform_7, window_bounds = array<i64: 1, 4>}, {transform_indices = @transform_8, window_bounds = array<i64: 1, 2, 128>}]} {
    %c0 = arith.constant 0 : index
    %c0_0 = arith.constant 0 : index
    %c0_1 = arith.constant 0 : index
    %0 = vector.load %arg1[%c0, %c0_0, %c0_1] : memref<4x8x32xf32, #tpu.memory_space<vmem>>, vector<4x8x32xf32>
    %c0_2 = arith.constant 0 : index
    %c0_3 = arith.constant 0 : index
    %c0_4 = arith.constant 0 : index
    %1 = vector.load %arg2[%c0_2, %c0_3, %c0_4] : memref<4x8x4xf32, #tpu.memory_space<vmem>>, vector<4x8x4xf32>
    %c0_5 = arith.constant 0 : index
    %c0_6 = arith.constant 0 : index
    %2 = vector.load %arg5[%c0_5, %c0_6] : memref<32x32xf32, #tpu.memory_space<vmem>>, vector<32x32xf32>
    %c0_7 = arith.constant 0 : index
    %c0_8 = arith.constant 0 : index
    %3 = vector.load %arg6[%c0_7, %c0_8] : memref<1x32xf32, #tpu.memory_space<vmem>>, vector<1x32xf32>
    %c0_9 = arith.constant 0 : index
    %c0_10 = arith.constant 0 : index
    %4 = vector.load %arg7[%c0_9, %c0_10] : memref<32x4xf32, #tpu.memory_space<vmem>>, vector<32x4xf32>
    %c0_11 = arith.constant 0 : index
    %c0_12 = arith.constant 0 : index
    %5 = vector.load %arg8[%c0_11, %c0_12] : memref<1x4xf32, #tpu.memory_space<vmem>>, vector<1x4xf32>
    %6 = vector.shape_cast %2 : vector<32x32xf32> to vector<1x32x32xf32>
    "tpu.trace_start"() <{level = 10 : i32, message = "tnd,tdh->tnh"}> : () -> ()
    %7 = vector.shape_cast %6 : vector<1x32x32xf32> to vector<32x32xf32>
    %cst = arith.constant dense<0.000000e+00> : vector<4x8x32xf32>
    %8 = tpu.matmul %0, %7, %cst {dimension_numbers = #tpu.dot_dimension_numbers<[2], [0], [0, 1], [1], [0, 0, 0, 1, 1, 1], [], []>} : vector<4x8x32xf32>, vector<32x32xf32>, vector<4x8x32xf32> -> vector<4x8x32xf32>
    "tpu.trace_stop"() : () -> ()
    %9 = vector.shape_cast %3 : vector<1x32xf32> to vector<1x1x32xf32>
    %10 = vector.broadcast %9 : vector<1x1x32xf32> to vector<4x8x32xf32>
    %11 = arith.addf %8, %10 : vector<4x8x32xf32>
    %cst_13 = arith.constant 0.000000e+00 : f32
    %12 = vector.broadcast %cst_13 : f32 to vector<4x8x32xf32>
    %13 = arith.maximumf %11, %12 : vector<4x8x32xf32>
    %14 = vector.shape_cast %4 : vector<32x4xf32> to vector<1x32x4xf32>
    "tpu.trace_start"() <{level = 10 : i32, message = "tnh,tho->tno"}> : () -> ()
    %15 = vector.shape_cast %14 : vector<1x32x4xf32> to vector<32x4xf32>
    %cst_14 = arith.constant dense<0.000000e+00> : vector<4x8x4xf32>
    %16 = tpu.matmul %13, %15, %cst_14 {dimension_numbers = #tpu.dot_dimension_numbers<[2], [0], [0, 1], [1], [0, 0, 0, 1, 1, 1], [], []>} : vector<4x8x32xf32>, vector<32x4xf32>, vector<4x8x4xf32> -> vector<4x8x4xf32>
    "tpu.trace_stop"() : () -> ()
    %17 = vector.shape_cast %5 : vector<1x4xf32> to vector<1x1x4xf32>
    %18 = vector.broadcast %17 : vector<1x1x4xf32> to vector<4x8x4xf32>
    %19 = arith.addf %16, %18 : vector<4x8x4xf32>
    %20 = arith.subf %19, %1 : vector<4x8x4xf32>
    %cst_15 = arith.constant 6.250000e-02 : f32
    %21 = vector.broadcast %cst_15 : f32 to vector<4x8x4xf32>
    %22 = arith.mulf %21, %20 : vector<4x8x4xf32>
    "tpu.trace_start"() <{level = 10 : i32, message = "tnh,tno->tho"}> : () -> ()
    %cst_16 = arith.constant dense<0.000000e+00> : vector<4x32x4xf32>
    %23 = tpu.matmul %13, %22, %cst_16 {dimension_numbers = #tpu.dot_dimension_numbers<[1], [1], [2], [2], [0, 0, 0, 2, 1, 2], [0], [0]>} : vector<4x8x32xf32>, vector<4x8x4xf32>, vector<4x32x4xf32> -> vector<4x32x4xf32>
    "tpu.trace_stop"() : () -> ()
    %cst_17 = arith.constant dense<0.000000e+00> : vector<4x4xf32>
    %24 = vector.multi_reduction <add>, %22, %cst_17 [1] : vector<4x8x4xf32> to vector<4x4xf32>
    %25 = vector.shape_cast %24 : vector<4x4xf32> to vector<4x1x4xf32>
    %26 = vector.shape_cast %4 : vector<32x4xf32> to vector<1x32x4xf32>
    "tpu.trace_start"() <{level = 10 : i32, message = "tno,tho->tnh"}> : () -> ()
    %27 = vector.shape_cast %26 : vector<1x32x4xf32> to vector<32x4xf32>
    %cst_18 = arith.constant dense<0.000000e+00> : vector<4x8x32xf32>
    %28 = tpu.matmul %22, %27, %cst_18 {dimension_numbers = #tpu.dot_dimension_numbers<[2], [1], [0, 1], [0], [0, 0, 0, 1, 1, 0], [], []>} : vector<4x8x4xf32>, vector<32x4xf32>, vector<4x8x32xf32> -> vector<4x8x32xf32>
    %cst_19 = arith.constant 0.000000e+00 : f32
    "tpu.trace_stop"() : () -> ()
    %29 = vector.broadcast %cst_19 : f32 to vector<4x8x32xf32>
    %30 = arith.cmpf ogt, %11, %29 : vector<4x8x32xf32>
    %cst_20 = arith.constant 0.000000e+00 : f32
    %31 = vector.broadcast %cst_20 : f32 to vector<4x8x32xf32>
    %32 = arith.select %30, %28, %31 : vector<4x8x32xi1>, vector<4x8x32xf32>
    "tpu.trace_start"() <{level = 10 : i32, message = "tnd,tnh->tdh"}> : () -> ()
    %cst_21 = arith.constant dense<0.000000e+00> : vector<4x32x32xf32>
    %33 = tpu.matmul %0, %32, %cst_21 {dimension_numbers = #tpu.dot_dimension_numbers<[1], [1], [2], [2], [0, 0, 0, 2, 1, 2], [0], [0]>} : vector<4x8x32xf32>, vector<4x8x32xf32>, vector<4x32x32xf32> -> vector<4x32x32xf32>
    "tpu.trace_stop"() : () -> ()
    %cst_22 = arith.constant dense<0.000000e+00> : vector<4x32xf32>
    %34 = vector.multi_reduction <add>, %32, %cst_22 [1] : vector<4x8x32xf32> to vector<4x32xf32>
    %35 = vector.shape_cast %34 : vector<4x32xf32> to vector<4x1x32xf32>
    %36 = vector.shape_cast %2 : vector<32x32xf32> to vector<1x32x32xf32>
    %cst_23 = arith.constant 0.00999999977 : f32
    %37 = vector.broadcast %cst_23 : f32 to vector<4x32x32xf32>
    %38 = arith.mulf %37, %33 : vector<4x32x32xf32>
    %39 = vector.broadcast %36 : vector<1x32x32xf32> to vector<4x32x32xf32>
    %40 = arith.subf %39, %38 : vector<4x32x32xf32>
    %41 = vector.shape_cast %3 : vector<1x32xf32> to vector<1x1x32xf32>
    %cst_24 = arith.constant 0.00999999977 : f32
    %42 = vector.broadcast %cst_24 : f32 to vector<4x1x32xf32>
    %43 = arith.mulf %42, %35 : vector<4x1x32xf32>
    %44 = vector.broadcast %41 : vector<1x1x32xf32> to vector<4x1x32xf32>
    %45 = arith.subf %44, %43 : vector<4x1x32xf32>
    %46 = vector.shape_cast %4 : vector<32x4xf32> to vector<1x32x4xf32>
    %cst_25 = arith.constant 0.00999999977 : f32
    %47 = vector.broadcast %cst_25 : f32 to vector<4x32x4xf32>
    %48 = arith.mulf %47, %23 : vector<4x32x4xf32>
    %49 = vector.broadcast %46 : vector<1x32x4xf32> to vector<4x32x4xf32>
    %50 = arith.subf %49, %48 : vector<4x32x4xf32>
    %51 = vector.shape_cast %5 : vector<1x4xf32> to vector<1x1x4xf32>
    %cst_26 = arith.constant 0.00999999977 : f32
    %52 = vector.broadcast %cst_26 : f32 to vector<4x1x4xf32>
    %53 = arith.mulf %52, %25 : vector<4x1x4xf32>
    %54 = vector.broadcast %51 : vector<1x1x4xf32> to vector<4x1x4xf32>
    %55 = arith.subf %54, %53 : vector<4x1x4xf32>
    %c0_i32 = arith.constant 0 : i32
    "tpu.trace_start"() <{level = 10 : i32, message = "tnd,tdh->tnh"}> : () -> ()
    %cst_27 = arith.constant dense<0.000000e+00> : vector<4x8x32xf32>
    %56 = tpu.matmul %0, %40, %cst_27 {dimension_numbers = #tpu.dot_dimension_numbers<[2], [1], [1], [2], [0, 0, 0, 1, 1, 2], [0], [0]>} : vector<4x8x32xf32>, vector<4x32x32xf32>, vector<4x8x32xf32> -> vector<4x8x32xf32>
    "tpu.trace_stop"() : () -> ()
    %57 = vector.broadcast %45 : vector<4x1x32xf32> to vector<4x8x32xf32>
    %58 = arith.addf %56, %57 : vector<4x8x32xf32>
    %cst_28 = arith.constant 0.000000e+00 : f32
    %59 = vector.broadcast %cst_28 : f32 to vector<4x8x32xf32>
    %60 = arith.maximumf %58, %59 : vector<4x8x32xf32>
    "tpu.trace_start"() <{level = 10 : i32, message = "tnh,tho->tno"}> : () -> ()
    %cst_29 = arith.constant dense<0.000000e+00> : vector<4x8x4xf32>
    %61 = tpu.matmul %60, %50, %cst_29 {dimension_numbers = #tpu.dot_dimension_numbers<[2], [1], [1], [2], [0, 0, 0, 1, 1, 2], [0], [0]>} : vector<4x8x32xf32>, vector<4x32x4xf32>, vector<4x8x4xf32> -> vector<4x8x4xf32>
    "tpu.trace_stop"() : () -> ()
    %62 = vector.broadcast %55 : vector<4x1x4xf32> to vector<4x8x4xf32>
    %63 = arith.addf %61, %62 : vector<4x8x4xf32>
    %64 = arith.subf %63, %1 : vector<4x8x4xf32>
    %cst_30 = arith.constant 6.250000e-02 : f32
    %65 = vector.broadcast %cst_30 : f32 to vector<4x8x4xf32>
    %66 = arith.mulf %65, %64 : vector<4x8x4xf32>
    "tpu.trace_start"() <{level = 10 : i32, message = "tnh,tno->tho"}> : () -> ()
    %cst_31 = arith.constant dense<0.000000e+00> : vector<4x32x4xf32>
    %67 = tpu.matmul %60, %66, %cst_31 {dimension_numbers = #tpu.dot_dimension_numbers<[1], [1], [2], [2], [0, 0, 0, 2, 1, 2], [0], [0]>} : vector<4x8x32xf32>, vector<4x8x4xf32>, vector<4x32x4xf32> -> vector<4x32x4xf32>
    "tpu.trace_stop"() : () -> ()
    %cst_32 = arith.constant dense<0.000000e+00> : vector<4x4xf32>
    %68 = vector.multi_reduction <add>, %66, %cst_32 [1] : vector<4x8x4xf32> to vector<4x4xf32>
    %69 = vector.shape_cast %68 : vector<4x4xf32> to vector<4x1x4xf32>
    "tpu.trace_start"() <{level = 10 : i32, message = "tno,tho->tnh"}> : () -> ()
    %cst_33 = arith.constant dense<0.000000e+00> : vector<4x8x32xf32>
    %70 = tpu.matmul %66, %50, %cst_33 {dimension_numbers = #tpu.dot_dimension_numbers<[2], [2], [1], [1], [0, 0, 0, 1, 1, 1], [0], [0]>} : vector<4x8x4xf32>, vector<4x32x4xf32>, vector<4x8x32xf32> -> vector<4x8x32xf32>
    %cst_34 = arith.constant 0.000000e+00 : f32
    "tpu.trace_stop"() : () -> ()
    %71 = vector.broadcast %cst_34 : f32 to vector<4x8x32xf32>
    %72 = arith.cmpf ogt, %58, %71 : vector<4x8x32xf32>
    %cst_35 = arith.constant 0.000000e+00 : f32
    %73 = vector.broadcast %cst_35 : f32 to vector<4x8x32xf32>
    %74 = arith.select %72, %70, %73 : vector<4x8x32xi1>, vector<4x8x32xf32>
    "tpu.trace_start"() <{level = 10 : i32, message = "tnd,tnh->tdh"}> : () -> ()
    %cst_36 = arith.constant dense<0.000000e+00> : vector<4x32x32xf32>
    %75 = tpu.matmul %0, %74, %cst_36 {dimension_numbers = #tpu.dot_dimension_numbers<[1], [1], [2], [2], [0, 0, 0, 2, 1, 2], [0], [0]>} : vector<4x8x32xf32>, vector<4x8x32xf32>, vector<4x32x32xf32> -> vector<4x32x32xf32>
    "tpu.trace_stop"() : () -> ()
    %cst_37 = arith.constant dense<0.000000e+00> : vector<4x32xf32>
    %76 = vector.multi_reduction <add>, %74, %cst_37 [1] : vector<4x8x32xf32> to vector<4x32xf32>
    %77 = vector.shape_cast %76 : vector<4x32xf32> to vector<4x1x32xf32>
    %cst_38 = arith.constant 0.00999999977 : f32
    %78 = vector.broadcast %cst_38 : f32 to vector<4x32x32xf32>
    %79 = arith.mulf %78, %75 : vector<4x32x32xf32>
    %80 = arith.subf %40, %79 : vector<4x32x32xf32>
    %cst_39 = arith.constant 0.00999999977 : f32
    %81 = vector.broadcast %cst_39 : f32 to vector<4x1x32xf32>
    %82 = arith.mulf %81, %77 : vector<4x1x32xf32>
    %83 = arith.subf %45, %82 : vector<4x1x32xf32>
    %cst_40 = arith.constant 0.00999999977 : f32
    %84 = vector.broadcast %cst_40 : f32 to vector<4x32x4xf32>
    %85 = arith.mulf %84, %67 : vector<4x32x4xf32>
    %86 = arith.subf %50, %85 : vector<4x32x4xf32>
    %cst_41 = arith.constant 0.00999999977 : f32
    %87 = vector.broadcast %cst_41 : f32 to vector<4x1x4xf32>
    %88 = arith.mulf %87, %69 : vector<4x1x4xf32>
    %89 = arith.subf %55, %88 : vector<4x1x4xf32>
    %c1_i32 = arith.constant 1 : i32
    "tpu.trace_start"() <{level = 10 : i32, message = "tnd,tdh->tnh"}> : () -> ()
    %cst_42 = arith.constant dense<0.000000e+00> : vector<4x8x32xf32>
    %90 = tpu.matmul %0, %80, %cst_42 {dimension_numbers = #tpu.dot_dimension_numbers<[2], [1], [1], [2], [0, 0, 0, 1, 1, 2], [0], [0]>} : vector<4x8x32xf32>, vector<4x32x32xf32>, vector<4x8x32xf32> -> vector<4x8x32xf32>
    "tpu.trace_stop"() : () -> ()
    %91 = vector.broadcast %83 : vector<4x1x32xf32> to vector<4x8x32xf32>
    %92 = arith.addf %90, %91 : vector<4x8x32xf32>
    %cst_43 = arith.constant 0.000000e+00 : f32
    %93 = vector.broadcast %cst_43 : f32 to vector<4x8x32xf32>
    %94 = arith.maximumf %92, %93 : vector<4x8x32xf32>
    "tpu.trace_start"() <{level = 10 : i32, message = "tnh,tho->tno"}> : () -> ()
    %cst_44 = arith.constant dense<0.000000e+00> : vector<4x8x4xf32>
    %95 = tpu.matmul %94, %86, %cst_44 {dimension_numbers = #tpu.dot_dimension_numbers<[2], [1], [1], [2], [0, 0, 0, 1, 1, 2], [0], [0]>} : vector<4x8x32xf32>, vector<4x32x4xf32>, vector<4x8x4xf32> -> vector<4x8x4xf32>
    "tpu.trace_stop"() : () -> ()
    %96 = vector.broadcast %89 : vector<4x1x4xf32> to vector<4x8x4xf32>
    %97 = arith.addf %95, %96 : vector<4x8x4xf32>
    %98 = arith.subf %97, %1 : vector<4x8x4xf32>
    %cst_45 = arith.constant 6.250000e-02 : f32
    %99 = vector.broadcast %cst_45 : f32 to vector<4x8x4xf32>
    %100 = arith.mulf %99, %98 : vector<4x8x4xf32>
    "tpu.trace_start"() <{level = 10 : i32, message = "tnh,tno->tho"}> : () -> ()
    %cst_46 = arith.constant dense<0.000000e+00> : vector<4x32x4xf32>
    %101 = tpu.matmul %94, %100, %cst_46 {dimension_numbers = #tpu.dot_dimension_numbers<[1], [1], [2], [2], [0, 0, 0, 2, 1, 2], [0], [0]>} : vector<4x8x32xf32>, vector<4x8x4xf32>, vector<4x32x4xf32> -> vector<4x32x4xf32>
    "tpu.trace_stop"() : () -> ()
    %cst_47 = arith.constant dense<0.000000e+00> : vector<4x4xf32>
    %102 = vector.multi_reduction <add>, %100, %cst_47 [1] : vector<4x8x4xf32> to vector<4x4xf32>
    %103 = vector.shape_cast %102 : vector<4x4xf32> to vector<4x1x4xf32>
    "tpu.trace_start"() <{level = 10 : i32, message = "tno,tho->tnh"}> : () -> ()
    %cst_48 = arith.constant dense<0.000000e+00> : vector<4x8x32xf32>
    %104 = tpu.matmul %100, %86, %cst_48 {dimension_numbers = #tpu.dot_dimension_numbers<[2], [2], [1], [1], [0, 0, 0, 1, 1, 1], [0], [0]>} : vector<4x8x4xf32>, vector<4x32x4xf32>, vector<4x8x32xf32> -> vector<4x8x32xf32>
    %cst_49 = arith.constant 0.000000e+00 : f32
    "tpu.trace_stop"() : () -> ()
    %105 = vector.broadcast %cst_49 : f32 to vector<4x8x32xf32>
    %106 = arith.cmpf ogt, %92, %105 : vector<4x8x32xf32>
    %cst_50 = arith.constant 0.000000e+00 : f32
    %107 = vector.broadcast %cst_50 : f32 to vector<4x8x32xf32>
    %108 = arith.select %106, %104, %107 : vector<4x8x32xi1>, vector<4x8x32xf32>
    "tpu.trace_start"() <{level = 10 : i32, message = "tnd,tnh->tdh"}> : () -> ()
    %cst_51 = arith.constant dense<0.000000e+00> : vector<4x32x32xf32>
    %109 = tpu.matmul %0, %108, %cst_51 {dimension_numbers = #tpu.dot_dimension_numbers<[1], [1], [2], [2], [0, 0, 0, 2, 1, 2], [0], [0]>} : vector<4x8x32xf32>, vector<4x8x32xf32>, vector<4x32x32xf32> -> vector<4x32x32xf32>
    "tpu.trace_stop"() : () -> ()
    %cst_52 = arith.constant dense<0.000000e+00> : vector<4x32xf32>
    %110 = vector.multi_reduction <add>, %108, %cst_52 [1] : vector<4x8x32xf32> to vector<4x32xf32>
    %111 = vector.shape_cast %110 : vector<4x32xf32> to vector<4x1x32xf32>
    %cst_53 = arith.constant 0.00999999977 : f32
    %112 = vector.broadcast %cst_53 : f32 to vector<4x32x32xf32>
    %113 = arith.mulf %112, %109 : vector<4x32x32xf32>
    %114 = arith.subf %80, %113 : vector<4x32x32xf32>
    %cst_54 = arith.constant 0.00999999977 : f32
    %115 = vector.broadcast %cst_54 : f32 to vector<4x1x32xf32>
    %116 = arith.mulf %115, %111 : vector<4x1x32xf32>
    %117 = arith.subf %83, %116 : vector<4x1x32xf32>
    %cst_55 = arith.constant 0.00999999977 : f32
    %118 = vector.broadcast %cst_55 : f32 to vector<4x32x4xf32>
    %119 = arith.mulf %118, %101 : vector<4x32x4xf32>
    %120 = arith.subf %86, %119 : vector<4x32x4xf32>
    %cst_56 = arith.constant 0.00999999977 : f32
    %121 = vector.broadcast %cst_56 : f32 to vector<4x1x4xf32>
    %122 = arith.mulf %121, %103 : vector<4x1x4xf32>
    %123 = arith.subf %89, %122 : vector<4x1x4xf32>
    %c0_57 = arith.constant 0 : index
    %c0_58 = arith.constant 0 : index
    %c0_59 = arith.constant 0 : index
    %124 = vector.load %arg3[%c0_57, %c0_58, %c0_59] : memref<4x8x32xf32, #tpu.memory_space<vmem>>, vector<4x8x32xf32>
    %c0_60 = arith.constant 0 : index
    %c0_61 = arith.constant 0 : index
    %c0_62 = arith.constant 0 : index
    %125 = vector.load %arg4[%c0_60, %c0_61, %c0_62] : memref<4x8x4xf32, #tpu.memory_space<vmem>>, vector<4x8x4xf32>
    "tpu.trace_start"() <{level = 10 : i32, message = "tnd,tdh->tnh"}> : () -> ()
    %cst_63 = arith.constant dense<0.000000e+00> : vector<4x8x32xf32>
    %126 = tpu.matmul %124, %114, %cst_63 {dimension_numbers = #tpu.dot_dimension_numbers<[2], [1], [1], [2], [0, 0, 0, 1, 1, 2], [0], [0]>} : vector<4x8x32xf32>, vector<4x32x32xf32>, vector<4x8x32xf32> -> vector<4x8x32xf32>
    "tpu.trace_stop"() : () -> ()
    %127 = vector.broadcast %117 : vector<4x1x32xf32> to vector<4x8x32xf32>
    %128 = arith.addf %126, %127 : vector<4x8x32xf32>
    %cst_64 = arith.constant 0.000000e+00 : f32
    %129 = vector.broadcast %cst_64 : f32 to vector<4x8x32xf32>
    %130 = arith.maximumf %128, %129 : vector<4x8x32xf32>
    "tpu.trace_start"() <{level = 10 : i32, message = "tnh,tho->tno"}> : () -> ()
    %cst_65 = arith.constant dense<0.000000e+00> : vector<4x8x4xf32>
    %131 = tpu.matmul %130, %120, %cst_65 {dimension_numbers = #tpu.dot_dimension_numbers<[2], [1], [1], [2], [0, 0, 0, 1, 1, 2], [0], [0]>} : vector<4x8x32xf32>, vector<4x32x4xf32>, vector<4x8x4xf32> -> vector<4x8x4xf32>
    "tpu.trace_stop"() : () -> ()
    %132 = vector.broadcast %123 : vector<4x1x4xf32> to vector<4x8x4xf32>
    %133 = arith.addf %131, %132 : vector<4x8x4xf32>
    %134 = arith.subf %133, %125 : vector<4x8x4xf32>
    %135 = arith.mulf %134, %134 : vector<4x8x4xf32>
    %cst_66 = arith.constant dense<0.000000e+00> : vector<4x8xf32>
    %136 = vector.multi_reduction <add>, %135, %cst_66 [2] : vector<4x8x4xf32> to vector<4x8xf32>
    %cst_67 = arith.constant dense<0.000000e+00> : vector<4xf32>
    %137 = vector.multi_reduction <add>, %136, %cst_67 [1] : vector<4x8xf32> to vector<4xf32>
    %138 = vector.shape_cast %137 : vector<4xf32> to vector<4x1xf32>
    %139 = math.absf %134 : vector<4x8x4xf32>
    %cst_68 = arith.constant dense<0.000000e+00> : vector<4x8xf32>
    %140 = vector.multi_reduction <add>, %139, %cst_68 [2] : vector<4x8x4xf32> to vector<4x8xf32>
    %cst_69 = arith.constant dense<0.000000e+00> : vector<4xf32>
    %141 = vector.multi_reduction <add>, %140, %cst_69 [1] : vector<4x8xf32> to vector<4xf32>
    %142 = vector.shape_cast %141 : vector<4xf32> to vector<4x1xf32>
    %143 = tpu.iota {dimensions = array<i32: 1>} : vector<4x128xi32>
    %144 = tpu.iota {dimensions = array<i32: 0>} : vector<4x128xi32>
    %145 = arith.cmpi eq, %143, %144 : vector<4x128xi32>
    %cst_70 = arith.constant 3.125000e-02 : f32
    %146 = vector.broadcast %cst_70 : f32 to vector<4x1xf32>
    %147 = arith.mulf %138, %146 : vector<4x1xf32>
    %cst_71 = arith.constant 0.000000e+00 : f32
    %148 = vector.shape_cast %147 : vector<4x1xf32> to vector<4x1xf32>
    %149 = vector.broadcast %148 : vector<4x1xf32> to vector<4x128xf32>
    %150 = vector.broadcast %cst_71 : f32 to vector<4x128xf32>
    %151 = arith.select %145, %149, %150 : vector<4x128xi1>, vector<4x128xf32>
    %cst_72 = arith.constant dense<0.000000e+00> : vector<128xf32>
    %152 = vector.multi_reduction <add>, %151, %cst_72 [0] : vector<4x128xf32> to vector<128xf32>
    %153 = vector.shape_cast %152 : vector<128xf32> to vector<1x128xf32>
    %cst_73 = arith.constant 3.125000e-02 : f32
    %154 = vector.broadcast %cst_73 : f32 to vector<4x1xf32>
    %155 = arith.mulf %142, %154 : vector<4x1xf32>
    %cst_74 = arith.constant 0.000000e+00 : f32
    %156 = vector.shape_cast %155 : vector<4x1xf32> to vector<4x1xf32>
    %157 = vector.broadcast %156 : vector<4x1xf32> to vector<4x128xf32>
    %158 = vector.broadcast %cst_74 : f32 to vector<4x128xf32>
    %159 = arith.select %145, %157, %158 : vector<4x128xi1>, vector<4x128xf32>
    %cst_75 = arith.constant dense<0.000000e+00> : vector<128xf32>
    %160 = vector.multi_reduction <add>, %159, %cst_75 [0] : vector<4x128xf32> to vector<128xf32>
    %161 = vector.shape_cast %160 : vector<128xf32> to vector<1x128xf32>
    %162 = tpu.concatenate %153, %161 in 0 : vector<1x128xf32>, vector<1x128xf32> -> vector<2x128xf32>
    %c0_76 = arith.constant 0 : index
    %c0_77 = arith.constant 0 : index
    %c0_78 = arith.constant 0 : index
    %163 = vector.load %arg9[%c0_76, %c0_77, %c0_78] : memref<1x2x128xf32, #tpu.memory_space<vmem>>, vector<1x2x128xf32>
    %164 = vector.shape_cast %163 : vector<1x2x128xf32> to vector<2x128xf32>
    %165 = vector.shape_cast %162 : vector<2x128xf32> to vector<1x2x128xf32>
    tpu.vector_store %arg9[%c0_76, %c0_77, %c0_78], %165 {strides = array<i32>} : memref<1x2x128xf32, #tpu.memory_space<vmem>>, vector<1x2x128xf32>,
    return
  }
  func.func @transform_0(%arg0: i32) -> (i32, i32, i32) {
    %c0_i32 = arith.constant 0 : i32
    %c0_i32_0 = arith.constant 0 : i32
    %c0_i32_1 = arith.constant 0 : i32
    return %arg0, %c0_i32, %c0_i32_0 : i32, i32, i32
  }
  func.func @transform_1(%arg0: i32) -> (i32, i32, i32) {
    %c0_i32 = arith.constant 0 : i32
    %c0_i32_0 = arith.constant 0 : i32
    %c0_i32_1 = arith.constant 0 : i32
    return %arg0, %c0_i32, %c0_i32_0 : i32, i32, i32
  }
  func.func @transform_2(%arg0: i32) -> (i32, i32, i32) {
    %c0_i32 = arith.constant 0 : i32
    %c0_i32_0 = arith.constant 0 : i32
    %c0_i32_1 = arith.constant 0 : i32
    return %arg0, %c0_i32, %c0_i32_0 : i32, i32, i32
  }
  func.func @transform_3(%arg0: i32) -> (i32, i32, i32) {
    %c0_i32 = arith.constant 0 : i32
    %c0_i32_0 = arith.constant 0 : i32
    %c0_i32_1 = arith.constant 0 : i32
    return %arg0, %c0_i32, %c0_i32_0 : i32, i32, i32
  }
  func.func @transform_4(%arg0: i32) -> (i32, i32) {
    %c0_i32 = arith.constant 0 : i32
    %c0_i32_0 = arith.constant 0 : i32
    %c0_i32_1 = arith.constant 0 : i32
    return %c0_i32, %c0_i32_0 : i32, i32
  }
  func.func @transform_5(%arg0: i32) -> (i32, i32) {
    %c0_i32 = arith.constant 0 : i32
    %c0_i32_0 = arith.constant 0 : i32
    %c0_i32_1 = arith.constant 0 : i32
    return %c0_i32, %c0_i32_0 : i32, i32
  }
  func.func @transform_6(%arg0: i32) -> (i32, i32) {
    %c0_i32 = arith.constant 0 : i32
    %c0_i32_0 = arith.constant 0 : i32
    %c0_i32_1 = arith.constant 0 : i32
    return %c0_i32, %c0_i32_0 : i32, i32
  }
  func.func @transform_7(%arg0: i32) -> (i32, i32) {
    %c0_i32 = arith.constant 0 : i32
    %c0_i32_0 = arith.constant 0 : i32
    %c0_i32_1 = arith.constant 0 : i32
    return %c0_i32, %c0_i32_0 : i32, i32
  }
  func.func @transform_8(%arg0: i32) -> (i32, i32, i32) {
    %c0_i32 = arith.constant 0 : i32
    %c0_i32_0 = arith.constant 0 : i32
    %c0_i32_1 = arith.constant 0 : i32
    return %arg0, %c0_i32, %c0_i32_0 : i32, i32, i32
  }
}

module attributes {stable_mosaic.version = 11 : i64} {
  func.func @_meta_block_kernel(%arg0: i32, %arg1: memref<4x8x32xf32, #tpu.memory_space<vmem>>, %arg2: memref<4x8x4xf32, #tpu.memory_space<vmem>>, %arg3: memref<4x8x32xf32, #tpu.memory_space<vmem>>, %arg4: memref<4x8x4xf32, #tpu.memory_space<vmem>>, %arg5: memref<32x32xf32, #tpu.memory_space<vmem>>, %arg6: memref<1x32xf32, #tpu.memory_space<vmem>>, %arg7: memref<32x4xf32, #tpu.memory_space<vmem>>, %arg8: memref<1x4xf32, #tpu.memory_space<vmem>>, %arg9: memref<1x2x128xf32, #tpu.memory_space<vmem>>) attributes {dimension_semantics = [#tpu.dimension_semantics<parallel>], iteration_bounds = array<i64: 2>, scalar_prefetch = 0 : i64, scratch_operands = 0 : i64, tpu.core_type = #tpu.core_type<tc>, window_params = [{transform_indices = @transform_0, window_bounds = array<i64: 4, 8, 32>}, {transform_indices = @transform_1, window_bounds = array<i64: 4, 8, 4>}, {transform_indices = @transform_2, window_bounds = array<i64: 4, 8, 32>}, {transform_indices = @transform_3, window_bounds = array<i64: 4, 8, 4>}, {pipeline_mode = #tpu.pipeline_mode<synchronous>, transform_indices = @transform_4, window_bounds = array<i64: 32, 32>}, {pipeline_mode = #tpu.pipeline_mode<synchronous>, transform_indices = @transform_5, window_bounds = array<i64: 1, 32>}, {pipeline_mode = #tpu.pipeline_mode<synchronous>, transform_indices = @transform_6, window_bounds = array<i64: 32, 4>}, {pipeline_mode = #tpu.pipeline_mode<synchronous>, transform_indices = @transform_7, window_bounds = array<i64: 1, 4>}, {transform_indices = @transform_8, window_bounds = array<i64: 1, 2, 128>}]} {
    %c0 = arith.constant 0 : index
    %c0_0 = arith.constant 0 : index
    %c0_1 = arith.constant 0 : index
    %0 = vector.load %arg1[%c0, %c0_0, %c0_1] : memref<4x8x32xf32, #tpu.memory_space<vmem>>, vector<4x8x32xf32>
    %c0_2 = arith.constant 0 : index
    %c0_3 = arith.constant 0 : index
    %c0_4 = arith.constant 0 : index
    %1 = vector.load %arg2[%c0_2, %c0_3, %c0_4] : memref<4x8x4xf32, #tpu.memory_space<vmem>>, vector<4x8x4xf32>
    %c0_5 = arith.constant 0 : index
    %c0_6 = arith.constant 0 : index
    %2 = vector.load %arg5[%c0_5, %c0_6] : memref<32x32xf32, #tpu.memory_space<vmem>>, vector<32x32xf32>
    %c0_7 = arith.constant 0 : index
    %c0_8 = arith.constant 0 : index
    %3 = vector.load %arg6[%c0_7, %c0_8] : memref<1x32xf32, #tpu.memory_space<vmem>>, vector<1x32xf32>
    %c0_9 = arith.constant 0 : index
    %c0_10 = arith.constant 0 : index
    %4 = vector.load %arg7[%c0_9, %c0_10] : memref<32x4xf32, #tpu.memory_space<vmem>>, vector<32x4xf32>
    %c0_11 = arith.constant 0 : index
    %c0_12 = arith.constant 0 : index
    %5 = vector.load %arg8[%c0_11, %c0_12] : memref<1x4xf32, #tpu.memory_space<vmem>>, vector<1x4xf32>
    %6 = vector.shape_cast %2 : vector<32x32xf32> to vector<1x32x32xf32>
    "tpu.trace_start"() <{level = 10 : i32, message = "tnd,tdh->tnh"}> : () -> ()
    %7 = vector.shape_cast %6 : vector<1x32x32xf32> to vector<32x32xf32>
    %cst = arith.constant dense<0.000000e+00> : vector<4x8x32xf32>
    %8 = tpu.matmul %0, %7, %cst {dimension_numbers = #tpu.dot_dimension_numbers<[2], [0], [0, 1], [1], [0, 0, 0, 1, 1, 1], [], []>} : vector<4x8x32xf32>, vector<32x32xf32>, vector<4x8x32xf32> -> vector<4x8x32xf32>
    "tpu.trace_stop"() : () -> ()
    %9 = vector.shape_cast %3 : vector<1x32xf32> to vector<1x1x32xf32>
    %10 = vector.broadcast %9 : vector<1x1x32xf32> to vector<4x8x32xf32>
    %11 = arith.addf %8, %10 : vector<4x8x32xf32>
    %cst_13 = arith.constant 0.000000e+00 : f32
    %12 = vector.broadcast %cst_13 : f32 to vector<4x8x32xf32>
    %13 = arith.maximumf %11, %12 : vector<4x8x32xf32>
    %14 = vector.shape_cast %4 : vector<32x4xf32> to vector<1x32x4xf32>
    "tpu.trace_start"() <{level = 10 : i32, message = "tnh,tho->tno"}> : () -> ()
    %15 = vector.shape_cast %14 : vector<1x32x4xf32> to vector<32x4xf32>
    %cst_14 = arith.constant dense<0.000000e+00> : vector<4x8x4xf32>
    %16 = tpu.matmul %13, %15, %cst_14 {dimension_numbers = #tpu.dot_dimension_numbers<[2], [0], [0, 1], [1], [0, 0, 0, 1, 1, 1], [], []>} : vector<4x8x32xf32>, vector<32x4xf32>, vector<4x8x4xf32> -> vector<4x8x4xf32>
    "tpu.trace_stop"() : () -> ()
    %17 = vector.shape_cast %5 : vector<1x4xf32> to vector<1x1x4xf32>
    %18 = vector.broadcast %17 : vector<1x1x4xf32> to vector<4x8x4xf32>
    %19 = arith.addf %16, %18 : vector<4x8x4xf32>
    %20 = arith.subf %19, %1 : vector<4x8x4xf32>
    %cst_15 = arith.constant 6.250000e-02 : f32
    %21 = vector.broadcast %cst_15 : f32 to vector<4x8x4xf32>
    %22 = arith.mulf %21, %20 : vector<4x8x4xf32>
    "tpu.trace_start"() <{level = 10 : i32, message = "tnh,tno->tho"}> : () -> ()
    %cst_16 = arith.constant dense<0.000000e+00> : vector<4x32x4xf32>
    %23 = tpu.matmul %13, %22, %cst_16 {dimension_numbers = #tpu.dot_dimension_numbers<[1], [1], [2], [2], [0, 0, 0, 2, 1, 2], [0], [0]>} : vector<4x8x32xf32>, vector<4x8x4xf32>, vector<4x32x4xf32> -> vector<4x32x4xf32>
    "tpu.trace_stop"() : () -> ()
    %cst_17 = arith.constant dense<0.000000e+00> : vector<4x4xf32>
    %24 = vector.multi_reduction <add>, %22, %cst_17 [1] : vector<4x8x4xf32> to vector<4x4xf32>
    %25 = vector.shape_cast %24 : vector<4x4xf32> to vector<4x1x4xf32>
    %26 = vector.shape_cast %4 : vector<32x4xf32> to vector<1x32x4xf32>
    "tpu.trace_start"() <{level = 10 : i32, message = "tno,tho->tnh"}> : () -> ()
    %27 = vector.shape_cast %26 : vector<1x32x4xf32> to vector<32x4xf32>
    %cst_18 = arith.constant dense<0.000000e+00> : vector<4x8x32xf32>
    %28 = tpu.matmul %22, %27, %cst_18 {dimension_numbers = #tpu.dot_dimension_numbers<[2], [1], [0, 1], [0], [0, 0, 0, 1, 1, 0], [], []>} : vector<4x8x4xf32>, vector<32x4xf32>, vector<4x8x32xf32> -> vector<4x8x32xf32>
    %cst_19 = arith.constant 0.000000e+00 : f32
    "tpu.trace_stop"() : () -> ()
    %29 = vector.broadcast %cst_19 : f32 to vector<4x8x32xf32>
    %30 = arith.cmpf ogt, %11, %29 : vector<4x8x32xf32>
    %cst_20 = arith.constant 0.000000e+00 : f32
    %31 = vector.broadcast %cst_20 : f32 to vector<4x8x32xf32>
    %32 = arith.select %30, %28, %31 : vector<4x8x32xi1>, vector<4x8x32xf32>
    "tpu.trace_start"() <{level = 10 : i32, message = "tnd,tnh->tdh"}> : () -> ()
    %cst_21 = arith.constant dense<0.000000e+00> : vector<4x32x32xf32>
    %33 = tpu.matmul %0, %32, %cst_21 {dimension_numbers = #tpu.dot_dimension_numbers<[1], [1], [2], [2], [0, 0, 0, 2, 1, 2], [0], [0]>} : vector<4x8x32xf32>, vector<4x8x32xf32>, vector<4x32x32xf32> -> vector<4x32x32xf32>
    "tpu.trace_stop"() : () -> ()
    %cst_22 = arith.constant dense<0.000000e+00> : vector<4x32xf32>
    %34 = vector.multi_reduction <add>, %32, %cst_22 [1] : vector<4x8x32xf32> to vector<4x32xf32>
    %35 = vector.shape_cast %34 : vector<4x32xf32> to vector<4x1x32xf32>
    %36 = vector.shape_cast %2 : vector<32x32xf32> to vector<1x32x32xf32>
    %cst_23 = arith.constant 0.00999999977 : f32
    %37 = vector.broadcast %cst_23 : f32 to vector<4x32x32xf32>
    %38 = arith.mulf %37, %33 : vector<4x32x32xf32>
    %39 = vector.broadcast %36 : vector<1x32x32xf32> to vector<4x32x32xf32>
    %40 = arith.subf %39, %38 : vector<4x32x32xf32>
    %41 = vector.shape_cast %3 : vector<1x32xf32> to vector<1x1x32xf32>
    %cst_24 = arith.constant 0.00999999977 : f32
    %42 = vector.broadcast %cst_24 : f32 to vector<4x1x32xf32>
    %43 = arith.mulf %42, %35 : vector<4x1x32xf32>
    %44 = vector.broadcast %41 : vector<1x1x32xf32> to vector<4x1x32xf32>
    %45 = arith.subf %44, %43 : vector<4x1x32xf32>
    %46 = vector.shape_cast %4 : vector<32x4xf32> to vector<1x32x4xf32>
    %cst_25 = arith.constant 0.00999999977 : f32
    %47 = vector.broadcast %cst_25 : f32 to vector<4x32x4xf32>
    %48 = arith.mulf %47, %23 : vector<4x32x4xf32>
    %49 = vector.broadcast %46 : vector<1x32x4xf32> to vector<4x32x4xf32>
    %50 = arith.subf %49, %48 : vector<4x32x4xf32>
    %51 = vector.shape_cast %5 : vector<1x4xf32> to vector<1x1x4xf32>
    %cst_26 = arith.constant 0.00999999977 : f32
    %52 = vector.broadcast %cst_26 : f32 to vector<4x1x4xf32>
    %53 = arith.mulf %52, %25 : vector<4x1x4xf32>
    %54 = vector.broadcast %51 : vector<1x1x4xf32> to vector<4x1x4xf32>
    %55 = arith.subf %54, %53 : vector<4x1x4xf32>
    %c0_i32 = arith.constant 0 : i32
    "tpu.trace_start"() <{level = 10 : i32, message = "tnd,tdh->tnh"}> : () -> ()
    %cst_27 = arith.constant dense<0.000000e+00> : vector<4x8x32xf32>
    %56 = tpu.matmul %0, %40, %cst_27 {dimension_numbers = #tpu.dot_dimension_numbers<[2], [1], [1], [2], [0, 0, 0, 1, 1, 2], [0], [0]>} : vector<4x8x32xf32>, vector<4x32x32xf32>, vector<4x8x32xf32> -> vector<4x8x32xf32>
    "tpu.trace_stop"() : () -> ()
    %57 = vector.broadcast %45 : vector<4x1x32xf32> to vector<4x8x32xf32>
    %58 = arith.addf %56, %57 : vector<4x8x32xf32>
    %cst_28 = arith.constant 0.000000e+00 : f32
    %59 = vector.broadcast %cst_28 : f32 to vector<4x8x32xf32>
    %60 = arith.maximumf %58, %59 : vector<4x8x32xf32>
    "tpu.trace_start"() <{level = 10 : i32, message = "tnh,tho->tno"}> : () -> ()
    %cst_29 = arith.constant dense<0.000000e+00> : vector<4x8x4xf32>
    %61 = tpu.matmul %60, %50, %cst_29 {dimension_numbers = #tpu.dot_dimension_numbers<[2], [1], [1], [2], [0, 0, 0, 1, 1, 2], [0], [0]>} : vector<4x8x32xf32>, vector<4x32x4xf32>, vector<4x8x4xf32> -> vector<4x8x4xf32>
    "tpu.trace_stop"() : () -> ()
    %62 = vector.broadcast %55 : vector<4x1x4xf32> to vector<4x8x4xf32>
    %63 = arith.addf %61, %62 : vector<4x8x4xf32>
    %64 = arith.subf %63, %1 : vector<4x8x4xf32>
    %cst_30 = arith.constant 6.250000e-02 : f32
    %65 = vector.broadcast %cst_30 : f32 to vector<4x8x4xf32>
    %66 = arith.mulf %65, %64 : vector<4x8x4xf32>
    "tpu.trace_start"() <{level = 10 : i32, message = "tnh,tno->tho"}> : () -> ()
    %cst_31 = arith.constant dense<0.000000e+00> : vector<4x32x4xf32>
    %67 = tpu.matmul %60, %66, %cst_31 {dimension_numbers = #tpu.dot_dimension_numbers<[1], [1], [2], [2], [0, 0, 0, 2, 1, 2], [0], [0]>} : vector<4x8x32xf32>, vector<4x8x4xf32>, vector<4x32x4xf32> -> vector<4x32x4xf32>
    "tpu.trace_stop"() : () -> ()
    %cst_32 = arith.constant dense<0.000000e+00> : vector<4x4xf32>
    %68 = vector.multi_reduction <add>, %66, %cst_32 [1] : vector<4x8x4xf32> to vector<4x4xf32>
    %69 = vector.shape_cast %68 : vector<4x4xf32> to vector<4x1x4xf32>
    "tpu.trace_start"() <{level = 10 : i32, message = "tno,tho->tnh"}> : () -> ()
    %cst_33 = arith.constant dense<0.000000e+00> : vector<4x8x32xf32>
    %70 = tpu.matmul %66, %50, %cst_33 {dimension_numbers = #tpu.dot_dimension_numbers<[2], [2], [1], [1], [0, 0, 0, 1, 1, 1], [0], [0]>} : vector<4x8x4xf32>, vector<4x32x4xf32>, vector<4x8x32xf32> -> vector<4x8x32xf32>
    %cst_34 = arith.constant 0.000000e+00 : f32
    "tpu.trace_stop"() : () -> ()
    %71 = vector.broadcast %cst_34 : f32 to vector<4x8x32xf32>
    %72 = arith.cmpf ogt, %58, %71 : vector<4x8x32xf32>
    %cst_35 = arith.constant 0.000000e+00 : f32
    %73 = vector.broadcast %cst_35 : f32 to vector<4x8x32xf32>
    %74 = arith.select %72, %70, %73 : vector<4x8x32xi1>, vector<4x8x32xf32>
    "tpu.trace_start"() <{level = 10 : i32, message = "tnd,tnh->tdh"}> : () -> ()
    %cst_36 = arith.constant dense<0.000000e+00> : vector<4x32x32xf32>
    %75 = tpu.matmul %0, %74, %cst_36 {dimension_numbers = #tpu.dot_dimension_numbers<[1], [1], [2], [2], [0, 0, 0, 2, 1, 2], [0], [0]>} : vector<4x8x32xf32>, vector<4x8x32xf32>, vector<4x32x32xf32> -> vector<4x32x32xf32>
    "tpu.trace_stop"() : () -> ()
    %cst_37 = arith.constant dense<0.000000e+00> : vector<4x32xf32>
    %76 = vector.multi_reduction <add>, %74, %cst_37 [1] : vector<4x8x32xf32> to vector<4x32xf32>
    %77 = vector.shape_cast %76 : vector<4x32xf32> to vector<4x1x32xf32>
    %cst_38 = arith.constant 0.00999999977 : f32
    %78 = vector.broadcast %cst_38 : f32 to vector<4x32x32xf32>
    %79 = arith.mulf %78, %75 : vector<4x32x32xf32>
    %80 = arith.subf %40, %79 : vector<4x32x32xf32>
    %cst_39 = arith.constant 0.00999999977 : f32
    %81 = vector.broadcast %cst_39 : f32 to vector<4x1x32xf32>
    %82 = arith.mulf %81, %77 : vector<4x1x32xf32>
    %83 = arith.subf %45, %82 : vector<4x1x32xf32>
    %cst_40 = arith.constant 0.00999999977 : f32
    %84 = vector.broadcast %cst_40 : f32 to vector<4x32x4xf32>
    %85 = arith.mulf %84, %67 : vector<4x32x4xf32>
    %86 = arith.subf %50, %85 : vector<4x32x4xf32>
    %cst_41 = arith.constant 0.00999999977 : f32
    %87 = vector.broadcast %cst_41 : f32 to vector<4x1x4xf32>
    %88 = arith.mulf %87, %69 : vector<4x1x4xf32>
    %89 = arith.subf %55, %88 : vector<4x1x4xf32>
    %c1_i32 = arith.constant 1 : i32
    "tpu.trace_start"() <{level = 10 : i32, message = "tnd,tdh->tnh"}> : () -> ()
    %cst_42 = arith.constant dense<0.000000e+00> : vector<4x8x32xf32>
    %90 = tpu.matmul %0, %80, %cst_42 {dimension_numbers = #tpu.dot_dimension_numbers<[2], [1], [1], [2], [0, 0, 0, 1, 1, 2], [0], [0]>} : vector<4x8x32xf32>, vector<4x32x32xf32>, vector<4x8x32xf32> -> vector<4x8x32xf32>
    "tpu.trace_stop"() : () -> ()
    %91 = vector.broadcast %83 : vector<4x1x32xf32> to vector<4x8x32xf32>
    %92 = arith.addf %90, %91 : vector<4x8x32xf32>
    %cst_43 = arith.constant 0.000000e+00 : f32
    %93 = vector.broadcast %cst_43 : f32 to vector<4x8x32xf32>
    %94 = arith.maximumf %92, %93 : vector<4x8x32xf32>
    "tpu.trace_start"() <{level = 10 : i32, message = "tnh,tho->tno"}> : () -> ()
    %cst_44 = arith.constant dense<0.000000e+00> : vector<4x8x4xf32>
    %95 = tpu.matmul %94, %86, %cst_44 {dimension_numbers = #tpu.dot_dimension_numbers<[2], [1], [1], [2], [0, 0, 0, 1, 1, 2], [0], [0]>} : vector<4x8x32xf32>, vector<4x32x4xf32>, vector<4x8x4xf32> -> vector<4x8x4xf32>
    "tpu.trace_stop"() : () -> ()
    %96 = vector.broadcast %89 : vector<4x1x4xf32> to vector<4x8x4xf32>
    %97 = arith.addf %95, %96 : vector<4x8x4xf32>
    %98 = arith.subf %97, %1 : vector<4x8x4xf32>
    %cst_45 = arith.constant 6.250000e-02 : f32
    %99 = vector.broadcast %cst_45 : f32 to vector<4x8x4xf32>
    %100 = arith.mulf %99, %98 : vector<4x8x4xf32>
    "tpu.trace_start"() <{level = 10 : i32, message = "tnh,tno->tho"}> : () -> ()
    %cst_46 = arith.constant dense<0.000000e+00> : vector<4x32x4xf32>
    %101 = tpu.matmul %94, %100, %cst_46 {dimension_numbers = #tpu.dot_dimension_numbers<[1], [1], [2], [2], [0, 0, 0, 2, 1, 2], [0], [0]>} : vector<4x8x32xf32>, vector<4x8x4xf32>, vector<4x32x4xf32> -> vector<4x32x4xf32>
    "tpu.trace_stop"() : () -> ()
    %cst_47 = arith.constant dense<0.000000e+00> : vector<4x4xf32>
    %102 = vector.multi_reduction <add>, %100, %cst_47 [1] : vector<4x8x4xf32> to vector<4x4xf32>
    %103 = vector.shape_cast %102 : vector<4x4xf32> to vector<4x1x4xf32>
    "tpu.trace_start"() <{level = 10 : i32, message = "tno,tho->tnh"}> : () -> ()
    %cst_48 = arith.constant dense<0.000000e+00> : vector<4x8x32xf32>
    %104 = tpu.matmul %100, %86, %cst_48 {dimension_numbers = #tpu.dot_dimension_numbers<[2], [2], [1], [1], [0, 0, 0, 1, 1, 1], [0], [0]>} : vector<4x8x4xf32>, vector<4x32x4xf32>, vector<4x8x32xf32> -> vector<4x8x32xf32>
    %cst_49 = arith.constant 0.000000e+00 : f32
    "tpu.trace_stop"() : () -> ()
    %105 = vector.broadcast %cst_49 : f32 to vector<4x8x32xf32>
    %106 = arith.cmpf ogt, %92, %105 : vector<4x8x32xf32>
    %cst_50 = arith.constant 0.000000e+00 : f32
    %107 = vector.broadcast %cst_50 : f32 to vector<4x8x32xf32>
    %108 = arith.select %106, %104, %107 : vector<4x8x32xi1>, vector<4x8x32xf32>
    "tpu.trace_start"() <{level = 10 : i32, message = "tnd,tnh->tdh"}> : () -> ()
    %cst_51 = arith.constant dense<0.000000e+00> : vector<4x32x32xf32>
    %109 = tpu.matmul %0, %108, %cst_51 {dimension_numbers = #tpu.dot_dimension_numbers<[1], [1], [2], [2], [0, 0, 0, 2, 1, 2], [0], [0]>} : vector<4x8x32xf32>, vector<4x8x32xf32>, vector<4x32x32xf32> -> vector<4x32x32xf32>
    "tpu.trace_stop"() : () -> ()
    %cst_52 = arith.constant dense<0.000000e+00> : vector<4x32xf32>
    %110 = vector.multi_reduction <add>, %108, %cst_52 [1] : vector<4x8x32xf32> to vector<4x32xf32>
    %111 = vector.shape_cast %110 : vector<4x32xf32> to vector<4x1x32xf32>
    %cst_53 = arith.constant 0.00999999977 : f32
    %112 = vector.broadcast %cst_53 : f32 to vector<4x32x32xf32>
    %113 = arith.mulf %112, %109 : vector<4x32x32xf32>
    %114 = arith.subf %80, %113 : vector<4x32x32xf32>
    %cst_54 = arith.constant 0.00999999977 : f32
    %115 = vector.broadcast %cst_54 : f32 to vector<4x1x32xf32>
    %116 = arith.mulf %115, %111 : vector<4x1x32xf32>
    %117 = arith.subf %83, %116 : vector<4x1x32xf32>
    %cst_55 = arith.constant 0.00999999977 : f32
    %118 = vector.broadcast %cst_55 : f32 to vector<4x32x4xf32>
    %119 = arith.mulf %118, %101 : vector<4x32x4xf32>
    %120 = arith.subf %86, %119 : vector<4x32x4xf32>
    %cst_56 = arith.constant 0.00999999977 : f32
    %121 = vector.broadcast %cst_56 : f32 to vector<4x1x4xf32>
    %122 = arith.mulf %121, %103 : vector<4x1x4xf32>
    %123 = arith.subf %89, %122 : vector<4x1x4xf32>
    %c0_57 = arith.constant 0 : index
    %c0_58 = arith.constant 0 : index
    %c0_59 = arith.constant 0 : index
    %124 = vector.load %arg3[%c0_57, %c0_58, %c0_59] : memref<4x8x32xf32, #tpu.memory_space<vmem>>, vector<4x8x32xf32>
    %c0_60 = arith.constant 0 : index
    %c0_61 = arith.constant 0 : index
    %c0_62 = arith.constant 0 : index
    %125 = vector.load %arg4[%c0_60, %c0_61, %c0_62] : memref<4x8x4xf32, #tpu.memory_space<vmem>>, vector<4x8x4xf32>
    "tpu.trace_start"() <{level = 10 : i32, message = "tnd,tdh->tnh"}> : () -> ()
    %cst_63 = arith.constant dense<0.000000e+00> : vector<4x8x32xf32>
    %126 = tpu.matmul %124, %114, %cst_63 {dimension_numbers = #tpu.dot_dimension_numbers<[2], [1], [1], [2], [0, 0, 0, 1, 1, 2], [0], [0]>} : vector<4x8x32xf32>, vector<4x32x32xf32>, vector<4x8x32xf32> -> vector<4x8x32xf32>
    "tpu.trace_stop"() : () -> ()
    %127 = vector.broadcast %117 : vector<4x1x32xf32> to vector<4x8x32xf32>
    %128 = arith.addf %126, %127 : vector<4x8x32xf32>
    %cst_64 = arith.constant 0.000000e+00 : f32
    %129 = vector.broadcast %cst_64 : f32 to vector<4x8x32xf32>
    %130 = arith.maximumf %128, %129 : vector<4x8x32xf32>
    "tpu.trace_start"() <{level = 10 : i32, message = "tnh,tho->tno"}> : () -> ()
    %cst_65 = arith.constant dense<0.000000e+00> : vector<4x8x4xf32>
    %131 = tpu.matmul %130, %120, %cst_65 {dimension_numbers = #tpu.dot_dimension_numbers<[2], [1], [1], [2], [0, 0, 0, 1, 1, 2], [0], [0]>} : vector<4x8x32xf32>, vector<4x32x4xf32>, vector<4x8x4xf32> -> vector<4x8x4xf32>
    "tpu.trace_stop"() : () -> ()
    %132 = vector.broadcast %123 : vector<4x1x4xf32> to vector<4x8x4xf32>
    %133 = arith.addf %131, %132 : vector<4x8x4xf32>
    %134 = arith.subf %133, %125 : vector<4x8x4xf32>
    %135 = arith.mulf %134, %134 : vector<4x8x4xf32>
    %cst_66 = arith.constant dense<0.000000e+00> : vector<4x8xf32>
    %136 = vector.multi_reduction <add>, %135, %cst_66 [2] : vector<4x8x4xf32> to vector<4x8xf32>
    %cst_67 = arith.constant dense<0.000000e+00> : vector<4xf32>
    %137 = vector.multi_reduction <add>, %136, %cst_67 [1] : vector<4x8xf32> to vector<4xf32>
    %138 = vector.shape_cast %137 : vector<4xf32> to vector<4x1xf32>
    %139 = math.absf %134 : vector<4x8x4xf32>
    %cst_68 = arith.constant dense<0.000000e+00> : vector<4x8xf32>
    %140 = vector.multi_reduction <add>, %139, %cst_68 [2] : vector<4x8x4xf32> to vector<4x8xf32>
    %cst_69 = arith.constant dense<0.000000e+00> : vector<4xf32>
    %141 = vector.multi_reduction <add>, %140, %cst_69 [1] : vector<4x8xf32> to vector<4xf32>
    %142 = vector.shape_cast %141 : vector<4xf32> to vector<4x1xf32>
    %143 = tpu.iota {dimensions = array<i32: 1>} : vector<4x128xi32>
    %144 = tpu.iota {dimensions = array<i32: 0>} : vector<4x128xi32>
    %145 = arith.cmpi eq, %143, %144 : vector<4x128xi32>
    %cst_70 = arith.constant 3.125000e-02 : f32
    %146 = vector.broadcast %cst_70 : f32 to vector<4x1xf32>
    %147 = arith.mulf %138, %146 : vector<4x1xf32>
    %cst_71 = arith.constant 0.000000e+00 : f32
    %148 = vector.shape_cast %147 : vector<4x1xf32> to vector<4x1xf32>
    %149 = vector.broadcast %148 : vector<4x1xf32> to vector<4x128xf32>
    %150 = vector.broadcast %cst_71 : f32 to vector<4x128xf32>
    %151 = arith.select %145, %149, %150 : vector<4x128xi1>, vector<4x128xf32>
    %cst_72 = arith.constant dense<0.000000e+00> : vector<128xf32>
    %152 = vector.multi_reduction <add>, %151, %cst_72 [0] : vector<4x128xf32> to vector<128xf32>
    %153 = vector.shape_cast %152 : vector<128xf32> to vector<1x128xf32>
    %cst_73 = arith.constant 3.125000e-02 : f32
    %154 = vector.broadcast %cst_73 : f32 to vector<4x1xf32>
    %155 = arith.mulf %142, %154 : vector<4x1xf32>
    %cst_74 = arith.constant 0.000000e+00 : f32
    %156 = vector.shape_cast %155 : vector<4x1xf32> to vector<4x1xf32>
    %157 = vector.broadcast %156 : vector<4x1xf32> to vector<4x128xf32>
    %158 = vector.broadcast %cst_74 : f32 to vector<4x128xf32>
    %159 = arith.select %145, %157, %158 : vector<4x128xi1>, vector<4x128xf32>
    %cst_75 = arith.constant dense<0.000000e+00> : vector<128xf32>
    %160 = vector.multi_reduction <add>, %159, %cst_75 [0] : vector<4x128xf32> to vector<128xf32>
    %161 = vector.shape_cast %160 : vector<128xf32> to vector<1x128xf32>
    %162 = tpu.concatenate %153, %161 in 0 : vector<1x128xf32>, vector<1x128xf32> -> vector<2x128xf32>
    %c0_76 = arith.constant 0 : index
    %c0_77 = arith.constant 0 : index
    %c0_78 = arith.constant 0 : index
    %163 = vector.load %arg9[%c0_76, %c0_77, %c0_78] : memref<1x2x128xf32, #tpu.memory_space<vmem>>, vector<1x2x128xf32>
    %164 = vector.shape_cast %163 : vector<1x2x128xf32> to vector<2x128xf32>
    %165 = vector.shape_cast %162 : vector<2x128xf32> to vector<1x2x128xf32>
    tpu.vector_store %arg9[%c0_76, %c0_77, %c0_78], %165 {strides = array<i32>} : memref<1x2x128xf32, #tpu.memory_space<vmem>>, vector<1x2x128xf32>,
    return
  }
  func.func @transform_0(%arg0: i32) -> (i32, i32, i32) {
    %c0_i32 = arith.constant 0 : i32
    %c0_i32_0 = arith.constant 0 : i32
    %c0_i32_1 = arith.constant 0 : i32
    return %arg0, %c0_i32, %c0_i32_0 : i32, i32, i32
  }
  func.func @transform_1(%arg0: i32) -> (i32, i32, i32) {
    %c0_i32 = arith.constant 0 : i32
    %c0_i32_0 = arith.constant 0 : i32
    %c0_i32_1 = arith.constant 0 : i32
    return %arg0, %c0_i32, %c0_i32_0 : i32, i32, i32
  }
  func.func @transform_2(%arg0: i32) -> (i32, i32, i32) {
    %c0_i32 = arith.constant 0 : i32
    %c0_i32_0 = arith.constant 0 : i32
    %c0_i32_1 = arith.constant 0 : i32
    return %arg0, %c0_i32, %c0_i32_0 : i32, i32, i32
  }
  func.func @transform_3(%arg0: i32) -> (i32, i32, i32) {
    %c0_i32 = arith.constant 0 : i32
    %c0_i32_0 = arith.constant 0 : i32
    %c0_i32_1 = arith.constant 0 : i32
    return %arg0, %c0_i32, %c0_i32_0 : i32, i32, i32
  }
  func.func @transform_4(%arg0: i32) -> (i32, i32) {
    %c0_i32 = arith.constant 0 : i32
    %c0_i32_0 = arith.constant 0 : i32
    %c0_i32_1 = arith.constant 0 : i32
    return %c0_i32, %c0_i32_0 : i32, i32
  }
  func.func @transform_5(%arg0: i32) -> (i32, i32) {
    %c0_i32 = arith.constant 0 : i32
    %c0_i32_0 = arith.constant 0 : i32
    %c0_i32_1 = arith.constant 0 : i32
    return %c0_i32, %c0_i32_0 : i32, i32
  }
  func.func @transform_6(%arg0: i32) -> (i32, i32) {
    %c0_i32 = arith.constant 0 : i32
    %c0_i32_0 = arith.constant 0 : i32
    %c0_i32_1 = arith.constant 0 : i32
    return %c0_i32, %c0_i32_0 : i32, i32
  }
  func.func @transform_7(%arg0: i32) -> (i32, i32) {
    %c0_i32 = arith.constant 0 : i32
    %c0_i32_0 = arith.constant 0 : i32
    %c0_i32_1 = arith.constant 0 : i32
    return %c0_i32, %c0_i32_0 : i32, i32
  }
  func.func @transform_8(%arg0: i32) -> (i32, i32, i32) {
    %c0_i32 = arith.constant 0 : i32
    %c0_i32_0 = arith.constant 0 : i32
    %c0_i32_1 = arith.constant 0 : i32
    return %arg0, %c0_i32, %c0_i32_0 : i32, i32, i32
  }
}

</mosaic_0001>

<llo_original>
// kernel: tpu_custom_call.1
$region0: #{tpu_custom_call.1}
  #allocation0 [shape = 'u32[]', space=smem, size = 0x4, offset = 0x4, fixed_abs, tag = 'smem constant byte address 0x4 - core index']
  #allocation1 [shape = 'u32[72,128]{1,0:T(1,128)}', space=vmem, size = 0x9000, scoped, tag = 'internal scratch']
  %s0 = inlined_call_operand.vmem [shape: f32[8,8,32], index: 0, kind: input, shape index: {}]
  %s1 = inlined_call_operand.vmem [shape: f32[8,8,4], index: 1, kind: input, shape index: {}]
  %s2 = inlined_call_operand.vmem [shape: f32[8,8,32], index: 2, kind: input, shape index: {}]
  %s3 = inlined_call_operand.vmem [shape: f32[8,8,4], index: 3, kind: input, shape index: {}]
  %s4 = inlined_call_operand.vmem [shape: f32[32,32], index: 4, kind: input, shape index: {}]
  %s5 = inlined_call_operand.vmem [shape: f32[1,32], index: 5, kind: input, shape index: {}]
  %s6 = inlined_call_operand.vmem [shape: f32[32,4], index: 6, kind: input, shape index: {}]
  %s7 = inlined_call_operand.vmem [shape: f32[1,4], index: 7, kind: input, shape index: {}]
  %s8 = inlined_call_operand.hbm [shape: f32[2,2,128], index: 8, kind: output, shape index: {}]
  %s9 = sld [smem:[#allocation0]]
  $region65: #{tpu_custom_call.1} parent=0
    _
  %s11 = ssub.s32 1, %s9
  %s12 = scalar_select 0, %s11, %s9
  $region1: #{tpu_custom_call.1} parent=0
    #allocation2 [shape = 'u8[2048]{0}', space=vmem, size = 0x800, scoped, tag = 'output window, operand 0']
    #allocation3 [shape = 's32[2]{0}', space=sflag, size = 0x8, scoped, tag = 'scoped memory for tpu_custom_call.1']
    %13 = vsyncpa [#allocation3], 0
    %s14 = scalar_lea.sflag [#allocation3], 1
    %15 = vsyncpa %s14, 0
    loop: start=0, step=1, limit=4
    $region2: #{tpu_custom_call.1} parent=1 // loop_pre_header
      _
    $region3: #{tpu_custom_call.1} parent=1 // loop_header
      %s17 = sphi 0, %s21
      %p18 = scmp.ge.s32.totalorder %s17, 4
      %s27 = sphi 0, %s29
      %s30 = sphi 0, %s27
      %s31 = sphi 0, %s30
      %s47 = sphi 0, %s31
      %s53 = sphi 0, %s55
      %s56 = sphi 0, %s53
      %s57 = sphi 0, %s56
      %s73 = sphi 0, %s57
      %s79 = sphi 0, %s81
      %s82 = sphi 0, %s79
      %s83 = sphi 0, %s82
      %s99 = sphi 0, %s83
      %s105 = sphi 0, %s107
      %s108 = sphi 0, %s105
      %s109 = sphi 0, %s108
      %s125 = sphi 0, %s109
      %s129 = sphi 0, %s129
      %s131 = sphi 0, %s129
      %s132 = sphi 0, %s131
      %s146 = sphi 0, %s132
      %s150 = sphi 0, %s150
      %s152 = sphi 0, %s150
      %s153 = sphi 0, %s152
      %s167 = sphi 0, %s153
      %s171 = sphi 0, %s171
      %s173 = sphi 0, %s171
      %s174 = sphi 0, %s173
      %s188 = sphi 0, %s174
      %s192 = sphi 0, %s192
      %s194 = sphi 0, %s192
      %s195 = sphi 0, %s194
      %s209 = sphi 0, %s195
      %s215 = sphi 0, %s217
      %s218 = sphi 0, %s215
      %s219 = sphi 0, %s218
      %s235 = sphi 0, %s219
    $region4: #{tpu_custom_call.1} parent=1 // loop_header_branch
      %20 = sbr.rel (%p18) target = $region8
    $region5: #{tpu_custom_call.1} parent=1 // loop_body
      %s22 = ssub.s32 %s17, 1
      %s23 = ssub.s32 %s17, 2
      %s24 = sadd.s32 %s17, 1
      %s25 = ssub.s32 %s17, %s24
      %p26 = scmp.eq.s32.totalorder %s25, 0
      %s28 = sadd.s32 %s27, 1
      %s29 = scalar_select %p26, %s27, %s28
      %p32 = pneg %p26
      %p33 = scmp.eq.s32.totalorder %s17, 1
      %p34 = por %p32, %p33
      %p35 = scmp.ne.s32.totalorder %s27, %s30
      %p36 = scmp.eq.s32.totalorder %s17, 0
      %p37 = por %p35, %p36
      %p38 = scmp.ne.s32.totalorder %s27, %s30
      %p39 = scmp.eq.s32.totalorder %s22, 1
      %p40 = por %p38, %p39
      %p41 = scmp.ne.s32.totalorder %s30, %s31
      %p42 = scmp.eq.s32.totalorder %s22, 0
      %p43 = por %p41, %p42
      %p44 = scmp.ne.s32.totalorder %s30, %s31
      %p45 = scmp.eq.s32.totalorder %s23, 1
      %p46 = por %p44, %p45
      %p48 = scmp.ne.s32.totalorder %s31, %s47
      %p49 = scmp.eq.s32.totalorder %s23, 0
      %p50 = por %p48, %p49
      %s51 = ssub.s32 %s17, %s24
      %p52 = scmp.eq.s32.totalorder %s51, 0
      %s54 = sadd.s32 %s53, 1
      %s55 = scalar_select %p52, %s53, %s54
      %p58 = pneg %p52
      %p59 = scmp.eq.s32.totalorder %s17, 1
      %p60 = por %p58, %p59
      %p61 = scmp.ne.s32.totalorder %s53, %s56
      %p62 = scmp.eq.s32.totalorder %s17, 0
      %p63 = por %p61, %p62
      %p64 = scmp.ne.s32.totalorder %s53, %s56
      %p65 = scmp.eq.s32.totalorder %s22, 1
      %p66 = por %p64, %p65
      %p67 = scmp.ne.s32.totalorder %s56, %s57
      %p68 = scmp.eq.s32.totalorder %s22, 0
      %p69 = por %p67, %p68
      %p70 = scmp.ne.s32.totalorder %s56, %s57
      %p71 = scmp.eq.s32.totalorder %s23, 1
      %p72 = por %p70, %p71
      %p74 = scmp.ne.s32.totalorder %s57, %s73
      %p75 = scmp.eq.s32.totalorder %s23, 0
      %p76 = por %p74, %p75
      %s77 = ssub.s32 %s17, %s24
      %p78 = scmp.eq.s32.totalorder %s77, 0
      %s80 = sadd.s32 %s79, 1
      %s81 = scalar_select %p78, %s79, %s80
      %p84 = pneg %p78
      %p85 = scmp.eq.s32.totalorder %s17, 1
      %p86 = por %p84, %p85
      %p87 = scmp.ne.s32.totalorder %s79, %s82
      %p88 = scmp.eq.s32.totalorder %s17, 0
      %p89 = por %p87, %p88
      %p90 = scmp.ne.s32.totalorder %s79, %s82
      %p91 = scmp.eq.s32.totalorder %s22, 1
      %p92 = por %p90, %p91
      %p93 = scmp.ne.s32.totalorder %s82, %s83
      %p94 = scmp.eq.s32.totalorder %s22, 0
      %p95 = por %p93, %p94
      %p96 = scmp.ne.s32.totalorder %s82, %s83
      %p97 = scmp.eq.s32.totalorder %s23, 1
      %p98 = por %p96, %p97
      %p100 = scmp.ne.s32.totalorder %s83, %s99
      %p101 = scmp.eq.s32.totalorder %s23, 0
      %p102 = por %p100, %p101
      %s103 = ssub.s32 %s17, %s24
      %p104 = scmp.eq.s32.totalorder %s103, 0
      %s106 = sadd.s32 %s105, 1
      %s107 = scalar_select %p104, %s105, %s106
      %p110 = pneg %p104
      %p111 = scmp.eq.s32.totalorder %s17, 1
      %p112 = por %p110, %p111
      %p113 = scmp.ne.s32.totalorder %s105, %s108
      %p114 = scmp.eq.s32.totalorder %s17, 0
      %p115 = por %p113, %p114
      %p116 = scmp.ne.s32.totalorder %s105, %s108
      %p117 = scmp.eq.s32.totalorder %s22, 1
      %p118 = por %p116, %p117
      %p119 = scmp.ne.s32.totalorder %s108, %s109
      %p120 = scmp.eq.s32.totalorder %s22, 0
      %p121 = por %p119, %p120
      %p122 = scmp.ne.s32.totalorder %s108, %s109
      %p123 = scmp.eq.s32.totalorder %s23, 1
      %p124 = por %p122, %p123
      %p126 = scmp.ne.s32.totalorder %s109, %s125
      %p127 = scmp.eq.s32.totalorder %s23, 0
      %p128 = por %p126, %p127
      %s130 = sadd.s32 %s129, 1
      %p133 = scmp.eq.s32.totalorder %s17, 1
      %p134 = scmp.ne.s32.totalorder %s129, %s131
      %p135 = scmp.eq.s32.totalorder %s17, 0
      %p136 = por %p134, %p135
      %p137 = scmp.ne.s32.totalorder %s129, %s131
      %p138 = scmp.eq.s32.totalorder %s22, 1
      %p139 = por %p137, %p138
      %p140 = scmp.ne.s32.totalorder %s131, %s132
      %p141 = scmp.eq.s32.totalorder %s22, 0
      %p142 = por %p140, %p141
      %p143 = scmp.ne.s32.totalorder %s131, %s132
      %p144 = scmp.eq.s32.totalorder %s23, 1
      %p145 = por %p143, %p144
      %p147 = scmp.ne.s32.totalorder %s132, %s146
      %p148 = scmp.eq.s32.totalorder %s23, 0
      %p149 = por %p147, %p148
      %s151 = sadd.s32 %s150, 1
      %p154 = scmp.eq.s32.totalorder %s17, 1
      %p155 = scmp.ne.s32.totalorder %s150, %s152
      %p156 = scmp.eq.s32.totalorder %s17, 0
      %p157 = por %p155, %p156
      %p158 = scmp.ne.s32.totalorder %s150, %s152
      %p159 = scmp.eq.s32.totalorder %s22, 1
      %p160 = por %p158, %p159
      %p161 = scmp.ne.s32.totalorder %s152, %s153
      %p162 = scmp.eq.s32.totalorder %s22, 0
      %p163 = por %p161, %p162
      %p164 = scmp.ne.s32.totalorder %s152, %s153
      %p165 = scmp.eq.s32.totalorder %s23, 1
      %p166 = por %p164, %p165
      %p168 = scmp.ne.s32.totalorder %s153, %s167
      %p169 = scmp.eq.s32.totalorder %s23, 0
      %p170 = por %p168, %p169
      %s172 = sadd.s32 %s171, 1
      %p175 = scmp.eq.s32.totalorder %s17, 1
      %p176 = scmp.ne.s32.totalorder %s171, %s173
      %p177 = scmp.eq.s32.totalorder %s17, 0
      %p178 = por %p176, %p177
      %p179 = scmp.ne.s32.totalorder %s171, %s173
      %p180 = scmp.eq.s32.totalorder %s22, 1
      %p181 = por %p179, %p180
      %p182 = scmp.ne.s32.totalorder %s173, %s174
      %p183 = scmp.eq.s32.totalorder %s22, 0
      %p184 = por %p182, %p183
      %p185 = scmp.ne.s32.totalorder %s173, %s174
      %p186 = scmp.eq.s32.totalorder %s23, 1
      %p187 = por %p185, %p186
      %p189 = scmp.ne.s32.totalorder %s174, %s188
      %p190 = scmp.eq.s32.totalorder %s23, 0
      %p191 = por %p189, %p190
      %s193 = sadd.s32 %s192, 1
      %p196 = scmp.eq.s32.totalorder %s17, 1
      %p197 = scmp.ne.s32.totalorder %s192, %s194
      %p198 = scmp.eq.s32.totalorder %s17, 0
      %p199 = por %p197, %p198
      %p200 = scmp.ne.s32.totalorder %s192, %s194
      %p201 = scmp.eq.s32.totalorder %s22, 1
      %p202 = por %p200, %p201
      %p203 = scmp.ne.s32.totalorder %s194, %s195
      %p204 = scmp.eq.s32.totalorder %s22, 0
      %p205 = por %p203, %p204
      %p206 = scmp.ne.s32.totalorder %s194, %s195
      %p207 = scmp.eq.s32.totalorder %s23, 1
      %p208 = por %p206, %p207
      %p210 = scmp.ne.s32.totalorder %s195, %s209
      %p211 = scmp.eq.s32.totalorder %s23, 0
      %p212 = por %p210, %p211
      %s213 = ssub.s32 %s17, %s24
      %p214 = scmp.eq.s32.totalorder %s213, 0
      %s216 = sadd.s32 %s215, 1
      %s217 = scalar_select %p214, %s215, %s216
      %p220 = pneg %p214
      %p221 = scmp.eq.s32.totalorder %s17, 1
      %p222 = por %p220, %p221
      %p223 = scmp.ne.s32.totalorder %s215, %s218
      %p224 = scmp.eq.s32.totalorder %s17, 0
      %p225 = por %p223, %p224
      %p226 = scmp.ne.s32.totalorder %s215, %s218
      %p227 = scmp.eq.s32.totalorder %s22, 1
      %p228 = por %p226, %p227
      %p229 = scmp.ne.s32.totalorder %s218, %s219
      %p230 = scmp.eq.s32.totalorder %s22, 0
      %p231 = por %p229, %p230
      %p232 = scmp.ne.s32.totalorder %s218, %s219
      %p233 = scmp.eq.s32.totalorder %s23, 1
      %p234 = por %p232, %p233
      %p236 = scmp.ne.s32.totalorder %s219, %s235
      %p237 = scmp.eq.s32.totalorder %s23, 0
      %p238 = por %p236, %p237
      %p239 = scmp.le.s32.totalorder 1, %s17
      %p240 = scmp.lt.s32.totalorder %s17, 3
      %p241 = pnand %p239, %p240
      %p242 = pneg %p241
      // Predicated region
      $region9: #{tpu_custom_call.1} parent=5 // pred_check
        _
      $region10: #{tpu_custom_call.1} parent=5 // pred_check_branch
        %244 = sbr.rel (%p241) target = $region12
      $region11: #{tpu_custom_call.1} parent=5 // pred_region
        %s245 = ssub.s32 %s17, 1
        // Predicated region
        $region13: #{tpu_custom_call.1} parent=11 // pred_check
          %p246 = pneg %p142
        $region14: #{tpu_custom_call.1} parent=11 // pred_check_branch
          %248 = sbr.rel (%p246) target = $region16
        $region15: #{tpu_custom_call.1} parent=11 // pred_region
          _
        $region16: #{tpu_custom_call.1} parent=11 // pred_fallthru
          _
        // Predicated region
        $region17: #{tpu_custom_call.1} parent=11 // pred_check
          %p249 = pneg %p163
        $region18: #{tpu_custom_call.1} parent=11 // pred_check_branch
          %251 = sbr.rel (%p249) target = $region20
        $region19: #{tpu_custom_call.1} parent=11 // pred_region
          _
        $region20: #{tpu_custom_call.1} parent=11 // pred_fallthru
          _
        // Predicated region
        $region21: #{tpu_custom_call.1} parent=11 // pred_check
          %p252 = pneg %p184
        $region22: #{tpu_custom_call.1} parent=11 // pred_check_branch
          %254 = sbr.rel (%p252) target = $region24
        $region23: #{tpu_custom_call.1} parent=11 // pred_region
          _
        $region24: #{tpu_custom_call.1} parent=11 // pred_fallthru
          _
        // Predicated region
        $region25: #{tpu_custom_call.1} parent=11 // pred_check
          %p255 = pneg %p205
        $region26: #{tpu_custom_call.1} parent=11 // pred_check_branch
          %257 = sbr.rel (%p255) target = $region28
        $region27: #{tpu_custom_call.1} parent=11 // pred_region
          _
        $region28: #{tpu_custom_call.1} parent=11 // pred_fallthru
          _
      $region12: #{tpu_custom_call.1} parent=5 // pred_fallthru
        _
      %p258 = scmp.lt.s32.totalorder %s17, 2
      // Predicated region
      $region29: #{tpu_custom_call.1} parent=5 // pred_check
        %p259 = pneg %p258
      $region30: #{tpu_custom_call.1} parent=5 // pred_check_branch
        %261 = sbr.rel (%p259) target = $region32
      $region31: #{tpu_custom_call.1} parent=5 // pred_region
        // Predicated region
        $region33: #{tpu_custom_call.1} parent=31 // pred_check
          %p262 = pneg %p37
        $region34: #{tpu_custom_call.1} parent=31 // pred_check_branch
          %264 = sbr.rel (%p262) target = $region36
        $region35: #{tpu_custom_call.1} parent=31 // pred_region
          %s265 = smul.u32 4, %s17
          %p266 = scmp.lt.s32.totalorder %s265, 7
          %s267 = scalar_select %p266, %s265, 7
          %s268 = smul.addr %s267, 8
          %s269 = scalar_lea.vmem %s0, %s268
          %s270 = smul.u32 4, %s17
        $region36: #{tpu_custom_call.1} parent=31 // pred_fallthru
          _
        // Predicated region
        $region37: #{tpu_custom_call.1} parent=31 // pred_check
          %p271 = pneg %p63
        $region38: #{tpu_custom_call.1} parent=31 // pred_check_branch
          %273 = sbr.rel (%p271) target = $region40
        $region39: #{tpu_custom_call.1} parent=31 // pred_region
          %s274 = smul.u32 4, %s17
          %p275 = scmp.lt.s32.totalorder %s274, 7
          %s276 = scalar_select %p275, %s274, 7
          %s277 = smul.addr %s276, 8
          %s278 = scalar_lea.vmem %s1, %s277
          %s279 = smul.u32 4, %s17
        $region40: #{tpu_custom_call.1} parent=31 // pred_fallthru
          _
        // Predicated region
        $region41: #{tpu_custom_call.1} parent=31 // pred_check
          %p280 = pneg %p89
        $region42: #{tpu_custom_call.1} parent=31 // pred_check_branch
          %282 = sbr.rel (%p280) target = $region44
        $region43: #{tpu_custom_call.1} parent=31 // pred_region
          %s283 = smul.u32 4, %s17
          %p284 = scmp.lt.s32.totalorder %s283, 7
          %s285 = scalar_select %p284, %s283, 7
          %s286 = smul.addr %s285, 8
          %s287 = scalar_lea.vmem %s2, %s286
          %s288 = smul.u32 4, %s17
        $region44: #{tpu_custom_call.1} parent=31 // pred_fallthru
          _
        // Predicated region
        $region45: #{tpu_custom_call.1} parent=31 // pred_check
          %p289 = pneg %p115
        $region46: #{tpu_custom_call.1} parent=31 // pred_check_branch
          %291 = sbr.rel (%p289) target = $region48
        $region47: #{tpu_custom_call.1} parent=31 // pred_region
          %s292 = smul.u32 4, %s17
          %p293 = scmp.lt.s32.totalorder %s292, 7
          %s294 = scalar_select %p293, %s292, 7
          %s295 = smul.addr %s294, 8
          %s296 = scalar_lea.vmem %s3, %s295
          %s297 = smul.u32 4, %s17
        $region48: #{tpu_custom_call.1} parent=31 // pred_fallthru
          _
      $region32: #{tpu_custom_call.1} parent=5 // pred_fallthru
        _
      %p298 = scmp.le.s32.totalorder 1, %s17
      %p299 = scmp.lt.s32.totalorder %s17, 3
      %p300 = pnand %p298, %p299
      %p301 = pneg %p300
      // Predicated region
      $region49: #{tpu_custom_call.1} parent=5 // pred_check
        _
      $region50: #{tpu_custom_call.1} parent=5 // pred_check_branch
        %303 = sbr.rel (%p300) target = $region52
      $region51: #{tpu_custom_call.1} parent=5 // pred_region
        %s304 = ssub.s32 %s17, 1
        %s305 = smul.u32 4, %s22
        %p306 = scmp.lt.s32.totalorder %s305, 7
        %s307 = scalar_select %p306, %s305, 7
        %s308 = smul.addr %s307, 8
        %s309 = scalar_lea.vmem %s0, %s308
        %p310 = pneg %p43
        %p311 = pneg %p40
        %s312 = smul.u32 4, %s22
        %p313 = scmp.lt.s32.totalorder %s312, 7
        %s314 = scalar_select %p313, %s312, 7
        %s315 = smul.addr %s314, 8
        %s316 = scalar_lea.vmem %s1, %s315
        %p317 = pneg %p69
        %p318 = pneg %p66
        %s319 = smul.u32 4, %s22
        %p320 = scmp.lt.s32.totalorder %s319, 7
        %s321 = scalar_select %p320, %s319, 7
        %s322 = smul.addr %s321, 8
        %s323 = scalar_lea.vmem %s2, %s322
        %p324 = pneg %p95
        %p325 = pneg %p92
        %s326 = smul.u32 4, %s22
        %p327 = scmp.lt.s32.totalorder %s326, 7
        %s328 = scalar_select %p327, %s326, 7
        %s329 = smul.addr %s328, 8
        %s330 = scalar_lea.vmem %s3, %s329
        %p331 = pneg %p121
        %p332 = pneg %p118
        %p333 = pneg %p142
        %p334 = pneg %p139
        %p335 = pneg %p163
        %p336 = pneg %p160
        %p337 = pneg %p184
        %p338 = pneg %p181
        %p339 = pneg %p205
        %p340 = pneg %p202
        %p341 = pneg %p231
        %p342 = pneg %p228
        %s343 = sand.u32 %s218, 1
        %s344 = scalar_lea.sflag [#allocation3], %s343
        %s345 = sand.u32 %s218, 1
        %s346 = smul.addr %s345, 2
        %s347 = scalar_lea.vmem [#allocation2], %s346
        %s348 = smul.u32 4, %s22
        %p349 = scmp.lt.s32.totalorder %s348, 7
        %s350 = scalar_select %p349, %s348, 7
        %s351 = smul.addr %s350, 8
        %s352 = scalar_lea.vmem %s0, %s351
        %s353 = smul.u32 4, %s22
        %s354 = smul.u32 4, %s22
        %p355 = scmp.lt.s32.totalorder %s354, 7
        %s356 = scalar_select %p355, %s354, 7
        %s357 = smul.addr %s356, 8
        %s358 = scalar_lea.vmem %s1, %s357
        %s359 = smul.u32 4, %s22
        %s360 = smul.u32 4, %s22
        %p361 = scmp.lt.s32.totalorder %s360, 7
        %s362 = scalar_select %p361, %s360, 7
        %s363 = smul.addr %s362, 8
        %s364 = scalar_lea.vmem %s2, %s363
        %s365 = smul.u32 4, %s22
        %s366 = smul.u32 4, %s22
        %p367 = scmp.lt.s32.totalorder %s366, 7
        %s368 = scalar_select %p367, %s366, 7
        %s369 = smul.addr %s368, 8
        %s370 = scalar_lea.vmem %s3, %s369
        %s371 = smul.u32 4, %s22
        %v372 = vld [vmem:[%s352] sm:$0xff]
        %v373 = vld [vmem:[%s352 + $0x8] sm:$0xff]
        %v374 = vld [vmem:[%s352 + $0x10] sm:$0xff]
        %v375 = vld [vmem:[%s352 + $0x18] sm:$0xff]
        %v376 = vld [vmem:[%s358] sm:$0xff]
        %v377 = vld [vmem:[%s358 + $0x8] sm:$0xff]
        %v378 = vld [vmem:[%s358 + $0x10] sm:$0xff]
        %v379 = vld [vmem:[%s358 + $0x18] sm:$0xff]
        %v380 = vld [vmem:[%s4] sm:$0xff]
        %v381 = vld [vmem:[%s4 + $0x8] sm:$0xff]
        %v382 = vld [vmem:[%s4 + $0x10] sm:$0xff]
        %v383 = vld [vmem:[%s4 + $0x18] sm:$0xff]
        %v384 = vld [vmem:[%s5] sm:$0x1]
        %v385 = vld [vmem:[%s6] sm:$0xff]
        %v386 = vld [vmem:[%s6 + $0x8] sm:$0xff]
        %v387 = vld [vmem:[%s6 + $0x10] sm:$0xff]
        %v388 = vld [vmem:[%s6 + $0x18] sm:$0xff]
        %v389 = vld [vmem:[%s7] sm:$0x1]
        %v391 = vperm.slane %v384, 0
        %vm393 = vcmask 261120
        %v395 = vsel %vm393, %v372, 0
        %v398 = vsel %vm393, %v373, 0
        %v401 = vsel %vm393, %v374, 0
        %v404 = vsel %vm393, %v375, 0
        %406 = vmatpush.msra.mxu0 0.0
        %407 = vmatpush.msra.mxu0 0.0
        %408 = vmatpush.msra.mxu0 0.0
        %409 = vmatpush.msra.mxu0 0.0
        %410 = vmatpush.msra.mxu0 0.0
        %411 = vmatpush.msra.mxu0 0.0
        %412 = vmatpush.msra.mxu0 0.0
        %413 = vmatpush.msra.mxu0 0.0
        %414 = vmatpush.msra.mxu0 0.0
        %415 = vmatpush.msra.mxu0 0.0
        %416 = vmatpush.msra.mxu0 0.0
        %417 = vmatpush.msra.mxu0 0.0
        %418 = vmatpush.msra.mxu0 %v383
        %419 = vmatpush.msra.mxu0 %v382
        %420 = vmatpush.msra.mxu0 %v381
        %421 = vmatpush.msra.mxu0 %v380
        %422 = vmatmul.f32.gmra.mxu0 %v395
        %v423 = vpop.f32.mrf.mxu0
        %v424 = vadd.f32 %v391, %v423
        %425 = vmatmul.f32.gmra.mxu0 %v398
        %v426 = vpop.f32.mrf.mxu0
        %v427 = vadd.f32 %v391, %v426
        %428 = vmatmul.f32.gmra.mxu0 %v401
        %v429 = vpop.f32.mrf.mxu0
        %v430 = vadd.f32 %v391, %v429
        %431 = vmatmul.f32.gmra.mxu0 %v404
        %v432 = vpop.f32.mrf.mxu0
        %v433 = vadd.f32 %v391, %v432
        %434 = vdwg.mxu0
        %v435 = vmax.f32 %v424, 0.0
        %v436 = vmax.f32 %v427, 0.0
        %v437 = vmax.f32 %v430, 0.0
        %v438 = vmax.f32 %v433, 0.0
        %v440 = vperm.slane %v389, 0
        %v443 = vsel %vm393, %v435, 0
        %v446 = vsel %vm393, %v436, 0
        %v449 = vsel %vm393, %v437, 0
        %v452 = vsel %vm393, %v438, 0
        %454 = vmatpush.msra.mxu0 0.0
        %455 = vmatpush.msra.mxu0 0.0
        %456 = vmatpush.msra.mxu0 0.0
        %457 = vmatpush.msra.mxu0 0.0
        %458 = vmatpush.msra.mxu0 0.0
        %459 = vmatpush.msra.mxu0 0.0
        %460 = vmatpush.msra.mxu0 0.0
        %461 = vmatpush.msra.mxu0 0.0
        %462 = vmatpush.msra.mxu0 0.0
        %463 = vmatpush.msra.mxu0 0.0
        %464 = vmatpush.msra.mxu0 0.0
        %465 = vmatpush.msra.mxu0 0.0
        %466 = vmatpush.msra.mxu0 %v388
        %467 = vmatpush.msra.mxu0 %v387
        %468 = vmatpush.msra.mxu0 %v386
        %469 = vmatpush.msra.mxu0 %v385
        %470 = vmatmul.f32.gmra.mxu0 %v443
        %v471 = vpop.f32.mrf.mxu0
        %v472 = vadd.f32 %v440, %v471
        %473 = vmatmul.f32.gmra.mxu0 %v446
        %v474 = vpop.f32.mrf.mxu0
        %v475 = vadd.f32 %v440, %v474
        %476 = vmatmul.f32.gmra.mxu0 %v449
        %v477 = vpop.f32.mrf.mxu0
        %v478 = vadd.f32 %v440, %v477
        %479 = vmatmul.f32.gmra.mxu0 %v452
        %v480 = vpop.f32.mrf.mxu0
        %v481 = vadd.f32 %v440, %v480
        %482 = vdwg.mxu0
        %v483 = vsub.f32 %v472, %v376
        %v484 = vsub.f32 %v475, %v377
        %v485 = vsub.f32 %v478, %v378
        %v486 = vsub.f32 %v481, %v379
        %v487 = vmul.f32 %v483, 0.0625
        %v488 = vmul.f32 %v484, 0.0625
        %v489 = vmul.f32 %v485, 0.0625
        %v490 = vmul.f32 %v486, 0.0625
        %491 = vxpose.xlu0.b32.start [1/16] %v435, 128
        %492 = vxpose.xlu0.b32.cont [2/16] 0.0, 128
        %493 = vxpose.xlu0.b32.cont [3/16] 0.0, 128
        %494 = vxpose.xlu0.b32.cont [4/16] 0.0, 128
        %495 = vxpose.xlu0.b32.cont [5/16] 0.0, 128
        %496 = vxpose.xlu0.b32.cont [6/16] 0.0, 128
        %497 = vxpose.xlu0.b32.cont [7/16] 0.0, 128
        %498 = vxpose.xlu0.b32.cont [8/16] 0.0, 128
        %499 = vxpose.xlu0.b32.cont [9/16] 0.0, 128
        %500 = vxpose.xlu0.b32.cont [10/16] 0.0, 128
        %501 = vxpose.xlu0.b32.cont [11/16] 0.0, 128
        %502 = vxpose.xlu0.b32.cont [12/16] 0.0, 128
        %503 = vxpose.xlu0.b32.cont [13/16] 0.0, 128
        %504 = vxpose.xlu0.b32.cont [14/16] 0.0, 128
        %505 = vxpose.xlu0.b32.cont [15/16] 0.0, 128
        %506 = vxpose.xlu0.b32.end [16/16] 0.0, 128
        %v507 = vpop.trf.xlu0
        %v508 = vpop.trf.xlu0
        %v509 = vpop.trf.xlu0
        %v510 = vpop.trf.xlu0
        %v511 = vpop.trf.xlu0
        %v512 = vpop.trf.xlu0
        %v513 = vpop.trf.xlu0
        %v514 = vpop.trf.xlu0
        %v515 = vpop.trf.xlu0
        %v516 = vpop.trf.xlu0
        %v517 = vpop.trf.xlu0
        %v518 = vpop.trf.xlu0
        %v519 = vpop.trf.xlu0
        %v520 = vpop.trf.xlu0
        %v521 = vpop.trf.xlu0
        %v522 = vpop.trf.xlu0
        %vm523 = vcmask 64512
        %v525 = vsel %vm523, %v507, 0
        %v528 = vsel %vm523, %v508, 0
        %v531 = vsel %vm523, %v509, 0
        %v534 = vsel %vm523, %v510, 0
        %536 = vmatpush.msra.mxu0 0.0
        %537 = vmatpush.msra.mxu0 0.0
        %538 = vmatpush.msra.mxu0 0.0
        %539 = vmatpush.msra.mxu0 0.0
        %540 = vmatpush.msra.mxu0 0.0
        %541 = vmatpush.msra.mxu0 0.0
        %542 = vmatpush.msra.mxu0 0.0
        %543 = vmatpush.msra.mxu0 0.0
        %544 = vmatpush.msra.mxu0 0.0
        %545 = vmatpush.msra.mxu0 0.0
        %546 = vmatpush.msra.mxu0 0.0
        %547 = vmatpush.msra.mxu0 0.0
        %548 = vmatpush.msra.mxu0 0.0
        %549 = vmatpush.msra.mxu0 0.0
        %550 = vmatpush.msra.mxu0 0.0
        %551 = vmatpush.msra.mxu0 %v487
        %552 = vmatmul.f32.gmra.mxu0 %v525
        %v553 = vpop.f32.mrf.mxu0
        %v554 = vadd.f32 0.0, %v553
        %555 = vmatmul.f32.gmra.mxu0 %v528
        %v556 = vpop.f32.mrf.mxu0
        %v557 = vadd.f32 0.0, %v556
        %558 = vmatmul.f32.gmra.mxu0 %v531
        %v559 = vpop.f32.mrf.mxu0
        %v560 = vadd.f32 0.0, %v559
        %561 = vmatmul.f32.gmra.mxu0 %v534
        %v562 = vpop.f32.mrf.mxu0
        %v563 = vadd.f32 0.0, %v562
        %564 = vdwg.mxu0
        %565 = vxpose.xlu0.b32.start [1/16] %v436, 128
        %566 = vxpose.xlu0.b32.cont [2/16] 0.0, 128
        %567 = vxpose.xlu0.b32.cont [3/16] 0.0, 128
        %568 = vxpose.xlu0.b32.cont [4/16] 0.0, 128
        %569 = vxpose.xlu0.b32.cont [5/16] 0.0, 128
        %570 = vxpose.xlu0.b32.cont [6/16] 0.0, 128
        %571 = vxpose.xlu0.b32.cont [7/16] 0.0, 128
        %572 = vxpose.xlu0.b32.cont [8/16] 0.0, 128
        %573 = vxpose.xlu0.b32.cont [9/16] 0.0, 128
        %574 = vxpose.xlu0.b32.cont [10/16] 0.0, 128
        %575 = vxpose.xlu0.b32.cont [11/16] 0.0, 128
        %576 = vxpose.xlu0.b32.cont [12/16] 0.0, 128
        %577 = vxpose.xlu0.b32.cont [13/16] 0.0, 128
        %578 = vxpose.xlu0.b32.cont [14/16] 0.0, 128
        %579 = vxpose.xlu0.b32.cont [15/16] 0.0, 128
        %580 = vxpose.xlu0.b32.end [16/16] 0.0, 128
        %v581 = vpop.trf.xlu0
        %v582 = vpop.trf.xlu0
        %v583 = vpop.trf.xlu0
        %v584 = vpop.trf.xlu0
        %v585 = vpop.trf.xlu0
        %v586 = vpop.trf.xlu0
        %v587 = vpop.trf.xlu0
        %v588 = vpop.trf.xlu0
        %v589 = vpop.trf.xlu0
        %v590 = vpop.trf.xlu0
        %v591 = vpop.trf.xlu0
        %v592 = vpop.trf.xlu0
        %v593 = vpop.trf.xlu0
        %v594 = vpop.trf.xlu0
        %v595 = vpop.trf.xlu0
        %v596 = vpop.trf.xlu0
        %v598 = vsel %vm523, %v581, 0
        %v601 = vsel %vm523, %v582, 0
        %v604 = vsel %vm523, %v583, 0
        %v607 = vsel %vm523, %v584, 0
        %609 = vmatpush.msra.mxu0 0.0
        %610 = vmatpush.msra.mxu0 0.0
        %611 = vmatpush.msra.mxu0 0.0
        %612 = vmatpush.msra.mxu0 0.0
        %613 = vmatpush.msra.mxu0 0.0
        %614 = vmatpush.msra.mxu0 0.0
        %615 = vmatpush.msra.mxu0 0.0
        %616 = vmatpush.msra.mxu0 0.0
        %617 = vmatpush.msra.mxu0 0.0
        %618 = vmatpush.msra.mxu0 0.0
        %619 = vmatpush.msra.mxu0 0.0
        %620 = vmatpush.msra.mxu0 0.0
        %621 = vmatpush.msra.mxu0 0.0
        %622 = vmatpush.msra.mxu0 0.0
        %623 = vmatpush.msra.mxu0 0.0
        %624 = vmatpush.msra.mxu0 %v488
        %625 = vmatmul.f32.gmra.mxu0 %v598
        %v626 = vpop.f32.mrf.mxu0
        %v627 = vadd.f32 0.0, %v626
        %628 = vmatmul.f32.gmra.mxu0 %v601
        %v629 = vpop.f32.mrf.mxu0
        %v630 = vadd.f32 0.0, %v629
        %631 = vmatmul.f32.gmra.mxu0 %v604
        %v632 = vpop.f32.mrf.mxu0
        %v633 = vadd.f32 0.0, %v632
        %634 = vmatmul.f32.gmra.mxu0 %v607
        %v635 = vpop.f32.mrf.mxu0
        %v636 = vadd.f32 0.0, %v635
        %637 = vdwg.mxu0
        %638 = vxpose.xlu0.b32.start [1/16] %v437, 128
        %639 = vxpose.xlu0.b32.cont [2/16] 0.0, 128
        %640 = vxpose.xlu0.b32.cont [3/16] 0.0, 128
        %641 = vxpose.xlu0.b32.cont [4/16] 0.0, 128
        %642 = vxpose.xlu0.b32.cont [5/16] 0.0, 128
        %643 = vxpose.xlu0.b32.cont [6/16] 0.0, 128
        %644 = vxpose.xlu0.b32.cont [7/16] 0.0, 128
        %645 = vxpose.xlu0.b32.cont [8/16] 0.0, 128
        %646 = vxpose.xlu0.b32.cont [9/16] 0.0, 128
        %647 = vxpose.xlu0.b32.cont [10/16] 0.0, 128
        %648 = vxpose.xlu0.b32.cont [11/16] 0.0, 128
        %649 = vxpose.xlu0.b32.cont [12/16] 0.0, 128
        %650 = vxpose.xlu0.b32.cont [13/16] 0.0, 128
        %651 = vxpose.xlu0.b32.cont [14/16] 0.0, 128
        %652 = vxpose.xlu0.b32.cont [15/16] 0.0, 128
        %653 = vxpose.xlu0.b32.end [16/16] 0.0, 128
        %v654 = vpop.trf.xlu0
        %v655 = vpop.trf.xlu0
        %v656 = vpop.trf.xlu0
        %v657 = vpop.trf.xlu0
        %v658 = vpop.trf.xlu0
        %v659 = vpop.trf.xlu0
        %v660 = vpop.trf.xlu0
        %v661 = vpop.trf.xlu0
        %v662 = vpop.trf.xlu0
        %v663 = vpop.trf.xlu0
        %v664 = vpop.trf.xlu0
        %v665 = vpop.trf.xlu0
        %v666 = vpop.trf.xlu0
        %v667 = vpop.trf.xlu0
        %v668 = vpop.trf.xlu0
        %v669 = vpop.trf.xlu0
        %v671 = vsel %vm523, %v654, 0
        %v674 = vsel %vm523, %v655, 0
        %v677 = vsel %vm523, %v656, 0
        %v680 = vsel %vm523, %v657, 0
        %682 = vmatpush.msra.mxu0 0.0
        %683 = vmatpush.msra.mxu0 0.0
        %684 = vmatpush.msra.mxu0 0.0
        %685 = vmatpush.msra.mxu0 0.0
        %686 = vmatpush.msra.mxu0 0.0
        %687 = vmatpush.msra.mxu0 0.0
        %688 = vmatpush.msra.mxu0 0.0
        %689 = vmatpush.msra.mxu0 0.0
        %690 = vmatpush.msra.mxu0 0.0
        %691 = vmatpush.msra.mxu0 0.0
        %692 = vmatpush.msra.mxu0 0.0
        %693 = vmatpush.msra.mxu0 0.0
        %694 = vmatpush.msra.mxu0 0.0
        %695 = vmatpush.msra.mxu0 0.0
        %696 = vmatpush.msra.mxu0 0.0
        %697 = vmatpush.msra.mxu0 %v489
        %698 = vmatmul.f32.gmra.mxu0 %v671
        %v699 = vpop.f32.mrf.mxu0
        %v700 = vadd.f32 0.0, %v699
        %701 = vmatmul.f32.gmra.mxu0 %v674
        %v702 = vpop.f32.mrf.mxu0
        %v703 = vadd.f32 0.0, %v702
        %704 = vmatmul.f32.gmra.mxu0 %v677
        %v705 = vpop.f32.mrf.mxu0
        %v706 = vadd.f32 0.0, %v705
        %707 = vmatmul.f32.gmra.mxu0 %v680
        %v708 = vpop.f32.mrf.mxu0
        %v709 = vadd.f32 0.0, %v708
        %710 = vdwg.mxu0
        %711 = vxpose.xlu0.b32.start [1/16] %v438, 128
        %712 = vxpose.xlu0.b32.cont [2/16] 0.0, 128
        %713 = vxpose.xlu0.b32.cont [3/16] 0.0, 128
        %714 = vxpose.xlu0.b32.cont [4/16] 0.0, 128
        %715 = vxpose.xlu0.b32.cont [5/16] 0.0, 128
        %716 = vxpose.xlu0.b32.cont [6/16] 0.0, 128
        %717 = vxpose.xlu0.b32.cont [7/16] 0.0, 128
        %718 = vxpose.xlu0.b32.cont [8/16] 0.0, 128
        %719 = vxpose.xlu0.b32.cont [9/16] 0.0, 128
        %720 = vxpose.xlu0.b32.cont [10/16] 0.0, 128
        %721 = vxpose.xlu0.b32.cont [11/16] 0.0, 128
        %722 = vxpose.xlu0.b32.cont [12/16] 0.0, 128
        %723 = vxpose.xlu0.b32.cont [13/16] 0.0, 128
        %724 = vxpose.xlu0.b32.cont [14/16] 0.0, 128
        %725 = vxpose.xlu0.b32.cont [15/16] 0.0, 128
        %726 = vxpose.xlu0.b32.end [16/16] 0.0, 128
        %v727 = vpop.trf.xlu0
        %v728 = vpop.trf.xlu0
        %v729 = vpop.trf.xlu0
        %v730 = vpop.trf.xlu0
        %v731 = vpop.trf.xlu0
        %v732 = vpop.trf.xlu0
        %v733 = vpop.trf.xlu0
        %v734 = vpop.trf.xlu0
        %v735 = vpop.trf.xlu0
        %v736 = vpop.trf.xlu0
        %v737 = vpop.trf.xlu0
        %v738 = vpop.trf.xlu0
        %v739 = vpop.trf.xlu0
        %v740 = vpop.trf.xlu0
        %v741 = vpop.trf.xlu0
        %v742 = vpop.trf.xlu0
        %v744 = vsel %vm523, %v727, 0
        %v747 = vsel %vm523, %v728, 0
        %v750 = vsel %vm523, %v729, 0
        %v753 = vsel %vm523, %v730, 0
        %755 = vmatpush.msra.mxu0 0.0
        %756 = vmatpush.msra.mxu0 0.0
        %757 = vmatpush.msra.mxu0 0.0
        %758 = vmatpush.msra.mxu0 0.0
        %759 = vmatpush.msra.mxu0 0.0
        %760 = vmatpush.msra.mxu0 0.0
        %761 = vmatpush.msra.mxu0 0.0
        %762 = vmatpush.msra.mxu0 0.0
        %763 = vmatpush.msra.mxu0 0.0
        %764 = vmatpush.msra.mxu0 0.0
        %765 = vmatpush.msra.mxu0 0.0
        %766 = vmatpush.msra.mxu0 0.0
        %767 = vmatpush.msra.mxu0 0.0
        %768 = vmatpush.msra.mxu0 0.0
        %769 = vmatpush.msra.mxu0 0.0
        %770 = vmatpush.msra.mxu0 %v490
        %771 = vmatmul.f32.gmra.mxu0 %v744
        %v772 = vpop.f32.mrf.mxu0
        %v773 = vadd.f32 0.0, %v772
        %774 = vmatmul.f32.gmra.mxu0 %v747
        %v775 = vpop.f32.mrf.mxu0
        %v776 = vadd.f32 0.0, %v775
        %777 = vmatmul.f32.gmra.mxu0 %v750
        %v778 = vpop.f32.mrf.mxu0
        %v779 = vadd.f32 0.0, %v778
        %780 = vmatmul.f32.gmra.mxu0 %v753
        %v781 = vpop.f32.mrf.mxu0
        %v782 = vadd.f32 0.0, %v781
        %783 = vdwg.mxu0
        %vm784 = vcmask 31744
        %v785 = vsel %vm784, %v487, 0.0
        %v786 = vrot.slane %v785, 4
        %v787 = vadd.f32 %v785, %v786
        %v788 = vrot.slane %v787, 2
        %v789 = vadd.f32 %v787, %v788
        %v790 = vrot.slane %v789, 1
        %v791 = vadd.f32 %v789, %v790
        %v792 = vsel %vm784, %v488, 0.0
        %v793 = vrot.slane %v792, 4
        %v794 = vadd.f32 %v792, %v793
        %v795 = vrot.slane %v794, 2
        %v796 = vadd.f32 %v794, %v795
        %v797 = vrot.slane %v796, 1
        %v798 = vadd.f32 %v796, %v797
        %v799 = vsel %vm784, %v489, 0.0
        %v800 = vrot.slane %v799, 4
        %v801 = vadd.f32 %v799, %v800
        %v802 = vrot.slane %v801, 2
        %v803 = vadd.f32 %v801, %v802
        %v804 = vrot.slane %v803, 1
        %v805 = vadd.f32 %v803, %v804
        %v806 = vsel %vm784, %v490, 0.0
        %v807 = vrot.slane %v806, 4
        %v808 = vadd.f32 %v806, %v807
        %v809 = vrot.slane %v808, 2
        %v810 = vadd.f32 %v808, %v809
        %v811 = vrot.slane %v810, 1
        %v812 = vadd.f32 %v810, %v811
        %v814 = vsel %vm784, %v487, 0
        %v817 = vsel %vm784, %v488, 0
        %v820 = vsel %vm784, %v489, 0
        %v823 = vsel %vm784, %v490, 0
        %v826 = vsel %vm784, %v385, 0
        %v829 = vsel %vm784, %v386, 0
        %v832 = vsel %vm784, %v387, 0
        %v835 = vsel %vm784, %v388, 0
        %837 = vmatpush.xpose.msra.mxu0 0.0
        %838 = vmatpush.xpose.msra.mxu0 0.0
        %839 = vmatpush.xpose.msra.mxu0 0.0
        %840 = vmatpush.xpose.msra.mxu0 0.0
        %841 = vmatpush.xpose.msra.mxu0 0.0
        %842 = vmatpush.xpose.msra.mxu0 0.0
        %843 = vmatpush.xpose.msra.mxu0 0.0
        %844 = vmatpush.xpose.msra.mxu0 0.0
        %845 = vmatpush.xpose.msra.mxu0 0.0
        %846 = vmatpush.xpose.msra.mxu0 0.0
        %847 = vmatpush.xpose.msra.mxu0 0.0
        %848 = vmatpush.xpose.msra.mxu0 0.0
        %849 = vmatpush.xpose.msra.mxu0 %v835
        %850 = vmatpush.xpose.msra.mxu0 %v832
        %851 = vmatpush.xpose.msra.mxu0 %v829
        %852 = vmatpush.xpose.msra.mxu0 %v826
        %853 = vmatmul.f32.gmra.mxu0 %v814
        %v854 = vpop.f32.mrf.mxu0
        %v855 = vadd.f32 0.0, %v854
        %856 = vmatmul.f32.gmra.mxu0 %v817
        %v857 = vpop.f32.mrf.mxu0
        %v858 = vadd.f32 0.0, %v857
        %859 = vmatmul.f32.gmra.mxu0 %v820
        %v860 = vpop.f32.mrf.mxu0
        %v861 = vadd.f32 0.0, %v860
        %862 = vmatmul.f32.gmra.mxu0 %v823
        %v863 = vpop.f32.mrf.mxu0
        %v864 = vadd.f32 0.0, %v863
        %865 = vdwg.mxu0
        %vm866 = vcmp.gt.f32.partialorder %v424, 0.0
        %vm867 = vcmp.gt.f32.partialorder %v427, 0.0
        %vm868 = vcmp.gt.f32.partialorder %v430, 0.0
        %vm869 = vcmp.gt.f32.partialorder %v433, 0.0
        %v870 = vsel %vm866, %v855, 0.0
        %v871 = vsel %vm867, %v858, 0.0
        %v872 = vsel %vm868, %v861, 0.0
        %v873 = vsel %vm869, %v864, 0.0
        %874 = vxpose.xlu0.b32.start [1/16] %v372, 128
        %875 = vxpose.xlu0.b32.cont [2/16] 0.0, 128
        %876 = vxpose.xlu0.b32.cont [3/16] 0.0, 128
        %877 = vxpose.xlu0.b32.cont [4/16] 0.0, 128
        %878 = vxpose.xlu0.b32.cont [5/16] 0.0, 128
        %879 = vxpose.xlu0.b32.cont [6/16] 0.0, 128
        %880 = vxpose.xlu0.b32.cont [7/16] 0.0, 128
        %881 = vxpose.xlu0.b32.cont [8/16] 0.0, 128
        %882 = vxpose.xlu0.b32.cont [9/16] 0.0, 128
        %883 = vxpose.xlu0.b32.cont [10/16] 0.0, 128
        %884 = vxpose.xlu0.b32.cont [11/16] 0.0, 128
        %885 = vxpose.xlu0.b32.cont [12/16] 0.0, 128
        %886 = vxpose.xlu0.b32.cont [13/16] 0.0, 128
        %887 = vxpose.xlu0.b32.cont [14/16] 0.0, 128
        %888 = vxpose.xlu0.b32.cont [15/16] 0.0, 128
        %889 = vxpose.xlu0.b32.end [16/16] 0.0, 128
        %v890 = vpop.trf.xlu0
        %v891 = vpop.trf.xlu0
        %v892 = vpop.trf.xlu0
        %v893 = vpop.trf.xlu0
        %v894 = vpop.trf.xlu0
        %v895 = vpop.trf.xlu0
        %v896 = vpop.trf.xlu0
        %v897 = vpop.trf.xlu0
        %v898 = vpop.trf.xlu0
        %v899 = vpop.trf.xlu0
        %v900 = vpop.trf.xlu0
        %v901 = vpop.trf.xlu0
        %v902 = vpop.trf.xlu0
        %v903 = vpop.trf.xlu0
        %v904 = vpop.trf.xlu0
        %v905 = vpop.trf.xlu0
        %v907 = vsel %vm523, %v890, 0
        %v910 = vsel %vm523, %v891, 0
        %v913 = vsel %vm523, %v892, 0
        %v916 = vsel %vm523, %v893, 0
        %918 = vmatpush.msra.mxu0 0.0
        %919 = vmatpush.msra.mxu0 0.0
        %920 = vmatpush.msra.mxu0 0.0
        %921 = vmatpush.msra.mxu0 0.0
        %922 = vmatpush.msra.mxu0 0.0
        %923 = vmatpush.msra.mxu0 0.0
        %924 = vmatpush.msra.mxu0 0.0
        %925 = vmatpush.msra.mxu0 0.0
        %926 = vmatpush.msra.mxu0 0.0
        %927 = vmatpush.msra.mxu0 0.0
        %928 = vmatpush.msra.mxu0 0.0
        %929 = vmatpush.msra.mxu0 0.0
        %930 = vmatpush.msra.mxu0 0.0
        %931 = vmatpush.msra.mxu0 0.0
        %932 = vmatpush.msra.mxu0 0.0
        %933 = vmatpush.msra.mxu0 %v870
        %934 = vmatmul.f32.gmra.mxu0 %v907
        %v935 = vpop.f32.mrf.mxu0
        %v936 = vadd.f32 0.0, %v935
        %937 = vmatmul.f32.gmra.mxu0 %v910
        %v938 = vpop.f32.mrf.mxu0
        %v939 = vadd.f32 0.0, %v938
        %940 = vmatmul.f32.gmra.mxu0 %v913
        %v941 = vpop.f32.mrf.mxu0
        %v942 = vadd.f32 0.0, %v941
        %943 = vmatmul.f32.gmra.mxu0 %v916
        %v944 = vpop.f32.mrf.mxu0
        %v945 = vadd.f32 0.0, %v944
        %946 = vdwg.mxu0
        %947 = vxpose.xlu0.b32.start [1/16] %v373, 128
        %948 = vxpose.xlu0.b32.cont [2/16] 0.0, 128
        %949 = vxpose.xlu0.b32.cont [3/16] 0.0, 128
        %950 = vxpose.xlu0.b32.cont [4/16] 0.0, 128
        %951 = vxpose.xlu0.b32.cont [5/16] 0.0, 128
        %952 = vxpose.xlu0.b32.cont [6/16] 0.0, 128
        %953 = vxpose.xlu0.b32.cont [7/16] 0.0, 128
        %954 = vxpose.xlu0.b32.cont [8/16] 0.0, 128
        %955 = vxpose.xlu0.b32.cont [9/16] 0.0, 128
        %956 = vxpose.xlu0.b32.cont [10/16] 0.0, 128
        %957 = vxpose.xlu0.b32.cont [11/16] 0.0, 128
        %958 = vxpose.xlu0.b32.cont [12/16] 0.0, 128
        %959 = vxpose.xlu0.b32.cont [13/16] 0.0, 128
        %960 = vxpose.xlu0.b32.cont [14/16] 0.0, 128
        %961 = vxpose.xlu0.b32.cont [15/16] 0.0, 128
        %962 = vxpose.xlu0.b32.end [16/16] 0.0, 128
        %v963 = vpop.trf.xlu0
        %v964 = vpop.trf.xlu0
        %v965 = vpop.trf.xlu0
        %v966 = vpop.trf.xlu0
        %v967 = vpop.trf.xlu0
        %v968 = vpop.trf.xlu0
        %v969 = vpop.trf.xlu0
        %v970 = vpop.trf.xlu0
        %v971 = vpop.trf.xlu0
        %v972 = vpop.trf.xlu0
        %v973 = vpop.trf.xlu0
        %v974 = vpop.trf.xlu0
        %v975 = vpop.trf.xlu0
        %v976 = vpop.trf.xlu0
        %v977 = vpop.trf.xlu0
        %v978 = vpop.trf.xlu0
        %v980 = vsel %vm523, %v963, 0
        %v983 = vsel %vm523, %v964, 0
        %v986 = vsel %vm523, %v965, 0
        %v989 = vsel %vm523, %v966, 0
        %991 = vmatpush.msra.mxu0 0.0
        %992 = vmatpush.msra.mxu0 0.0
        %993 = vmatpush.msra.mxu0 0.0
        %994 = vmatpush.msra.mxu0 0.0
        %995 = vmatpush.msra.mxu0 0.0
        %996 = vmatpush.msra.mxu0 0.0
        %997 = vmatpush.msra.mxu0 0.0
        %998 = vmatpush.msra.mxu0 0.0
        %999 = vmatpush.msra.mxu0 0.0
        %1000 = vmatpush.msra.mxu0 0.0
        %1001 = vmatpush.msra.mxu0 0.0
        %1002 = vmatpush.msra.mxu0 0.0
        %1003 = vmatpush.msra.mxu0 0.0
        %1004 = vmatpush.msra.mxu0 0.0
        %1005 = vmatpush.msra.mxu0 0.0
        %1006 = vmatpush.msra.mxu0 %v871
        %1007 = vmatmul.f32.gmra.mxu0 %v980
        %v1008 = vpop.f32.mrf.mxu0
        %v1009 = vadd.f32 0.0, %v1008
        %1010 = vmatmul.f32.gmra.mxu0 %v983
        %v1011 = vpop.f32.mrf.mxu0
        %v1012 = vadd.f32 0.0, %v1011
        %1013 = vmatmul.f32.gmra.mxu0 %v986
        %v1014 = vpop.f32.mrf.mxu0
        %v1015 = vadd.f32 0.0, %v1014
        %1016 = vmatmul.f32.gmra.mxu0 %v989
        %v1017 = vpop.f32.mrf.mxu0
        %v1018 = vadd.f32 0.0, %v1017
        %1019 = vdwg.mxu0
        %1020 = vxpose.xlu0.b32.start [1/16] %v374, 128
        %1021 = vxpose.xlu0.b32.cont [2/16] 0.0, 128
        %1022 = vxpose.xlu0.b32.cont [3/16] 0.0, 128
        %1023 = vxpose.xlu0.b32.cont [4/16] 0.0, 128
        %1024 = vxpose.xlu0.b32.cont [5/16] 0.0, 128
        %1025 = vxpose.xlu0.b32.cont [6/16] 0.0, 128
        %1026 = vxpose.xlu0.b32.cont [7/16] 0.0, 128
        %1027 = vxpose.xlu0.b32.cont [8/16] 0.0, 128
        %1028 = vxpose.xlu0.b32.cont [9/16] 0.0, 128
        %1029 = vxpose.xlu0.b32.cont [10/16] 0.0, 128
        %1030 = vxpose.xlu0.b32.cont [11/16] 0.0, 128
        %1031 = vxpose.xlu0.b32.cont [12/16] 0.0, 128
        %1032 = vxpose.xlu0.b32.cont [13/16] 0.0, 128
        %1033 = vxpose.xlu0.b32.cont [14/16] 0.0, 128
        %1034 = vxpose.xlu0.b32.cont [15/16] 0.0, 128
        %1035 = vxpose.xlu0.b32.end [16/16] 0.0, 128
        %v1036 = vpop.trf.xlu0
        %v1037 = vpop.trf.xlu0
        %v1038 = vpop.trf.xlu0
        %v1039 = vpop.trf.xlu0
        %v1040 = vpop.trf.xlu0
        %v1041 = vpop.trf.xlu0
        %v1042 = vpop.trf.xlu0
        %v1043 = vpop.trf.xlu0
        %v1044 = vpop.trf.xlu0
        %v1045 = vpop.trf.xlu0
        %v1046 = vpop.trf.xlu0
        %v1047 = vpop.trf.xlu0
        %v1048 = vpop.trf.xlu0
        %v1049 = vpop.trf.xlu0
        %v1050 = vpop.trf.xlu0
        %v1051 = vpop.trf.xlu0
        %v1053 = vsel %vm523, %v1036, 0
        %v1056 = vsel %vm523, %v1037, 0
        %v1059 = vsel %vm523, %v1038, 0
        %v1062 = vsel %vm523, %v1039, 0
        %1064 = vmatpush.msra.mxu0 0.0
        %1065 = vmatpush.msra.mxu0 0.0
        %1066 = vmatpush.msra.mxu0 0.0
        %1067 = vmatpush.msra.mxu0 0.0
        %1068 = vmatpush.msra.mxu0 0.0
        %1069 = vmatpush.msra.mxu0 0.0
        %1070 = vmatpush.msra.mxu0 0.0
        %1071 = vmatpush.msra.mxu0 0.0
        %1072 = vmatpush.msra.mxu0 0.0
        %1073 = vmatpush.msra.mxu0 0.0
        %1074 = vmatpush.msra.mxu0 0.0
        %1075 = vmatpush.msra.mxu0 0.0
        %1076 = vmatpush.msra.mxu0 0.0
        %1077 = vmatpush.msra.mxu0 0.0
        %1078 = vmatpush.msra.mxu0 0.0
        %1079 = vmatpush.msra.mxu0 %v872
        %1080 = vmatmul.f32.gmra.mxu0 %v1053
        %v1081 = vpop.f32.mrf.mxu0
        %v1082 = vadd.f32 0.0, %v1081
        %1083 = vmatmul.f32.gmra.mxu0 %v1056
        %v1084 = vpop.f32.mrf.mxu0
        %v1085 = vadd.f32 0.0, %v1084
        %1086 = vmatmul.f32.gmra.mxu0 %v1059
        %v1087 = vpop.f32.mrf.mxu0
        %v1088 = vadd.f32 0.0, %v1087
        %1089 = vmatmul.f32.gmra.mxu0 %v1062
        %v1090 = vpop.f32.mrf.mxu0
        %v1091 = vadd.f32 0.0, %v1090
        %1092 = vdwg.mxu0
        %1093 = vxpose.xlu0.b32.start [1/16] %v375, 128
        %1094 = vxpose.xlu0.b32.cont [2/16] 0.0, 128
        %1095 = vxpose.xlu0.b32.cont [3/16] 0.0, 128
        %1096 = vxpose.xlu0.b32.cont [4/16] 0.0, 128
        %1097 = vxpose.xlu0.b32.cont [5/16] 0.0, 128
        %1098 = vxpose.xlu0.b32.cont [6/16] 0.0, 128
        %1099 = vxpose.xlu0.b32.cont [7/16] 0.0, 128
        %1100 = vxpose.xlu0.b32.cont [8/16] 0.0, 128
        %1101 = vxpose.xlu0.b32.cont [9/16] 0.0, 128
        %1102 = vxpose.xlu0.b32.cont [10/16] 0.0, 128
        %1103 = vxpose.xlu0.b32.cont [11/16] 0.0, 128
        %1104 = vxpose.xlu0.b32.cont [12/16] 0.0, 128
        %1105 = vxpose.xlu0.b32.cont [13/16] 0.0, 128
        %1106 = vxpose.xlu0.b32.cont [14/16] 0.0, 128
        %1107 = vxpose.xlu0.b32.cont [15/16] 0.0, 128
        %1108 = vxpose.xlu0.b32.end [16/16] 0.0, 128
        %v1109 = vpop.trf.xlu0
        %v1110 = vpop.trf.xlu0
        %v1111 = vpop.trf.xlu0
        %v1112 = vpop.trf.xlu0
        %v1113 = vpop.trf.xlu0
        %v1114 = vpop.trf.xlu0
        %v1115 = vpop.trf.xlu0
        %v1116 = vpop.trf.xlu0
        %v1117 = vpop.trf.xlu0
        %v1118 = vpop.trf.xlu0
        %v1119 = vpop.trf.xlu0
        %v1120 = vpop.trf.xlu0
        %v1121 = vpop.trf.xlu0
        %v1122 = vpop.trf.xlu0
        %v1123 = vpop.trf.xlu0
        %v1124 = vpop.trf.xlu0
        %v1126 = vsel %vm523, %v1109, 0
        %v1129 = vsel %vm523, %v1110, 0
        %v1132 = vsel %vm523, %v1111, 0
        %v1135 = vsel %vm523, %v1112, 0
        %1137 = vmatpush.msra.mxu0 0.0
        %1138 = vmatpush.msra.mxu0 0.0
        %1139 = vmatpush.msra.mxu0 0.0
        %1140 = vmatpush.msra.mxu0 0.0
        %1141 = vmatpush.msra.mxu0 0.0
        %1142 = vmatpush.msra.mxu0 0.0
        %1143 = vmatpush.msra.mxu0 0.0
        %1144 = vmatpush.msra.mxu0 0.0
        %1145 = vmatpush.msra.mxu0 0.0
        %1146 = vmatpush.msra.mxu0 0.0
        %1147 = vmatpush.msra.mxu0 0.0
        %1148 = vmatpush.msra.mxu0 0.0
        %1149 = vmatpush.msra.mxu0 0.0
        %1150 = vmatpush.msra.mxu0 0.0
        %1151 = vmatpush.msra.mxu0 0.0
        %1152 = vmatpush.msra.mxu0 %v873
        %1153 = vmatmul.f32.gmra.mxu0 %v1126
        %v1154 = vpop.f32.mrf.mxu0
        %v1155 = vadd.f32 0.0, %v1154
        %1156 = vmatmul.f32.gmra.mxu0 %v1129
        %v1157 = vpop.f32.mrf.mxu0
        %v1158 = vadd.f32 0.0, %v1157
        %1159 = vmatmul.f32.gmra.mxu0 %v1132
        %v1160 = vpop.f32.mrf.mxu0
        %v1161 = vadd.f32 0.0, %v1160
        %1162 = vmatmul.f32.gmra.mxu0 %v1135
        %v1163 = vpop.f32.mrf.mxu0
        %v1164 = vadd.f32 0.0, %v1163
        %1165 = vdwg.mxu0
        %v1166 = vsel %vm393, %v870, 0.0
        %v1167 = vrot.slane %v1166, 4
        %v1168 = vadd.f32 %v1166, %v1167
        %v1169 = vrot.slane %v1168, 2
        %v1170 = vadd.f32 %v1168, %v1169
        %v1171 = vrot.slane %v1170, 1
        %v1172 = vadd.f32 %v1170, %v1171
        %v1173 = vsel %vm393, %v871, 0.0
        %v1174 = vrot.slane %v1173, 4
        %v1175 = vadd.f32 %v1173, %v1174
        %v1176 = vrot.slane %v1175, 2
        %v1177 = vadd.f32 %v1175, %v1176
        %v1178 = vrot.slane %v1177, 1
        %v1179 = vadd.f32 %v1177, %v1178
        %v1180 = vsel %vm393, %v872, 0.0
        %v1181 = vrot.slane %v1180, 4
        %v1182 = vadd.f32 %v1180, %v1181
        %v1183 = vrot.slane %v1182, 2
        %v1184 = vadd.f32 %v1182, %v1183
        %v1185 = vrot.slane %v1184, 1
        %v1186 = vadd.f32 %v1184, %v1185
        %v1187 = vsel %vm393, %v873, 0.0
        %v1188 = vrot.slane %v1187, 4
        %v1189 = vadd.f32 %v1187, %v1188
        %v1190 = vrot.slane %v1189, 2
        %v1191 = vadd.f32 %v1189, %v1190
        %v1192 = vrot.slane %v1191, 1
        %v1193 = vadd.f32 %v1191, %v1192
        %v1194 = vmul.f32 %v936, 0.01
        %v1195 = vmul.f32 %v939, 0.01
        %v1196 = vmul.f32 %v942, 0.01
        %v1197 = vmul.f32 %v945, 0.01
        %v1198 = vmul.f32 %v1009, 0.01
        %v1199 = vmul.f32 %v1012, 0.01
        %v1200 = vmul.f32 %v1015, 0.01
        %v1201 = vmul.f32 %v1018, 0.01
        %v1202 = vmul.f32 %v1082, 0.01
        %v1203 = vmul.f32 %v1085, 0.01
        %v1204 = vmul.f32 %v1088, 0.01
        %v1205 = vmul.f32 %v1091, 0.01
        %v1206 = vmul.f32 %v1155, 0.01
        %v1207 = vmul.f32 %v1158, 0.01
        %v1208 = vmul.f32 %v1161, 0.01
        %v1209 = vmul.f32 %v1164, 0.01
        %v1210 = vsub.f32 %v380, %v1194
        %v1211 = vsub.f32 %v381, %v1195
        %v1212 = vsub.f32 %v382, %v1196
        %v1213 = vsub.f32 %v383, %v1197
        %v1214 = vsub.f32 %v380, %v1198
        %v1215 = vsub.f32 %v381, %v1199
        %v1216 = vsub.f32 %v382, %v1200
        %v1217 = vsub.f32 %v383, %v1201
        %v1218 = vsub.f32 %v380, %v1202
        %v1219 = vsub.f32 %v381, %v1203
        %v1220 = vsub.f32 %v382, %v1204
        %v1221 = vsub.f32 %v383, %v1205
        %v1222 = vsub.f32 %v380, %v1206
        %v1223 = vsub.f32 %v381, %v1207
        %v1224 = vsub.f32 %v382, %v1208
        %v1225 = vsub.f32 %v383, %v1209
        %v1226 = vmul.f32 %v1172, 0.01
        %v1227 = vmul.f32 %v1179, 0.01
        %v1228 = vmul.f32 %v1186, 0.01
        %v1229 = vmul.f32 %v1193, 0.01
        %v1230 = vsub.f32 %v384, %v1226
        %v1231 = vsub.f32 %v384, %v1227
        %v1232 = vsub.f32 %v384, %v1228
        %v1233 = vsub.f32 %v384, %v1229
        %v1234 = vmul.f32 %v554, 0.01
        %v1235 = vmul.f32 %v557, 0.01
        %v1236 = vmul.f32 %v560, 0.01
        %v1237 = vmul.f32 %v563, 0.01
        %v1238 = vmul.f32 %v627, 0.01
        %v1239 = vmul.f32 %v630, 0.01
        %v1240 = vmul.f32 %v633, 0.01
        %v1241 = vmul.f32 %v636, 0.01
        %v1242 = vmul.f32 %v700, 0.01
        %v1243 = vmul.f32 %v703, 0.01
        %v1244 = vmul.f32 %v706, 0.01
        %v1245 = vmul.f32 %v709, 0.01
        %v1246 = vmul.f32 %v773, 0.01
        %v1247 = vmul.f32 %v776, 0.01
        %v1248 = vmul.f32 %v779, 0.01
        %v1249 = vmul.f32 %v782, 0.01
        %v1250 = vsub.f32 %v385, %v1234
        %v1251 = vsub.f32 %v386, %v1235
        %v1252 = vsub.f32 %v387, %v1236
        %v1253 = vsub.f32 %v388, %v1237
        %v1254 = vsub.f32 %v385, %v1238
        %v1255 = vsub.f32 %v386, %v1239
        %v1256 = vsub.f32 %v387, %v1240
        %v1257 = vsub.f32 %v388, %v1241
        %v1258 = vsub.f32 %v385, %v1242
        %v1259 = vsub.f32 %v386, %v1243
        %v1260 = vsub.f32 %v387, %v1244
        %v1261 = vsub.f32 %v388, %v1245
        %v1262 = vsub.f32 %v385, %v1246
        %v1263 = vsub.f32 %v386, %v1247
        %v1264 = vsub.f32 %v387, %v1248
        %v1265 = vsub.f32 %v388, %v1249
        %v1266 = vmul.f32 %v791, 0.01
        %v1267 = vmul.f32 %v798, 0.01
        %v1268 = vmul.f32 %v805, 0.01
        %v1269 = vmul.f32 %v812, 0.01
        %v1270 = vsub.f32 %v389, %v1266
        %v1271 = vsub.f32 %v389, %v1267
        %v1272 = vsub.f32 %v389, %v1268
        %v1273 = vsub.f32 %v389, %v1269
        %v1278 = vperm.slane %v1230, 0
        %v1279 = vperm.slane %v1231, 0
        %v1280 = vperm.slane %v1232, 0
        %v1281 = vperm.slane %v1233, 0
        %1286 = vmatpush.msra.mxu0 0.0
        %1287 = vmatpush.msra.mxu0 0.0
        %1288 = vmatpush.msra.mxu0 0.0
        %1289 = vmatpush.msra.mxu0 0.0
        %1290 = vmatpush.msra.mxu0 0.0
        %1291 = vmatpush.msra.mxu0 0.0
        %1292 = vmatpush.msra.mxu0 0.0
        %1293 = vmatpush.msra.mxu0 0.0
        %1294 = vmatpush.msra.mxu0 0.0
        %1295 = vmatpush.msra.mxu0 0.0
        %1296 = vmatpush.msra.mxu0 0.0
        %1297 = vmatpush.msra.mxu0 0.0
        %1298 = vmatpush.msra.mxu0 %v1213
        %1299 = vmatpush.msra.mxu0 %v1212
        %1300 = vmatpush.msra.mxu0 %v1211
        %1301 = vmatpush.msra.mxu0 %v1210
        %1302 = vmatmul.f32.gmra.mxu0 %v395
        %v1303 = vpop.f32.mrf.mxu0
        %v1304 = vadd.f32 %v1278, %v1303
        %1305 = vdwg.mxu0
        %1306 = vmatpush.msra.mxu0 0.0
        %1307 = vmatpush.msra.mxu0 0.0
        %1308 = vmatpush.msra.mxu0 0.0
        %1309 = vmatpush.msra.mxu0 0.0
        %1310 = vmatpush.msra.mxu0 0.0
        %1311 = vmatpush.msra.mxu0 0.0
        %1312 = vmatpush.msra.mxu0 0.0
        %1313 = vmatpush.msra.mxu0 0.0
        %1314 = vmatpush.msra.mxu0 0.0
        %1315 = vmatpush.msra.mxu0 0.0
        %1316 = vmatpush.msra.mxu0 0.0
        %1317 = vmatpush.msra.mxu0 0.0
        %1318 = vmatpush.msra.mxu0 %v1217
        %1319 = vmatpush.msra.mxu0 %v1216
        %1320 = vmatpush.msra.mxu0 %v1215
        %1321 = vmatpush.msra.mxu0 %v1214
        %1322 = vmatmul.f32.gmra.mxu0 %v398
        %v1323 = vpop.f32.mrf.mxu0
        %v1324 = vadd.f32 %v1279, %v1323
        %1325 = vdwg.mxu0
        %1326 = vmatpush.msra.mxu0 0.0
        %1327 = vmatpush.msra.mxu0 0.0
        %1328 = vmatpush.msra.mxu0 0.0
        %1329 = vmatpush.msra.mxu0 0.0
        %1330 = vmatpush.msra.mxu0 0.0
        %1331 = vmatpush.msra.mxu0 0.0
        %1332 = vmatpush.msra.mxu0 0.0
        %1333 = vmatpush.msra.mxu0 0.0
        %1334 = vmatpush.msra.mxu0 0.0
        %1335 = vmatpush.msra.mxu0 0.0
        %1336 = vmatpush.msra.mxu0 0.0
        %1337 = vmatpush.msra.mxu0 0.0
        %1338 = vmatpush.msra.mxu0 %v1221
        %1339 = vmatpush.msra.mxu0 %v1220
        %1340 = vmatpush.msra.mxu0 %v1219
        %1341 = vmatpush.msra.mxu0 %v1218
        %1342 = vmatmul.f32.gmra.mxu0 %v401
        %v1343 = vpop.f32.mrf.mxu0
        %v1344 = vadd.f32 %v1280, %v1343
        %1345 = vdwg.mxu0
        %1346 = vmatpush.msra.mxu0 0.0
        %1347 = vmatpush.msra.mxu0 0.0
        %1348 = vmatpush.msra.mxu0 0.0
        %1349 = vmatpush.msra.mxu0 0.0
        %1350 = vmatpush.msra.mxu0 0.0
        %1351 = vmatpush.msra.mxu0 0.0
        %1352 = vmatpush.msra.mxu0 0.0
        %1353 = vmatpush.msra.mxu0 0.0
        %1354 = vmatpush.msra.mxu0 0.0
        %1355 = vmatpush.msra.mxu0 0.0
        %1356 = vmatpush.msra.mxu0 0.0
        %1357 = vmatpush.msra.mxu0 0.0
        %1358 = vmatpush.msra.mxu0 %v1225
        %1359 = vmatpush.msra.mxu0 %v1224
        %1360 = vmatpush.msra.mxu0 %v1223
        %1361 = vmatpush.msra.mxu0 %v1222
        %1362 = vmatmul.f32.gmra.mxu0 %v404
        %v1363 = vpop.f32.mrf.mxu0
        %v1364 = vadd.f32 %v1281, %v1363
        %1365 = vdwg.mxu0
        %v1366 = vmax.f32 %v1304, 0.0
        %v1367 = vmax.f32 %v1324, 0.0
        %v1368 = vmax.f32 %v1344, 0.0
        %v1369 = vmax.f32 %v1364, 0.0
        %v1374 = vperm.slane %v1270, 0
        %v1375 = vperm.slane %v1271, 0
        %v1376 = vperm.slane %v1272, 0
        %v1377 = vperm.slane %v1273, 0
        %v1383 = vsel %vm393, %v1366, 0
        %1385 = vmatpush.msra.mxu0 0.0
        %1386 = vmatpush.msra.mxu0 0.0
        %1387 = vmatpush.msra.mxu0 0.0
        %1388 = vmatpush.msra.mxu0 0.0
        %1389 = vmatpush.msra.mxu0 0.0
        %1390 = vmatpush.msra.mxu0 0.0
        %1391 = vmatpush.msra.mxu0 0.0
        %1392 = vmatpush.msra.mxu0 0.0
        %1393 = vmatpush.msra.mxu0 0.0
        %1394 = vmatpush.msra.mxu0 0.0
        %1395 = vmatpush.msra.mxu0 0.0
        %1396 = vmatpush.msra.mxu0 0.0
        %1397 = vmatpush.msra.mxu0 %v1253
        %1398 = vmatpush.msra.mxu0 %v1252
        %1399 = vmatpush.msra.mxu0 %v1251
        %1400 = vmatpush.msra.mxu0 %v1250
        %1401 = vmatmul.f32.gmra.mxu0 %v1383
        %v1402 = vpop.f32.mrf.mxu0
        %v1403 = vadd.f32 %v1374, %v1402
        %1404 = vdwg.mxu0
        %v1406 = vsel %vm393, %v1367, 0
        %1408 = vmatpush.msra.mxu0 0.0
        %1409 = vmatpush.msra.mxu0 0.0
        %1410 = vmatpush.msra.mxu0 0.0
        %1411 = vmatpush.msra.mxu0 0.0
        %1412 = vmatpush.msra.mxu0 0.0
        %1413 = vmatpush.msra.mxu0 0.0
        %1414 = vmatpush.msra.mxu0 0.0
        %1415 = vmatpush.msra.mxu0 0.0
        %1416 = vmatpush.msra.mxu0 0.0
        %1417 = vmatpush.msra.mxu0 0.0
        %1418 = vmatpush.msra.mxu0 0.0
        %1419 = vmatpush.msra.mxu0 0.0
        %1420 = vmatpush.msra.mxu0 %v1257
        %1421 = vmatpush.msra.mxu0 %v1256
        %1422 = vmatpush.msra.mxu0 %v1255
        %1423 = vmatpush.msra.mxu0 %v1254
        %1424 = vmatmul.f32.gmra.mxu0 %v1406
        %v1425 = vpop.f32.mrf.mxu0
        %v1426 = vadd.f32 %v1375, %v1425
        %1427 = vdwg.mxu0
        %v1429 = vsel %vm393, %v1368, 0
        %1431 = vmatpush.msra.mxu0 0.0
        %1432 = vmatpush.msra.mxu0 0.0
        %1433 = vmatpush.msra.mxu0 0.0
        %1434 = vmatpush.msra.mxu0 0.0
        %1435 = vmatpush.msra.mxu0 0.0
        %1436 = vmatpush.msra.mxu0 0.0
        %1437 = vmatpush.msra.mxu0 0.0
        %1438 = vmatpush.msra.mxu0 0.0
        %1439 = vmatpush.msra.mxu0 0.0
        %1440 = vmatpush.msra.mxu0 0.0
        %1441 = vmatpush.msra.mxu0 0.0
        %1442 = vmatpush.msra.mxu0 0.0
        %1443 = vmatpush.msra.mxu0 %v1261
        %1444 = vmatpush.msra.mxu0 %v1260
        %1445 = vmatpush.msra.mxu0 %v1259
        %1446 = vmatpush.msra.mxu0 %v1258
        %1447 = vmatmul.f32.gmra.mxu0 %v1429
        %v1448 = vpop.f32.mrf.mxu0
        %v1449 = vadd.f32 %v1376, %v1448
        %1450 = vdwg.mxu0
        %v1452 = vsel %vm393, %v1369, 0
        %1454 = vmatpush.msra.mxu0 0.0
        %1455 = vmatpush.msra.mxu0 0.0
        %1456 = vmatpush.msra.mxu0 0.0
        %1457 = vmatpush.msra.mxu0 0.0
        %1458 = vmatpush.msra.mxu0 0.0
        %1459 = vmatpush.msra.mxu0 0.0
        %1460 = vmatpush.msra.mxu0 0.0
        %1461 = vmatpush.msra.mxu0 0.0
        %1462 = vmatpush.msra.mxu0 0.0
        %1463 = vmatpush.msra.mxu0 0.0
        %1464 = vmatpush.msra.mxu0 0.0
        %1465 = vmatpush.msra.mxu0 0.0
        %1466 = vmatpush.msra.mxu0 %v1265
        %1467 = vmatpush.msra.mxu0 %v1264
        %1468 = vmatpush.msra.mxu0 %v1263
        %1469 = vmatpush.msra.mxu0 %v1262
        %1470 = vmatmul.f32.gmra.mxu0 %v1452
        %v1471 = vpop.f32.mrf.mxu0
        %v1472 = vadd.f32 %v1377, %v1471
        %1473 = vdwg.mxu0
        %v1474 = vsub.f32 %v1403, %v376
        %v1475 = vsub.f32 %v1426, %v377
        %v1476 = vsub.f32 %v1449, %v378
        %v1477 = vsub.f32 %v1472, %v379
        %v1478 = vmul.f32 %v1474, 0.0625
        %v1479 = vmul.f32 %v1475, 0.0625
        %v1480 = vmul.f32 %v1476, 0.0625
        %v1481 = vmul.f32 %v1477, 0.0625
        %1482 = vxpose.xlu0.b32.start [1/16] %v1366, 128
        %1483 = vxpose.xlu0.b32.cont [2/16] 0.0, 128
        %1484 = vxpose.xlu0.b32.cont [3/16] 0.0, 128
        %1485 = vxpose.xlu0.b32.cont [4/16] 0.0, 128
        %1486 = vxpose.xlu0.b32.cont [5/16] 0.0, 128
        %1487 = vxpose.xlu0.b32.cont [6/16] 0.0, 128
        %1488 = vxpose.xlu0.b32.cont [7/16] 0.0, 128
        %1489 = vxpose.xlu0.b32.cont [8/16] 0.0, 128
        %1490 = vxpose.xlu0.b32.cont [9/16] 0.0, 128
        %1491 = vxpose.xlu0.b32.cont [10/16] 0.0, 128
        %1492 = vxpose.xlu0.b32.cont [11/16] 0.0, 128
        %1493 = vxpose.xlu0.b32.cont [12/16] 0.0, 128
        %1494 = vxpose.xlu0.b32.cont [13/16] 0.0, 128
        %1495 = vxpose.xlu0.b32.cont [14/16] 0.0, 128
        %1496 = vxpose.xlu0.b32.cont [15/16] 0.0, 128
        %1497 = vxpose.xlu0.b32.end [16/16] 0.0, 128
        %v1498 = vpop.trf.xlu0
        %v1499 = vpop.trf.xlu0
        %v1500 = vpop.trf.xlu0
        %v1501 = vpop.trf.xlu0
        %v1502 = vpop.trf.xlu0
        %v1503 = vpop.trf.xlu0
        %v1504 = vpop.trf.xlu0
        %v1505 = vpop.trf.xlu0
        %v1506 = vpop.trf.xlu0
        %v1507 = vpop.trf.xlu0
        %v1508 = vpop.trf.xlu0
        %v1509 = vpop.trf.xlu0
        %v1510 = vpop.trf.xlu0
        %v1511 = vpop.trf.xlu0
        %v1512 = vpop.trf.xlu0
        %v1513 = vpop.trf.xlu0
        %v1515 = vsel %vm523, %v1498, 0
        %v1518 = vsel %vm523, %v1499, 0
        %v1521 = vsel %vm523, %v1500, 0
        %v1524 = vsel %vm523, %v1501, 0
        %1526 = vmatpush.msra.mxu0 0.0
        %1527 = vmatpush.msra.mxu0 0.0
        %1528 = vmatpush.msra.mxu0 0.0
        %1529 = vmatpush.msra.mxu0 0.0
        %1530 = vmatpush.msra.mxu0 0.0
        %1531 = vmatpush.msra.mxu0 0.0
        %1532 = vmatpush.msra.mxu0 0.0
        %1533 = vmatpush.msra.mxu0 0.0
        %1534 = vmatpush.msra.mxu0 0.0
        %1535 = vmatpush.msra.mxu0 0.0
        %1536 = vmatpush.msra.mxu0 0.0
        %1537 = vmatpush.msra.mxu0 0.0
        %1538 = vmatpush.msra.mxu0 0.0
        %1539 = vmatpush.msra.mxu0 0.0
        %1540 = vmatpush.msra.mxu0 0.0
        %1541 = vmatpush.msra.mxu0 %v1478
        %1542 = vmatmul.f32.gmra.mxu0 %v1515
        %v1543 = vpop.f32.mrf.mxu0
        %v1544 = vadd.f32 0.0, %v1543
        %1545 = vmatmul.f32.gmra.mxu0 %v1518
        %v1546 = vpop.f32.mrf.mxu0
        %v1547 = vadd.f32 0.0, %v1546
        %1548 = vmatmul.f32.gmra.mxu0 %v1521
        %v1549 = vpop.f32.mrf.mxu0
        %v1550 = vadd.f32 0.0, %v1549
        %1551 = vmatmul.f32.gmra.mxu0 %v1524
        %v1552 = vpop.f32.mrf.mxu0
        %v1553 = vadd.f32 0.0, %v1552
        %1554 = vdwg.mxu0
        %1555 = vxpose.xlu0.b32.start [1/16] %v1367, 128
        %1556 = vxpose.xlu0.b32.cont [2/16] 0.0, 128
        %1557 = vxpose.xlu0.b32.cont [3/16] 0.0, 128
        %1558 = vxpose.xlu0.b32.cont [4/16] 0.0, 128
        %1559 = vxpose.xlu0.b32.cont [5/16] 0.0, 128
        %1560 = vxpose.xlu0.b32.cont [6/16] 0.0, 128
        %1561 = vxpose.xlu0.b32.cont [7/16] 0.0, 128
        %1562 = vxpose.xlu0.b32.cont [8/16] 0.0, 128
        %1563 = vxpose.xlu0.b32.cont [9/16] 0.0, 128
        %1564 = vxpose.xlu0.b32.cont [10/16] 0.0, 128
        %1565 = vxpose.xlu0.b32.cont [11/16] 0.0, 128
        %1566 = vxpose.xlu0.b32.cont [12/16] 0.0, 128
        %1567 = vxpose.xlu0.b32.cont [13/16] 0.0, 128
        %1568 = vxpose.xlu0.b32.cont [14/16] 0.0, 128
        %1569 = vxpose.xlu0.b32.cont [15/16] 0.0, 128
        %1570 = vxpose.xlu0.b32.end [16/16] 0.0, 128
        %v1571 = vpop.trf.xlu0
        %v1572 = vpop.trf.xlu0
        %v1573 = vpop.trf.xlu0
        %v1574 = vpop.trf.xlu0
        %v1575 = vpop.trf.xlu0
        %v1576 = vpop.trf.xlu0
        %v1577 = vpop.trf.xlu0
        %v1578 = vpop.trf.xlu0
        %v1579 = vpop.trf.xlu0
        %v1580 = vpop.trf.xlu0
        %v1581 = vpop.trf.xlu0
        %v1582 = vpop.trf.xlu0
        %v1583 = vpop.trf.xlu0
        %v1584 = vpop.trf.xlu0
        %v1585 = vpop.trf.xlu0
        %v1586 = vpop.trf.xlu0
        %v1588 = vsel %vm523, %v1571, 0
        %v1591 = vsel %vm523, %v1572, 0
        %v1594 = vsel %vm523, %v1573, 0
        %v1597 = vsel %vm523, %v1574, 0
        %1599 = vmatpush.msra.mxu0 0.0
        %1600 = vmatpush.msra.mxu0 0.0
        %1601 = vmatpush.msra.mxu0 0.0
        %1602 = vmatpush.msra.mxu0 0.0
        %1603 = vmatpush.msra.mxu0 0.0
        %1604 = vmatpush.msra.mxu0 0.0
        %1605 = vmatpush.msra.mxu0 0.0
        %1606 = vmatpush.msra.mxu0 0.0
        %1607 = vmatpush.msra.mxu0 0.0
        %1608 = vmatpush.msra.mxu0 0.0
        %1609 = vmatpush.msra.mxu0 0.0
        %1610 = vmatpush.msra.mxu0 0.0
        %1611 = vmatpush.msra.mxu0 0.0
        %1612 = vmatpush.msra.mxu0 0.0
        %1613 = vmatpush.msra.mxu0 0.0
        %1614 = vmatpush.msra.mxu0 %v1479
        %1615 = vmatmul.f32.gmra.mxu0 %v1588
        %v1616 = vpop.f32.mrf.mxu0
        %v1617 = vadd.f32 0.0, %v1616
        %1618 = vmatmul.f32.gmra.mxu0 %v1591
        %v1619 = vpop.f32.mrf.mxu0
        %v1620 = vadd.f32 0.0, %v1619
        %1621 = vmatmul.f32.gmra.mxu0 %v1594
        %v1622 = vpop.f32.mrf.mxu0
        %v1623 = vadd.f32 0.0, %v1622
        %1624 = vmatmul.f32.gmra.mxu0 %v1597
        %v1625 = vpop.f32.mrf.mxu0
        %v1626 = vadd.f32 0.0, %v1625
        %1627 = vdwg.mxu0
        %1628 = vxpose.xlu0.b32.start [1/16] %v1368, 128
        %1629 = vxpose.xlu0.b32.cont [2/16] 0.0, 128
        %1630 = vxpose.xlu0.b32.cont [3/16] 0.0, 128
        %1631 = vxpose.xlu0.b32.cont [4/16] 0.0, 128
        %1632 = vxpose.xlu0.b32.cont [5/16] 0.0, 128
        %1633 = vxpose.xlu0.b32.cont [6/16] 0.0, 128
        %1634 = vxpose.xlu0.b32.cont [7/16] 0.0, 128
        %1635 = vxpose.xlu0.b32.cont [8/16] 0.0, 128
        %1636 = vxpose.xlu0.b32.cont [9/16] 0.0, 128
        %1637 = vxpose.xlu0.b32.cont [10/16] 0.0, 128
        %1638 = vxpose.xlu0.b32.cont [11/16] 0.0, 128
        %1639 = vxpose.xlu0.b32.cont [12/16] 0.0, 128
        %1640 = vxpose.xlu0.b32.cont [13/16] 0.0, 128
        %1641 = vxpose.xlu0.b32.cont [14/16] 0.0, 128
        %1642 = vxpose.xlu0.b32.cont [15/16] 0.0, 128
        %1643 = vxpose.xlu0.b32.end [16/16] 0.0, 128
        %v1644 = vpop.trf.xlu0
        %v1645 = vpop.trf.xlu0
        %v1646 = vpop.trf.xlu0
        %v1647 = vpop.trf.xlu0
        %v1648 = vpop.trf.xlu0
        %v1649 = vpop.trf.xlu0
        %v1650 = vpop.trf.xlu0
        %v1651 = vpop.trf.xlu0
        %v1652 = vpop.trf.xlu0
        %v1653 = vpop.trf.xlu0
        %v1654 = vpop.trf.xlu0
        %v1655 = vpop.trf.xlu0
        %v1656 = vpop.trf.xlu0
        %v1657 = vpop.trf.xlu0
        %v1658 = vpop.trf.xlu0
        %v1659 = vpop.trf.xlu0
        %v1661 = vsel %vm523, %v1644, 0
        %v1664 = vsel %vm523, %v1645, 0
        %v1667 = vsel %vm523, %v1646, 0
        %v1670 = vsel %vm523, %v1647, 0
        %1672 = vmatpush.msra.mxu0 0.0
        %1673 = vmatpush.msra.mxu0 0.0
        %1674 = vmatpush.msra.mxu0 0.0
        %1675 = vmatpush.msra.mxu0 0.0
        %1676 = vmatpush.msra.mxu0 0.0
        %1677 = vmatpush.msra.mxu0 0.0
        %1678 = vmatpush.msra.mxu0 0.0
        %1679 = vmatpush.msra.mxu0 0.0
        %1680 = vmatpush.msra.mxu0 0.0
        %1681 = vmatpush.msra.mxu0 0.0
        %1682 = vmatpush.msra.mxu0 0.0
        %1683 = vmatpush.msra.mxu0 0.0
        %1684 = vmatpush.msra.mxu0 0.0
        %1685 = vmatpush.msra.mxu0 0.0
        %1686 = vmatpush.msra.mxu0 0.0
        %1687 = vmatpush.msra.mxu0 %v1480
        %1688 = vmatmul.f32.gmra.mxu0 %v1661
        %v1689 = vpop.f32.mrf.mxu0
        %v1690 = vadd.f32 0.0, %v1689
        %1691 = vmatmul.f32.gmra.mxu0 %v1664
        %v1692 = vpop.f32.mrf.mxu0
        %v1693 = vadd.f32 0.0, %v1692
        %1694 = vmatmul.f32.gmra.mxu0 %v1667
        %v1695 = vpop.f32.mrf.mxu0
        %v1696 = vadd.f32 0.0, %v1695
        %1697 = vmatmul.f32.gmra.mxu0 %v1670
        %v1698 = vpop.f32.mrf.mxu0
        %v1699 = vadd.f32 0.0, %v1698
        %1700 = vdwg.mxu0
        %1701 = vxpose.xlu0.b32.start [1/16] %v1369, 128
        %1702 = vxpose.xlu0.b32.cont [2/16] 0.0, 128
        %1703 = vxpose.xlu0.b32.cont [3/16] 0.0, 128
        %1704 = vxpose.xlu0.b32.cont [4/16] 0.0, 128
        %1705 = vxpose.xlu0.b32.cont [5/16] 0.0, 128
        %1706 = vxpose.xlu0.b32.cont [6/16] 0.0, 128
        %1707 = vxpose.xlu0.b32.cont [7/16] 0.0, 128
        %1708 = vxpose.xlu0.b32.cont [8/16] 0.0, 128
        %1709 = vxpose.xlu0.b32.cont [9/16] 0.0, 128
        %1710 = vxpose.xlu0.b32.cont [10/16] 0.0, 128
        %1711 = vxpose.xlu0.b32.cont [11/16] 0.0, 128
        %1712 = vxpose.xlu0.b32.cont [12/16] 0.0, 128
        %1713 = vxpose.xlu0.b32.cont [13/16] 0.0, 128
        %1714 = vxpose.xlu0.b32.cont [14/16] 0.0, 128
        %1715 = vxpose.xlu0.b32.cont [15/16] 0.0, 128
        %1716 = vxpose.xlu0.b32.end [16/16] 0.0, 128
        %v1717 = vpop.trf.xlu0
        %v1718 = vpop.trf.xlu0
        %v1719 = vpop.trf.xlu0
        %v1720 = vpop.trf.xlu0
        %v1721 = vpop.trf.xlu0
        %v1722 = vpop.trf.xlu0
        %v1723 = vpop.trf.xlu0
        %v1724 = vpop.trf.xlu0
        %v1725 = vpop.trf.xlu0
        %v1726 = vpop.trf.xlu0
        %v1727 = vpop.trf.xlu0
        %v1728 = vpop.trf.xlu0
        %v1729 = vpop.trf.xlu0
        %v1730 = vpop.trf.xlu0
        %v1731 = vpop.trf.xlu0
        %v1732 = vpop.trf.xlu0
        %v1734 = vsel %vm523, %v1717, 0
        %v1737 = vsel %vm523, %v1718, 0
        %v1740 = vsel %vm523, %v1719, 0
        %v1743 = vsel %vm523, %v1720, 0
        %1745 = vmatpush.msra.mxu0 0.0
        %1746 = vmatpush.msra.mxu0 0.0
        %1747 = vmatpush.msra.mxu0 0.0
        %1748 = vmatpush.msra.mxu0 0.0
        %1749 = vmatpush.msra.mxu0 0.0
        %1750 = vmatpush.msra.mxu0 0.0
        %1751 = vmatpush.msra.mxu0 0.0
        %1752 = vmatpush.msra.mxu0 0.0
        %1753 = vmatpush.msra.mxu0 0.0
        %1754 = vmatpush.msra.mxu0 0.0
        %1755 = vmatpush.msra.mxu0 0.0
        %1756 = vmatpush.msra.mxu0 0.0
        %1757 = vmatpush.msra.mxu0 0.0
        %1758 = vmatpush.msra.mxu0 0.0
        %1759 = vmatpush.msra.mxu0 0.0
        %1760 = vmatpush.msra.mxu0 %v1481
        %1761 = vmatmul.f32.gmra.mxu0 %v1734
        %v1762 = vpop.f32.mrf.mxu0
        %v1763 = vadd.f32 0.0, %v1762
        %1764 = vmatmul.f32.gmra.mxu0 %v1737
        %v1765 = vpop.f32.mrf.mxu0
        %v1766 = vadd.f32 0.0, %v1765
        %1767 = vmatmul.f32.gmra.mxu0 %v1740
        %v1768 = vpop.f32.mrf.mxu0
        %v1769 = vadd.f32 0.0, %v1768
        %1770 = vmatmul.f32.gmra.mxu0 %v1743
        %v1771 = vpop.f32.mrf.mxu0
        %v1772 = vadd.f32 0.0, %v1771
        %1773 = vdwg.mxu0
        %v1774 = vsel %vm784, %v1478, 0.0
        %v1775 = vrot.slane %v1774, 4
        %v1776 = vadd.f32 %v1774, %v1775
        %v1777 = vrot.slane %v1776, 2
        %v1778 = vadd.f32 %v1776, %v1777
        %v1779 = vrot.slane %v1778, 1
        %v1780 = vadd.f32 %v1778, %v1779
        %v1781 = vsel %vm784, %v1479, 0.0
        %v1782 = vrot.slane %v1781, 4
        %v1783 = vadd.f32 %v1781, %v1782
        %v1784 = vrot.slane %v1783, 2
        %v1785 = vadd.f32 %v1783, %v1784
        %v1786 = vrot.slane %v1785, 1
        %v1787 = vadd.f32 %v1785, %v1786
        %v1788 = vsel %vm784, %v1480, 0.0
        %v1789 = vrot.slane %v1788, 4
        %v1790 = vadd.f32 %v1788, %v1789
        %v1791 = vrot.slane %v1790, 2
        %v1792 = vadd.f32 %v1790, %v1791
        %v1793 = vrot.slane %v1792, 1
        %v1794 = vadd.f32 %v1792, %v1793
        %v1795 = vsel %vm784, %v1481, 0.0
        %v1796 = vrot.slane %v1795, 4
        %v1797 = vadd.f32 %v1795, %v1796
        %v1798 = vrot.slane %v1797, 2
        %v1799 = vadd.f32 %v1797, %v1798
        %v1800 = vrot.slane %v1799, 1
        %v1801 = vadd.f32 %v1799, %v1800
        %v1803 = vsel %vm784, %v1478, 0
        %v1806 = vsel %vm784, %v1250, 0
        %v1809 = vsel %vm784, %v1251, 0
        %v1812 = vsel %vm784, %v1252, 0
        %v1815 = vsel %vm784, %v1253, 0
        %1817 = vmatpush.xpose.msra.mxu0 0.0
        %1818 = vmatpush.xpose.msra.mxu0 0.0
        %1819 = vmatpush.xpose.msra.mxu0 0.0
        %1820 = vmatpush.xpose.msra.mxu0 0.0
        %1821 = vmatpush.xpose.msra.mxu0 0.0
        %1822 = vmatpush.xpose.msra.mxu0 0.0
        %1823 = vmatpush.xpose.msra.mxu0 0.0
        %1824 = vmatpush.xpose.msra.mxu0 0.0
        %1825 = vmatpush.xpose.msra.mxu0 0.0
        %1826 = vmatpush.xpose.msra.mxu0 0.0
        %1827 = vmatpush.xpose.msra.mxu0 0.0
        %1828 = vmatpush.xpose.msra.mxu0 0.0
        %1829 = vmatpush.xpose.msra.mxu0 %v1815
        %1830 = vmatpush.xpose.msra.mxu0 %v1812
        %1831 = vmatpush.xpose.msra.mxu0 %v1809
        %1832 = vmatpush.xpose.msra.mxu0 %v1806
        %1833 = vmatmul.f32.gmra.mxu0 %v1803
        %v1834 = vpop.f32.mrf.mxu0
        %v1835 = vadd.f32 0.0, %v1834
        %1836 = vdwg.mxu0
        %v1838 = vsel %vm784, %v1479, 0
        %v1841 = vsel %vm784, %v1254, 0
        %v1844 = vsel %vm784, %v1255, 0
        %v1847 = vsel %vm784, %v1256, 0
        %v1850 = vsel %vm784, %v1257, 0
        %1852 = vmatpush.xpose.msra.mxu0 0.0
        %1853 = vmatpush.xpose.msra.mxu0 0.0
        %1854 = vmatpush.xpose.msra.mxu0 0.0
        %1855 = vmatpush.xpose.msra.mxu0 0.0
        %1856 = vmatpush.xpose.msra.mxu0 0.0
        %1857 = vmatpush.xpose.msra.mxu0 0.0
        %1858 = vmatpush.xpose.msra.mxu0 0.0
        %1859 = vmatpush.xpose.msra.mxu0 0.0
        %1860 = vmatpush.xpose.msra.mxu0 0.0
        %1861 = vmatpush.xpose.msra.mxu0 0.0
        %1862 = vmatpush.xpose.msra.mxu0 0.0
        %1863 = vmatpush.xpose.msra.mxu0 0.0
        %1864 = vmatpush.xpose.msra.mxu0 %v1850
        %1865 = vmatpush.xpose.msra.mxu0 %v1847
        %1866 = vmatpush.xpose.msra.mxu0 %v1844
        %1867 = vmatpush.xpose.msra.mxu0 %v1841
        %1868 = vmatmul.f32.gmra.mxu0 %v1838
        %v1869 = vpop.f32.mrf.mxu0
        %v1870 = vadd.f32 0.0, %v1869
        %1871 = vdwg.mxu0
        %v1873 = vsel %vm784, %v1480, 0
        %v1876 = vsel %vm784, %v1258, 0
        %v1879 = vsel %vm784, %v1259, 0
        %v1882 = vsel %vm784, %v1260, 0
        %v1885 = vsel %vm784, %v1261, 0
        %1887 = vmatpush.xpose.msra.mxu0 0.0
        %1888 = vmatpush.xpose.msra.mxu0 0.0
        %1889 = vmatpush.xpose.msra.mxu0 0.0
        %1890 = vmatpush.xpose.msra.mxu0 0.0
        %1891 = vmatpush.xpose.msra.mxu0 0.0
        %1892 = vmatpush.xpose.msra.mxu0 0.0
        %1893 = vmatpush.xpose.msra.mxu0 0.0
        %1894 = vmatpush.xpose.msra.mxu0 0.0
        %1895 = vmatpush.xpose.msra.mxu0 0.0
        %1896 = vmatpush.xpose.msra.mxu0 0.0
        %1897 = vmatpush.xpose.msra.mxu0 0.0
        %1898 = vmatpush.xpose.msra.mxu0 0.0
        %1899 = vmatpush.xpose.msra.mxu0 %v1885
        %1900 = vmatpush.xpose.msra.mxu0 %v1882
        %1901 = vmatpush.xpose.msra.mxu0 %v1879
        %1902 = vmatpush.xpose.msra.mxu0 %v1876
        %1903 = vmatmul.f32.gmra.mxu0 %v1873
        %v1904 = vpop.f32.mrf.mxu0
        %v1905 = vadd.f32 0.0, %v1904
        %1906 = vdwg.mxu0
        %v1908 = vsel %vm784, %v1481, 0
        %v1911 = vsel %vm784, %v1262, 0
        %v1914 = vsel %vm784, %v1263, 0
        %v1917 = vsel %vm784, %v1264, 0
        %v1920 = vsel %vm784, %v1265, 0
        %1922 = vmatpush.xpose.msra.mxu0 0.0
        %1923 = vmatpush.xpose.msra.mxu0 0.0
        %1924 = vmatpush.xpose.msra.mxu0 0.0
        %1925 = vmatpush.xpose.msra.mxu0 0.0
        %1926 = vmatpush.xpose.msra.mxu0 0.0
        %1927 = vmatpush.xpose.msra.mxu0 0.0
        %1928 = vmatpush.xpose.msra.mxu0 0.0
        %1929 = vmatpush.xpose.msra.mxu0 0.0
        %1930 = vmatpush.xpose.msra.mxu0 0.0
        %1931 = vmatpush.xpose.msra.mxu0 0.0
        %1932 = vmatpush.xpose.msra.mxu0 0.0
        %1933 = vmatpush.xpose.msra.mxu0 0.0
        %1934 = vmatpush.xpose.msra.mxu0 %v1920
        %1935 = vmatpush.xpose.msra.mxu0 %v1917
        %1936 = vmatpush.xpose.msra.mxu0 %v1914
        %1937 = vmatpush.xpose.msra.mxu0 %v1911
        %1938 = vmatmul.f32.gmra.mxu0 %v1908
        %v1939 = vpop.f32.mrf.mxu0
        %v1940 = vadd.f32 0.0, %v1939
        %1941 = vdwg.mxu0
        %vm1942 = vcmp.gt.f32.partialorder %v1304, 0.0
        %vm1943 = vcmp.gt.f32.partialorder %v1324, 0.0
        %vm1944 = vcmp.gt.f32.partialorder %v1344, 0.0
        %vm1945 = vcmp.gt.f32.partialorder %v1364, 0.0
        %v1946 = vsel %vm1942, %v1835, 0.0
        %v1947 = vsel %vm1943, %v1870, 0.0
        %v1948 = vsel %vm1944, %v1905, 0.0
        %v1949 = vsel %vm1945, %v1940, 0.0
        %1950 = vmatpush.msra.mxu0 0.0
        %1951 = vmatpush.msra.mxu0 0.0
        %1952 = vmatpush.msra.mxu0 0.0
        %1953 = vmatpush.msra.mxu0 0.0
        %1954 = vmatpush.msra.mxu0 0.0
        %1955 = vmatpush.msra.mxu0 0.0
        %1956 = vmatpush.msra.mxu0 0.0
        %1957 = vmatpush.msra.mxu0 0.0
        %1958 = vmatpush.msra.mxu0 0.0
        %1959 = vmatpush.msra.mxu0 0.0
        %1960 = vmatpush.msra.mxu0 0.0
        %1961 = vmatpush.msra.mxu0 0.0
        %1962 = vmatpush.msra.mxu0 0.0
        %1963 = vmatpush.msra.mxu0 0.0
        %1964 = vmatpush.msra.mxu0 0.0
        %1965 = vmatpush.msra.mxu0 %v1946
        %1966 = vmatmul.f32.gmra.mxu0 %v907
        %v1967 = vpop.f32.mrf.mxu0
        %v1968 = vadd.f32 0.0, %v1967
        %1969 = vmatmul.f32.gmra.mxu0 %v910
        %v1970 = vpop.f32.mrf.mxu0
        %v1971 = vadd.f32 0.0, %v1970
        %1972 = vmatmul.f32.gmra.mxu0 %v913
        %v1973 = vpop.f32.mrf.mxu0
        %v1974 = vadd.f32 0.0, %v1973
        %1975 = vmatmul.f32.gmra.mxu0 %v916
        %v1976 = vpop.f32.mrf.mxu0
        %v1977 = vadd.f32 0.0, %v1976
        %1978 = vdwg.mxu0
        %1979 = vmatpush.msra.mxu0 0.0
        %1980 = vmatpush.msra.mxu0 0.0
        %1981 = vmatpush.msra.mxu0 0.0
        %1982 = vmatpush.msra.mxu0 0.0
        %1983 = vmatpush.msra.mxu0 0.0
        %1984 = vmatpush.msra.mxu0 0.0
        %1985 = vmatpush.msra.mxu0 0.0
        %1986 = vmatpush.msra.mxu0 0.0
        %1987 = vmatpush.msra.mxu0 0.0
        %1988 = vmatpush.msra.mxu0 0.0
        %1989 = vmatpush.msra.mxu0 0.0
        %1990 = vmatpush.msra.mxu0 0.0
        %1991 = vmatpush.msra.mxu0 0.0
        %1992 = vmatpush.msra.mxu0 0.0
        %1993 = vmatpush.msra.mxu0 0.0
        %1994 = vmatpush.msra.mxu0 %v1947
        %1995 = vmatmul.f32.gmra.mxu0 %v980
        %v1996 = vpop.f32.mrf.mxu0
        %v1997 = vadd.f32 0.0, %v1996
        %1998 = vmatmul.f32.gmra.mxu0 %v983
        %v1999 = vpop.f32.mrf.mxu0
        %v2000 = vadd.f32 0.0, %v1999
        %2001 = vmatmul.f32.gmra.mxu0 %v986
        %v2002 = vpop.f32.mrf.mxu0
        %v2003 = vadd.f32 0.0, %v2002
        %2004 = vmatmul.f32.gmra.mxu0 %v989
        %v2005 = vpop.f32.mrf.mxu0
        %v2006 = vadd.f32 0.0, %v2005
        %2007 = vdwg.mxu0
        %2008 = vmatpush.msra.mxu0 0.0
        %2009 = vmatpush.msra.mxu0 0.0
        %2010 = vmatpush.msra.mxu0 0.0
        %2011 = vmatpush.msra.mxu0 0.0
        %2012 = vmatpush.msra.mxu0 0.0
        %2013 = vmatpush.msra.mxu0 0.0
        %2014 = vmatpush.msra.mxu0 0.0
        %2015 = vmatpush.msra.mxu0 0.0
        %2016 = vmatpush.msra.mxu0 0.0
        %2017 = vmatpush.msra.mxu0 0.0
        %2018 = vmatpush.msra.mxu0 0.0
        %2019 = vmatpush.msra.mxu0 0.0
        %2020 = vmatpush.msra.mxu0 0.0
        %2021 = vmatpush.msra.mxu0 0.0
        %2022 = vmatpush.msra.mxu0 0.0
        %2023 = vmatpush.msra.mxu0 %v1948
        %2024 = vmatmul.f32.gmra.mxu0 %v1053
        %v2025 = vpop.f32.mrf.mxu0
        %v2026 = vadd.f32 0.0, %v2025
        %2027 = vmatmul.f32.gmra.mxu0 %v1056
        %v2028 = vpop.f32.mrf.mxu0
        %v2029 = vadd.f32 0.0, %v2028
        %2030 = vmatmul.f32.gmra.mxu0 %v1059
        %v2031 = vpop.f32.mrf.mxu0
        %v2032 = vadd.f32 0.0, %v2031
        %2033 = vmatmul.f32.gmra.mxu0 %v1062
        %v2034 = vpop.f32.mrf.mxu0
        %v2035 = vadd.f32 0.0, %v2034
        %2036 = vdwg.mxu0
        %2037 = vmatpush.msra.mxu0 0.0
        %2038 = vmatpush.msra.mxu0 0.0
        %2039 = vmatpush.msra.mxu0 0.0
        %2040 = vmatpush.msra.mxu0 0.0
        %2041 = vmatpush.msra.mxu0 0.0
        %2042 = vmatpush.msra.mxu0 0.0
        %2043 = vmatpush.msra.mxu0 0.0
        %2044 = vmatpush.msra.mxu0 0.0
        %2045 = vmatpush.msra.mxu0 0.0
        %2046 = vmatpush.msra.mxu0 0.0
        %2047 = vmatpush.msra.mxu0 0.0
        %2048 = vmatpush.msra.mxu0 0.0
        %2049 = vmatpush.msra.mxu0 0.0
        %2050 = vmatpush.msra.mxu0 0.0
        %2051 = vmatpush.msra.mxu0 0.0
        %2052 = vmatpush.msra.mxu0 %v1949
        %2053 = vmatmul.f32.gmra.mxu0 %v1126
        %v2054 = vpop.f32.mrf.mxu0
        %v2055 = vadd.f32 0.0, %v2054
        %2056 = vmatmul.f32.gmra.mxu0 %v1129
        %v2057 = vpop.f32.mrf.mxu0
        %v2058 = vadd.f32 0.0, %v2057
        %2059 = vmatmul.f32.gmra.mxu0 %v1132
        %v2060 = vpop.f32.mrf.mxu0
        %v2061 = vadd.f32 0.0, %v2060
        %2062 = vmatmul.f32.gmra.mxu0 %v1135
        %v2063 = vpop.f32.mrf.mxu0
        %v2064 = vadd.f32 0.0, %v2063
        %2065 = vdwg.mxu0
        %v2066 = vsel %vm393, %v1946, 0.0
        %v2067 = vrot.slane %v2066, 4
        %v2068 = vadd.f32 %v2066, %v2067
        %v2069 = vrot.slane %v2068, 2
        %v2070 = vadd.f32 %v2068, %v2069
        %v2071 = vrot.slane %v2070, 1
        %v2072 = vadd.f32 %v2070, %v2071
        %v2073 = vsel %vm393, %v1947, 0.0
        %v2074 = vrot.slane %v2073, 4
        %v2075 = vadd.f32 %v2073, %v2074
        %v2076 = vrot.slane %v2075, 2
        %v2077 = vadd.f32 %v2075, %v2076
        %v2078 = vrot.slane %v2077, 1
        %v2079 = vadd.f32 %v2077, %v2078
        %v2080 = vsel %vm393, %v1948, 0.0
        %v2081 = vrot.slane %v2080, 4
        %v2082 = vadd.f32 %v2080, %v2081
        %v2083 = vrot.slane %v2082, 2
        %v2084 = vadd.f32 %v2082, %v2083
        %v2085 = vrot.slane %v2084, 1
        %v2086 = vadd.f32 %v2084, %v2085
        %v2087 = vsel %vm393, %v1949, 0.0
        %v2088 = vrot.slane %v2087, 4
        %v2089 = vadd.f32 %v2087, %v2088
        %v2090 = vrot.slane %v2089, 2
        %v2091 = vadd.f32 %v2089, %v2090
        %v2092 = vrot.slane %v2091, 1
        %v2093 = vadd.f32 %v2091, %v2092
        %v2094 = vmul.f32 %v1968, 0.01
        %v2095 = vmul.f32 %v1971, 0.01
        %v2096 = vmul.f32 %v1974, 0.01
        %v2097 = vmul.f32 %v1977, 0.01
        %v2098 = vmul.f32 %v1997, 0.01
        %v2099 = vmul.f32 %v2000, 0.01
        %v2100 = vmul.f32 %v2003, 0.01
        %v2101 = vmul.f32 %v2006, 0.01
        %v2102 = vmul.f32 %v2026, 0.01
        %v2103 = vmul.f32 %v2029, 0.01
        %v2104 = vmul.f32 %v2032, 0.01
        %v2105 = vmul.f32 %v2035, 0.01
        %v2106 = vmul.f32 %v2055, 0.01
        %v2107 = vmul.f32 %v2058, 0.01
        %v2108 = vmul.f32 %v2061, 0.01
        %v2109 = vmul.f32 %v2064, 0.01
        %v2110 = vsub.f32 %v1210, %v2094
        %v2111 = vsub.f32 %v1211, %v2095
        %v2112 = vsub.f32 %v1212, %v2096
        %v2113 = vsub.f32 %v1213, %v2097
        %v2114 = vsub.f32 %v1214, %v2098
        %v2115 = vsub.f32 %v1215, %v2099
        %v2116 = vsub.f32 %v1216, %v2100
        %v2117 = vsub.f32 %v1217, %v2101
        %v2118 = vsub.f32 %v1218, %v2102
        %v2119 = vsub.f32 %v1219, %v2103
        %v2120 = vsub.f32 %v1220, %v2104
        %v2121 = vsub.f32 %v1221, %v2105
        %v2122 = vsub.f32 %v1222, %v2106
        %v2123 = vsub.f32 %v1223, %v2107
        %v2124 = vsub.f32 %v1224, %v2108
        %v2125 = vsub.f32 %v1225, %v2109
        %v2126 = vmul.f32 %v2072, 0.01
        %v2127 = vmul.f32 %v2079, 0.01
        %v2128 = vmul.f32 %v2086, 0.01
        %v2129 = vmul.f32 %v2093, 0.01
        %v2130 = vsub.f32 %v1230, %v2126
        %v2131 = vsub.f32 %v1231, %v2127
        %v2132 = vsub.f32 %v1232, %v2128
        %v2133 = vsub.f32 %v1233, %v2129
        %v2134 = vmul.f32 %v1544, 0.01
        %v2135 = vmul.f32 %v1547, 0.01
        %v2136 = vmul.f32 %v1550, 0.01
        %v2137 = vmul.f32 %v1553, 0.01
        %v2138 = vmul.f32 %v1617, 0.01
        %v2139 = vmul.f32 %v1620, 0.01
        %v2140 = vmul.f32 %v1623, 0.01
        %v2141 = vmul.f32 %v1626, 0.01
        %v2142 = vmul.f32 %v1690, 0.01
        %v2143 = vmul.f32 %v1693, 0.01
        %v2144 = vmul.f32 %v1696, 0.01
        %v2145 = vmul.f32 %v1699, 0.01
        %v2146 = vmul.f32 %v1763, 0.01
        %v2147 = vmul.f32 %v1766, 0.01
        %v2148 = vmul.f32 %v1769, 0.01
        %v2149 = vmul.f32 %v1772, 0.01
        %v2150 = vsub.f32 %v1250, %v2134
        %v2151 = vsub.f32 %v1251, %v2135
        %v2152 = vsub.f32 %v1252, %v2136
        %v2153 = vsub.f32 %v1253, %v2137
        %v2154 = vsub.f32 %v1254, %v2138
        %v2155 = vsub.f32 %v1255, %v2139
        %v2156 = vsub.f32 %v1256, %v2140
        %v2157 = vsub.f32 %v1257, %v2141
        %v2158 = vsub.f32 %v1258, %v2142
        %v2159 = vsub.f32 %v1259, %v2143
        %v2160 = vsub.f32 %v1260, %v2144
        %v2161 = vsub.f32 %v1261, %v2145
        %v2162 = vsub.f32 %v1262, %v2146
        %v2163 = vsub.f32 %v1263, %v2147
        %v2164 = vsub.f32 %v1264, %v2148
        %v2165 = vsub.f32 %v1265, %v2149
        %v2166 = vmul.f32 %v1780, 0.01
        %v2167 = vmul.f32 %v1787, 0.01
        %v2168 = vmul.f32 %v1794, 0.01
        %v2169 = vmul.f32 %v1801, 0.01
        %v2170 = vsub.f32 %v1270, %v2166
        %v2171 = vsub.f32 %v1271, %v2167
        %v2172 = vsub.f32 %v1272, %v2168
        %v2173 = vsub.f32 %v1273, %v2169
        %v2178 = vperm.slane %v2130, 0
        %v2179 = vperm.slane %v2131, 0
        %v2180 = vperm.slane %v2132, 0
        %v2181 = vperm.slane %v2133, 0
        %2186 = vmatpush.msra.mxu0 0.0
        %2187 = vmatpush.msra.mxu0 0.0
        %2188 = vmatpush.msra.mxu0 0.0
        %2189 = vmatpush.msra.mxu0 0.0
        %2190 = vmatpush.msra.mxu0 0.0
        %2191 = vmatpush.msra.mxu0 0.0
        %2192 = vmatpush.msra.mxu0 0.0
        %2193 = vmatpush.msra.mxu0 0.0
        %2194 = vmatpush.msra.mxu0 0.0
        %2195 = vmatpush.msra.mxu0 0.0
        %2196 = vmatpush.msra.mxu0 0.0
        %2197 = vmatpush.msra.mxu0 0.0
        %2198 = vmatpush.msra.mxu0 %v2113
        %2199 = vmatpush.msra.mxu0 %v2112
        %2200 = vmatpush.msra.mxu0 %v2111
        %2201 = vmatpush.msra.mxu0 %v2110
        %2202 = vmatmul.f32.gmra.mxu0 %v395
        %v2203 = vpop.f32.mrf.mxu0
        %v2204 = vadd.f32 %v2178, %v2203
        %2205 = vdwg.mxu0
        %2206 = vmatpush.msra.mxu0 0.0
        %2207 = vmatpush.msra.mxu0 0.0
        %2208 = vmatpush.msra.mxu0 0.0
        %2209 = vmatpush.msra.mxu0 0.0
        %2210 = vmatpush.msra.mxu0 0.0
        %2211 = vmatpush.msra.mxu0 0.0
        %2212 = vmatpush.msra.mxu0 0.0
        %2213 = vmatpush.msra.mxu0 0.0
        %2214 = vmatpush.msra.mxu0 0.0
        %2215 = vmatpush.msra.mxu0 0.0
        %2216 = vmatpush.msra.mxu0 0.0
        %2217 = vmatpush.msra.mxu0 0.0
        %2218 = vmatpush.msra.mxu0 %v2117
        %2219 = vmatpush.msra.mxu0 %v2116
        %2220 = vmatpush.msra.mxu0 %v2115
        %2221 = vmatpush.msra.mxu0 %v2114
        %2222 = vmatmul.f32.gmra.mxu0 %v398
        %v2223 = vpop.f32.mrf.mxu0
        %v2224 = vadd.f32 %v2179, %v2223
        %2225 = vdwg.mxu0
        %2226 = vmatpush.msra.mxu0 0.0
        %2227 = vmatpush.msra.mxu0 0.0
        %2228 = vmatpush.msra.mxu0 0.0
        %2229 = vmatpush.msra.mxu0 0.0
        %2230 = vmatpush.msra.mxu0 0.0
        %2231 = vmatpush.msra.mxu0 0.0
        %2232 = vmatpush.msra.mxu0 0.0
        %2233 = vmatpush.msra.mxu0 0.0
        %2234 = vmatpush.msra.mxu0 0.0
        %2235 = vmatpush.msra.mxu0 0.0
        %2236 = vmatpush.msra.mxu0 0.0
        %2237 = vmatpush.msra.mxu0 0.0
        %2238 = vmatpush.msra.mxu0 %v2121
        %2239 = vmatpush.msra.mxu0 %v2120
        %2240 = vmatpush.msra.mxu0 %v2119
        %2241 = vmatpush.msra.mxu0 %v2118
        %2242 = vmatmul.f32.gmra.mxu0 %v401
        %v2243 = vpop.f32.mrf.mxu0
        %v2244 = vadd.f32 %v2180, %v2243
        %2245 = vdwg.mxu0
        %2246 = vmatpush.msra.mxu0 0.0
        %2247 = vmatpush.msra.mxu0 0.0
        %2248 = vmatpush.msra.mxu0 0.0
        %2249 = vmatpush.msra.mxu0 0.0
        %2250 = vmatpush.msra.mxu0 0.0
        %2251 = vmatpush.msra.mxu0 0.0
        %2252 = vmatpush.msra.mxu0 0.0
        %2253 = vmatpush.msra.mxu0 0.0
        %2254 = vmatpush.msra.mxu0 0.0
        %2255 = vmatpush.msra.mxu0 0.0
        %2256 = vmatpush.msra.mxu0 0.0
        %2257 = vmatpush.msra.mxu0 0.0
        %2258 = vmatpush.msra.mxu0 %v2125
        %2259 = vmatpush.msra.mxu0 %v2124
        %2260 = vmatpush.msra.mxu0 %v2123
        %2261 = vmatpush.msra.mxu0 %v2122
        %2262 = vmatmul.f32.gmra.mxu0 %v404
        %v2263 = vpop.f32.mrf.mxu0
        %v2264 = vadd.f32 %v2181, %v2263
        %2265 = vdwg.mxu0
        %v2266 = vmax.f32 %v2204, 0.0
        %v2267 = vmax.f32 %v2224, 0.0
        %v2268 = vmax.f32 %v2244, 0.0
        %v2269 = vmax.f32 %v2264, 0.0
        %v2274 = vperm.slane %v2170, 0
        %v2275 = vperm.slane %v2171, 0
        %v2276 = vperm.slane %v2172, 0
        %v2277 = vperm.slane %v2173, 0
        %v2283 = vsel %vm393, %v2266, 0
        %2285 = vmatpush.msra.mxu0 0.0
        %2286 = vmatpush.msra.mxu0 0.0
        %2287 = vmatpush.msra.mxu0 0.0
        %2288 = vmatpush.msra.mxu0 0.0
        %2289 = vmatpush.msra.mxu0 0.0
        %2290 = vmatpush.msra.mxu0 0.0
        %2291 = vmatpush.msra.mxu0 0.0
        %2292 = vmatpush.msra.mxu0 0.0
        %2293 = vmatpush.msra.mxu0 0.0
        %2294 = vmatpush.msra.mxu0 0.0
        %2295 = vmatpush.msra.mxu0 0.0
        %2296 = vmatpush.msra.mxu0 0.0
        %2297 = vmatpush.msra.mxu0 %v2153
        %2298 = vmatpush.msra.mxu0 %v2152
        %2299 = vmatpush.msra.mxu0 %v2151
        %2300 = vmatpush.msra.mxu0 %v2150
        %2301 = vmatmul.f32.gmra.mxu0 %v2283
        %v2302 = vpop.f32.mrf.mxu0
        %v2303 = vadd.f32 %v2274, %v2302
        %2304 = vdwg.mxu0
        %v2306 = vsel %vm393, %v2267, 0
        %2308 = vmatpush.msra.mxu0 0.0
        %2309 = vmatpush.msra.mxu0 0.0
        %2310 = vmatpush.msra.mxu0 0.0
        %2311 = vmatpush.msra.mxu0 0.0
        %2312 = vmatpush.msra.mxu0 0.0
        %2313 = vmatpush.msra.mxu0 0.0
        %2314 = vmatpush.msra.mxu0 0.0
        %2315 = vmatpush.msra.mxu0 0.0
        %2316 = vmatpush.msra.mxu0 0.0
        %2317 = vmatpush.msra.mxu0 0.0
        %2318 = vmatpush.msra.mxu0 0.0
        %2319 = vmatpush.msra.mxu0 0.0
        %2320 = vmatpush.msra.mxu0 %v2157
        %2321 = vmatpush.msra.mxu0 %v2156
        %2322 = vmatpush.msra.mxu0 %v2155
        %2323 = vmatpush.msra.mxu0 %v2154
        %2324 = vmatmul.f32.gmra.mxu0 %v2306
        %v2325 = vpop.f32.mrf.mxu0
        %v2326 = vadd.f32 %v2275, %v2325
        %2327 = vdwg.mxu0
        %v2329 = vsel %vm393, %v2268, 0
        %2331 = vmatpush.msra.mxu0 0.0
        %2332 = vmatpush.msra.mxu0 0.0
        %2333 = vmatpush.msra.mxu0 0.0
        %2334 = vmatpush.msra.mxu0 0.0
        %2335 = vmatpush.msra.mxu0 0.0
        %2336 = vmatpush.msra.mxu0 0.0
        %2337 = vmatpush.msra.mxu0 0.0
        %2338 = vmatpush.msra.mxu0 0.0
        %2339 = vmatpush.msra.mxu0 0.0
        %2340 = vmatpush.msra.mxu0 0.0
        %2341 = vmatpush.msra.mxu0 0.0
        %2342 = vmatpush.msra.mxu0 0.0
        %2343 = vmatpush.msra.mxu0 %v2161
        %2344 = vmatpush.msra.mxu0 %v2160
        %2345 = vmatpush.msra.mxu0 %v2159
        %2346 = vmatpush.msra.mxu0 %v2158
        %2347 = vmatmul.f32.gmra.mxu0 %v2329
        %v2348 = vpop.f32.mrf.mxu0
        %v2349 = vadd.f32 %v2276, %v2348
        %2350 = vdwg.mxu0
        %v2352 = vsel %vm393, %v2269, 0
        %2354 = vmatpush.msra.mxu0 0.0
        %2355 = vmatpush.msra.mxu0 0.0
        %2356 = vmatpush.msra.mxu0 0.0
        %2357 = vmatpush.msra.mxu0 0.0
        %2358 = vmatpush.msra.mxu0 0.0
        %2359 = vmatpush.msra.mxu0 0.0
        %2360 = vmatpush.msra.mxu0 0.0
        %2361 = vmatpush.msra.mxu0 0.0
        %2362 = vmatpush.msra.mxu0 0.0
        %2363 = vmatpush.msra.mxu0 0.0
        %2364 = vmatpush.msra.mxu0 0.0
        %2365 = vmatpush.msra.mxu0 0.0
        %2366 = vmatpush.msra.mxu0 %v2165
        %2367 = vmatpush.msra.mxu0 %v2164
        %2368 = vmatpush.msra.mxu0 %v2163
        %2369 = vmatpush.msra.mxu0 %v2162
        %2370 = vmatmul.f32.gmra.mxu0 %v2352
        %v2371 = vpop.f32.mrf.mxu0
        %v2372 = vadd.f32 %v2277, %v2371
        %2373 = vdwg.mxu0
        %v2374 = vsub.f32 %v2303, %v376
        %v2375 = vsub.f32 %v2326, %v377
        %v2376 = vsub.f32 %v2349, %v378
        %v2377 = vsub.f32 %v2372, %v379
        %v2378 = vmul.f32 %v2374, 0.0625
        %v2379 = vmul.f32 %v2375, 0.0625
        %v2380 = vmul.f32 %v2376, 0.0625
        %v2381 = vmul.f32 %v2377, 0.0625
        %2382 = vxpose.xlu0.b32.start [1/16] %v2266, 128
        %2383 = vxpose.xlu0.b32.cont [2/16] 0.0, 128
        %2384 = vxpose.xlu0.b32.cont [3/16] 0.0, 128
        %2385 = vxpose.xlu0.b32.cont [4/16] 0.0, 128
        %2386 = vxpose.xlu0.b32.cont [5/16] 0.0, 128
        %2387 = vxpose.xlu0.b32.cont [6/16] 0.0, 128
        %2388 = vxpose.xlu0.b32.cont [7/16] 0.0, 128
        %2389 = vxpose.xlu0.b32.cont [8/16] 0.0, 128
        %2390 = vxpose.xlu0.b32.cont [9/16] 0.0, 128
        %2391 = vxpose.xlu0.b32.cont [10/16] 0.0, 128
        %2392 = vxpose.xlu0.b32.cont [11/16] 0.0, 128
        %2393 = vxpose.xlu0.b32.cont [12/16] 0.0, 128
        %2394 = vxpose.xlu0.b32.cont [13/16] 0.0, 128
        %2395 = vxpose.xlu0.b32.cont [14/16] 0.0, 128
        %2396 = vxpose.xlu0.b32.cont [15/16] 0.0, 128
        %2397 = vxpose.xlu0.b32.end [16/16] 0.0, 128
        %v2398 = vpop.trf.xlu0
        %v2399 = vpop.trf.xlu0
        %v2400 = vpop.trf.xlu0
        %v2401 = vpop.trf.xlu0
        %v2402 = vpop.trf.xlu0
        %v2403 = vpop.trf.xlu0
        %v2404 = vpop.trf.xlu0
        %v2405 = vpop.trf.xlu0
        %v2406 = vpop.trf.xlu0
        %v2407 = vpop.trf.xlu0
        %v2408 = vpop.trf.xlu0
        %v2409 = vpop.trf.xlu0
        %v2410 = vpop.trf.xlu0
        %v2411 = vpop.trf.xlu0
        %v2412 = vpop.trf.xlu0
        %v2413 = vpop.trf.xlu0
        %v2415 = vsel %vm523, %v2398, 0
        %v2418 = vsel %vm523, %v2399, 0
        %v2421 = vsel %vm523, %v2400, 0
        %v2424 = vsel %vm523, %v2401, 0
        %2426 = vmatpush.msra.mxu0 0.0
        %2427 = vmatpush.msra.mxu0 0.0
        %2428 = vmatpush.msra.mxu0 0.0
        %2429 = vmatpush.msra.mxu0 0.0
        %2430 = vmatpush.msra.mxu0 0.0
        %2431 = vmatpush.msra.mxu0 0.0
        %2432 = vmatpush.msra.mxu0 0.0
        %2433 = vmatpush.msra.mxu0 0.0
        %2434 = vmatpush.msra.mxu0 0.0
        %2435 = vmatpush.msra.mxu0 0.0
        %2436 = vmatpush.msra.mxu0 0.0
        %2437 = vmatpush.msra.mxu0 0.0
        %2438 = vmatpush.msra.mxu0 0.0
        %2439 = vmatpush.msra.mxu0 0.0
        %2440 = vmatpush.msra.mxu0 0.0
        %2441 = vmatpush.msra.mxu0 %v2378
        %2442 = vmatmul.f32.gmra.mxu0 %v2415
        %v2443 = vpop.f32.mrf.mxu0
        %v2444 = vadd.f32 0.0, %v2443
        %2445 = vmatmul.f32.gmra.mxu0 %v2418
        %v2446 = vpop.f32.mrf.mxu0
        %v2447 = vadd.f32 0.0, %v2446
        %2448 = vmatmul.f32.gmra.mxu0 %v2421
        %v2449 = vpop.f32.mrf.mxu0
        %v2450 = vadd.f32 0.0, %v2449
        %2451 = vmatmul.f32.gmra.mxu0 %v2424
        %v2452 = vpop.f32.mrf.mxu0
        %v2453 = vadd.f32 0.0, %v2452
        %2454 = vdwg.mxu0
        %2455 = vxpose.xlu0.b32.start [1/16] %v2267, 128
        %2456 = vxpose.xlu0.b32.cont [2/16] 0.0, 128
        %2457 = vxpose.xlu0.b32.cont [3/16] 0.0, 128
        %2458 = vxpose.xlu0.b32.cont [4/16] 0.0, 128
        %2459 = vxpose.xlu0.b32.cont [5/16] 0.0, 128
        %2460 = vxpose.xlu0.b32.cont [6/16] 0.0, 128
        %2461 = vxpose.xlu0.b32.cont [7/16] 0.0, 128
        %2462 = vxpose.xlu0.b32.cont [8/16] 0.0, 128
        %2463 = vxpose.xlu0.b32.cont [9/16] 0.0, 128
        %2464 = vxpose.xlu0.b32.cont [10/16] 0.0, 128
        %2465 = vxpose.xlu0.b32.cont [11/16] 0.0, 128
        %2466 = vxpose.xlu0.b32.cont [12/16] 0.0, 128
        %2467 = vxpose.xlu0.b32.cont [13/16] 0.0, 128
        %2468 = vxpose.xlu0.b32.cont [14/16] 0.0, 128
        %2469 = vxpose.xlu0.b32.cont [15/16] 0.0, 128
        %2470 = vxpose.xlu0.b32.end [16/16] 0.0, 128
        %v2471 = vpop.trf.xlu0
        %v2472 = vpop.trf.xlu0
        %v2473 = vpop.trf.xlu0
        %v2474 = vpop.trf.xlu0
        %v2475 = vpop.trf.xlu0
        %v2476 = vpop.trf.xlu0
        %v2477 = vpop.trf.xlu0
        %v2478 = vpop.trf.xlu0
        %v2479 = vpop.trf.xlu0
        %v2480 = vpop.trf.xlu0
        %v2481 = vpop.trf.xlu0
        %v2482 = vpop.trf.xlu0
        %v2483 = vpop.trf.xlu0
        %v2484 = vpop.trf.xlu0
        %v2485 = vpop.trf.xlu0
        %v2486 = vpop.trf.xlu0
        %v2488 = vsel %vm523, %v2471, 0
        %v2491 = vsel %vm523, %v2472, 0
        %v2494 = vsel %vm523, %v2473, 0
        %v2497 = vsel %vm523, %v2474, 0
        %2499 = vmatpush.msra.mxu0 0.0
        %2500 = vmatpush.msra.mxu0 0.0
        %2501 = vmatpush.msra.mxu0 0.0
        %2502 = vmatpush.msra.mxu0 0.0
        %2503 = vmatpush.msra.mxu0 0.0
        %2504 = vmatpush.msra.mxu0 0.0
        %2505 = vmatpush.msra.mxu0 0.0
        %2506 = vmatpush.msra.mxu0 0.0
        %2507 = vmatpush.msra.mxu0 0.0
        %2508 = vmatpush.msra.mxu0 0.0
        %2509 = vmatpush.msra.mxu0 0.0
        %2510 = vmatpush.msra.mxu0 0.0
        %2511 = vmatpush.msra.mxu0 0.0
        %2512 = vmatpush.msra.mxu0 0.0
        %2513 = vmatpush.msra.mxu0 0.0
        %2514 = vmatpush.msra.mxu0 %v2379
        %2515 = vmatmul.f32.gmra.mxu0 %v2488
        %v2516 = vpop.f32.mrf.mxu0
        %v2517 = vadd.f32 0.0, %v2516
        %2518 = vmatmul.f32.gmra.mxu0 %v2491
        %v2519 = vpop.f32.mrf.mxu0
        %v2520 = vadd.f32 0.0, %v2519
        %2521 = vmatmul.f32.gmra.mxu0 %v2494
        %v2522 = vpop.f32.mrf.mxu0
        %v2523 = vadd.f32 0.0, %v2522
        %2524 = vmatmul.f32.gmra.mxu0 %v2497
        %v2525 = vpop.f32.mrf.mxu0
        %v2526 = vadd.f32 0.0, %v2525
        %2527 = vdwg.mxu0
        %2528 = vxpose.xlu0.b32.start [1/16] %v2268, 128
        %2529 = vxpose.xlu0.b32.cont [2/16] 0.0, 128
        %2530 = vxpose.xlu0.b32.cont [3/16] 0.0, 128
        %2531 = vxpose.xlu0.b32.cont [4/16] 0.0, 128
        %2532 = vxpose.xlu0.b32.cont [5/16] 0.0, 128
        %2533 = vxpose.xlu0.b32.cont [6/16] 0.0, 128
        %2534 = vxpose.xlu0.b32.cont [7/16] 0.0, 128
        %2535 = vxpose.xlu0.b32.cont [8/16] 0.0, 128
        %2536 = vxpose.xlu0.b32.cont [9/16] 0.0, 128
        %2537 = vxpose.xlu0.b32.cont [10/16] 0.0, 128
        %2538 = vxpose.xlu0.b32.cont [11/16] 0.0, 128
        %2539 = vxpose.xlu0.b32.cont [12/16] 0.0, 128
        %2540 = vxpose.xlu0.b32.cont [13/16] 0.0, 128
        %2541 = vxpose.xlu0.b32.cont [14/16] 0.0, 128
        %2542 = vxpose.xlu0.b32.cont [15/16] 0.0, 128
        %2543 = vxpose.xlu0.b32.end [16/16] 0.0, 128
        %v2544 = vpop.trf.xlu0
        %v2545 = vpop.trf.xlu0
        %v2546 = vpop.trf.xlu0
        %v2547 = vpop.trf.xlu0
        %v2548 = vpop.trf.xlu0
        %v2549 = vpop.trf.xlu0
        %v2550 = vpop.trf.xlu0
        %v2551 = vpop.trf.xlu0
        %v2552 = vpop.trf.xlu0
        %v2553 = vpop.trf.xlu0
        %v2554 = vpop.trf.xlu0
        %v2555 = vpop.trf.xlu0
        %v2556 = vpop.trf.xlu0
        %v2557 = vpop.trf.xlu0
        %v2558 = vpop.trf.xlu0
        %v2559 = vpop.trf.xlu0
        %v2561 = vsel %vm523, %v2544, 0
        %v2564 = vsel %vm523, %v2545, 0
        %v2567 = vsel %vm523, %v2546, 0
        %v2570 = vsel %vm523, %v2547, 0
        %2572 = vmatpush.msra.mxu0 0.0
        %2573 = vmatpush.msra.mxu0 0.0
        %2574 = vmatpush.msra.mxu0 0.0
        %2575 = vmatpush.msra.mxu0 0.0
        %2576 = vmatpush.msra.mxu0 0.0
        %2577 = vmatpush.msra.mxu0 0.0
        %2578 = vmatpush.msra.mxu0 0.0
        %2579 = vmatpush.msra.mxu0 0.0
        %2580 = vmatpush.msra.mxu0 0.0
        %2581 = vmatpush.msra.mxu0 0.0
        %2582 = vmatpush.msra.mxu0 0.0
        %2583 = vmatpush.msra.mxu0 0.0
        %2584 = vmatpush.msra.mxu0 0.0
        %2585 = vmatpush.msra.mxu0 0.0
        %2586 = vmatpush.msra.mxu0 0.0
        %2587 = vmatpush.msra.mxu0 %v2380
        %2588 = vmatmul.f32.gmra.mxu0 %v2561
        %v2589 = vpop.f32.mrf.mxu0
        %v2590 = vadd.f32 0.0, %v2589
        %2591 = vmatmul.f32.gmra.mxu0 %v2564
        %v2592 = vpop.f32.mrf.mxu0
        %v2593 = vadd.f32 0.0, %v2592
        %2594 = vmatmul.f32.gmra.mxu0 %v2567
        %v2595 = vpop.f32.mrf.mxu0
        %v2596 = vadd.f32 0.0, %v2595
        %2597 = vmatmul.f32.gmra.mxu0 %v2570
        %v2598 = vpop.f32.mrf.mxu0
        %v2599 = vadd.f32 0.0, %v2598
        %2600 = vdwg.mxu0
        %2601 = vxpose.xlu0.b32.start [1/16] %v2269, 128
        %2602 = vxpose.xlu0.b32.cont [2/16] 0.0, 128
        %2603 = vxpose.xlu0.b32.cont [3/16] 0.0, 128
        %2604 = vxpose.xlu0.b32.cont [4/16] 0.0, 128
        %2605 = vxpose.xlu0.b32.cont [5/16] 0.0, 128
        %2606 = vxpose.xlu0.b32.cont [6/16] 0.0, 128
        %2607 = vxpose.xlu0.b32.cont [7/16] 0.0, 128
        %2608 = vxpose.xlu0.b32.cont [8/16] 0.0, 128
        %2609 = vxpose.xlu0.b32.cont [9/16] 0.0, 128
        %2610 = vxpose.xlu0.b32.cont [10/16] 0.0, 128
        %2611 = vxpose.xlu0.b32.cont [11/16] 0.0, 128
        %2612 = vxpose.xlu0.b32.cont [12/16] 0.0, 128
        %2613 = vxpose.xlu0.b32.cont [13/16] 0.0, 128
        %2614 = vxpose.xlu0.b32.cont [14/16] 0.0, 128
        %2615 = vxpose.xlu0.b32.cont [15/16] 0.0, 128
        %2616 = vxpose.xlu0.b32.end [16/16] 0.0, 128
        %v2617 = vpop.trf.xlu0
        %v2618 = vpop.trf.xlu0
        %v2619 = vpop.trf.xlu0
        %v2620 = vpop.trf.xlu0
        %v2621 = vpop.trf.xlu0
        %v2622 = vpop.trf.xlu0
        %v2623 = vpop.trf.xlu0
        %v2624 = vpop.trf.xlu0
        %v2625 = vpop.trf.xlu0
        %v2626 = vpop.trf.xlu0
        %v2627 = vpop.trf.xlu0
        %v2628 = vpop.trf.xlu0
        %v2629 = vpop.trf.xlu0
        %v2630 = vpop.trf.xlu0
        %v2631 = vpop.trf.xlu0
        %v2632 = vpop.trf.xlu0
        %v2634 = vsel %vm523, %v2617, 0
        %v2637 = vsel %vm523, %v2618, 0
        %v2640 = vsel %vm523, %v2619, 0
        %v2643 = vsel %vm523, %v2620, 0
        %2645 = vmatpush.msra.mxu0 0.0
        %2646 = vmatpush.msra.mxu0 0.0
        %2647 = vmatpush.msra.mxu0 0.0
        %2648 = vmatpush.msra.mxu0 0.0
        %2649 = vmatpush.msra.mxu0 0.0
        %2650 = vmatpush.msra.mxu0 0.0
        %2651 = vmatpush.msra.mxu0 0.0
        %2652 = vmatpush.msra.mxu0 0.0
        %2653 = vmatpush.msra.mxu0 0.0
        %2654 = vmatpush.msra.mxu0 0.0
        %2655 = vmatpush.msra.mxu0 0.0
        %2656 = vmatpush.msra.mxu0 0.0
        %2657 = vmatpush.msra.mxu0 0.0
        %2658 = vmatpush.msra.mxu0 0.0
        %2659 = vmatpush.msra.mxu0 0.0
        %2660 = vmatpush.msra.mxu0 %v2381
        %2661 = vmatmul.f32.gmra.mxu0 %v2634
        %v2662 = vpop.f32.mrf.mxu0
        %v2663 = vadd.f32 0.0, %v2662
        %2664 = vmatmul.f32.gmra.mxu0 %v2637
        %v2665 = vpop.f32.mrf.mxu0
        %v2666 = vadd.f32 0.0, %v2665
        %2667 = vmatmul.f32.gmra.mxu0 %v2640
        %v2668 = vpop.f32.mrf.mxu0
        %v2669 = vadd.f32 0.0, %v2668
        %2670 = vmatmul.f32.gmra.mxu0 %v2643
        %v2671 = vpop.f32.mrf.mxu0
        %v2672 = vadd.f32 0.0, %v2671
        %2673 = vdwg.mxu0
        %v2674 = vsel %vm784, %v2378, 0.0
        %v2675 = vrot.slane %v2674, 4
        %v2676 = vadd.f32 %v2674, %v2675
        %v2677 = vrot.slane %v2676, 2
        %v2678 = vadd.f32 %v2676, %v2677
        %v2679 = vrot.slane %v2678, 1
        %v2680 = vadd.f32 %v2678, %v2679
        %v2681 = vsel %vm784, %v2379, 0.0
        %v2682 = vrot.slane %v2681, 4
        %v2683 = vadd.f32 %v2681, %v2682
        %v2684 = vrot.slane %v2683, 2
        %v2685 = vadd.f32 %v2683, %v2684
        %v2686 = vrot.slane %v2685, 1
        %v2687 = vadd.f32 %v2685, %v2686
        %v2688 = vsel %vm784, %v2380, 0.0
        %v2689 = vrot.slane %v2688, 4
        %v2690 = vadd.f32 %v2688, %v2689
        %v2691 = vrot.slane %v2690, 2
        %v2692 = vadd.f32 %v2690, %v2691
        %v2693 = vrot.slane %v2692, 1
        %v2694 = vadd.f32 %v2692, %v2693
        %v2695 = vsel %vm784, %v2381, 0.0
        %v2696 = vrot.slane %v2695, 4
        %v2697 = vadd.f32 %v2695, %v2696
        %v2698 = vrot.slane %v2697, 2
        %v2699 = vadd.f32 %v2697, %v2698
        %v2700 = vrot.slane %v2699, 1
        %v2701 = vadd.f32 %v2699, %v2700
        %v2703 = vsel %vm784, %v2378, 0
        %v2706 = vsel %vm784, %v2150, 0
        %v2709 = vsel %vm784, %v2151, 0
        %v2712 = vsel %vm784, %v2152, 0
        %v2715 = vsel %vm784, %v2153, 0
        %2717 = vmatpush.xpose.msra.mxu0 0.0
        %2718 = vmatpush.xpose.msra.mxu0 0.0
        %2719 = vmatpush.xpose.msra.mxu0 0.0
        %2720 = vmatpush.xpose.msra.mxu0 0.0
        %2721 = vmatpush.xpose.msra.mxu0 0.0
        %2722 = vmatpush.xpose.msra.mxu0 0.0
        %2723 = vmatpush.xpose.msra.mxu0 0.0
        %2724 = vmatpush.xpose.msra.mxu0 0.0
        %2725 = vmatpush.xpose.msra.mxu0 0.0
        %2726 = vmatpush.xpose.msra.mxu0 0.0
        %2727 = vmatpush.xpose.msra.mxu0 0.0
        %2728 = vmatpush.xpose.msra.mxu0 0.0
        %2729 = vmatpush.xpose.msra.mxu0 %v2715
        %2730 = vmatpush.xpose.msra.mxu0 %v2712
        %2731 = vmatpush.xpose.msra.mxu0 %v2709
        %2732 = vmatpush.xpose.msra.mxu0 %v2706
        %2733 = vmatmul.f32.gmra.mxu0 %v2703
        %v2734 = vpop.f32.mrf.mxu0
        %v2735 = vadd.f32 0.0, %v2734
        %2736 = vdwg.mxu0
        %v2738 = vsel %vm784, %v2379, 0
        %v2741 = vsel %vm784, %v2154, 0
        %v2744 = vsel %vm784, %v2155, 0
        %v2747 = vsel %vm784, %v2156, 0
        %v2750 = vsel %vm784, %v2157, 0
        %2752 = vmatpush.xpose.msra.mxu0 0.0
        %2753 = vmatpush.xpose.msra.mxu0 0.0
        %2754 = vmatpush.xpose.msra.mxu0 0.0
        %2755 = vmatpush.xpose.msra.mxu0 0.0
        %2756 = vmatpush.xpose.msra.mxu0 0.0
        %2757 = vmatpush.xpose.msra.mxu0 0.0
        %2758 = vmatpush.xpose.msra.mxu0 0.0
        %2759 = vmatpush.xpose.msra.mxu0 0.0
        %2760 = vmatpush.xpose.msra.mxu0 0.0
        %2761 = vmatpush.xpose.msra.mxu0 0.0
        %2762 = vmatpush.xpose.msra.mxu0 0.0
        %2763 = vmatpush.xpose.msra.mxu0 0.0
        %2764 = vmatpush.xpose.msra.mxu0 %v2750
        %2765 = vmatpush.xpose.msra.mxu0 %v2747
        %2766 = vmatpush.xpose.msra.mxu0 %v2744
        %2767 = vmatpush.xpose.msra.mxu0 %v2741
        %2768 = vmatmul.f32.gmra.mxu0 %v2738
        %v2769 = vpop.f32.mrf.mxu0
        %v2770 = vadd.f32 0.0, %v2769
        %2771 = vdwg.mxu0
        %v2773 = vsel %vm784, %v2380, 0
        %v2776 = vsel %vm784, %v2158, 0
        %v2779 = vsel %vm784, %v2159, 0
        %v2782 = vsel %vm784, %v2160, 0
        %v2785 = vsel %vm784, %v2161, 0
        %2787 = vmatpush.xpose.msra.mxu0 0.0
        %2788 = vmatpush.xpose.msra.mxu0 0.0
        %2789 = vmatpush.xpose.msra.mxu0 0.0
        %2790 = vmatpush.xpose.msra.mxu0 0.0
        %2791 = vmatpush.xpose.msra.mxu0 0.0
        %2792 = vmatpush.xpose.msra.mxu0 0.0
        %2793 = vmatpush.xpose.msra.mxu0 0.0
        %2794 = vmatpush.xpose.msra.mxu0 0.0
        %2795 = vmatpush.xpose.msra.mxu0 0.0
        %2796 = vmatpush.xpose.msra.mxu0 0.0
        %2797 = vmatpush.xpose.msra.mxu0 0.0
        %2798 = vmatpush.xpose.msra.mxu0 0.0
        %2799 = vmatpush.xpose.msra.mxu0 %v2785
        %2800 = vmatpush.xpose.msra.mxu0 %v2782
        %2801 = vmatpush.xpose.msra.mxu0 %v2779
        %2802 = vmatpush.xpose.msra.mxu0 %v2776
        %2803 = vmatmul.f32.gmra.mxu0 %v2773
        %v2804 = vpop.f32.mrf.mxu0
        %v2805 = vadd.f32 0.0, %v2804
        %2806 = vdwg.mxu0
        %v2808 = vsel %vm784, %v2381, 0
        %v2811 = vsel %vm784, %v2162, 0
        %v2814 = vsel %vm784, %v2163, 0
        %v2817 = vsel %vm784, %v2164, 0
        %v2820 = vsel %vm784, %v2165, 0
        %2822 = vmatpush.xpose.msra.mxu0 0.0
        %2823 = vmatpush.xpose.msra.mxu0 0.0
        %2824 = vmatpush.xpose.msra.mxu0 0.0
        %2825 = vmatpush.xpose.msra.mxu0 0.0
        %2826 = vmatpush.xpose.msra.mxu0 0.0
        %2827 = vmatpush.xpose.msra.mxu0 0.0
        %2828 = vmatpush.xpose.msra.mxu0 0.0
        %2829 = vmatpush.xpose.msra.mxu0 0.0
        %2830 = vmatpush.xpose.msra.mxu0 0.0
        %2831 = vmatpush.xpose.msra.mxu0 0.0
        %2832 = vmatpush.xpose.msra.mxu0 0.0
        %2833 = vmatpush.xpose.msra.mxu0 0.0
        %2834 = vmatpush.xpose.msra.mxu0 %v2820
        %2835 = vmatpush.xpose.msra.mxu0 %v2817
        %2836 = vmatpush.xpose.msra.mxu0 %v2814
        %2837 = vmatpush.xpose.msra.mxu0 %v2811
        %2838 = vmatmul.f32.gmra.mxu0 %v2808
        %v2839 = vpop.f32.mrf.mxu0
        %v2840 = vadd.f32 0.0, %v2839
        %2841 = vdwg.mxu0
        %vm2842 = vcmp.gt.f32.partialorder %v2204, 0.0
        %vm2843 = vcmp.gt.f32.partialorder %v2224, 0.0
        %vm2844 = vcmp.gt.f32.partialorder %v2244, 0.0
        %vm2845 = vcmp.gt.f32.partialorder %v2264, 0.0
        %v2846 = vsel %vm2842, %v2735, 0.0
        %v2847 = vsel %vm2843, %v2770, 0.0
        %v2848 = vsel %vm2844, %v2805, 0.0
        %v2849 = vsel %vm2845, %v2840, 0.0
        %2850 = vmatpush.msra.mxu0 0.0
        %2851 = vmatpush.msra.mxu0 0.0
        %2852 = vmatpush.msra.mxu0 0.0
        %2853 = vmatpush.msra.mxu0 0.0
        %2854 = vmatpush.msra.mxu0 0.0
        %2855 = vmatpush.msra.mxu0 0.0
        %2856 = vmatpush.msra.mxu0 0.0
        %2857 = vmatpush.msra.mxu0 0.0
        %2858 = vmatpush.msra.mxu0 0.0
        %2859 = vmatpush.msra.mxu0 0.0
        %2860 = vmatpush.msra.mxu0 0.0
        %2861 = vmatpush.msra.mxu0 0.0
        %2862 = vmatpush.msra.mxu0 0.0
        %2863 = vmatpush.msra.mxu0 0.0
        %2864 = vmatpush.msra.mxu0 0.0
        %2865 = vmatpush.msra.mxu0 %v2846
        %2866 = vmatmul.f32.gmra.mxu0 %v907
        %v2867 = vpop.f32.mrf.mxu0
        %v2868 = vadd.f32 0.0, %v2867
        %2869 = vmatmul.f32.gmra.mxu0 %v910
        %v2870 = vpop.f32.mrf.mxu0
        %v2871 = vadd.f32 0.0, %v2870
        %2872 = vmatmul.f32.gmra.mxu0 %v913
        %v2873 = vpop.f32.mrf.mxu0
        %v2874 = vadd.f32 0.0, %v2873
        %2875 = vmatmul.f32.gmra.mxu0 %v916
        %v2876 = vpop.f32.mrf.mxu0
        %v2877 = vadd.f32 0.0, %v2876
        %2878 = vdwg.mxu0
        %2879 = vmatpush.msra.mxu0 0.0
        %2880 = vmatpush.msra.mxu0 0.0
        %2881 = vmatpush.msra.mxu0 0.0
        %2882 = vmatpush.msra.mxu0 0.0
        %2883 = vmatpush.msra.mxu0 0.0
        %2884 = vmatpush.msra.mxu0 0.0
        %2885 = vmatpush.msra.mxu0 0.0
        %2886 = vmatpush.msra.mxu0 0.0
        %2887 = vmatpush.msra.mxu0 0.0
        %2888 = vmatpush.msra.mxu0 0.0
        %2889 = vmatpush.msra.mxu0 0.0
        %2890 = vmatpush.msra.mxu0 0.0
        %2891 = vmatpush.msra.mxu0 0.0
        %2892 = vmatpush.msra.mxu0 0.0
        %2893 = vmatpush.msra.mxu0 0.0
        %2894 = vmatpush.msra.mxu0 %v2847
        %2895 = vmatmul.f32.gmra.mxu0 %v980
        %v2896 = vpop.f32.mrf.mxu0
        %v2897 = vadd.f32 0.0, %v2896
        %2898 = vmatmul.f32.gmra.mxu0 %v983
        %v2899 = vpop.f32.mrf.mxu0
        %v2900 = vadd.f32 0.0, %v2899
        %2901 = vmatmul.f32.gmra.mxu0 %v986
        %v2902 = vpop.f32.mrf.mxu0
        %v2903 = vadd.f32 0.0, %v2902
        %2904 = vmatmul.f32.gmra.mxu0 %v989
        %v2905 = vpop.f32.mrf.mxu0
        %v2906 = vadd.f32 0.0, %v2905
        %2907 = vdwg.mxu0
        %2908 = vmatpush.msra.mxu0 0.0
        %2909 = vmatpush.msra.mxu0 0.0
        %2910 = vmatpush.msra.mxu0 0.0
        %2911 = vmatpush.msra.mxu0 0.0
        %2912 = vmatpush.msra.mxu0 0.0
        %2913 = vmatpush.msra.mxu0 0.0
        %2914 = vmatpush.msra.mxu0 0.0
        %2915 = vmatpush.msra.mxu0 0.0
        %2916 = vmatpush.msra.mxu0 0.0
        %2917 = vmatpush.msra.mxu0 0.0
        %2918 = vmatpush.msra.mxu0 0.0
        %2919 = vmatpush.msra.mxu0 0.0
        %2920 = vmatpush.msra.mxu0 0.0
        %2921 = vmatpush.msra.mxu0 0.0
        %2922 = vmatpush.msra.mxu0 0.0
        %2923 = vmatpush.msra.mxu0 %v2848
        %2924 = vmatmul.f32.gmra.mxu0 %v1053
        %v2925 = vpop.f32.mrf.mxu0
        %v2926 = vadd.f32 0.0, %v2925
        %2927 = vmatmul.f32.gmra.mxu0 %v1056
        %v2928 = vpop.f32.mrf.mxu0
        %v2929 = vadd.f32 0.0, %v2928
        %2930 = vmatmul.f32.gmra.mxu0 %v1059
        %v2931 = vpop.f32.mrf.mxu0
        %v2932 = vadd.f32 0.0, %v2931
        %2933 = vmatmul.f32.gmra.mxu0 %v1062
        %v2934 = vpop.f32.mrf.mxu0
        %v2935 = vadd.f32 0.0, %v2934
        %2936 = vdwg.mxu0
        %2937 = vmatpush.msra.mxu0 0.0
        %2938 = vmatpush.msra.mxu0 0.0
        %2939 = vmatpush.msra.mxu0 0.0
        %2940 = vmatpush.msra.mxu0 0.0
        %2941 = vmatpush.msra.mxu0 0.0
        %2942 = vmatpush.msra.mxu0 0.0
        %2943 = vmatpush.msra.mxu0 0.0
        %2944 = vmatpush.msra.mxu0 0.0
        %2945 = vmatpush.msra.mxu0 0.0
        %2946 = vmatpush.msra.mxu0 0.0
        %2947 = vmatpush.msra.mxu0 0.0
        %2948 = vmatpush.msra.mxu0 0.0
        %2949 = vmatpush.msra.mxu0 0.0
        %2950 = vmatpush.msra.mxu0 0.0
        %2951 = vmatpush.msra.mxu0 0.0
        %2952 = vmatpush.msra.mxu0 %v2849
        %2953 = vmatmul.f32.gmra.mxu0 %v1126
        %v2954 = vpop.f32.mrf.mxu0
        %v2955 = vadd.f32 0.0, %v2954
        %2956 = vmatmul.f32.gmra.mxu0 %v1129
        %v2957 = vpop.f32.mrf.mxu0
        %v2958 = vadd.f32 0.0, %v2957
        %2959 = vmatmul.f32.gmra.mxu0 %v1132
        %v2960 = vpop.f32.mrf.mxu0
        %v2961 = vadd.f32 0.0, %v2960
        %2962 = vmatmul.f32.gmra.mxu0 %v1135
        %v2963 = vpop.f32.mrf.mxu0
        %v2964 = vadd.f32 0.0, %v2963
        %2965 = vdwg.mxu0
        %v2966 = vsel %vm393, %v2846, 0.0
        %v2967 = vrot.slane %v2966, 4
        %v2968 = vadd.f32 %v2966, %v2967
        %v2969 = vrot.slane %v2968, 2
        %v2970 = vadd.f32 %v2968, %v2969
        %v2971 = vrot.slane %v2970, 1
        %v2972 = vadd.f32 %v2970, %v2971
        %v2973 = vsel %vm393, %v2847, 0.0
        %v2974 = vrot.slane %v2973, 4
        %v2975 = vadd.f32 %v2973, %v2974
        %v2976 = vrot.slane %v2975, 2
        %v2977 = vadd.f32 %v2975, %v2976
        %v2978 = vrot.slane %v2977, 1
        %v2979 = vadd.f32 %v2977, %v2978
        %v2980 = vsel %vm393, %v2848, 0.0
        %v2981 = vrot.slane %v2980, 4
        %v2982 = vadd.f32 %v2980, %v2981
        %v2983 = vrot.slane %v2982, 2
        %v2984 = vadd.f32 %v2982, %v2983
        %v2985 = vrot.slane %v2984, 1
        %v2986 = vadd.f32 %v2984, %v2985
        %v2987 = vsel %vm393, %v2849, 0.0
        %v2988 = vrot.slane %v2987, 4
        %v2989 = vadd.f32 %v2987, %v2988
        %v2990 = vrot.slane %v2989, 2
        %v2991 = vadd.f32 %v2989, %v2990
        %v2992 = vrot.slane %v2991, 1
        %v2993 = vadd.f32 %v2991, %v2992
        %v2994 = vmul.f32 %v2868, 0.01
        %v2995 = vmul.f32 %v2871, 0.01
        %v2996 = vmul.f32 %v2874, 0.01
        %v2997 = vmul.f32 %v2877, 0.01
        %v2998 = vmul.f32 %v2897, 0.01
        %v2999 = vmul.f32 %v2900, 0.01
        %v3000 = vmul.f32 %v2903, 0.01
        %v3001 = vmul.f32 %v2906, 0.01
        %v3002 = vmul.f32 %v2926, 0.01
        %v3003 = vmul.f32 %v2929, 0.01
        %v3004 = vmul.f32 %v2932, 0.01
        %v3005 = vmul.f32 %v2935, 0.01
        %v3006 = vmul.f32 %v2955, 0.01
        %v3007 = vmul.f32 %v2958, 0.01
        %v3008 = vmul.f32 %v2961, 0.01
        %v3009 = vmul.f32 %v2964, 0.01
        %v3010 = vsub.f32 %v2110, %v2994
        %v3011 = vsub.f32 %v2111, %v2995
        %v3012 = vsub.f32 %v2112, %v2996
        %v3013 = vsub.f32 %v2113, %v2997
        %v3014 = vsub.f32 %v2114, %v2998
        %v3015 = vsub.f32 %v2115, %v2999
        %v3016 = vsub.f32 %v2116, %v3000
        %v3017 = vsub.f32 %v2117, %v3001
        %v3018 = vsub.f32 %v2118, %v3002
        %v3019 = vsub.f32 %v2119, %v3003
        %v3020 = vsub.f32 %v2120, %v3004
        %v3021 = vsub.f32 %v2121, %v3005
        %v3022 = vsub.f32 %v2122, %v3006
        %v3023 = vsub.f32 %v2123, %v3007
        %v3024 = vsub.f32 %v2124, %v3008
        %v3025 = vsub.f32 %v2125, %v3009
        %v3026 = vmul.f32 %v2972, 0.01
        %v3027 = vmul.f32 %v2979, 0.01
        %v3028 = vmul.f32 %v2986, 0.01
        %v3029 = vmul.f32 %v2993, 0.01
        %v3030 = vsub.f32 %v2130, %v3026
        %v3031 = vsub.f32 %v2131, %v3027
        %v3032 = vsub.f32 %v2132, %v3028
        %v3033 = vsub.f32 %v2133, %v3029
        %v3034 = vmul.f32 %v2444, 0.01
        %v3035 = vmul.f32 %v2447, 0.01
        %v3036 = vmul.f32 %v2450, 0.01
        %v3037 = vmul.f32 %v2453, 0.01
        %v3038 = vmul.f32 %v2517, 0.01
        %v3039 = vmul.f32 %v2520, 0.01
        %v3040 = vmul.f32 %v2523, 0.01
        %v3041 = vmul.f32 %v2526, 0.01
        %v3042 = vmul.f32 %v2590, 0.01
        %v3043 = vmul.f32 %v2593, 0.01
        %v3044 = vmul.f32 %v2596, 0.01
        %v3045 = vmul.f32 %v2599, 0.01
        %v3046 = vmul.f32 %v2663, 0.01
        %v3047 = vmul.f32 %v2666, 0.01
        %v3048 = vmul.f32 %v2669, 0.01
        %v3049 = vmul.f32 %v2672, 0.01
        %v3050 = vsub.f32 %v2150, %v3034
        %v3051 = vsub.f32 %v2151, %v3035
        %v3052 = vsub.f32 %v2152, %v3036
        %v3053 = vsub.f32 %v2153, %v3037
        %v3054 = vsub.f32 %v2154, %v3038
        %v3055 = vsub.f32 %v2155, %v3039
        %v3056 = vsub.f32 %v2156, %v3040
        %v3057 = vsub.f32 %v2157, %v3041
        %v3058 = vsub.f32 %v2158, %v3042
        %v3059 = vsub.f32 %v2159, %v3043
        %v3060 = vsub.f32 %v2160, %v3044
        %v3061 = vsub.f32 %v2161, %v3045
        %v3062 = vsub.f32 %v2162, %v3046
        %v3063 = vsub.f32 %v2163, %v3047
        %v3064 = vsub.f32 %v2164, %v3048
        %v3065 = vsub.f32 %v2165, %v3049
        %v3066 = vmul.f32 %v2680, 0.01
        %v3067 = vmul.f32 %v2687, 0.01
        %v3068 = vmul.f32 %v2694, 0.01
        %v3069 = vmul.f32 %v2701, 0.01
        %v3070 = vsub.f32 %v2170, %v3066
        %v3071 = vsub.f32 %v2171, %v3067
        %v3072 = vsub.f32 %v2172, %v3068
        %v3073 = vsub.f32 %v2173, %v3069
        %v3074 = vld [vmem:[%s364] sm:$0xff]
        %v3075 = vld [vmem:[%s364 + $0x8] sm:$0xff]
        %v3076 = vld [vmem:[%s364 + $0x10] sm:$0xff]
        %v3077 = vld [vmem:[%s364 + $0x18] sm:$0xff]
        %v3078 = vld [vmem:[%s370] sm:$0xff]
        %v3079 = vld [vmem:[%s370 + $0x8] sm:$0xff]
        %v3080 = vld [vmem:[%s370 + $0x10] sm:$0xff]
        %v3081 = vld [vmem:[%s370 + $0x18] sm:$0xff]
        %v3086 = vperm.slane %v3030, 0
        %v3087 = vperm.slane %v3031, 0
        %v3088 = vperm.slane %v3032, 0
        %v3089 = vperm.slane %v3033, 0
        %v3095 = vsel %vm393, %v3074, 0
        %3097 = vmatpush.msra.mxu0 0.0
        %3098 = vmatpush.msra.mxu0 0.0
        %3099 = vmatpush.msra.mxu0 0.0
        %3100 = vmatpush.msra.mxu0 0.0
        %3101 = vmatpush.msra.mxu0 0.0
        %3102 = vmatpush.msra.mxu0 0.0
        %3103 = vmatpush.msra.mxu0 0.0
        %3104 = vmatpush.msra.mxu0 0.0
        %3105 = vmatpush.msra.mxu0 0.0
        %3106 = vmatpush.msra.mxu0 0.0
        %3107 = vmatpush.msra.mxu0 0.0
        %3108 = vmatpush.msra.mxu0 0.0
        %3109 = vmatpush.msra.mxu0 %v3013
        %3110 = vmatpush.msra.mxu0 %v3012
        %3111 = vmatpush.msra.mxu0 %v3011
        %3112 = vmatpush.msra.mxu0 %v3010
        %3113 = vmatmul.f32.gmra.mxu0 %v3095
        %v3114 = vpop.f32.mrf.mxu0
        %v3115 = vadd.f32 %v3086, %v3114
        %3116 = vdwg.mxu0
        %v3118 = vsel %vm393, %v3075, 0
        %3120 = vmatpush.msra.mxu0 0.0
        %3121 = vmatpush.msra.mxu0 0.0
        %3122 = vmatpush.msra.mxu0 0.0
        %3123 = vmatpush.msra.mxu0 0.0
        %3124 = vmatpush.msra.mxu0 0.0
        %3125 = vmatpush.msra.mxu0 0.0
        %3126 = vmatpush.msra.mxu0 0.0
        %3127 = vmatpush.msra.mxu0 0.0
        %3128 = vmatpush.msra.mxu0 0.0
        %3129 = vmatpush.msra.mxu0 0.0
        %3130 = vmatpush.msra.mxu0 0.0
        %3131 = vmatpush.msra.mxu0 0.0
        %3132 = vmatpush.msra.mxu0 %v3017
        %3133 = vmatpush.msra.mxu0 %v3016
        %3134 = vmatpush.msra.mxu0 %v3015
        %3135 = vmatpush.msra.mxu0 %v3014
        %3136 = vmatmul.f32.gmra.mxu0 %v3118
        %v3137 = vpop.f32.mrf.mxu0
        %v3138 = vadd.f32 %v3087, %v3137
        %3139 = vdwg.mxu0
        %v3141 = vsel %vm393, %v3076, 0
        %3143 = vmatpush.msra.mxu0 0.0
        %3144 = vmatpush.msra.mxu0 0.0
        %3145 = vmatpush.msra.mxu0 0.0
        %3146 = vmatpush.msra.mxu0 0.0
        %3147 = vmatpush.msra.mxu0 0.0
        %3148 = vmatpush.msra.mxu0 0.0
        %3149 = vmatpush.msra.mxu0 0.0
        %3150 = vmatpush.msra.mxu0 0.0
        %3151 = vmatpush.msra.mxu0 0.0
        %3152 = vmatpush.msra.mxu0 0.0
        %3153 = vmatpush.msra.mxu0 0.0
        %3154 = vmatpush.msra.mxu0 0.0
        %3155 = vmatpush.msra.mxu0 %v3021
        %3156 = vmatpush.msra.mxu0 %v3020
        %3157 = vmatpush.msra.mxu0 %v3019
        %3158 = vmatpush.msra.mxu0 %v3018
        %3159 = vmatmul.f32.gmra.mxu0 %v3141
        %v3160 = vpop.f32.mrf.mxu0
        %v3161 = vadd.f32 %v3088, %v3160
        %3162 = vdwg.mxu0
        %v3164 = vsel %vm393, %v3077, 0
        %3166 = vmatpush.msra.mxu0 0.0
        %3167 = vmatpush.msra.mxu0 0.0
        %3168 = vmatpush.msra.mxu0 0.0
        %3169 = vmatpush.msra.mxu0 0.0
        %3170 = vmatpush.msra.mxu0 0.0
        %3171 = vmatpush.msra.mxu0 0.0
        %3172 = vmatpush.msra.mxu0 0.0
        %3173 = vmatpush.msra.mxu0 0.0
        %3174 = vmatpush.msra.mxu0 0.0
        %3175 = vmatpush.msra.mxu0 0.0
        %3176 = vmatpush.msra.mxu0 0.0
        %3177 = vmatpush.msra.mxu0 0.0
        %3178 = vmatpush.msra.mxu0 %v3025
        %3179 = vmatpush.msra.mxu0 %v3024
        %3180 = vmatpush.msra.mxu0 %v3023
        %3181 = vmatpush.msra.mxu0 %v3022
        %3182 = vmatmul.f32.gmra.mxu0 %v3164
        %v3183 = vpop.f32.mrf.mxu0
        %v3184 = vadd.f32 %v3089, %v3183
        %3185 = vdwg.mxu0
        %v3186 = vmax.f32 %v3115, 0.0
        %v3187 = vmax.f32 %v3138, 0.0
        %v3188 = vmax.f32 %v3161, 0.0
        %v3189 = vmax.f32 %v3184, 0.0
        %v3194 = vperm.slane %v3070, 0
        %v3195 = vperm.slane %v3071, 0
        %v3196 = vperm.slane %v3072, 0
        %v3197 = vperm.slane %v3073, 0
        %v3203 = vsel %vm393, %v3186, 0
        %3205 = vmatpush.msra.mxu0 0.0
        %3206 = vmatpush.msra.mxu0 0.0
        %3207 = vmatpush.msra.mxu0 0.0
        %3208 = vmatpush.msra.mxu0 0.0
        %3209 = vmatpush.msra.mxu0 0.0
        %3210 = vmatpush.msra.mxu0 0.0
        %3211 = vmatpush.msra.mxu0 0.0
        %3212 = vmatpush.msra.mxu0 0.0
        %3213 = vmatpush.msra.mxu0 0.0
        %3214 = vmatpush.msra.mxu0 0.0
        %3215 = vmatpush.msra.mxu0 0.0
        %3216 = vmatpush.msra.mxu0 0.0
        %3217 = vmatpush.msra.mxu0 %v3053
        %3218 = vmatpush.msra.mxu0 %v3052
        %3219 = vmatpush.msra.mxu0 %v3051
        %3220 = vmatpush.msra.mxu0 %v3050
        %3221 = vmatmul.f32.gmra.mxu0 %v3203
        %v3222 = vpop.f32.mrf.mxu0
        %v3223 = vadd.f32 %v3194, %v3222
        %3224 = vdwg.mxu0
        %v3226 = vsel %vm393, %v3187, 0
        %3228 = vmatpush.msra.mxu0 0.0
        %3229 = vmatpush.msra.mxu0 0.0
        %3230 = vmatpush.msra.mxu0 0.0
        %3231 = vmatpush.msra.mxu0 0.0
        %3232 = vmatpush.msra.mxu0 0.0
        %3233 = vmatpush.msra.mxu0 0.0
        %3234 = vmatpush.msra.mxu0 0.0
        %3235 = vmatpush.msra.mxu0 0.0
        %3236 = vmatpush.msra.mxu0 0.0
        %3237 = vmatpush.msra.mxu0 0.0
        %3238 = vmatpush.msra.mxu0 0.0
        %3239 = vmatpush.msra.mxu0 0.0
        %3240 = vmatpush.msra.mxu0 %v3057
        %3241 = vmatpush.msra.mxu0 %v3056
        %3242 = vmatpush.msra.mxu0 %v3055
        %3243 = vmatpush.msra.mxu0 %v3054
        %3244 = vmatmul.f32.gmra.mxu0 %v3226
        %v3245 = vpop.f32.mrf.mxu0
        %v3246 = vadd.f32 %v3195, %v3245
        %3247 = vdwg.mxu0
        %v3249 = vsel %vm393, %v3188, 0
        %3251 = vmatpush.msra.mxu0 0.0
        %3252 = vmatpush.msra.mxu0 0.0
        %3253 = vmatpush.msra.mxu0 0.0
        %3254 = vmatpush.msra.mxu0 0.0
        %3255 = vmatpush.msra.mxu0 0.0
        %3256 = vmatpush.msra.mxu0 0.0
        %3257 = vmatpush.msra.mxu0 0.0
        %3258 = vmatpush.msra.mxu0 0.0
        %3259 = vmatpush.msra.mxu0 0.0
        %3260 = vmatpush.msra.mxu0 0.0
        %3261 = vmatpush.msra.mxu0 0.0
        %3262 = vmatpush.msra.mxu0 0.0
        %3263 = vmatpush.msra.mxu0 %v3061
        %3264 = vmatpush.msra.mxu0 %v3060
        %3265 = vmatpush.msra.mxu0 %v3059
        %3266 = vmatpush.msra.mxu0 %v3058
        %3267 = vmatmul.f32.gmra.mxu0 %v3249
        %v3268 = vpop.f32.mrf.mxu0
        %v3269 = vadd.f32 %v3196, %v3268
        %3270 = vdwg.mxu0
        %v3272 = vsel %vm393, %v3189, 0
        %3274 = vmatpush.msra.mxu0 0.0
        %3275 = vmatpush.msra.mxu0 0.0
        %3276 = vmatpush.msra.mxu0 0.0
        %3277 = vmatpush.msra.mxu0 0.0
        %3278 = vmatpush.msra.mxu0 0.0
        %3279 = vmatpush.msra.mxu0 0.0
        %3280 = vmatpush.msra.mxu0 0.0
        %3281 = vmatpush.msra.mxu0 0.0
        %3282 = vmatpush.msra.mxu0 0.0
        %3283 = vmatpush.msra.mxu0 0.0
        %3284 = vmatpush.msra.mxu0 0.0
        %3285 = vmatpush.msra.mxu0 0.0
        %3286 = vmatpush.msra.mxu0 %v3065
        %3287 = vmatpush.msra.mxu0 %v3064
        %3288 = vmatpush.msra.mxu0 %v3063
        %3289 = vmatpush.msra.mxu0 %v3062
        %3290 = vmatmul.f32.gmra.mxu0 %v3272
        %v3291 = vpop.f32.mrf.mxu0
        %v3292 = vadd.f32 %v3197, %v3291
        %3293 = vdwg.mxu0
        %v3294 = vsub.f32 %v3223, %v3078
        %v3295 = vsub.f32 %v3246, %v3079
        %v3296 = vsub.f32 %v3269, %v3080
        %v3297 = vsub.f32 %v3292, %v3081
        %v3298 = vmul.f32 %v3294, %v3294
        %v3299 = vmul.f32 %v3295, %v3295
        %v3300 = vmul.f32 %v3296, %v3296
        %v3301 = vmul.f32 %v3297, %v3297
        %v3302 = vsel %vm784, %v3298, 0.0
        %3303 = vadd.xlane.f32.xlu0 %v3302
        %v3304 = vpop.xlane.xlu0 %3303
        %v3305 = vsel %vm784, %v3299, 0.0
        %3306 = vadd.xlane.f32.xlu0 %v3305
        %v3307 = vpop.xlane.xlu0 %3306
        %v3308 = vsel %vm784, %v3300, 0.0
        %3309 = vadd.xlane.f32.xlu0 %v3308
        %v3310 = vpop.xlane.xlu0 %3309
        %v3311 = vsel %vm784, %v3301, 0.0
        %3312 = vadd.xlane.f32.xlu0 %v3311
        %v3313 = vpop.xlane.xlu0 %3312
        %v3318 = vlaneseq
        %v3319 = vand.u32 %v3318, 127
        %v3320 = vperm.slane %v3304, %v3319
        %v3321 = vperm.slane %v3307, %v3319
        %v3322 = vperm.slane %v3310, %v3319
        %v3323 = vperm.slane %v3313, %v3319
        %vm3324 = vcmask 1041409
        %v3325 = vsel %vm3324, %v3321, %v3320
        %vm3326 = vcmask 1042434
        %v3327 = vsel %vm3326, %v3322, %v3325
        %vm3328 = vcmask 1043459
        %v3329 = vsel %vm3328, %v3323, %v3327
        %vm3331 = vcmask 60416
        %v3332 = vsel %vm3331, %v3329, 0.0
        %3333 = vadd.xlane.f32.xlu0 %v3332
        %v3334 = vpop.xlane.xlu0 %3333
        %v3335 = vand.u32 2147483647, %v3294
        %v3336 = vand.u32 2147483647, %v3295
        %v3337 = vand.u32 2147483647, %v3296
        %v3338 = vand.u32 2147483647, %v3297
        %v3339 = vsel %vm784, %v3335, 0.0
        %3340 = vadd.xlane.f32.xlu0 %v3339
        %v3341 = vpop.xlane.xlu0 %3340
        %v3342 = vsel %vm784, %v3336, 0.0
        %3343 = vadd.xlane.f32.xlu0 %v3342
        %v3344 = vpop.xlane.xlu0 %3343
        %v3345 = vsel %vm784, %v3337, 0.0
        %3346 = vadd.xlane.f32.xlu0 %v3345
        %v3347 = vpop.xlane.xlu0 %3346
        %v3348 = vsel %vm784, %v3338, 0.0
        %3349 = vadd.xlane.f32.xlu0 %v3348
        %v3350 = vpop.xlane.xlu0 %3349
        %v3355 = vperm.slane %v3341, %v3319
        %v3356 = vperm.slane %v3344, %v3319
        %v3357 = vperm.slane %v3347, %v3319
        %v3358 = vperm.slane %v3350, %v3319
        %v3359 = vsel %vm3324, %v3356, %v3355
        %v3360 = vsel %vm3326, %v3357, %v3359
        %v3361 = vsel %vm3328, %v3358, %v3360
        %v3363 = vsel %vm3331, %v3361, 0.0
        %3364 = vadd.xlane.f32.xlu0 %v3363
        %v3365 = vpop.xlane.xlu0 %3364
        %v3366 = vlaneseq
        %v3367 = vshrl.u32 %v3366, 7
        %vm3368 = vcmp.eq.s32.totalorder %v3319, %v3367
        %v3369 = vmul.f32 %v3334, 0.03125
        %v3370 = vsel %vm3368, %v3369, 0.0
        %vm3371 = vcmask 1043456
        %v3372 = vsel %vm3371, %v3370, 0.0
        %v3373 = vrot.slane %v3372, 4
        %v3374 = vadd.f32 %v3372, %v3373
        %v3375 = vrot.slane %v3374, 2
        %v3376 = vadd.f32 %v3374, %v3375
        %v3377 = vrot.slane %v3376, 1
        %v3378 = vadd.f32 %v3376, %v3377
        %v3379 = vmul.f32 %v3365, 0.03125
        %v3380 = vsel %vm3368, %v3379, 0.0
        %v3381 = vsel %vm3371, %v3380, 0.0
        %v3382 = vrot.slane %v3381, 4
        %v3383 = vadd.f32 %v3381, %v3382
        %v3384 = vrot.slane %v3383, 2
        %v3385 = vadd.f32 %v3383, %v3384
        %v3386 = vrot.slane %v3385, 1
        %v3387 = vadd.f32 %v3385, %v3386
        %vm3388 = vcmask 1040384
        %v3389 = vsel %vm3388, %v3378, %v3387
        %3390 = vst [vmem:[%s347] sm:$0x3] %v3389
        %s3391 = sand.u32 %s218, 1
        %s3392 = scalar_lea.sflag [#allocation3], %s3391
        %s3393 = sand.u32 %s218, 1
        %s3394 = smul.addr %s3393, 2
        %s3395 = scalar_lea.vmem [#allocation2], %s3394
        // Predicated region
        $region53: #{tpu_custom_call.1} parent=51 // pred_check
          %p3396 = pneg %p228
        $region54: #{tpu_custom_call.1} parent=51 // pred_check_branch
          %3398 = sbr.rel (%p3396) target = $region56
        $region55: #{tpu_custom_call.1} parent=51 // pred_region
          %3400 = vsyncadd %s3392, 0
          %s3401 = smul.addr %s22, 2
          %s3402 = scalar_lea.hbm %s8, %s3401
          %s3404 = sshll.u32 %s3395, 4
          %s3405 = int_to_ptr.vmem [resolvable:$true] %s3404
          %s3406 = sshll.u32 %s3402, 4
          %s3407 = int_to_ptr.hbm [resolvable:$true] %s3406
          %3409 = dma.vmem_to_hbm [thread:$0]  %s3405, 32, %s3407, %s3392
        $region56: #{tpu_custom_call.1} parent=51 // pred_fallthru
          _
      $region52: #{tpu_custom_call.1} parent=5 // pred_fallthru
        _
      %p3410 = scmp.le.s32.totalorder 2, %s17
      // Predicated region
      $region57: #{tpu_custom_call.1} parent=5 // pred_check
        %p3411 = pneg %p3410
      $region58: #{tpu_custom_call.1} parent=5 // pred_check_branch
        %3413 = sbr.rel (%p3411) target = $region60
      $region59: #{tpu_custom_call.1} parent=5 // pred_region
        %s3414 = ssub.s32 %s17, 2
        // Predicated region
        $region61: #{tpu_custom_call.1} parent=59 // pred_check
          %p3415 = pneg %p234
        $region62: #{tpu_custom_call.1} parent=59 // pred_check_branch
          %3417 = sbr.rel (%p3415) target = $region64
        $region63: #{tpu_custom_call.1} parent=59 // pred_region
          %s3418 = sand.u32 %s219, 1
          %s3419 = scalar_lea.sflag [#allocation3], %s3418
          %s3420 = sand.u32 %s219, 1
          %s3421 = smul.addr %s3420, 2
          %s3422 = scalar_lea.vmem [#allocation2], %s3421
          %3424 = dma.done %s3419, 32
        $region64: #{tpu_custom_call.1} parent=59 // pred_fallthru
          _
      $region60: #{tpu_custom_call.1} parent=5 // pred_fallthru
        _
    $region6: #{tpu_custom_call.1} parent=1 // loop_footer
      %s21 = sadd.s32 1, %s17
    $region7: #{tpu_custom_call.1} parent=1 // loop_footer_branch
      %16 = sbr.rel target = $region3
    $region8: #{tpu_custom_call.1} parent=1 // loop_exit
      _
    %3425 = vsyncpa [#allocation3], 1
    %s3426 = scalar_lea.sflag [#allocation3], 1
    %3427 = vsyncpa %s3426, 1

// kernel: tpu_custom_call.1
$region0: #{tpu_custom_call.1}
  #allocation0 [shape = 'u32[]', space=smem, size = 0x4, offset = 0x4, fixed_abs, tag = 'smem constant byte address 0x4 - core index']
  #allocation1 [shape = 'u32[72,128]{1,0:T(1,128)}', space=vmem, size = 0x9000, scoped, tag = 'internal scratch']
  %s0 = inlined_call_operand.vmem [shape: f32[8,8,32], index: 0, kind: input, shape index: {}]
  %s1 = inlined_call_operand.vmem [shape: f32[8,8,4], index: 1, kind: input, shape index: {}]
  %s2 = inlined_call_operand.vmem [shape: f32[8,8,32], index: 2, kind: input, shape index: {}]
  %s3 = inlined_call_operand.vmem [shape: f32[8,8,4], index: 3, kind: input, shape index: {}]
  %s4 = inlined_call_operand.vmem [shape: f32[32,32], index: 4, kind: input, shape index: {}]
  %s5 = inlined_call_operand.vmem [shape: f32[1,32], index: 5, kind: input, shape index: {}]
  %s6 = inlined_call_operand.vmem [shape: f32[32,4], index: 6, kind: input, shape index: {}]
  %s7 = inlined_call_operand.vmem [shape: f32[1,4], index: 7, kind: input, shape index: {}]
  %s8 = inlined_call_operand.hbm [shape: f32[2,2,128], index: 8, kind: output, shape index: {}]
  %s9 = sld [smem:[#allocation0]]
  $region65: #{tpu_custom_call.1} parent=0
    _
  %s11 = ssub.s32 1, %s9
  %s12 = scalar_select 0, %s11, %s9
  $region1: #{tpu_custom_call.1} parent=0
    #allocation2 [shape = 'u8[2048]{0}', space=vmem, size = 0x800, scoped, tag = 'output window, operand 0']
    #allocation3 [shape = 's32[2]{0}', space=sflag, size = 0x8, scoped, tag = 'scoped memory for tpu_custom_call.1']
    %13 = vsyncpa [#allocation3], 0
    %s14 = scalar_lea.sflag [#allocation3], 1
    %15 = vsyncpa %s14, 0
    loop: start=0, step=1, limit=4
    $region2: #{tpu_custom_call.1} parent=1 // loop_pre_header
      _
    $region3: #{tpu_custom_call.1} parent=1 // loop_header
      %s17 = sphi 0, %s21
      %p18 = scmp.ge.s32.totalorder %s17, 4
      %s27 = sphi 0, %s29
      %s30 = sphi 0, %s27
      %s31 = sphi 0, %s30
      %s47 = sphi 0, %s31
      %s53 = sphi 0, %s55
      %s56 = sphi 0, %s53
      %s57 = sphi 0, %s56
      %s73 = sphi 0, %s57
      %s79 = sphi 0, %s81
      %s82 = sphi 0, %s79
      %s83 = sphi 0, %s82
      %s99 = sphi 0, %s83
      %s105 = sphi 0, %s107
      %s108 = sphi 0, %s105
      %s109 = sphi 0, %s108
      %s125 = sphi 0, %s109
      %s129 = sphi 0, %s129
      %s131 = sphi 0, %s129
      %s132 = sphi 0, %s131
      %s146 = sphi 0, %s132
      %s150 = sphi 0, %s150
      %s152 = sphi 0, %s150
      %s153 = sphi 0, %s152
      %s167 = sphi 0, %s153
      %s171 = sphi 0, %s171
      %s173 = sphi 0, %s171
      %s174 = sphi 0, %s173
      %s188 = sphi 0, %s174
      %s192 = sphi 0, %s192
      %s194 = sphi 0, %s192
      %s195 = sphi 0, %s194
      %s209 = sphi 0, %s195
      %s215 = sphi 0, %s217
      %s218 = sphi 0, %s215
      %s219 = sphi 0, %s218
      %s235 = sphi 0, %s219
    $region4: #{tpu_custom_call.1} parent=1 // loop_header_branch
      %20 = sbr.rel (%p18) target = $region8
    $region5: #{tpu_custom_call.1} parent=1 // loop_body
      %s22 = ssub.s32 %s17, 1
      %s23 = ssub.s32 %s17, 2
      %s24 = sadd.s32 %s17, 1
      %s25 = ssub.s32 %s17, %s24
      %p26 = scmp.eq.s32.totalorder %s25, 0
      %s28 = sadd.s32 %s27, 1
      %s29 = scalar_select %p26, %s27, %s28
      %p32 = pneg %p26
      %p33 = scmp.eq.s32.totalorder %s17, 1
      %p34 = por %p32, %p33
      %p35 = scmp.ne.s32.totalorder %s27, %s30
      %p36 = scmp.eq.s32.totalorder %s17, 0
      %p37 = por %p35, %p36
      %p38 = scmp.ne.s32.totalorder %s27, %s30
      %p39 = scmp.eq.s32.totalorder %s22, 1
      %p40 = por %p38, %p39
      %p41 = scmp.ne.s32.totalorder %s30, %s31
      %p42 = scmp.eq.s32.totalorder %s22, 0
      %p43 = por %p41, %p42
      %p44 = scmp.ne.s32.totalorder %s30, %s31
      %p45 = scmp.eq.s32.totalorder %s23, 1
      %p46 = por %p44, %p45
      %p48 = scmp.ne.s32.totalorder %s31, %s47
      %p49 = scmp.eq.s32.totalorder %s23, 0
      %p50 = por %p48, %p49
      %s51 = ssub.s32 %s17, %s24
      %p52 = scmp.eq.s32.totalorder %s51, 0
      %s54 = sadd.s32 %s53, 1
      %s55 = scalar_select %p52, %s53, %s54
      %p58 = pneg %p52
      %p59 = scmp.eq.s32.totalorder %s17, 1
      %p60 = por %p58, %p59
      %p61 = scmp.ne.s32.totalorder %s53, %s56
      %p62 = scmp.eq.s32.totalorder %s17, 0
      %p63 = por %p61, %p62
      %p64 = scmp.ne.s32.totalorder %s53, %s56
      %p65 = scmp.eq.s32.totalorder %s22, 1
      %p66 = por %p64, %p65
      %p67 = scmp.ne.s32.totalorder %s56, %s57
      %p68 = scmp.eq.s32.totalorder %s22, 0
      %p69 = por %p67, %p68
      %p70 = scmp.ne.s32.totalorder %s56, %s57
      %p71 = scmp.eq.s32.totalorder %s23, 1
      %p72 = por %p70, %p71
      %p74 = scmp.ne.s32.totalorder %s57, %s73
      %p75 = scmp.eq.s32.totalorder %s23, 0
      %p76 = por %p74, %p75
      %s77 = ssub.s32 %s17, %s24
      %p78 = scmp.eq.s32.totalorder %s77, 0
      %s80 = sadd.s32 %s79, 1
      %s81 = scalar_select %p78, %s79, %s80
      %p84 = pneg %p78
      %p85 = scmp.eq.s32.totalorder %s17, 1
      %p86 = por %p84, %p85
      %p87 = scmp.ne.s32.totalorder %s79, %s82
      %p88 = scmp.eq.s32.totalorder %s17, 0
      %p89 = por %p87, %p88
      %p90 = scmp.ne.s32.totalorder %s79, %s82
      %p91 = scmp.eq.s32.totalorder %s22, 1
      %p92 = por %p90, %p91
      %p93 = scmp.ne.s32.totalorder %s82, %s83
      %p94 = scmp.eq.s32.totalorder %s22, 0
      %p95 = por %p93, %p94
      %p96 = scmp.ne.s32.totalorder %s82, %s83
      %p97 = scmp.eq.s32.totalorder %s23, 1
      %p98 = por %p96, %p97
      %p100 = scmp.ne.s32.totalorder %s83, %s99
      %p101 = scmp.eq.s32.totalorder %s23, 0
      %p102 = por %p100, %p101
      %s103 = ssub.s32 %s17, %s24
      %p104 = scmp.eq.s32.totalorder %s103, 0
      %s106 = sadd.s32 %s105, 1
      %s107 = scalar_select %p104, %s105, %s106
      %p110 = pneg %p104
      %p111 = scmp.eq.s32.totalorder %s17, 1
      %p112 = por %p110, %p111
      %p113 = scmp.ne.s32.totalorder %s105, %s108
      %p114 = scmp.eq.s32.totalorder %s17, 0
      %p115 = por %p113, %p114
      %p116 = scmp.ne.s32.totalorder %s105, %s108
      %p117 = scmp.eq.s32.totalorder %s22, 1
      %p118 = por %p116, %p117
      %p119 = scmp.ne.s32.totalorder %s108, %s109
      %p120 = scmp.eq.s32.totalorder %s22, 0
      %p121 = por %p119, %p120
      %p122 = scmp.ne.s32.totalorder %s108, %s109
      %p123 = scmp.eq.s32.totalorder %s23, 1
      %p124 = por %p122, %p123
      %p126 = scmp.ne.s32.totalorder %s109, %s125
      %p127 = scmp.eq.s32.totalorder %s23, 0
      %p128 = por %p126, %p127
      %s130 = sadd.s32 %s129, 1
      %p133 = scmp.eq.s32.totalorder %s17, 1
      %p134 = scmp.ne.s32.totalorder %s129, %s131
      %p135 = scmp.eq.s32.totalorder %s17, 0
      %p136 = por %p134, %p135
      %p137 = scmp.ne.s32.totalorder %s129, %s131
      %p138 = scmp.eq.s32.totalorder %s22, 1
      %p139 = por %p137, %p138
      %p140 = scmp.ne.s32.totalorder %s131, %s132
      %p141 = scmp.eq.s32.totalorder %s22, 0
      %p142 = por %p140, %p141
      %p143 = scmp.ne.s32.totalorder %s131, %s132
      %p144 = scmp.eq.s32.totalorder %s23, 1
      %p145 = por %p143, %p144
      %p147 = scmp.ne.s32.totalorder %s132, %s146
      %p148 = scmp.eq.s32.totalorder %s23, 0
      %p149 = por %p147, %p148
      %s151 = sadd.s32 %s150, 1
      %p154 = scmp.eq.s32.totalorder %s17, 1
      %p155 = scmp.ne.s32.totalorder %s150, %s152
      %p156 = scmp.eq.s32.totalorder %s17, 0
      %p157 = por %p155, %p156
      %p158 = scmp.ne.s32.totalorder %s150, %s152
      %p159 = scmp.eq.s32.totalorder %s22, 1
      %p160 = por %p158, %p159
      %p161 = scmp.ne.s32.totalorder %s152, %s153
      %p162 = scmp.eq.s32.totalorder %s22, 0
      %p163 = por %p161, %p162
      %p164 = scmp.ne.s32.totalorder %s152, %s153
      %p165 = scmp.eq.s32.totalorder %s23, 1
      %p166 = por %p164, %p165
      %p168 = scmp.ne.s32.totalorder %s153, %s167
      %p169 = scmp.eq.s32.totalorder %s23, 0
      %p170 = por %p168, %p169
      %s172 = sadd.s32 %s171, 1
      %p175 = scmp.eq.s32.totalorder %s17, 1
      %p176 = scmp.ne.s32.totalorder %s171, %s173
      %p177 = scmp.eq.s32.totalorder %s17, 0
      %p178 = por %p176, %p177
      %p179 = scmp.ne.s32.totalorder %s171, %s173
      %p180 = scmp.eq.s32.totalorder %s22, 1
      %p181 = por %p179, %p180
      %p182 = scmp.ne.s32.totalorder %s173, %s174
      %p183 = scmp.eq.s32.totalorder %s22, 0
      %p184 = por %p182, %p183
      %p185 = scmp.ne.s32.totalorder %s173, %s174
      %p186 = scmp.eq.s32.totalorder %s23, 1
      %p187 = por %p185, %p186
      %p189 = scmp.ne.s32.totalorder %s174, %s188
      %p190 = scmp.eq.s32.totalorder %s23, 0
      %p191 = por %p189, %p190
      %s193 = sadd.s32 %s192, 1
      %p196 = scmp.eq.s32.totalorder %s17, 1
      %p197 = scmp.ne.s32.totalorder %s192, %s194
      %p198 = scmp.eq.s32.totalorder %s17, 0
      %p199 = por %p197, %p198
      %p200 = scmp.ne.s32.totalorder %s192, %s194
      %p201 = scmp.eq.s32.totalorder %s22, 1
      %p202 = por %p200, %p201
      %p203 = scmp.ne.s32.totalorder %s194, %s195
      %p204 = scmp.eq.s32.totalorder %s22, 0
      %p205 = por %p203, %p204
      %p206 = scmp.ne.s32.totalorder %s194, %s195
      %p207 = scmp.eq.s32.totalorder %s23, 1
      %p208 = por %p206, %p207
      %p210 = scmp.ne.s32.totalorder %s195, %s209
      %p211 = scmp.eq.s32.totalorder %s23, 0
      %p212 = por %p210, %p211
      %s213 = ssub.s32 %s17, %s24
      %p214 = scmp.eq.s32.totalorder %s213, 0
      %s216 = sadd.s32 %s215, 1
      %s217 = scalar_select %p214, %s215, %s216
      %p220 = pneg %p214
      %p221 = scmp.eq.s32.totalorder %s17, 1
      %p222 = por %p220, %p221
      %p223 = scmp.ne.s32.totalorder %s215, %s218
      %p224 = scmp.eq.s32.totalorder %s17, 0
      %p225 = por %p223, %p224
      %p226 = scmp.ne.s32.totalorder %s215, %s218
      %p227 = scmp.eq.s32.totalorder %s22, 1
      %p228 = por %p226, %p227
      %p229 = scmp.ne.s32.totalorder %s218, %s219
      %p230 = scmp.eq.s32.totalorder %s22, 0
      %p231 = por %p229, %p230
      %p232 = scmp.ne.s32.totalorder %s218, %s219
      %p233 = scmp.eq.s32.totalorder %s23, 1
      %p234 = por %p232, %p233
      %p236 = scmp.ne.s32.totalorder %s219, %s235
      %p237 = scmp.eq.s32.totalorder %s23, 0
      %p238 = por %p236, %p237
      %p239 = scmp.le.s32.totalorder 1, %s17
      %p240 = scmp.lt.s32.totalorder %s17, 3
      %p241 = pnand %p239, %p240
      %p242 = pneg %p241
      // Predicated region
      $region9: #{tpu_custom_call.1} parent=5 // pred_check
        _
      $region10: #{tpu_custom_call.1} parent=5 // pred_check_branch
        %244 = sbr.rel (%p241) target = $region12
      $region11: #{tpu_custom_call.1} parent=5 // pred_region
        %s245 = ssub.s32 %s17, 1
        // Predicated region
        $region13: #{tpu_custom_call.1} parent=11 // pred_check
          %p246 = pneg %p142
        $region14: #{tpu_custom_call.1} parent=11 // pred_check_branch
          %248 = sbr.rel (%p246) target = $region16
        $region15: #{tpu_custom_call.1} parent=11 // pred_region
          _
        $region16: #{tpu_custom_call.1} parent=11 // pred_fallthru
          _
        // Predicated region
        $region17: #{tpu_custom_call.1} parent=11 // pred_check
          %p249 = pneg %p163
        $region18: #{tpu_custom_call.1} parent=11 // pred_check_branch
          %251 = sbr.rel (%p249) target = $region20
        $region19: #{tpu_custom_call.1} parent=11 // pred_region
          _
        $region20: #{tpu_custom_call.1} parent=11 // pred_fallthru
          _
        // Predicated region
        $region21: #{tpu_custom_call.1} parent=11 // pred_check
          %p252 = pneg %p184
        $region22: #{tpu_custom_call.1} parent=11 // pred_check_branch
          %254 = sbr.rel (%p252) target = $region24
        $region23: #{tpu_custom_call.1} parent=11 // pred_region
          _
        $region24: #{tpu_custom_call.1} parent=11 // pred_fallthru
          _
        // Predicated region
        $region25: #{tpu_custom_call.1} parent=11 // pred_check
          %p255 = pneg %p205
        $region26: #{tpu_custom_call.1} parent=11 // pred_check_branch
          %257 = sbr.rel (%p255) target = $region28
        $region27: #{tpu_custom_call.1} parent=11 // pred_region
          _
        $region28: #{tpu_custom_call.1} parent=11 // pred_fallthru
          _
      $region12: #{tpu_custom_call.1} parent=5 // pred_fallthru
        _
      %p258 = scmp.lt.s32.totalorder %s17, 2
      // Predicated region
      $region29: #{tpu_custom_call.1} parent=5 // pred_check
        %p259 = pneg %p258
      $region30: #{tpu_custom_call.1} parent=5 // pred_check_branch
        %261 = sbr.rel (%p259) target = $region32
      $region31: #{tpu_custom_call.1} parent=5 // pred_region
        // Predicated region
        $region33: #{tpu_custom_call.1} parent=31 // pred_check
          %p262 = pneg %p37
        $region34: #{tpu_custom_call.1} parent=31 // pred_check_branch
          %264 = sbr.rel (%p262) target = $region36
        $region35: #{tpu_custom_call.1} parent=31 // pred_region
          %s265 = smul.u32 4, %s17
          %p266 = scmp.lt.s32.totalorder %s265, 7
          %s267 = scalar_select %p266, %s265, 7
          %s268 = smul.addr %s267, 8
          %s269 = scalar_lea.vmem %s0, %s268
          %s270 = smul.u32 4, %s17
        $region36: #{tpu_custom_call.1} parent=31 // pred_fallthru
          _
        // Predicated region
        $region37: #{tpu_custom_call.1} parent=31 // pred_check
          %p271 = pneg %p63
        $region38: #{tpu_custom_call.1} parent=31 // pred_check_branch
          %273 = sbr.rel (%p271) target = $region40
        $region39: #{tpu_custom_call.1} parent=31 // pred_region
          %s274 = smul.u32 4, %s17
          %p275 = scmp.lt.s32.totalorder %s274, 7
          %s276 = scalar_select %p275, %s274, 7
          %s277 = smul.addr %s276, 8
          %s278 = scalar_lea.vmem %s1, %s277
          %s279 = smul.u32 4, %s17
        $region40: #{tpu_custom_call.1} parent=31 // pred_fallthru
          _
        // Predicated region
        $region41: #{tpu_custom_call.1} parent=31 // pred_check
          %p280 = pneg %p89
        $region42: #{tpu_custom_call.1} parent=31 // pred_check_branch
          %282 = sbr.rel (%p280) target = $region44
        $region43: #{tpu_custom_call.1} parent=31 // pred_region
          %s283 = smul.u32 4, %s17
          %p284 = scmp.lt.s32.totalorder %s283, 7
          %s285 = scalar_select %p284, %s283, 7
          %s286 = smul.addr %s285, 8
          %s287 = scalar_lea.vmem %s2, %s286
          %s288 = smul.u32 4, %s17
        $region44: #{tpu_custom_call.1} parent=31 // pred_fallthru
          _
        // Predicated region
        $region45: #{tpu_custom_call.1} parent=31 // pred_check
          %p289 = pneg %p115
        $region46: #{tpu_custom_call.1} parent=31 // pred_check_branch
          %291 = sbr.rel (%p289) target = $region48
        $region47: #{tpu_custom_call.1} parent=31 // pred_region
          %s292 = smul.u32 4, %s17
          %p293 = scmp.lt.s32.totalorder %s292, 7
          %s294 = scalar_select %p293, %s292, 7
          %s295 = smul.addr %s294, 8
          %s296 = scalar_lea.vmem %s3, %s295
          %s297 = smul.u32 4, %s17
        $region48: #{tpu_custom_call.1} parent=31 // pred_fallthru
          _
      $region32: #{tpu_custom_call.1} parent=5 // pred_fallthru
        _
      %p298 = scmp.le.s32.totalorder 1, %s17
      %p299 = scmp.lt.s32.totalorder %s17, 3
      %p300 = pnand %p298, %p299
      %p301 = pneg %p300
      // Predicated region
      $region49: #{tpu_custom_call.1} parent=5 // pred_check
        _
      $region50: #{tpu_custom_call.1} parent=5 // pred_check_branch
        %303 = sbr.rel (%p300) target = $region52
      $region51: #{tpu_custom_call.1} parent=5 // pred_region
        %s304 = ssub.s32 %s17, 1
        %s305 = smul.u32 4, %s22
        %p306 = scmp.lt.s32.totalorder %s305, 7
        %s307 = scalar_select %p306, %s305, 7
        %s308 = smul.addr %s307, 8
        %s309 = scalar_lea.vmem %s0, %s308
        %p310 = pneg %p43
        %p311 = pneg %p40
        %s312 = smul.u32 4, %s22
        %p313 = scmp.lt.s32.totalorder %s312, 7
        %s314 = scalar_select %p313, %s312, 7
        %s315 = smul.addr %s314, 8
        %s316 = scalar_lea.vmem %s1, %s315
        %p317 = pneg %p69
        %p318 = pneg %p66
        %s319 = smul.u32 4, %s22
        %p320 = scmp.lt.s32.totalorder %s319, 7
        %s321 = scalar_select %p320, %s319, 7
        %s322 = smul.addr %s321, 8
        %s323 = scalar_lea.vmem %s2, %s322
        %p324 = pneg %p95
        %p325 = pneg %p92
        %s326 = smul.u32 4, %s22
        %p327 = scmp.lt.s32.totalorder %s326, 7
        %s328 = scalar_select %p327, %s326, 7
        %s329 = smul.addr %s328, 8
        %s330 = scalar_lea.vmem %s3, %s329
        %p331 = pneg %p121
        %p332 = pneg %p118
        %p333 = pneg %p142
        %p334 = pneg %p139
        %p335 = pneg %p163
        %p336 = pneg %p160
        %p337 = pneg %p184
        %p338 = pneg %p181
        %p339 = pneg %p205
        %p340 = pneg %p202
        %p341 = pneg %p231
        %p342 = pneg %p228
        %s343 = sand.u32 %s218, 1
        %s344 = scalar_lea.sflag [#allocation3], %s343
        %s345 = sand.u32 %s218, 1
        %s346 = smul.addr %s345, 2
        %s347 = scalar_lea.vmem [#allocation2], %s346
        %s348 = smul.u32 4, %s22
        %p349 = scmp.lt.s32.totalorder %s348, 7
        %s350 = scalar_select %p349, %s348, 7
        %s351 = smul.addr %s350, 8
        %s352 = scalar_lea.vmem %s0, %s351
        %s353 = smul.u32 4, %s22
        %s354 = smul.u32 4, %s22
        %p355 = scmp.lt.s32.totalorder %s354, 7
        %s356 = scalar_select %p355, %s354, 7
        %s357 = smul.addr %s356, 8
        %s358 = scalar_lea.vmem %s1, %s357
        %s359 = smul.u32 4, %s22
        %s360 = smul.u32 4, %s22
        %p361 = scmp.lt.s32.totalorder %s360, 7
        %s362 = scalar_select %p361, %s360, 7
        %s363 = smul.addr %s362, 8
        %s364 = scalar_lea.vmem %s2, %s363
        %s365 = smul.u32 4, %s22
        %s366 = smul.u32 4, %s22
        %p367 = scmp.lt.s32.totalorder %s366, 7
        %s368 = scalar_select %p367, %s366, 7
        %s369 = smul.addr %s368, 8
        %s370 = scalar_lea.vmem %s3, %s369
        %s371 = smul.u32 4, %s22
        %v372 = vld [vmem:[%s352] sm:$0xff]
        %v373 = vld [vmem:[%s352 + $0x8] sm:$0xff]
        %v374 = vld [vmem:[%s352 + $0x10] sm:$0xff]
        %v375 = vld [vmem:[%s352 + $0x18] sm:$0xff]
        %v376 = vld [vmem:[%s358] sm:$0xff]
        %v377 = vld [vmem:[%s358 + $0x8] sm:$0xff]
        %v378 = vld [vmem:[%s358 + $0x10] sm:$0xff]
        %v379 = vld [vmem:[%s358 + $0x18] sm:$0xff]
        %v380 = vld [vmem:[%s4] sm:$0xff]
        %v381 = vld [vmem:[%s4 + $0x8] sm:$0xff]
        %v382 = vld [vmem:[%s4 + $0x10] sm:$0xff]
        %v383 = vld [vmem:[%s4 + $0x18] sm:$0xff]
        %v384 = vld [vmem:[%s5] sm:$0x1]
        %v385 = vld [vmem:[%s6] sm:$0xff]
        %v386 = vld [vmem:[%s6 + $0x8] sm:$0xff]
        %v387 = vld [vmem:[%s6 + $0x10] sm:$0xff]
        %v388 = vld [vmem:[%s6 + $0x18] sm:$0xff]
        %v389 = vld [vmem:[%s7] sm:$0x1]
        %v391 = vperm.slane %v384, 0
        %vm393 = vcmask 261120
        %v395 = vsel %vm393, %v372, 0
        %v398 = vsel %vm393, %v373, 0
        %v401 = vsel %vm393, %v374, 0
        %v404 = vsel %vm393, %v375, 0
        %406 = vmatpush.msra.mxu0 0.0
        %407 = vmatpush.msra.mxu0 0.0
        %408 = vmatpush.msra.mxu0 0.0
        %409 = vmatpush.msra.mxu0 0.0
        %410 = vmatpush.msra.mxu0 0.0
        %411 = vmatpush.msra.mxu0 0.0
        %412 = vmatpush.msra.mxu0 0.0
        %413 = vmatpush.msra.mxu0 0.0
        %414 = vmatpush.msra.mxu0 0.0
        %415 = vmatpush.msra.mxu0 0.0
        %416 = vmatpush.msra.mxu0 0.0
        %417 = vmatpush.msra.mxu0 0.0
        %418 = vmatpush.msra.mxu0 %v383
        %419 = vmatpush.msra.mxu0 %v382
        %420 = vmatpush.msra.mxu0 %v381
        %421 = vmatpush.msra.mxu0 %v380
        %422 = vmatmul.f32.gmra.mxu0 %v395
        %v423 = vpop.f32.mrf.mxu0
        %v424 = vadd.f32 %v391, %v423
        %425 = vmatmul.f32.gmra.mxu0 %v398
        %v426 = vpop.f32.mrf.mxu0
        %v427 = vadd.f32 %v391, %v426
        %428 = vmatmul.f32.gmra.mxu0 %v401
        %v429 = vpop.f32.mrf.mxu0
        %v430 = vadd.f32 %v391, %v429
        %431 = vmatmul.f32.gmra.mxu0 %v404
        %v432 = vpop.f32.mrf.mxu0
        %v433 = vadd.f32 %v391, %v432
        %434 = vdwg.mxu0
        %v435 = vmax.f32 %v424, 0.0
        %v436 = vmax.f32 %v427, 0.0
        %v437 = vmax.f32 %v430, 0.0
        %v438 = vmax.f32 %v433, 0.0
        %v440 = vperm.slane %v389, 0
        %v443 = vsel %vm393, %v435, 0
        %v446 = vsel %vm393, %v436, 0
        %v449 = vsel %vm393, %v437, 0
        %v452 = vsel %vm393, %v438, 0
        %454 = vmatpush.msra.mxu0 0.0
        %455 = vmatpush.msra.mxu0 0.0
        %456 = vmatpush.msra.mxu0 0.0
        %457 = vmatpush.msra.mxu0 0.0
        %458 = vmatpush.msra.mxu0 0.0
        %459 = vmatpush.msra.mxu0 0.0
        %460 = vmatpush.msra.mxu0 0.0
        %461 = vmatpush.msra.mxu0 0.0
        %462 = vmatpush.msra.mxu0 0.0
        %463 = vmatpush.msra.mxu0 0.0
        %464 = vmatpush.msra.mxu0 0.0
        %465 = vmatpush.msra.mxu0 0.0
        %466 = vmatpush.msra.mxu0 %v388
        %467 = vmatpush.msra.mxu0 %v387
        %468 = vmatpush.msra.mxu0 %v386
        %469 = vmatpush.msra.mxu0 %v385
        %470 = vmatmul.f32.gmra.mxu0 %v443
        %v471 = vpop.f32.mrf.mxu0
        %v472 = vadd.f32 %v440, %v471
        %473 = vmatmul.f32.gmra.mxu0 %v446
        %v474 = vpop.f32.mrf.mxu0
        %v475 = vadd.f32 %v440, %v474
        %476 = vmatmul.f32.gmra.mxu0 %v449
        %v477 = vpop.f32.mrf.mxu0
        %v478 = vadd.f32 %v440, %v477
        %479 = vmatmul.f32.gmra.mxu0 %v452
        %v480 = vpop.f32.mrf.mxu0
        %v481 = vadd.f32 %v440, %v480
        %482 = vdwg.mxu0
        %v483 = vsub.f32 %v472, %v376
        %v484 = vsub.f32 %v475, %v377
        %v485 = vsub.f32 %v478, %v378
        %v486 = vsub.f32 %v481, %v379
        %v487 = vmul.f32 %v483, 0.0625
        %v488 = vmul.f32 %v484, 0.0625
        %v489 = vmul.f32 %v485, 0.0625
        %v490 = vmul.f32 %v486, 0.0625
        %491 = vxpose.xlu0.b32.start [1/16] %v435, 128
        %492 = vxpose.xlu0.b32.cont [2/16] 0.0, 128
        %493 = vxpose.xlu0.b32.cont [3/16] 0.0, 128
        %494 = vxpose.xlu0.b32.cont [4/16] 0.0, 128
        %495 = vxpose.xlu0.b32.cont [5/16] 0.0, 128
        %496 = vxpose.xlu0.b32.cont [6/16] 0.0, 128
        %497 = vxpose.xlu0.b32.cont [7/16] 0.0, 128
        %498 = vxpose.xlu0.b32.cont [8/16] 0.0, 128
        %499 = vxpose.xlu0.b32.cont [9/16] 0.0, 128
        %500 = vxpose.xlu0.b32.cont [10/16] 0.0, 128
        %501 = vxpose.xlu0.b32.cont [11/16] 0.0, 128
        %502 = vxpose.xlu0.b32.cont [12/16] 0.0, 128
        %503 = vxpose.xlu0.b32.cont [13/16] 0.0, 128
        %504 = vxpose.xlu0.b32.cont [14/16] 0.0, 128
        %505 = vxpose.xlu0.b32.cont [15/16] 0.0, 128
        %506 = vxpose.xlu0.b32.end [16/16] 0.0, 128
        %v507 = vpop.trf.xlu0
        %v508 = vpop.trf.xlu0
        %v509 = vpop.trf.xlu0
        %v510 = vpop.trf.xlu0
        %v511 = vpop.trf.xlu0
        %v512 = vpop.trf.xlu0
        %v513 = vpop.trf.xlu0
        %v514 = vpop.trf.xlu0
        %v515 = vpop.trf.xlu0
        %v516 = vpop.trf.xlu0
        %v517 = vpop.trf.xlu0
        %v518 = vpop.trf.xlu0
        %v519 = vpop.trf.xlu0
        %v520 = vpop.trf.xlu0
        %v521 = vpop.trf.xlu0
        %v522 = vpop.trf.xlu0
        %vm523 = vcmask 64512
        %v525 = vsel %vm523, %v507, 0
        %v528 = vsel %vm523, %v508, 0
        %v531 = vsel %vm523, %v509, 0
        %v534 = vsel %vm523, %v510, 0
        %536 = vmatpush.msra.mxu0 0.0
        %537 = vmatpush.msra.mxu0 0.0
        %538 = vmatpush.msra.mxu0 0.0
        %539 = vmatpush.msra.mxu0 0.0
        %540 = vmatpush.msra.mxu0 0.0
        %541 = vmatpush.msra.mxu0 0.0
        %542 = vmatpush.msra.mxu0 0.0
        %543 = vmatpush.msra.mxu0 0.0
        %544 = vmatpush.msra.mxu0 0.0
        %545 = vmatpush.msra.mxu0 0.0
        %546 = vmatpush.msra.mxu0 0.0
        %547 = vmatpush.msra.mxu0 0.0
        %548 = vmatpush.msra.mxu0 0.0
        %549 = vmatpush.msra.mxu0 0.0
        %550 = vmatpush.msra.mxu0 0.0
        %551 = vmatpush.msra.mxu0 %v487
        %552 = vmatmul.f32.gmra.mxu0 %v525
        %v553 = vpop.f32.mrf.mxu0
        %v554 = vadd.f32 0.0, %v553
        %555 = vmatmul.f32.gmra.mxu0 %v528
        %v556 = vpop.f32.mrf.mxu0
        %v557 = vadd.f32 0.0, %v556
        %558 = vmatmul.f32.gmra.mxu0 %v531
        %v559 = vpop.f32.mrf.mxu0
        %v560 = vadd.f32 0.0, %v559
        %561 = vmatmul.f32.gmra.mxu0 %v534
        %v562 = vpop.f32.mrf.mxu0
        %v563 = vadd.f32 0.0, %v562
        %564 = vdwg.mxu0
        %565 = vxpose.xlu0.b32.start [1/16] %v436, 128
        %566 = vxpose.xlu0.b32.cont [2/16] 0.0, 128
        %567 = vxpose.xlu0.b32.cont [3/16] 0.0, 128
        %568 = vxpose.xlu0.b32.cont [4/16] 0.0, 128
        %569 = vxpose.xlu0.b32.cont [5/16] 0.0, 128
        %570 = vxpose.xlu0.b32.cont [6/16] 0.0, 128
        %571 = vxpose.xlu0.b32.cont [7/16] 0.0, 128
        %572 = vxpose.xlu0.b32.cont [8/16] 0.0, 128
        %573 = vxpose.xlu0.b32.cont [9/16] 0.0, 128
        %574 = vxpose.xlu0.b32.cont [10/16] 0.0, 128
        %575 = vxpose.xlu0.b32.cont [11/16] 0.0, 128
        %576 = vxpose.xlu0.b32.cont [12/16] 0.0, 128
        %577 = vxpose.xlu0.b32.cont [13/16] 0.0, 128
        %578 = vxpose.xlu0.b32.cont [14/16] 0.0, 128
        %579 = vxpose.xlu0.b32.cont [15/16] 0.0, 128
        %580 = vxpose.xlu0.b32.end [16/16] 0.0, 128
        %v581 = vpop.trf.xlu0
        %v582 = vpop.trf.xlu0
        %v583 = vpop.trf.xlu0
        %v584 = vpop.trf.xlu0
        %v585 = vpop.trf.xlu0
        %v586 = vpop.trf.xlu0
        %v587 = vpop.trf.xlu0
        %v588 = vpop.trf.xlu0
        %v589 = vpop.trf.xlu0
        %v590 = vpop.trf.xlu0
        %v591 = vpop.trf.xlu0
        %v592 = vpop.trf.xlu0
        %v593 = vpop.trf.xlu0
        %v594 = vpop.trf.xlu0
        %v595 = vpop.trf.xlu0
        %v596 = vpop.trf.xlu0
        %v598 = vsel %vm523, %v581, 0
        %v601 = vsel %vm523, %v582, 0
        %v604 = vsel %vm523, %v583, 0
        %v607 = vsel %vm523, %v584, 0
        %609 = vmatpush.msra.mxu0 0.0
        %610 = vmatpush.msra.mxu0 0.0
        %611 = vmatpush.msra.mxu0 0.0
        %612 = vmatpush.msra.mxu0 0.0
        %613 = vmatpush.msra.mxu0 0.0
        %614 = vmatpush.msra.mxu0 0.0
        %615 = vmatpush.msra.mxu0 0.0
        %616 = vmatpush.msra.mxu0 0.0
        %617 = vmatpush.msra.mxu0 0.0
        %618 = vmatpush.msra.mxu0 0.0
        %619 = vmatpush.msra.mxu0 0.0
        %620 = vmatpush.msra.mxu0 0.0
        %621 = vmatpush.msra.mxu0 0.0
        %622 = vmatpush.msra.mxu0 0.0
        %623 = vmatpush.msra.mxu0 0.0
        %624 = vmatpush.msra.mxu0 %v488
        %625 = vmatmul.f32.gmra.mxu0 %v598
        %v626 = vpop.f32.mrf.mxu0
        %v627 = vadd.f32 0.0, %v626
        %628 = vmatmul.f32.gmra.mxu0 %v601
        %v629 = vpop.f32.mrf.mxu0
        %v630 = vadd.f32 0.0, %v629
        %631 = vmatmul.f32.gmra.mxu0 %v604
        %v632 = vpop.f32.mrf.mxu0
        %v633 = vadd.f32 0.0, %v632
        %634 = vmatmul.f32.gmra.mxu0 %v607
        %v635 = vpop.f32.mrf.mxu0
        %v636 = vadd.f32 0.0, %v635
        %637 = vdwg.mxu0
        %638 = vxpose.xlu0.b32.start [1/16] %v437, 128
        %639 = vxpose.xlu0.b32.cont [2/16] 0.0, 128
        %640 = vxpose.xlu0.b32.cont [3/16] 0.0, 128
        %641 = vxpose.xlu0.b32.cont [4/16] 0.0, 128
        %642 = vxpose.xlu0.b32.cont [5/16] 0.0, 128
        %643 = vxpose.xlu0.b32.cont [6/16] 0.0, 128
        %644 = vxpose.xlu0.b32.cont [7/16] 0.0, 128
        %645 = vxpose.xlu0.b32.cont [8/16] 0.0, 128
        %646 = vxpose.xlu0.b32.cont [9/16] 0.0, 128
        %647 = vxpose.xlu0.b32.cont [10/16] 0.0, 128
        %648 = vxpose.xlu0.b32.cont [11/16] 0.0, 128
        %649 = vxpose.xlu0.b32.cont [12/16] 0.0, 128
        %650 = vxpose.xlu0.b32.cont [13/16] 0.0, 128
        %651 = vxpose.xlu0.b32.cont [14/16] 0.0, 128
        %652 = vxpose.xlu0.b32.cont [15/16] 0.0, 128
        %653 = vxpose.xlu0.b32.end [16/16] 0.0, 128
        %v654 = vpop.trf.xlu0
        %v655 = vpop.trf.xlu0
        %v656 = vpop.trf.xlu0
        %v657 = vpop.trf.xlu0
        %v658 = vpop.trf.xlu0
        %v659 = vpop.trf.xlu0
        %v660 = vpop.trf.xlu0
        %v661 = vpop.trf.xlu0
        %v662 = vpop.trf.xlu0
        %v663 = vpop.trf.xlu0
        %v664 = vpop.trf.xlu0
        %v665 = vpop.trf.xlu0
        %v666 = vpop.trf.xlu0
        %v667 = vpop.trf.xlu0
        %v668 = vpop.trf.xlu0
        %v669 = vpop.trf.xlu0
        %v671 = vsel %vm523, %v654, 0
        %v674 = vsel %vm523, %v655, 0
        %v677 = vsel %vm523, %v656, 0
        %v680 = vsel %vm523, %v657, 0
        %682 = vmatpush.msra.mxu0 0.0
        %683 = vmatpush.msra.mxu0 0.0
        %684 = vmatpush.msra.mxu0 0.0
        %685 = vmatpush.msra.mxu0 0.0
        %686 = vmatpush.msra.mxu0 0.0
        %687 = vmatpush.msra.mxu0 0.0
        %688 = vmatpush.msra.mxu0 0.0
        %689 = vmatpush.msra.mxu0 0.0
        %690 = vmatpush.msra.mxu0 0.0
        %691 = vmatpush.msra.mxu0 0.0
        %692 = vmatpush.msra.mxu0 0.0
        %693 = vmatpush.msra.mxu0 0.0
        %694 = vmatpush.msra.mxu0 0.0
        %695 = vmatpush.msra.mxu0 0.0
        %696 = vmatpush.msra.mxu0 0.0
        %697 = vmatpush.msra.mxu0 %v489
        %698 = vmatmul.f32.gmra.mxu0 %v671
        %v699 = vpop.f32.mrf.mxu0
        %v700 = vadd.f32 0.0, %v699
        %701 = vmatmul.f32.gmra.mxu0 %v674
        %v702 = vpop.f32.mrf.mxu0
        %v703 = vadd.f32 0.0, %v702
        %704 = vmatmul.f32.gmra.mxu0 %v677
        %v705 = vpop.f32.mrf.mxu0
        %v706 = vadd.f32 0.0, %v705
        %707 = vmatmul.f32.gmra.mxu0 %v680
        %v708 = vpop.f32.mrf.mxu0
        %v709 = vadd.f32 0.0, %v708
        %710 = vdwg.mxu0
        %711 = vxpose.xlu0.b32.start [1/16] %v438, 128
        %712 = vxpose.xlu0.b32.cont [2/16] 0.0, 128
        %713 = vxpose.xlu0.b32.cont [3/16] 0.0, 128
        %714 = vxpose.xlu0.b32.cont [4/16] 0.0, 128
        %715 = vxpose.xlu0.b32.cont [5/16] 0.0, 128
        %716 = vxpose.xlu0.b32.cont [6/16] 0.0, 128
        %717 = vxpose.xlu0.b32.cont [7/16] 0.0, 128
        %718 = vxpose.xlu0.b32.cont [8/16] 0.0, 128
        %719 = vxpose.xlu0.b32.cont [9/16] 0.0, 128
        %720 = vxpose.xlu0.b32.cont [10/16] 0.0, 128
        %721 = vxpose.xlu0.b32.cont [11/16] 0.0, 128
        %722 = vxpose.xlu0.b32.cont [12/16] 0.0, 128
        %723 = vxpose.xlu0.b32.cont [13/16] 0.0, 128
        %724 = vxpose.xlu0.b32.cont [14/16] 0.0, 128
        %725 = vxpose.xlu0.b32.cont [15/16] 0.0, 128
        %726 = vxpose.xlu0.b32.end [16/16] 0.0, 128
        %v727 = vpop.trf.xlu0
        %v728 = vpop.trf.xlu0
        %v729 = vpop.trf.xlu0
        %v730 = vpop.trf.xlu0
        %v731 = vpop.trf.xlu0
        %v732 = vpop.trf.xlu0
        %v733 = vpop.trf.xlu0
        %v734 = vpop.trf.xlu0
        %v735 = vpop.trf.xlu0
        %v736 = vpop.trf.xlu0
        %v737 = vpop.trf.xlu0
        %v738 = vpop.trf.xlu0
        %v739 = vpop.trf.xlu0
        %v740 = vpop.trf.xlu0
        %v741 = vpop.trf.xlu0
        %v742 = vpop.trf.xlu0
        %v744 = vsel %vm523, %v727, 0
        %v747 = vsel %vm523, %v728, 0
        %v750 = vsel %vm523, %v729, 0
        %v753 = vsel %vm523, %v730, 0
        %755 = vmatpush.msra.mxu0 0.0
        %756 = vmatpush.msra.mxu0 0.0
        %757 = vmatpush.msra.mxu0 0.0
        %758 = vmatpush.msra.mxu0 0.0
        %759 = vmatpush.msra.mxu0 0.0
        %760 = vmatpush.msra.mxu0 0.0
        %761 = vmatpush.msra.mxu0 0.0
        %762 = vmatpush.msra.mxu0 0.0
        %763 = vmatpush.msra.mxu0 0.0
        %764 = vmatpush.msra.mxu0 0.0
        %765 = vmatpush.msra.mxu0 0.0
        %766 = vmatpush.msra.mxu0 0.0
        %767 = vmatpush.msra.mxu0 0.0
        %768 = vmatpush.msra.mxu0 0.0
        %769 = vmatpush.msra.mxu0 0.0
        %770 = vmatpush.msra.mxu0 %v490
        %771 = vmatmul.f32.gmra.mxu0 %v744
        %v772 = vpop.f32.mrf.mxu0
        %v773 = vadd.f32 0.0, %v772
        %774 = vmatmul.f32.gmra.mxu0 %v747
        %v775 = vpop.f32.mrf.mxu0
        %v776 = vadd.f32 0.0, %v775
        %777 = vmatmul.f32.gmra.mxu0 %v750
        %v778 = vpop.f32.mrf.mxu0
        %v779 = vadd.f32 0.0, %v778
        %780 = vmatmul.f32.gmra.mxu0 %v753
        %v781 = vpop.f32.mrf.mxu0
        %v782 = vadd.f32 0.0, %v781
        %783 = vdwg.mxu0
        %vm784 = vcmask 31744
        %v785 = vsel %vm784, %v487, 0.0
        %v786 = vrot.slane %v785, 4
        %v787 = vadd.f32 %v785, %v786
        %v788 = vrot.slane %v787, 2
        %v789 = vadd.f32 %v787, %v788
        %v790 = vrot.slane %v789, 1
        %v791 = vadd.f32 %v789, %v790
        %v792 = vsel %vm784, %v488, 0.0
        %v793 = vrot.slane %v792, 4
        %v794 = vadd.f32 %v792, %v793
        %v795 = vrot.slane %v794, 2
        %v796 = vadd.f32 %v794, %v795
        %v797 = vrot.slane %v796, 1
        %v798 = vadd.f32 %v796, %v797
        %v799 = vsel %vm784, %v489, 0.0
        %v800 = vrot.slane %v799, 4
        %v801 = vadd.f32 %v799, %v800
        %v802 = vrot.slane %v801, 2
        %v803 = vadd.f32 %v801, %v802
        %v804 = vrot.slane %v803, 1
        %v805 = vadd.f32 %v803, %v804
        %v806 = vsel %vm784, %v490, 0.0
        %v807 = vrot.slane %v806, 4
        %v808 = vadd.f32 %v806, %v807
        %v809 = vrot.slane %v808, 2
        %v810 = vadd.f32 %v808, %v809
        %v811 = vrot.slane %v810, 1
        %v812 = vadd.f32 %v810, %v811
        %v814 = vsel %vm784, %v487, 0
        %v817 = vsel %vm784, %v488, 0
        %v820 = vsel %vm784, %v489, 0
        %v823 = vsel %vm784, %v490, 0
        %v826 = vsel %vm784, %v385, 0
        %v829 = vsel %vm784, %v386, 0
        %v832 = vsel %vm784, %v387, 0
        %v835 = vsel %vm784, %v388, 0
        %837 = vmatpush.xpose.msra.mxu0 0.0
        %838 = vmatpush.xpose.msra.mxu0 0.0
        %839 = vmatpush.xpose.msra.mxu0 0.0
        %840 = vmatpush.xpose.msra.mxu0 0.0
        %841 = vmatpush.xpose.msra.mxu0 0.0
        %842 = vmatpush.xpose.msra.mxu0 0.0
        %843 = vmatpush.xpose.msra.mxu0 0.0
        %844 = vmatpush.xpose.msra.mxu0 0.0
        %845 = vmatpush.xpose.msra.mxu0 0.0
        %846 = vmatpush.xpose.msra.mxu0 0.0
        %847 = vmatpush.xpose.msra.mxu0 0.0
        %848 = vmatpush.xpose.msra.mxu0 0.0
        %849 = vmatpush.xpose.msra.mxu0 %v835
        %850 = vmatpush.xpose.msra.mxu0 %v832
        %851 = vmatpush.xpose.msra.mxu0 %v829
        %852 = vmatpush.xpose.msra.mxu0 %v826
        %853 = vmatmul.f32.gmra.mxu0 %v814
        %v854 = vpop.f32.mrf.mxu0
        %v855 = vadd.f32 0.0, %v854
        %856 = vmatmul.f32.gmra.mxu0 %v817
        %v857 = vpop.f32.mrf.mxu0
        %v858 = vadd.f32 0.0, %v857
        %859 = vmatmul.f32.gmra.mxu0 %v820
        %v860 = vpop.f32.mrf.mxu0
        %v861 = vadd.f32 0.0, %v860
        %862 = vmatmul.f32.gmra.mxu0 %v823
        %v863 = vpop.f32.mrf.mxu0
        %v864 = vadd.f32 0.0, %v863
        %865 = vdwg.mxu0
        %vm866 = vcmp.gt.f32.partialorder %v424, 0.0
        %vm867 = vcmp.gt.f32.partialorder %v427, 0.0
        %vm868 = vcmp.gt.f32.partialorder %v430, 0.0
        %vm869 = vcmp.gt.f32.partialorder %v433, 0.0
        %v870 = vsel %vm866, %v855, 0.0
        %v871 = vsel %vm867, %v858, 0.0
        %v872 = vsel %vm868, %v861, 0.0
        %v873 = vsel %vm869, %v864, 0.0
        %874 = vxpose.xlu0.b32.start [1/16] %v372, 128
        %875 = vxpose.xlu0.b32.cont [2/16] 0.0, 128
        %876 = vxpose.xlu0.b32.cont [3/16] 0.0, 128
        %877 = vxpose.xlu0.b32.cont [4/16] 0.0, 128
        %878 = vxpose.xlu0.b32.cont [5/16] 0.0, 128
        %879 = vxpose.xlu0.b32.cont [6/16] 0.0, 128
        %880 = vxpose.xlu0.b32.cont [7/16] 0.0, 128
        %881 = vxpose.xlu0.b32.cont [8/16] 0.0, 128
        %882 = vxpose.xlu0.b32.cont [9/16] 0.0, 128
        %883 = vxpose.xlu0.b32.cont [10/16] 0.0, 128
        %884 = vxpose.xlu0.b32.cont [11/16] 0.0, 128
        %885 = vxpose.xlu0.b32.cont [12/16] 0.0, 128
        %886 = vxpose.xlu0.b32.cont [13/16] 0.0, 128
        %887 = vxpose.xlu0.b32.cont [14/16] 0.0, 128
        %888 = vxpose.xlu0.b32.cont [15/16] 0.0, 128
        %889 = vxpose.xlu0.b32.end [16/16] 0.0, 128
        %v890 = vpop.trf.xlu0
        %v891 = vpop.trf.xlu0
        %v892 = vpop.trf.xlu0
        %v893 = vpop.trf.xlu0
        %v894 = vpop.trf.xlu0
        %v895 = vpop.trf.xlu0
        %v896 = vpop.trf.xlu0
        %v897 = vpop.trf.xlu0
        %v898 = vpop.trf.xlu0
        %v899 = vpop.trf.xlu0
        %v900 = vpop.trf.xlu0
        %v901 = vpop.trf.xlu0
        %v902 = vpop.trf.xlu0
        %v903 = vpop.trf.xlu0
        %v904 = vpop.trf.xlu0
        %v905 = vpop.trf.xlu0
        %v907 = vsel %vm523, %v890, 0
        %v910 = vsel %vm523, %v891, 0
        %v913 = vsel %vm523, %v892, 0
        %v916 = vsel %vm523, %v893, 0
        %918 = vmatpush.msra.mxu0 0.0
        %919 = vmatpush.msra.mxu0 0.0
        %920 = vmatpush.msra.mxu0 0.0
        %921 = vmatpush.msra.mxu0 0.0
        %922 = vmatpush.msra.mxu0 0.0
        %923 = vmatpush.msra.mxu0 0.0
        %924 = vmatpush.msra.mxu0 0.0
        %925 = vmatpush.msra.mxu0 0.0
        %926 = vmatpush.msra.mxu0 0.0
        %927 = vmatpush.msra.mxu0 0.0
        %928 = vmatpush.msra.mxu0 0.0
        %929 = vmatpush.msra.mxu0 0.0
        %930 = vmatpush.msra.mxu0 0.0
        %931 = vmatpush.msra.mxu0 0.0
        %932 = vmatpush.msra.mxu0 0.0
        %933 = vmatpush.msra.mxu0 %v870
        %934 = vmatmul.f32.gmra.mxu0 %v907
        %v935 = vpop.f32.mrf.mxu0
        %v936 = vadd.f32 0.0, %v935
        %937 = vmatmul.f32.gmra.mxu0 %v910
        %v938 = vpop.f32.mrf.mxu0
        %v939 = vadd.f32 0.0, %v938
        %940 = vmatmul.f32.gmra.mxu0 %v913
        %v941 = vpop.f32.mrf.mxu0
        %v942 = vadd.f32 0.0, %v941
        %943 = vmatmul.f32.gmra.mxu0 %v916
        %v944 = vpop.f32.mrf.mxu0
        %v945 = vadd.f32 0.0, %v944
        %946 = vdwg.mxu0
        %947 = vxpose.xlu0.b32.start [1/16] %v373, 128
        %948 = vxpose.xlu0.b32.cont [2/16] 0.0, 128
        %949 = vxpose.xlu0.b32.cont [3/16] 0.0, 128
        %950 = vxpose.xlu0.b32.cont [4/16] 0.0, 128
        %951 = vxpose.xlu0.b32.cont [5/16] 0.0, 128
        %952 = vxpose.xlu0.b32.cont [6/16] 0.0, 128
        %953 = vxpose.xlu0.b32.cont [7/16] 0.0, 128
        %954 = vxpose.xlu0.b32.cont [8/16] 0.0, 128
        %955 = vxpose.xlu0.b32.cont [9/16] 0.0, 128
        %956 = vxpose.xlu0.b32.cont [10/16] 0.0, 128
        %957 = vxpose.xlu0.b32.cont [11/16] 0.0, 128
        %958 = vxpose.xlu0.b32.cont [12/16] 0.0, 128
        %959 = vxpose.xlu0.b32.cont [13/16] 0.0, 128
        %960 = vxpose.xlu0.b32.cont [14/16] 0.0, 128
        %961 = vxpose.xlu0.b32.cont [15/16] 0.0, 128
        %962 = vxpose.xlu0.b32.end [16/16] 0.0, 128
        %v963 = vpop.trf.xlu0
        %v964 = vpop.trf.xlu0
        %v965 = vpop.trf.xlu0
        %v966 = vpop.trf.xlu0
        %v967 = vpop.trf.xlu0
        %v968 = vpop.trf.xlu0
        %v969 = vpop.trf.xlu0
        %v970 = vpop.trf.xlu0
        %v971 = vpop.trf.xlu0
        %v972 = vpop.trf.xlu0
        %v973 = vpop.trf.xlu0
        %v974 = vpop.trf.xlu0
        %v975 = vpop.trf.xlu0
        %v976 = vpop.trf.xlu0
        %v977 = vpop.trf.xlu0
        %v978 = vpop.trf.xlu0
        %v980 = vsel %vm523, %v963, 0
        %v983 = vsel %vm523, %v964, 0
        %v986 = vsel %vm523, %v965, 0
        %v989 = vsel %vm523, %v966, 0
        %991 = vmatpush.msra.mxu0 0.0
        %992 = vmatpush.msra.mxu0 0.0
        %993 = vmatpush.msra.mxu0 0.0
        %994 = vmatpush.msra.mxu0 0.0
        %995 = vmatpush.msra.mxu0 0.0
        %996 = vmatpush.msra.mxu0 0.0
        %997 = vmatpush.msra.mxu0 0.0
        %998 = vmatpush.msra.mxu0 0.0
        %999 = vmatpush.msra.mxu0 0.0
        %1000 = vmatpush.msra.mxu0 0.0
        %1001 = vmatpush.msra.mxu0 0.0
        %1002 = vmatpush.msra.mxu0 0.0
        %1003 = vmatpush.msra.mxu0 0.0
        %1004 = vmatpush.msra.mxu0 0.0
        %1005 = vmatpush.msra.mxu0 0.0
        %1006 = vmatpush.msra.mxu0 %v871
        %1007 = vmatmul.f32.gmra.mxu0 %v980
        %v1008 = vpop.f32.mrf.mxu0
        %v1009 = vadd.f32 0.0, %v1008
        %1010 = vmatmul.f32.gmra.mxu0 %v983
        %v1011 = vpop.f32.mrf.mxu0
        %v1012 = vadd.f32 0.0, %v1011
        %1013 = vmatmul.f32.gmra.mxu0 %v986
        %v1014 = vpop.f32.mrf.mxu0
        %v1015 = vadd.f32 0.0, %v1014
        %1016 = vmatmul.f32.gmra.mxu0 %v989
        %v1017 = vpop.f32.mrf.mxu0
        %v1018 = vadd.f32 0.0, %v1017
        %1019 = vdwg.mxu0
        %1020 = vxpose.xlu0.b32.start [1/16] %v374, 128
        %1021 = vxpose.xlu0.b32.cont [2/16] 0.0, 128
        %1022 = vxpose.xlu0.b32.cont [3/16] 0.0, 128
        %1023 = vxpose.xlu0.b32.cont [4/16] 0.0, 128
        %1024 = vxpose.xlu0.b32.cont [5/16] 0.0, 128
        %1025 = vxpose.xlu0.b32.cont [6/16] 0.0, 128
        %1026 = vxpose.xlu0.b32.cont [7/16] 0.0, 128
        %1027 = vxpose.xlu0.b32.cont [8/16] 0.0, 128
        %1028 = vxpose.xlu0.b32.cont [9/16] 0.0, 128
        %1029 = vxpose.xlu0.b32.cont [10/16] 0.0, 128
        %1030 = vxpose.xlu0.b32.cont [11/16] 0.0, 128
        %1031 = vxpose.xlu0.b32.cont [12/16] 0.0, 128
        %1032 = vxpose.xlu0.b32.cont [13/16] 0.0, 128
        %1033 = vxpose.xlu0.b32.cont [14/16] 0.0, 128
        %1034 = vxpose.xlu0.b32.cont [15/16] 0.0, 128
        %1035 = vxpose.xlu0.b32.end [16/16] 0.0, 128
        %v1036 = vpop.trf.xlu0
        %v1037 = vpop.trf.xlu0
        %v1038 = vpop.trf.xlu0
        %v1039 = vpop.trf.xlu0
        %v1040 = vpop.trf.xlu0
        %v1041 = vpop.trf.xlu0
        %v1042 = vpop.trf.xlu0
        %v1043 = vpop.trf.xlu0
        %v1044 = vpop.trf.xlu0
        %v1045 = vpop.trf.xlu0
        %v1046 = vpop.trf.xlu0
        %v1047 = vpop.trf.xlu0
        %v1048 = vpop.trf.xlu0
        %v1049 = vpop.trf.xlu0
        %v1050 = vpop.trf.xlu0
        %v1051 = vpop.trf.xlu0
        %v1053 = vsel %vm523, %v1036, 0
        %v1056 = vsel %vm523, %v1037, 0
        %v1059 = vsel %vm523, %v1038, 0
        %v1062 = vsel %vm523, %v1039, 0
        %1064 = vmatpush.msra.mxu0 0.0
        %1065 = vmatpush.msra.mxu0 0.0
        %1066 = vmatpush.msra.mxu0 0.0
        %1067 = vmatpush.msra.mxu0 0.0
        %1068 = vmatpush.msra.mxu0 0.0
        %1069 = vmatpush.msra.mxu0 0.0
        %1070 = vmatpush.msra.mxu0 0.0
        %1071 = vmatpush.msra.mxu0 0.0
        %1072 = vmatpush.msra.mxu0 0.0
        %1073 = vmatpush.msra.mxu0 0.0
        %1074 = vmatpush.msra.mxu0 0.0
        %1075 = vmatpush.msra.mxu0 0.0
        %1076 = vmatpush.msra.mxu0 0.0
        %1077 = vmatpush.msra.mxu0 0.0
        %1078 = vmatpush.msra.mxu0 0.0
        %1079 = vmatpush.msra.mxu0 %v872
        %1080 = vmatmul.f32.gmra.mxu0 %v1053
        %v1081 = vpop.f32.mrf.mxu0
        %v1082 = vadd.f32 0.0, %v1081
        %1083 = vmatmul.f32.gmra.mxu0 %v1056
        %v1084 = vpop.f32.mrf.mxu0
        %v1085 = vadd.f32 0.0, %v1084
        %1086 = vmatmul.f32.gmra.mxu0 %v1059
        %v1087 = vpop.f32.mrf.mxu0
        %v1088 = vadd.f32 0.0, %v1087
        %1089 = vmatmul.f32.gmra.mxu0 %v1062
        %v1090 = vpop.f32.mrf.mxu0
        %v1091 = vadd.f32 0.0, %v1090
        %1092 = vdwg.mxu0
        %1093 = vxpose.xlu0.b32.start [1/16] %v375, 128
        %1094 = vxpose.xlu0.b32.cont [2/16] 0.0, 128
        %1095 = vxpose.xlu0.b32.cont [3/16] 0.0, 128
        %1096 = vxpose.xlu0.b32.cont [4/16] 0.0, 128
        %1097 = vxpose.xlu0.b32.cont [5/16] 0.0, 128
        %1098 = vxpose.xlu0.b32.cont [6/16] 0.0, 128
        %1099 = vxpose.xlu0.b32.cont [7/16] 0.0, 128
        %1100 = vxpose.xlu0.b32.cont [8/16] 0.0, 128
        %1101 = vxpose.xlu0.b32.cont [9/16] 0.0, 128
        %1102 = vxpose.xlu0.b32.cont [10/16] 0.0, 128
        %1103 = vxpose.xlu0.b32.cont [11/16] 0.0, 128
        %1104 = vxpose.xlu0.b32.cont [12/16] 0.0, 128
        %1105 = vxpose.xlu0.b32.cont [13/16] 0.0, 128
        %1106 = vxpose.xlu0.b32.cont [14/16] 0.0, 128
        %1107 = vxpose.xlu0.b32.cont [15/16] 0.0, 128
        %1108 = vxpose.xlu0.b32.end [16/16] 0.0, 128
        %v1109 = vpop.trf.xlu0
        %v1110 = vpop.trf.xlu0
        %v1111 = vpop.trf.xlu0
        %v1112 = vpop.trf.xlu0
        %v1113 = vpop.trf.xlu0
        %v1114 = vpop.trf.xlu0
        %v1115 = vpop.trf.xlu0
        %v1116 = vpop.trf.xlu0
        %v1117 = vpop.trf.xlu0
        %v1118 = vpop.trf.xlu0
        %v1119 = vpop.trf.xlu0
        %v1120 = vpop.trf.xlu0
        %v1121 = vpop.trf.xlu0
        %v1122 = vpop.trf.xlu0
        %v1123 = vpop.trf.xlu0
        %v1124 = vpop.trf.xlu0
        %v1126 = vsel %vm523, %v1109, 0
        %v1129 = vsel %vm523, %v1110, 0
        %v1132 = vsel %vm523, %v1111, 0
        %v1135 = vsel %vm523, %v1112, 0
        %1137 = vmatpush.msra.mxu0 0.0
        %1138 = vmatpush.msra.mxu0 0.0
        %1139 = vmatpush.msra.mxu0 0.0
        %1140 = vmatpush.msra.mxu0 0.0
        %1141 = vmatpush.msra.mxu0 0.0
        %1142 = vmatpush.msra.mxu0 0.0
        %1143 = vmatpush.msra.mxu0 0.0
        %1144 = vmatpush.msra.mxu0 0.0
        %1145 = vmatpush.msra.mxu0 0.0
        %1146 = vmatpush.msra.mxu0 0.0
        %1147 = vmatpush.msra.mxu0 0.0
        %1148 = vmatpush.msra.mxu0 0.0
        %1149 = vmatpush.msra.mxu0 0.0
        %1150 = vmatpush.msra.mxu0 0.0
        %1151 = vmatpush.msra.mxu0 0.0
        %1152 = vmatpush.msra.mxu0 %v873
        %1153 = vmatmul.f32.gmra.mxu0 %v1126
        %v1154 = vpop.f32.mrf.mxu0
        %v1155 = vadd.f32 0.0, %v1154
        %1156 = vmatmul.f32.gmra.mxu0 %v1129
        %v1157 = vpop.f32.mrf.mxu0
        %v1158 = vadd.f32 0.0, %v1157
        %1159 = vmatmul.f32.gmra.mxu0 %v1132
        %v1160 = vpop.f32.mrf.mxu0
        %v1161 = vadd.f32 0.0, %v1160
        %1162 = vmatmul.f32.gmra.mxu0 %v1135
        %v1163 = vpop.f32.mrf.mxu0
        %v1164 = vadd.f32 0.0, %v1163
        %1165 = vdwg.mxu0
        %v1166 = vsel %vm393, %v870, 0.0
        %v1167 = vrot.slane %v1166, 4
        %v1168 = vadd.f32 %v1166, %v1167
        %v1169 = vrot.slane %v1168, 2
        %v1170 = vadd.f32 %v1168, %v1169
        %v1171 = vrot.slane %v1170, 1
        %v1172 = vadd.f32 %v1170, %v1171
        %v1173 = vsel %vm393, %v871, 0.0
        %v1174 = vrot.slane %v1173, 4
        %v1175 = vadd.f32 %v1173, %v1174
        %v1176 = vrot.slane %v1175, 2
        %v1177 = vadd.f32 %v1175, %v1176
        %v1178 = vrot.slane %v1177, 1
        %v1179 = vadd.f32 %v1177, %v1178
        %v1180 = vsel %vm393, %v872, 0.0
        %v1181 = vrot.slane %v1180, 4
        %v1182 = vadd.f32 %v1180, %v1181
        %v1183 = vrot.slane %v1182, 2
        %v1184 = vadd.f32 %v1182, %v1183
        %v1185 = vrot.slane %v1184, 1
        %v1186 = vadd.f32 %v1184, %v1185
        %v1187 = vsel %vm393, %v873, 0.0
        %v1188 = vrot.slane %v1187, 4
        %v1189 = vadd.f32 %v1187, %v1188
        %v1190 = vrot.slane %v1189, 2
        %v1191 = vadd.f32 %v1189, %v1190
        %v1192 = vrot.slane %v1191, 1
        %v1193 = vadd.f32 %v1191, %v1192
        %v1194 = vmul.f32 %v936, 0.01
        %v1195 = vmul.f32 %v939, 0.01
        %v1196 = vmul.f32 %v942, 0.01
        %v1197 = vmul.f32 %v945, 0.01
        %v1198 = vmul.f32 %v1009, 0.01
        %v1199 = vmul.f32 %v1012, 0.01
        %v1200 = vmul.f32 %v1015, 0.01
        %v1201 = vmul.f32 %v1018, 0.01
        %v1202 = vmul.f32 %v1082, 0.01
        %v1203 = vmul.f32 %v1085, 0.01
        %v1204 = vmul.f32 %v1088, 0.01
        %v1205 = vmul.f32 %v1091, 0.01
        %v1206 = vmul.f32 %v1155, 0.01
        %v1207 = vmul.f32 %v1158, 0.01
        %v1208 = vmul.f32 %v1161, 0.01
        %v1209 = vmul.f32 %v1164, 0.01
        %v1210 = vsub.f32 %v380, %v1194
        %v1211 = vsub.f32 %v381, %v1195
        %v1212 = vsub.f32 %v382, %v1196
        %v1213 = vsub.f32 %v383, %v1197
        %v1214 = vsub.f32 %v380, %v1198
        %v1215 = vsub.f32 %v381, %v1199
        %v1216 = vsub.f32 %v382, %v1200
        %v1217 = vsub.f32 %v383, %v1201
        %v1218 = vsub.f32 %v380, %v1202
        %v1219 = vsub.f32 %v381, %v1203
        %v1220 = vsub.f32 %v382, %v1204
        %v1221 = vsub.f32 %v383, %v1205
        %v1222 = vsub.f32 %v380, %v1206
        %v1223 = vsub.f32 %v381, %v1207
        %v1224 = vsub.f32 %v382, %v1208
        %v1225 = vsub.f32 %v383, %v1209
        %v1226 = vmul.f32 %v1172, 0.01
        %v1227 = vmul.f32 %v1179, 0.01
        %v1228 = vmul.f32 %v1186, 0.01
        %v1229 = vmul.f32 %v1193, 0.01
        %v1230 = vsub.f32 %v384, %v1226
        %v1231 = vsub.f32 %v384, %v1227
        %v1232 = vsub.f32 %v384, %v1228
        %v1233 = vsub.f32 %v384, %v1229
        %v1234 = vmul.f32 %v554, 0.01
        %v1235 = vmul.f32 %v557, 0.01
        %v1236 = vmul.f32 %v560, 0.01
        %v1237 = vmul.f32 %v563, 0.01
        %v1238 = vmul.f32 %v627, 0.01
        %v1239 = vmul.f32 %v630, 0.01
        %v1240 = vmul.f32 %v633, 0.01
        %v1241 = vmul.f32 %v636, 0.01
        %v1242 = vmul.f32 %v700, 0.01
        %v1243 = vmul.f32 %v703, 0.01
        %v1244 = vmul.f32 %v706, 0.01
        %v1245 = vmul.f32 %v709, 0.01
        %v1246 = vmul.f32 %v773, 0.01
        %v1247 = vmul.f32 %v776, 0.01
        %v1248 = vmul.f32 %v779, 0.01
        %v1249 = vmul.f32 %v782, 0.01
        %v1250 = vsub.f32 %v385, %v1234
        %v1251 = vsub.f32 %v386, %v1235
        %v1252 = vsub.f32 %v387, %v1236
        %v1253 = vsub.f32 %v388, %v1237
        %v1254 = vsub.f32 %v385, %v1238
        %v1255 = vsub.f32 %v386, %v1239
        %v1256 = vsub.f32 %v387, %v1240
        %v1257 = vsub.f32 %v388, %v1241
        %v1258 = vsub.f32 %v385, %v1242
        %v1259 = vsub.f32 %v386, %v1243
        %v1260 = vsub.f32 %v387, %v1244
        %v1261 = vsub.f32 %v388, %v1245
        %v1262 = vsub.f32 %v385, %v1246
        %v1263 = vsub.f32 %v386, %v1247
        %v1264 = vsub.f32 %v387, %v1248
        %v1265 = vsub.f32 %v388, %v1249
        %v1266 = vmul.f32 %v791, 0.01
        %v1267 = vmul.f32 %v798, 0.01
        %v1268 = vmul.f32 %v805, 0.01
        %v1269 = vmul.f32 %v812, 0.01
        %v1270 = vsub.f32 %v389, %v1266
        %v1271 = vsub.f32 %v389, %v1267
        %v1272 = vsub.f32 %v389, %v1268
        %v1273 = vsub.f32 %v389, %v1269
        %v1278 = vperm.slane %v1230, 0
        %v1279 = vperm.slane %v1231, 0
        %v1280 = vperm.slane %v1232, 0
        %v1281 = vperm.slane %v1233, 0
        %1286 = vmatpush.msra.mxu0 0.0
        %1287 = vmatpush.msra.mxu0 0.0
        %1288 = vmatpush.msra.mxu0 0.0
        %1289 = vmatpush.msra.mxu0 0.0
        %1290 = vmatpush.msra.mxu0 0.0
        %1291 = vmatpush.msra.mxu0 0.0
        %1292 = vmatpush.msra.mxu0 0.0
        %1293 = vmatpush.msra.mxu0 0.0
        %1294 = vmatpush.msra.mxu0 0.0
        %1295 = vmatpush.msra.mxu0 0.0
        %1296 = vmatpush.msra.mxu0 0.0
        %1297 = vmatpush.msra.mxu0 0.0
        %1298 = vmatpush.msra.mxu0 %v1213
        %1299 = vmatpush.msra.mxu0 %v1212
        %1300 = vmatpush.msra.mxu0 %v1211
        %1301 = vmatpush.msra.mxu0 %v1210
        %1302 = vmatmul.f32.gmra.mxu0 %v395
        %v1303 = vpop.f32.mrf.mxu0
        %v1304 = vadd.f32 %v1278, %v1303
        %1305 = vdwg.mxu0
        %1306 = vmatpush.msra.mxu0 0.0
        %1307 = vmatpush.msra.mxu0 0.0
        %1308 = vmatpush.msra.mxu0 0.0
        %1309 = vmatpush.msra.mxu0 0.0
        %1310 = vmatpush.msra.mxu0 0.0
        %1311 = vmatpush.msra.mxu0 0.0
        %1312 = vmatpush.msra.mxu0 0.0
        %1313 = vmatpush.msra.mxu0 0.0
        %1314 = vmatpush.msra.mxu0 0.0
        %1315 = vmatpush.msra.mxu0 0.0
        %1316 = vmatpush.msra.mxu0 0.0
        %1317 = vmatpush.msra.mxu0 0.0
        %1318 = vmatpush.msra.mxu0 %v1217
        %1319 = vmatpush.msra.mxu0 %v1216
        %1320 = vmatpush.msra.mxu0 %v1215
        %1321 = vmatpush.msra.mxu0 %v1214
        %1322 = vmatmul.f32.gmra.mxu0 %v398
        %v1323 = vpop.f32.mrf.mxu0
        %v1324 = vadd.f32 %v1279, %v1323
        %1325 = vdwg.mxu0
        %1326 = vmatpush.msra.mxu0 0.0
        %1327 = vmatpush.msra.mxu0 0.0
        %1328 = vmatpush.msra.mxu0 0.0
        %1329 = vmatpush.msra.mxu0 0.0
        %1330 = vmatpush.msra.mxu0 0.0
        %1331 = vmatpush.msra.mxu0 0.0
        %1332 = vmatpush.msra.mxu0 0.0
        %1333 = vmatpush.msra.mxu0 0.0
        %1334 = vmatpush.msra.mxu0 0.0
        %1335 = vmatpush.msra.mxu0 0.0
        %1336 = vmatpush.msra.mxu0 0.0
        %1337 = vmatpush.msra.mxu0 0.0
        %1338 = vmatpush.msra.mxu0 %v1221
        %1339 = vmatpush.msra.mxu0 %v1220
        %1340 = vmatpush.msra.mxu0 %v1219
        %1341 = vmatpush.msra.mxu0 %v1218
        %1342 = vmatmul.f32.gmra.mxu0 %v401
        %v1343 = vpop.f32.mrf.mxu0
        %v1344 = vadd.f32 %v1280, %v1343
        %1345 = vdwg.mxu0
        %1346 = vmatpush.msra.mxu0 0.0
        %1347 = vmatpush.msra.mxu0 0.0
        %1348 = vmatpush.msra.mxu0 0.0
        %1349 = vmatpush.msra.mxu0 0.0
        %1350 = vmatpush.msra.mxu0 0.0
        %1351 = vmatpush.msra.mxu0 0.0
        %1352 = vmatpush.msra.mxu0 0.0
        %1353 = vmatpush.msra.mxu0 0.0
        %1354 = vmatpush.msra.mxu0 0.0
        %1355 = vmatpush.msra.mxu0 0.0
        %1356 = vmatpush.msra.mxu0 0.0
        %1357 = vmatpush.msra.mxu0 0.0
        %1358 = vmatpush.msra.mxu0 %v1225
        %1359 = vmatpush.msra.mxu0 %v1224
        %1360 = vmatpush.msra.mxu0 %v1223
        %1361 = vmatpush.msra.mxu0 %v1222
        %1362 = vmatmul.f32.gmra.mxu0 %v404
        %v1363 = vpop.f32.mrf.mxu0
        %v1364 = vadd.f32 %v1281, %v1363
        %1365 = vdwg.mxu0
        %v1366 = vmax.f32 %v1304, 0.0
        %v1367 = vmax.f32 %v1324, 0.0
        %v1368 = vmax.f32 %v1344, 0.0
        %v1369 = vmax.f32 %v1364, 0.0
        %v1374 = vperm.slane %v1270, 0
        %v1375 = vperm.slane %v1271, 0
        %v1376 = vperm.slane %v1272, 0
        %v1377 = vperm.slane %v1273, 0
        %v1383 = vsel %vm393, %v1366, 0
        %1385 = vmatpush.msra.mxu0 0.0
        %1386 = vmatpush.msra.mxu0 0.0
        %1387 = vmatpush.msra.mxu0 0.0
        %1388 = vmatpush.msra.mxu0 0.0
        %1389 = vmatpush.msra.mxu0 0.0
        %1390 = vmatpush.msra.mxu0 0.0
        %1391 = vmatpush.msra.mxu0 0.0
        %1392 = vmatpush.msra.mxu0 0.0
        %1393 = vmatpush.msra.mxu0 0.0
        %1394 = vmatpush.msra.mxu0 0.0
        %1395 = vmatpush.msra.mxu0 0.0
        %1396 = vmatpush.msra.mxu0 0.0
        %1397 = vmatpush.msra.mxu0 %v1253
        %1398 = vmatpush.msra.mxu0 %v1252
        %1399 = vmatpush.msra.mxu0 %v1251
        %1400 = vmatpush.msra.mxu0 %v1250
        %1401 = vmatmul.f32.gmra.mxu0 %v1383
        %v1402 = vpop.f32.mrf.mxu0
        %v1403 = vadd.f32 %v1374, %v1402
        %1404 = vdwg.mxu0
        %v1406 = vsel %vm393, %v1367, 0
        %1408 = vmatpush.msra.mxu0 0.0
        %1409 = vmatpush.msra.mxu0 0.0
        %1410 = vmatpush.msra.mxu0 0.0
        %1411 = vmatpush.msra.mxu0 0.0
        %1412 = vmatpush.msra.mxu0 0.0
        %1413 = vmatpush.msra.mxu0 0.0
        %1414 = vmatpush.msra.mxu0 0.0
        %1415 = vmatpush.msra.mxu0 0.0
        %1416 = vmatpush.msra.mxu0 0.0
        %1417 = vmatpush.msra.mxu0 0.0
        %1418 = vmatpush.msra.mxu0 0.0
        %1419 = vmatpush.msra.mxu0 0.0
        %1420 = vmatpush.msra.mxu0 %v1257
        %1421 = vmatpush.msra.mxu0 %v1256
        %1422 = vmatpush.msra.mxu0 %v1255
        %1423 = vmatpush.msra.mxu0 %v1254
        %1424 = vmatmul.f32.gmra.mxu0 %v1406
        %v1425 = vpop.f32.mrf.mxu0
        %v1426 = vadd.f32 %v1375, %v1425
        %1427 = vdwg.mxu0
        %v1429 = vsel %vm393, %v1368, 0
        %1431 = vmatpush.msra.mxu0 0.0
        %1432 = vmatpush.msra.mxu0 0.0
        %1433 = vmatpush.msra.mxu0 0.0
        %1434 = vmatpush.msra.mxu0 0.0
        %1435 = vmatpush.msra.mxu0 0.0
        %1436 = vmatpush.msra.mxu0 0.0
        %1437 = vmatpush.msra.mxu0 0.0
        %1438 = vmatpush.msra.mxu0 0.0
        %1439 = vmatpush.msra.mxu0 0.0
        %1440 = vmatpush.msra.mxu0 0.0
        %1441 = vmatpush.msra.mxu0 0.0
        %1442 = vmatpush.msra.mxu0 0.0
        %1443 = vmatpush.msra.mxu0 %v1261
        %1444 = vmatpush.msra.mxu0 %v1260
        %1445 = vmatpush.msra.mxu0 %v1259
        %1446 = vmatpush.msra.mxu0 %v1258
        %1447 = vmatmul.f32.gmra.mxu0 %v1429
        %v1448 = vpop.f32.mrf.mxu0
        %v1449 = vadd.f32 %v1376, %v1448
        %1450 = vdwg.mxu0
        %v1452 = vsel %vm393, %v1369, 0
        %1454 = vmatpush.msra.mxu0 0.0
        %1455 = vmatpush.msra.mxu0 0.0
        %1456 = vmatpush.msra.mxu0 0.0
        %1457 = vmatpush.msra.mxu0 0.0
        %1458 = vmatpush.msra.mxu0 0.0
        %1459 = vmatpush.msra.mxu0 0.0
        %1460 = vmatpush.msra.mxu0 0.0
        %1461 = vmatpush.msra.mxu0 0.0
        %1462 = vmatpush.msra.mxu0 0.0
        %1463 = vmatpush.msra.mxu0 0.0
        %1464 = vmatpush.msra.mxu0 0.0
        %1465 = vmatpush.msra.mxu0 0.0
        %1466 = vmatpush.msra.mxu0 %v1265
        %1467 = vmatpush.msra.mxu0 %v1264
        %1468 = vmatpush.msra.mxu0 %v1263
        %1469 = vmatpush.msra.mxu0 %v1262
        %1470 = vmatmul.f32.gmra.mxu0 %v1452
        %v1471 = vpop.f32.mrf.mxu0
        %v1472 = vadd.f32 %v1377, %v1471
        %1473 = vdwg.mxu0
        %v1474 = vsub.f32 %v1403, %v376
        %v1475 = vsub.f32 %v1426, %v377
        %v1476 = vsub.f32 %v1449, %v378
        %v1477 = vsub.f32 %v1472, %v379
        %v1478 = vmul.f32 %v1474, 0.0625
        %v1479 = vmul.f32 %v1475, 0.0625
        %v1480 = vmul.f32 %v1476, 0.0625
        %v1481 = vmul.f32 %v1477, 0.0625
        %1482 = vxpose.xlu0.b32.start [1/16] %v1366, 128
        %1483 = vxpose.xlu0.b32.cont [2/16] 0.0, 128
        %1484 = vxpose.xlu0.b32.cont [3/16] 0.0, 128
        %1485 = vxpose.xlu0.b32.cont [4/16] 0.0, 128
        %1486 = vxpose.xlu0.b32.cont [5/16] 0.0, 128
        %1487 = vxpose.xlu0.b32.cont [6/16] 0.0, 128
        %1488 = vxpose.xlu0.b32.cont [7/16] 0.0, 128
        %1489 = vxpose.xlu0.b32.cont [8/16] 0.0, 128
        %1490 = vxpose.xlu0.b32.cont [9/16] 0.0, 128
        %1491 = vxpose.xlu0.b32.cont [10/16] 0.0, 128
        %1492 = vxpose.xlu0.b32.cont [11/16] 0.0, 128
        %1493 = vxpose.xlu0.b32.cont [12/16] 0.0, 128
        %1494 = vxpose.xlu0.b32.cont [13/16] 0.0, 128
        %1495 = vxpose.xlu0.b32.cont [14/16] 0.0, 128
        %1496 = vxpose.xlu0.b32.cont [15/16] 0.0, 128
        %1497 = vxpose.xlu0.b32.end [16/16] 0.0, 128
        %v1498 = vpop.trf.xlu0
        %v1499 = vpop.trf.xlu0
        %v1500 = vpop.trf.xlu0
        %v1501 = vpop.trf.xlu0
        %v1502 = vpop.trf.xlu0
        %v1503 = vpop.trf.xlu0
        %v1504 = vpop.trf.xlu0
        %v1505 = vpop.trf.xlu0
        %v1506 = vpop.trf.xlu0
        %v1507 = vpop.trf.xlu0
        %v1508 = vpop.trf.xlu0
        %v1509 = vpop.trf.xlu0
        %v1510 = vpop.trf.xlu0
        %v1511 = vpop.trf.xlu0
        %v1512 = vpop.trf.xlu0
        %v1513 = vpop.trf.xlu0
        %v1515 = vsel %vm523, %v1498, 0
        %v1518 = vsel %vm523, %v1499, 0
        %v1521 = vsel %vm523, %v1500, 0
        %v1524 = vsel %vm523, %v1501, 0
        %1526 = vmatpush.msra.mxu0 0.0
        %1527 = vmatpush.msra.mxu0 0.0
        %1528 = vmatpush.msra.mxu0 0.0
        %1529 = vmatpush.msra.mxu0 0.0
        %1530 = vmatpush.msra.mxu0 0.0
        %1531 = vmatpush.msra.mxu0 0.0
        %1532 = vmatpush.msra.mxu0 0.0
        %1533 = vmatpush.msra.mxu0 0.0
        %1534 = vmatpush.msra.mxu0 0.0
        %1535 = vmatpush.msra.mxu0 0.0
        %1536 = vmatpush.msra.mxu0 0.0
        %1537 = vmatpush.msra.mxu0 0.0
        %1538 = vmatpush.msra.mxu0 0.0
        %1539 = vmatpush.msra.mxu0 0.0
        %1540 = vmatpush.msra.mxu0 0.0
        %1541 = vmatpush.msra.mxu0 %v1478
        %1542 = vmatmul.f32.gmra.mxu0 %v1515
        %v1543 = vpop.f32.mrf.mxu0
        %v1544 = vadd.f32 0.0, %v1543
        %1545 = vmatmul.f32.gmra.mxu0 %v1518
        %v1546 = vpop.f32.mrf.mxu0
        %v1547 = vadd.f32 0.0, %v1546
        %1548 = vmatmul.f32.gmra.mxu0 %v1521
        %v1549 = vpop.f32.mrf.mxu0
        %v1550 = vadd.f32 0.0, %v1549
        %1551 = vmatmul.f32.gmra.mxu0 %v1524
        %v1552 = vpop.f32.mrf.mxu0
        %v1553 = vadd.f32 0.0, %v1552
        %1554 = vdwg.mxu0
        %1555 = vxpose.xlu0.b32.start [1/16] %v1367, 128
        %1556 = vxpose.xlu0.b32.cont [2/16] 0.0, 128
        %1557 = vxpose.xlu0.b32.cont [3/16] 0.0, 128
        %1558 = vxpose.xlu0.b32.cont [4/16] 0.0, 128
        %1559 = vxpose.xlu0.b32.cont [5/16] 0.0, 128
        %1560 = vxpose.xlu0.b32.cont [6/16] 0.0, 128
        %1561 = vxpose.xlu0.b32.cont [7/16] 0.0, 128
        %1562 = vxpose.xlu0.b32.cont [8/16] 0.0, 128
        %1563 = vxpose.xlu0.b32.cont [9/16] 0.0, 128
        %1564 = vxpose.xlu0.b32.cont [10/16] 0.0, 128
        %1565 = vxpose.xlu0.b32.cont [11/16] 0.0, 128
        %1566 = vxpose.xlu0.b32.cont [12/16] 0.0, 128
        %1567 = vxpose.xlu0.b32.cont [13/16] 0.0, 128
        %1568 = vxpose.xlu0.b32.cont [14/16] 0.0, 128
        %1569 = vxpose.xlu0.b32.cont [15/16] 0.0, 128
        %1570 = vxpose.xlu0.b32.end [16/16] 0.0, 128
        %v1571 = vpop.trf.xlu0
        %v1572 = vpop.trf.xlu0
        %v1573 = vpop.trf.xlu0
        %v1574 = vpop.trf.xlu0
        %v1575 = vpop.trf.xlu0
        %v1576 = vpop.trf.xlu0
        %v1577 = vpop.trf.xlu0
        %v1578 = vpop.trf.xlu0
        %v1579 = vpop.trf.xlu0
        %v1580 = vpop.trf.xlu0
        %v1581 = vpop.trf.xlu0
        %v1582 = vpop.trf.xlu0
        %v1583 = vpop.trf.xlu0
        %v1584 = vpop.trf.xlu0
        %v1585 = vpop.trf.xlu0
        %v1586 = vpop.trf.xlu0
        %v1588 = vsel %vm523, %v1571, 0
        %v1591 = vsel %vm523, %v1572, 0
        %v1594 = vsel %vm523, %v1573, 0
        %v1597 = vsel %vm523, %v1574, 0
        %1599 = vmatpush.msra.mxu0 0.0
        %1600 = vmatpush.msra.mxu0 0.0
        %1601 = vmatpush.msra.mxu0 0.0
        %1602 = vmatpush.msra.mxu0 0.0
        %1603 = vmatpush.msra.mxu0 0.0
        %1604 = vmatpush.msra.mxu0 0.0
        %1605 = vmatpush.msra.mxu0 0.0
        %1606 = vmatpush.msra.mxu0 0.0
        %1607 = vmatpush.msra.mxu0 0.0
        %1608 = vmatpush.msra.mxu0 0.0
        %1609 = vmatpush.msra.mxu0 0.0
        %1610 = vmatpush.msra.mxu0 0.0
        %1611 = vmatpush.msra.mxu0 0.0
        %1612 = vmatpush.msra.mxu0 0.0
        %1613 = vmatpush.msra.mxu0 0.0
        %1614 = vmatpush.msra.mxu0 %v1479
        %1615 = vmatmul.f32.gmra.mxu0 %v1588
        %v1616 = vpop.f32.mrf.mxu0
        %v1617 = vadd.f32 0.0, %v1616
        %1618 = vmatmul.f32.gmra.mxu0 %v1591
        %v1619 = vpop.f32.mrf.mxu0
        %v1620 = vadd.f32 0.0, %v1619
        %1621 = vmatmul.f32.gmra.mxu0 %v1594
        %v1622 = vpop.f32.mrf.mxu0
        %v1623 = vadd.f32 0.0, %v1622
        %1624 = vmatmul.f32.gmra.mxu0 %v1597
        %v1625 = vpop.f32.mrf.mxu0
        %v1626 = vadd.f32 0.0, %v1625
        %1627 = vdwg.mxu0
        %1628 = vxpose.xlu0.b32.start [1/16] %v1368, 128
        %1629 = vxpose.xlu0.b32.cont [2/16] 0.0, 128
        %1630 = vxpose.xlu0.b32.cont [3/16] 0.0, 128
        %1631 = vxpose.xlu0.b32.cont [4/16] 0.0, 128
        %1632 = vxpose.xlu0.b32.cont [5/16] 0.0, 128
        %1633 = vxpose.xlu0.b32.cont [6/16] 0.0, 128
        %1634 = vxpose.xlu0.b32.cont [7/16] 0.0, 128
        %1635 = vxpose.xlu0.b32.cont [8/16] 0.0, 128
        %1636 = vxpose.xlu0.b32.cont [9/16] 0.0, 128
        %1637 = vxpose.xlu0.b32.cont [10/16] 0.0, 128
        %1638 = vxpose.xlu0.b32.cont [11/16] 0.0, 128
        %1639 = vxpose.xlu0.b32.cont [12/16] 0.0, 128
        %1640 = vxpose.xlu0.b32.cont [13/16] 0.0, 128
        %1641 = vxpose.xlu0.b32.cont [14/16] 0.0, 128
        %1642 = vxpose.xlu0.b32.cont [15/16] 0.0, 128
        %1643 = vxpose.xlu0.b32.end [16/16] 0.0, 128
        %v1644 = vpop.trf.xlu0
        %v1645 = vpop.trf.xlu0
        %v1646 = vpop.trf.xlu0
        %v1647 = vpop.trf.xlu0
        %v1648 = vpop.trf.xlu0
        %v1649 = vpop.trf.xlu0
        %v1650 = vpop.trf.xlu0
        %v1651 = vpop.trf.xlu0
        %v1652 = vpop.trf.xlu0
        %v1653 = vpop.trf.xlu0
        %v1654 = vpop.trf.xlu0
        %v1655 = vpop.trf.xlu0
        %v1656 = vpop.trf.xlu0
        %v1657 = vpop.trf.xlu0
        %v1658 = vpop.trf.xlu0
        %v1659 = vpop.trf.xlu0
        %v1661 = vsel %vm523, %v1644, 0
        %v1664 = vsel %vm523, %v1645, 0
        %v1667 = vsel %vm523, %v1646, 0
        %v1670 = vsel %vm523, %v1647, 0
        %1672 = vmatpush.msra.mxu0 0.0
        %1673 = vmatpush.msra.mxu0 0.0
        %1674 = vmatpush.msra.mxu0 0.0
        %1675 = vmatpush.msra.mxu0 0.0
        %1676 = vmatpush.msra.mxu0 0.0
        %1677 = vmatpush.msra.mxu0 0.0
        %1678 = vmatpush.msra.mxu0 0.0
        %1679 = vmatpush.msra.mxu0 0.0
        %1680 = vmatpush.msra.mxu0 0.0
        %1681 = vmatpush.msra.mxu0 0.0
        %1682 = vmatpush.msra.mxu0 0.0
        %1683 = vmatpush.msra.mxu0 0.0
        %1684 = vmatpush.msra.mxu0 0.0
        %1685 = vmatpush.msra.mxu0 0.0
        %1686 = vmatpush.msra.mxu0 0.0
        %1687 = vmatpush.msra.mxu0 %v1480
        %1688 = vmatmul.f32.gmra.mxu0 %v1661
        %v1689 = vpop.f32.mrf.mxu0
        %v1690 = vadd.f32 0.0, %v1689
        %1691 = vmatmul.f32.gmra.mxu0 %v1664
        %v1692 = vpop.f32.mrf.mxu0
        %v1693 = vadd.f32 0.0, %v1692
        %1694 = vmatmul.f32.gmra.mxu0 %v1667
        %v1695 = vpop.f32.mrf.mxu0
        %v1696 = vadd.f32 0.0, %v1695
        %1697 = vmatmul.f32.gmra.mxu0 %v1670
        %v1698 = vpop.f32.mrf.mxu0
        %v1699 = vadd.f32 0.0, %v1698
        %1700 = vdwg.mxu0
        %1701 = vxpose.xlu0.b32.start [1/16] %v1369, 128
        %1702 = vxpose.xlu0.b32.cont [2/16] 0.0, 128
        %1703 = vxpose.xlu0.b32.cont [3/16] 0.0, 128
        %1704 = vxpose.xlu0.b32.cont [4/16] 0.0, 128
        %1705 = vxpose.xlu0.b32.cont [5/16] 0.0, 128
        %1706 = vxpose.xlu0.b32.cont [6/16] 0.0, 128
        %1707 = vxpose.xlu0.b32.cont [7/16] 0.0, 128
        %1708 = vxpose.xlu0.b32.cont [8/16] 0.0, 128
        %1709 = vxpose.xlu0.b32.cont [9/16] 0.0, 128
        %1710 = vxpose.xlu0.b32.cont [10/16] 0.0, 128
        %1711 = vxpose.xlu0.b32.cont [11/16] 0.0, 128
        %1712 = vxpose.xlu0.b32.cont [12/16] 0.0, 128
        %1713 = vxpose.xlu0.b32.cont [13/16] 0.0, 128
        %1714 = vxpose.xlu0.b32.cont [14/16] 0.0, 128
        %1715 = vxpose.xlu0.b32.cont [15/16] 0.0, 128
        %1716 = vxpose.xlu0.b32.end [16/16] 0.0, 128
        %v1717 = vpop.trf.xlu0
        %v1718 = vpop.trf.xlu0
        %v1719 = vpop.trf.xlu0
        %v1720 = vpop.trf.xlu0
        %v1721 = vpop.trf.xlu0
        %v1722 = vpop.trf.xlu0
        %v1723 = vpop.trf.xlu0
        %v1724 = vpop.trf.xlu0
        %v1725 = vpop.trf.xlu0
        %v1726 = vpop.trf.xlu0
        %v1727 = vpop.trf.xlu0
        %v1728 = vpop.trf.xlu0
        %v1729 = vpop.trf.xlu0
        %v1730 = vpop.trf.xlu0
        %v1731 = vpop.trf.xlu0
        %v1732 = vpop.trf.xlu0
        %v1734 = vsel %vm523, %v1717, 0
        %v1737 = vsel %vm523, %v1718, 0
        %v1740 = vsel %vm523, %v1719, 0
        %v1743 = vsel %vm523, %v1720, 0
        %1745 = vmatpush.msra.mxu0 0.0
        %1746 = vmatpush.msra.mxu0 0.0
        %1747 = vmatpush.msra.mxu0 0.0
        %1748 = vmatpush.msra.mxu0 0.0
        %1749 = vmatpush.msra.mxu0 0.0
        %1750 = vmatpush.msra.mxu0 0.0
        %1751 = vmatpush.msra.mxu0 0.0
        %1752 = vmatpush.msra.mxu0 0.0
        %1753 = vmatpush.msra.mxu0 0.0
        %1754 = vmatpush.msra.mxu0 0.0
        %1755 = vmatpush.msra.mxu0 0.0
        %1756 = vmatpush.msra.mxu0 0.0
        %1757 = vmatpush.msra.mxu0 0.0
        %1758 = vmatpush.msra.mxu0 0.0
        %1759 = vmatpush.msra.mxu0 0.0
        %1760 = vmatpush.msra.mxu0 %v1481
        %1761 = vmatmul.f32.gmra.mxu0 %v1734
        %v1762 = vpop.f32.mrf.mxu0
        %v1763 = vadd.f32 0.0, %v1762
        %1764 = vmatmul.f32.gmra.mxu0 %v1737
        %v1765 = vpop.f32.mrf.mxu0
        %v1766 = vadd.f32 0.0, %v1765
        %1767 = vmatmul.f32.gmra.mxu0 %v1740
        %v1768 = vpop.f32.mrf.mxu0
        %v1769 = vadd.f32 0.0, %v1768
        %1770 = vmatmul.f32.gmra.mxu0 %v1743
        %v1771 = vpop.f32.mrf.mxu0
        %v1772 = vadd.f32 0.0, %v1771
        %1773 = vdwg.mxu0
        %v1774 = vsel %vm784, %v1478, 0.0
        %v1775 = vrot.slane %v1774, 4
        %v1776 = vadd.f32 %v1774, %v1775
        %v1777 = vrot.slane %v1776, 2
        %v1778 = vadd.f32 %v1776, %v1777
        %v1779 = vrot.slane %v1778, 1
        %v1780 = vadd.f32 %v1778, %v1779
        %v1781 = vsel %vm784, %v1479, 0.0
        %v1782 = vrot.slane %v1781, 4
        %v1783 = vadd.f32 %v1781, %v1782
        %v1784 = vrot.slane %v1783, 2
        %v1785 = vadd.f32 %v1783, %v1784
        %v1786 = vrot.slane %v1785, 1
        %v1787 = vadd.f32 %v1785, %v1786
        %v1788 = vsel %vm784, %v1480, 0.0
        %v1789 = vrot.slane %v1788, 4
        %v1790 = vadd.f32 %v1788, %v1789
        %v1791 = vrot.slane %v1790, 2
        %v1792 = vadd.f32 %v1790, %v1791
        %v1793 = vrot.slane %v1792, 1
        %v1794 = vadd.f32 %v1792, %v1793
        %v1795 = vsel %vm784, %v1481, 0.0
        %v1796 = vrot.slane %v1795, 4
        %v1797 = vadd.f32 %v1795, %v1796
        %v1798 = vrot.slane %v1797, 2
        %v1799 = vadd.f32 %v1797, %v1798
        %v1800 = vrot.slane %v1799, 1
        %v1801 = vadd.f32 %v1799, %v1800
        %v1803 = vsel %vm784, %v1478, 0
        %v1806 = vsel %vm784, %v1250, 0
        %v1809 = vsel %vm784, %v1251, 0
        %v1812 = vsel %vm784, %v1252, 0
        %v1815 = vsel %vm784, %v1253, 0
        %1817 = vmatpush.xpose.msra.mxu0 0.0
        %1818 = vmatpush.xpose.msra.mxu0 0.0
        %1819 = vmatpush.xpose.msra.mxu0 0.0
        %1820 = vmatpush.xpose.msra.mxu0 0.0
        %1821 = vmatpush.xpose.msra.mxu0 0.0
        %1822 = vmatpush.xpose.msra.mxu0 0.0
        %1823 = vmatpush.xpose.msra.mxu0 0.0
        %1824 = vmatpush.xpose.msra.mxu0 0.0
        %1825 = vmatpush.xpose.msra.mxu0 0.0
        %1826 = vmatpush.xpose.msra.mxu0 0.0
        %1827 = vmatpush.xpose.msra.mxu0 0.0
        %1828 = vmatpush.xpose.msra.mxu0 0.0
        %1829 = vmatpush.xpose.msra.mxu0 %v1815
        %1830 = vmatpush.xpose.msra.mxu0 %v1812
        %1831 = vmatpush.xpose.msra.mxu0 %v1809
        %1832 = vmatpush.xpose.msra.mxu0 %v1806
        %1833 = vmatmul.f32.gmra.mxu0 %v1803
        %v1834 = vpop.f32.mrf.mxu0
        %v1835 = vadd.f32 0.0, %v1834
        %1836 = vdwg.mxu0
        %v1838 = vsel %vm784, %v1479, 0
        %v1841 = vsel %vm784, %v1254, 0
        %v1844 = vsel %vm784, %v1255, 0
        %v1847 = vsel %vm784, %v1256, 0
        %v1850 = vsel %vm784, %v1257, 0
        %1852 = vmatpush.xpose.msra.mxu0 0.0
        %1853 = vmatpush.xpose.msra.mxu0 0.0
        %1854 = vmatpush.xpose.msra.mxu0 0.0
        %1855 = vmatpush.xpose.msra.mxu0 0.0
        %1856 = vmatpush.xpose.msra.mxu0 0.0
        %1857 = vmatpush.xpose.msra.mxu0 0.0
        %1858 = vmatpush.xpose.msra.mxu0 0.0
        %1859 = vmatpush.xpose.msra.mxu0 0.0
        %1860 = vmatpush.xpose.msra.mxu0 0.0
        %1861 = vmatpush.xpose.msra.mxu0 0.0
        %1862 = vmatpush.xpose.msra.mxu0 0.0
        %1863 = vmatpush.xpose.msra.mxu0 0.0
        %1864 = vmatpush.xpose.msra.mxu0 %v1850
        %1865 = vmatpush.xpose.msra.mxu0 %v1847
        %1866 = vmatpush.xpose.msra.mxu0 %v1844
        %1867 = vmatpush.xpose.msra.mxu0 %v1841
        %1868 = vmatmul.f32.gmra.mxu0 %v1838
        %v1869 = vpop.f32.mrf.mxu0
        %v1870 = vadd.f32 0.0, %v1869
        %1871 = vdwg.mxu0
        %v1873 = vsel %vm784, %v1480, 0
        %v1876 = vsel %vm784, %v1258, 0
        %v1879 = vsel %vm784, %v1259, 0
        %v1882 = vsel %vm784, %v1260, 0
        %v1885 = vsel %vm784, %v1261, 0
        %1887 = vmatpush.xpose.msra.mxu0 0.0
        %1888 = vmatpush.xpose.msra.mxu0 0.0
        %1889 = vmatpush.xpose.msra.mxu0 0.0
        %1890 = vmatpush.xpose.msra.mxu0 0.0
        %1891 = vmatpush.xpose.msra.mxu0 0.0
        %1892 = vmatpush.xpose.msra.mxu0 0.0
        %1893 = vmatpush.xpose.msra.mxu0 0.0
        %1894 = vmatpush.xpose.msra.mxu0 0.0
        %1895 = vmatpush.xpose.msra.mxu0 0.0
        %1896 = vmatpush.xpose.msra.mxu0 0.0
        %1897 = vmatpush.xpose.msra.mxu0 0.0
        %1898 = vmatpush.xpose.msra.mxu0 0.0
        %1899 = vmatpush.xpose.msra.mxu0 %v1885
        %1900 = vmatpush.xpose.msra.mxu0 %v1882
        %1901 = vmatpush.xpose.msra.mxu0 %v1879
        %1902 = vmatpush.xpose.msra.mxu0 %v1876
        %1903 = vmatmul.f32.gmra.mxu0 %v1873
        %v1904 = vpop.f32.mrf.mxu0
        %v1905 = vadd.f32 0.0, %v1904
        %1906 = vdwg.mxu0
        %v1908 = vsel %vm784, %v1481, 0
        %v1911 = vsel %vm784, %v1262, 0
        %v1914 = vsel %vm784, %v1263, 0
        %v1917 = vsel %vm784, %v1264, 0
        %v1920 = vsel %vm784, %v1265, 0
        %1922 = vmatpush.xpose.msra.mxu0 0.0
        %1923 = vmatpush.xpose.msra.mxu0 0.0
        %1924 = vmatpush.xpose.msra.mxu0 0.0
        %1925 = vmatpush.xpose.msra.mxu0 0.0
        %1926 = vmatpush.xpose.msra.mxu0 0.0
        %1927 = vmatpush.xpose.msra.mxu0 0.0
        %1928 = vmatpush.xpose.msra.mxu0 0.0
        %1929 = vmatpush.xpose.msra.mxu0 0.0
        %1930 = vmatpush.xpose.msra.mxu0 0.0
        %1931 = vmatpush.xpose.msra.mxu0 0.0
        %1932 = vmatpush.xpose.msra.mxu0 0.0
        %1933 = vmatpush.xpose.msra.mxu0 0.0
        %1934 = vmatpush.xpose.msra.mxu0 %v1920
        %1935 = vmatpush.xpose.msra.mxu0 %v1917
        %1936 = vmatpush.xpose.msra.mxu0 %v1914
        %1937 = vmatpush.xpose.msra.mxu0 %v1911
        %1938 = vmatmul.f32.gmra.mxu0 %v1908
        %v1939 = vpop.f32.mrf.mxu0
        %v1940 = vadd.f32 0.0, %v1939
        %1941 = vdwg.mxu0
        %vm1942 = vcmp.gt.f32.partialorder %v1304, 0.0
        %vm1943 = vcmp.gt.f32.partialorder %v1324, 0.0
        %vm1944 = vcmp.gt.f32.partialorder %v1344, 0.0
        %vm1945 = vcmp.gt.f32.partialorder %v1364, 0.0
        %v1946 = vsel %vm1942, %v1835, 0.0
        %v1947 = vsel %vm1943, %v1870, 0.0
        %v1948 = vsel %vm1944, %v1905, 0.0
        %v1949 = vsel %vm1945, %v1940, 0.0
        %1950 = vmatpush.msra.mxu0 0.0
        %1951 = vmatpush.msra.mxu0 0.0
        %1952 = vmatpush.msra.mxu0 0.0
        %1953 = vmatpush.msra.mxu0 0.0
        %1954 = vmatpush.msra.mxu0 0.0
        %1955 = vmatpush.msra.mxu0 0.0
        %1956 = vmatpush.msra.mxu0 0.0
        %1957 = vmatpush.msra.mxu0 0.0
        %1958 = vmatpush.msra.mxu0 0.0
        %1959 = vmatpush.msra.mxu0 0.0
        %1960 = vmatpush.msra.mxu0 0.0
        %1961 = vmatpush.msra.mxu0 0.0
        %1962 = vmatpush.msra.mxu0 0.0
        %1963 = vmatpush.msra.mxu0 0.0
        %1964 = vmatpush.msra.mxu0 0.0
        %1965 = vmatpush.msra.mxu0 %v1946
        %1966 = vmatmul.f32.gmra.mxu0 %v907
        %v1967 = vpop.f32.mrf.mxu0
        %v1968 = vadd.f32 0.0, %v1967
        %1969 = vmatmul.f32.gmra.mxu0 %v910
        %v1970 = vpop.f32.mrf.mxu0
        %v1971 = vadd.f32 0.0, %v1970
        %1972 = vmatmul.f32.gmra.mxu0 %v913
        %v1973 = vpop.f32.mrf.mxu0
        %v1974 = vadd.f32 0.0, %v1973
        %1975 = vmatmul.f32.gmra.mxu0 %v916
        %v1976 = vpop.f32.mrf.mxu0
        %v1977 = vadd.f32 0.0, %v1976
        %1978 = vdwg.mxu0
        %1979 = vmatpush.msra.mxu0 0.0
        %1980 = vmatpush.msra.mxu0 0.0
        %1981 = vmatpush.msra.mxu0 0.0
        %1982 = vmatpush.msra.mxu0 0.0
        %1983 = vmatpush.msra.mxu0 0.0
        %1984 = vmatpush.msra.mxu0 0.0
        %1985 = vmatpush.msra.mxu0 0.0
        %1986 = vmatpush.msra.mxu0 0.0
        %1987 = vmatpush.msra.mxu0 0.0
        %1988 = vmatpush.msra.mxu0 0.0
        %1989 = vmatpush.msra.mxu0 0.0
        %1990 = vmatpush.msra.mxu0 0.0
        %1991 = vmatpush.msra.mxu0 0.0
        %1992 = vmatpush.msra.mxu0 0.0
        %1993 = vmatpush.msra.mxu0 0.0
        %1994 = vmatpush.msra.mxu0 %v1947
        %1995 = vmatmul.f32.gmra.mxu0 %v980
        %v1996 = vpop.f32.mrf.mxu0
        %v1997 = vadd.f32 0.0, %v1996
        %1998 = vmatmul.f32.gmra.mxu0 %v983
        %v1999 = vpop.f32.mrf.mxu0
        %v2000 = vadd.f32 0.0, %v1999
        %2001 = vmatmul.f32.gmra.mxu0 %v986
        %v2002 = vpop.f32.mrf.mxu0
        %v2003 = vadd.f32 0.0, %v2002
        %2004 = vmatmul.f32.gmra.mxu0 %v989
        %v2005 = vpop.f32.mrf.mxu0
        %v2006 = vadd.f32 0.0, %v2005
        %2007 = vdwg.mxu0
        %2008 = vmatpush.msra.mxu0 0.0
        %2009 = vmatpush.msra.mxu0 0.0
        %2010 = vmatpush.msra.mxu0 0.0
        %2011 = vmatpush.msra.mxu0 0.0
        %2012 = vmatpush.msra.mxu0 0.0
        %2013 = vmatpush.msra.mxu0 0.0
        %2014 = vmatpush.msra.mxu0 0.0
        %2015 = vmatpush.msra.mxu0 0.0
        %2016 = vmatpush.msra.mxu0 0.0
        %2017 = vmatpush.msra.mxu0 0.0
        %2018 = vmatpush.msra.mxu0 0.0
        %2019 = vmatpush.msra.mxu0 0.0
        %2020 = vmatpush.msra.mxu0 0.0
        %2021 = vmatpush.msra.mxu0 0.0
        %2022 = vmatpush.msra.mxu0 0.0
        %2023 = vmatpush.msra.mxu0 %v1948
        %2024 = vmatmul.f32.gmra.mxu0 %v1053
        %v2025 = vpop.f32.mrf.mxu0
        %v2026 = vadd.f32 0.0, %v2025
        %2027 = vmatmul.f32.gmra.mxu0 %v1056
        %v2028 = vpop.f32.mrf.mxu0
        %v2029 = vadd.f32 0.0, %v2028
        %2030 = vmatmul.f32.gmra.mxu0 %v1059
        %v2031 = vpop.f32.mrf.mxu0
        %v2032 = vadd.f32 0.0, %v2031
        %2033 = vmatmul.f32.gmra.mxu0 %v1062
        %v2034 = vpop.f32.mrf.mxu0
        %v2035 = vadd.f32 0.0, %v2034
        %2036 = vdwg.mxu0
        %2037 = vmatpush.msra.mxu0 0.0
        %2038 = vmatpush.msra.mxu0 0.0
        %2039 = vmatpush.msra.mxu0 0.0
        %2040 = vmatpush.msra.mxu0 0.0
        %2041 = vmatpush.msra.mxu0 0.0
        %2042 = vmatpush.msra.mxu0 0.0
        %2043 = vmatpush.msra.mxu0 0.0
        %2044 = vmatpush.msra.mxu0 0.0
        %2045 = vmatpush.msra.mxu0 0.0
        %2046 = vmatpush.msra.mxu0 0.0
        %2047 = vmatpush.msra.mxu0 0.0
        %2048 = vmatpush.msra.mxu0 0.0
        %2049 = vmatpush.msra.mxu0 0.0
        %2050 = vmatpush.msra.mxu0 0.0
        %2051 = vmatpush.msra.mxu0 0.0
        %2052 = vmatpush.msra.mxu0 %v1949
        %2053 = vmatmul.f32.gmra.mxu0 %v1126
        %v2054 = vpop.f32.mrf.mxu0
        %v2055 = vadd.f32 0.0, %v2054
        %2056 = vmatmul.f32.gmra.mxu0 %v1129
        %v2057 = vpop.f32.mrf.mxu0
        %v2058 = vadd.f32 0.0, %v2057
        %2059 = vmatmul.f32.gmra.mxu0 %v1132
        %v2060 = vpop.f32.mrf.mxu0
        %v2061 = vadd.f32 0.0, %v2060
        %2062 = vmatmul.f32.gmra.mxu0 %v1135
        %v2063 = vpop.f32.mrf.mxu0
        %v2064 = vadd.f32 0.0, %v2063
        %2065 = vdwg.mxu0
        %v2066 = vsel %vm393, %v1946, 0.0
        %v2067 = vrot.slane %v2066, 4
        %v2068 = vadd.f32 %v2066, %v2067
        %v2069 = vrot.slane %v2068, 2
        %v2070 = vadd.f32 %v2068, %v2069
        %v2071 = vrot.slane %v2070, 1
        %v2072 = vadd.f32 %v2070, %v2071
        %v2073 = vsel %vm393, %v1947, 0.0
        %v2074 = vrot.slane %v2073, 4
        %v2075 = vadd.f32 %v2073, %v2074
        %v2076 = vrot.slane %v2075, 2
        %v2077 = vadd.f32 %v2075, %v2076
        %v2078 = vrot.slane %v2077, 1
        %v2079 = vadd.f32 %v2077, %v2078
        %v2080 = vsel %vm393, %v1948, 0.0
        %v2081 = vrot.slane %v2080, 4
        %v2082 = vadd.f32 %v2080, %v2081
        %v2083 = vrot.slane %v2082, 2
        %v2084 = vadd.f32 %v2082, %v2083
        %v2085 = vrot.slane %v2084, 1
        %v2086 = vadd.f32 %v2084, %v2085
        %v2087 = vsel %vm393, %v1949, 0.0
        %v2088 = vrot.slane %v2087, 4
        %v2089 = vadd.f32 %v2087, %v2088
        %v2090 = vrot.slane %v2089, 2
        %v2091 = vadd.f32 %v2089, %v2090
        %v2092 = vrot.slane %v2091, 1
        %v2093 = vadd.f32 %v2091, %v2092
        %v2094 = vmul.f32 %v1968, 0.01
        %v2095 = vmul.f32 %v1971, 0.01
        %v2096 = vmul.f32 %v1974, 0.01
        %v2097 = vmul.f32 %v1977, 0.01
        %v2098 = vmul.f32 %v1997, 0.01
        %v2099 = vmul.f32 %v2000, 0.01
        %v2100 = vmul.f32 %v2003, 0.01
        %v2101 = vmul.f32 %v2006, 0.01
        %v2102 = vmul.f32 %v2026, 0.01
        %v2103 = vmul.f32 %v2029, 0.01
        %v2104 = vmul.f32 %v2032, 0.01
        %v2105 = vmul.f32 %v2035, 0.01
        %v2106 = vmul.f32 %v2055, 0.01
        %v2107 = vmul.f32 %v2058, 0.01
        %v2108 = vmul.f32 %v2061, 0.01
        %v2109 = vmul.f32 %v2064, 0.01
        %v2110 = vsub.f32 %v1210, %v2094
        %v2111 = vsub.f32 %v1211, %v2095
        %v2112 = vsub.f32 %v1212, %v2096
        %v2113 = vsub.f32 %v1213, %v2097
        %v2114 = vsub.f32 %v1214, %v2098
        %v2115 = vsub.f32 %v1215, %v2099
        %v2116 = vsub.f32 %v1216, %v2100
        %v2117 = vsub.f32 %v1217, %v2101
        %v2118 = vsub.f32 %v1218, %v2102
        %v2119 = vsub.f32 %v1219, %v2103
        %v2120 = vsub.f32 %v1220, %v2104
        %v2121 = vsub.f32 %v1221, %v2105
        %v2122 = vsub.f32 %v1222, %v2106
        %v2123 = vsub.f32 %v1223, %v2107
        %v2124 = vsub.f32 %v1224, %v2108
        %v2125 = vsub.f32 %v1225, %v2109
        %v2126 = vmul.f32 %v2072, 0.01
        %v2127 = vmul.f32 %v2079, 0.01
        %v2128 = vmul.f32 %v2086, 0.01
        %v2129 = vmul.f32 %v2093, 0.01
        %v2130 = vsub.f32 %v1230, %v2126
        %v2131 = vsub.f32 %v1231, %v2127
        %v2132 = vsub.f32 %v1232, %v2128
        %v2133 = vsub.f32 %v1233, %v2129
        %v2134 = vmul.f32 %v1544, 0.01
        %v2135 = vmul.f32 %v1547, 0.01
        %v2136 = vmul.f32 %v1550, 0.01
        %v2137 = vmul.f32 %v1553, 0.01
        %v2138 = vmul.f32 %v1617, 0.01
        %v2139 = vmul.f32 %v1620, 0.01
        %v2140 = vmul.f32 %v1623, 0.01
        %v2141 = vmul.f32 %v1626, 0.01
        %v2142 = vmul.f32 %v1690, 0.01
        %v2143 = vmul.f32 %v1693, 0.01
        %v2144 = vmul.f32 %v1696, 0.01
        %v2145 = vmul.f32 %v1699, 0.01
        %v2146 = vmul.f32 %v1763, 0.01
        %v2147 = vmul.f32 %v1766, 0.01
        %v2148 = vmul.f32 %v1769, 0.01
        %v2149 = vmul.f32 %v1772, 0.01
        %v2150 = vsub.f32 %v1250, %v2134
        %v2151 = vsub.f32 %v1251, %v2135
        %v2152 = vsub.f32 %v1252, %v2136
        %v2153 = vsub.f32 %v1253, %v2137
        %v2154 = vsub.f32 %v1254, %v2138
        %v2155 = vsub.f32 %v1255, %v2139
        %v2156 = vsub.f32 %v1256, %v2140
        %v2157 = vsub.f32 %v1257, %v2141
        %v2158 = vsub.f32 %v1258, %v2142
        %v2159 = vsub.f32 %v1259, %v2143
        %v2160 = vsub.f32 %v1260, %v2144
        %v2161 = vsub.f32 %v1261, %v2145
        %v2162 = vsub.f32 %v1262, %v2146
        %v2163 = vsub.f32 %v1263, %v2147
        %v2164 = vsub.f32 %v1264, %v2148
        %v2165 = vsub.f32 %v1265, %v2149
        %v2166 = vmul.f32 %v1780, 0.01
        %v2167 = vmul.f32 %v1787, 0.01
        %v2168 = vmul.f32 %v1794, 0.01
        %v2169 = vmul.f32 %v1801, 0.01
        %v2170 = vsub.f32 %v1270, %v2166
        %v2171 = vsub.f32 %v1271, %v2167
        %v2172 = vsub.f32 %v1272, %v2168
        %v2173 = vsub.f32 %v1273, %v2169
        %v2178 = vperm.slane %v2130, 0
        %v2179 = vperm.slane %v2131, 0
        %v2180 = vperm.slane %v2132, 0
        %v2181 = vperm.slane %v2133, 0
        %2186 = vmatpush.msra.mxu0 0.0
        %2187 = vmatpush.msra.mxu0 0.0
        %2188 = vmatpush.msra.mxu0 0.0
        %2189 = vmatpush.msra.mxu0 0.0
        %2190 = vmatpush.msra.mxu0 0.0
        %2191 = vmatpush.msra.mxu0 0.0
        %2192 = vmatpush.msra.mxu0 0.0
        %2193 = vmatpush.msra.mxu0 0.0
        %2194 = vmatpush.msra.mxu0 0.0
        %2195 = vmatpush.msra.mxu0 0.0
        %2196 = vmatpush.msra.mxu0 0.0
        %2197 = vmatpush.msra.mxu0 0.0
        %2198 = vmatpush.msra.mxu0 %v2113
        %2199 = vmatpush.msra.mxu0 %v2112
        %2200 = vmatpush.msra.mxu0 %v2111
        %2201 = vmatpush.msra.mxu0 %v2110
        %2202 = vmatmul.f32.gmra.mxu0 %v395
        %v2203 = vpop.f32.mrf.mxu0
        %v2204 = vadd.f32 %v2178, %v2203
        %2205 = vdwg.mxu0
        %2206 = vmatpush.msra.mxu0 0.0
        %2207 = vmatpush.msra.mxu0 0.0
        %2208 = vmatpush.msra.mxu0 0.0
        %2209 = vmatpush.msra.mxu0 0.0
        %2210 = vmatpush.msra.mxu0 0.0
        %2211 = vmatpush.msra.mxu0 0.0
        %2212 = vmatpush.msra.mxu0 0.0
        %2213 = vmatpush.msra.mxu0 0.0
        %2214 = vmatpush.msra.mxu0 0.0
        %2215 = vmatpush.msra.mxu0 0.0
        %2216 = vmatpush.msra.mxu0 0.0
        %2217 = vmatpush.msra.mxu0 0.0
        %2218 = vmatpush.msra.mxu0 %v2117
        %2219 = vmatpush.msra.mxu0 %v2116
        %2220 = vmatpush.msra.mxu0 %v2115
        %2221 = vmatpush.msra.mxu0 %v2114
        %2222 = vmatmul.f32.gmra.mxu0 %v398
        %v2223 = vpop.f32.mrf.mxu0
        %v2224 = vadd.f32 %v2179, %v2223
        %2225 = vdwg.mxu0
        %2226 = vmatpush.msra.mxu0 0.0
        %2227 = vmatpush.msra.mxu0 0.0
        %2228 = vmatpush.msra.mxu0 0.0
        %2229 = vmatpush.msra.mxu0 0.0
        %2230 = vmatpush.msra.mxu0 0.0
        %2231 = vmatpush.msra.mxu0 0.0
        %2232 = vmatpush.msra.mxu0 0.0
        %2233 = vmatpush.msra.mxu0 0.0
        %2234 = vmatpush.msra.mxu0 0.0
        %2235 = vmatpush.msra.mxu0 0.0
        %2236 = vmatpush.msra.mxu0 0.0
        %2237 = vmatpush.msra.mxu0 0.0
        %2238 = vmatpush.msra.mxu0 %v2121
        %2239 = vmatpush.msra.mxu0 %v2120
        %2240 = vmatpush.msra.mxu0 %v2119
        %2241 = vmatpush.msra.mxu0 %v2118
        %2242 = vmatmul.f32.gmra.mxu0 %v401
        %v2243 = vpop.f32.mrf.mxu0
        %v2244 = vadd.f32 %v2180, %v2243
        %2245 = vdwg.mxu0
        %2246 = vmatpush.msra.mxu0 0.0
        %2247 = vmatpush.msra.mxu0 0.0
        %2248 = vmatpush.msra.mxu0 0.0
        %2249 = vmatpush.msra.mxu0 0.0
        %2250 = vmatpush.msra.mxu0 0.0
        %2251 = vmatpush.msra.mxu0 0.0
        %2252 = vmatpush.msra.mxu0 0.0
        %2253 = vmatpush.msra.mxu0 0.0
        %2254 = vmatpush.msra.mxu0 0.0
        %2255 = vmatpush.msra.mxu0 0.0
        %2256 = vmatpush.msra.mxu0 0.0
        %2257 = vmatpush.msra.mxu0 0.0
        %2258 = vmatpush.msra.mxu0 %v2125
        %2259 = vmatpush.msra.mxu0 %v2124
        %2260 = vmatpush.msra.mxu0 %v2123
        %2261 = vmatpush.msra.mxu0 %v2122
        %2262 = vmatmul.f32.gmra.mxu0 %v404
        %v2263 = vpop.f32.mrf.mxu0
        %v2264 = vadd.f32 %v2181, %v2263
        %2265 = vdwg.mxu0
        %v2266 = vmax.f32 %v2204, 0.0
        %v2267 = vmax.f32 %v2224, 0.0
        %v2268 = vmax.f32 %v2244, 0.0
        %v2269 = vmax.f32 %v2264, 0.0
        %v2274 = vperm.slane %v2170, 0
        %v2275 = vperm.slane %v2171, 0
        %v2276 = vperm.slane %v2172, 0
        %v2277 = vperm.slane %v2173, 0
        %v2283 = vsel %vm393, %v2266, 0
        %2285 = vmatpush.msra.mxu0 0.0
        %2286 = vmatpush.msra.mxu0 0.0
        %2287 = vmatpush.msra.mxu0 0.0
        %2288 = vmatpush.msra.mxu0 0.0
        %2289 = vmatpush.msra.mxu0 0.0
        %2290 = vmatpush.msra.mxu0 0.0
        %2291 = vmatpush.msra.mxu0 0.0
        %2292 = vmatpush.msra.mxu0 0.0
        %2293 = vmatpush.msra.mxu0 0.0
        %2294 = vmatpush.msra.mxu0 0.0
        %2295 = vmatpush.msra.mxu0 0.0
        %2296 = vmatpush.msra.mxu0 0.0
        %2297 = vmatpush.msra.mxu0 %v2153
        %2298 = vmatpush.msra.mxu0 %v2152
        %2299 = vmatpush.msra.mxu0 %v2151
        %2300 = vmatpush.msra.mxu0 %v2150
        %2301 = vmatmul.f32.gmra.mxu0 %v2283
        %v2302 = vpop.f32.mrf.mxu0
        %v2303 = vadd.f32 %v2274, %v2302
        %2304 = vdwg.mxu0
        %v2306 = vsel %vm393, %v2267, 0
        %2308 = vmatpush.msra.mxu0 0.0
        %2309 = vmatpush.msra.mxu0 0.0
        %2310 = vmatpush.msra.mxu0 0.0
        %2311 = vmatpush.msra.mxu0 0.0
        %2312 = vmatpush.msra.mxu0 0.0
        %2313 = vmatpush.msra.mxu0 0.0
        %2314 = vmatpush.msra.mxu0 0.0
        %2315 = vmatpush.msra.mxu0 0.0
        %2316 = vmatpush.msra.mxu0 0.0
        %2317 = vmatpush.msra.mxu0 0.0
        %2318 = vmatpush.msra.mxu0 0.0
        %2319 = vmatpush.msra.mxu0 0.0
        %2320 = vmatpush.msra.mxu0 %v2157
        %2321 = vmatpush.msra.mxu0 %v2156
        %2322 = vmatpush.msra.mxu0 %v2155
        %2323 = vmatpush.msra.mxu0 %v2154
        %2324 = vmatmul.f32.gmra.mxu0 %v2306
        %v2325 = vpop.f32.mrf.mxu0
        %v2326 = vadd.f32 %v2275, %v2325
        %2327 = vdwg.mxu0
        %v2329 = vsel %vm393, %v2268, 0
        %2331 = vmatpush.msra.mxu0 0.0
        %2332 = vmatpush.msra.mxu0 0.0
        %2333 = vmatpush.msra.mxu0 0.0
        %2334 = vmatpush.msra.mxu0 0.0
        %2335 = vmatpush.msra.mxu0 0.0
        %2336 = vmatpush.msra.mxu0 0.0
        %2337 = vmatpush.msra.mxu0 0.0
        %2338 = vmatpush.msra.mxu0 0.0
        %2339 = vmatpush.msra.mxu0 0.0
        %2340 = vmatpush.msra.mxu0 0.0
        %2341 = vmatpush.msra.mxu0 0.0
        %2342 = vmatpush.msra.mxu0 0.0
        %2343 = vmatpush.msra.mxu0 %v2161
        %2344 = vmatpush.msra.mxu0 %v2160
        %2345 = vmatpush.msra.mxu0 %v2159
        %2346 = vmatpush.msra.mxu0 %v2158
        %2347 = vmatmul.f32.gmra.mxu0 %v2329
        %v2348 = vpop.f32.mrf.mxu0
        %v2349 = vadd.f32 %v2276, %v2348
        %2350 = vdwg.mxu0
        %v2352 = vsel %vm393, %v2269, 0
        %2354 = vmatpush.msra.mxu0 0.0
        %2355 = vmatpush.msra.mxu0 0.0
        %2356 = vmatpush.msra.mxu0 0.0
        %2357 = vmatpush.msra.mxu0 0.0
        %2358 = vmatpush.msra.mxu0 0.0
        %2359 = vmatpush.msra.mxu0 0.0
        %2360 = vmatpush.msra.mxu0 0.0
        %2361 = vmatpush.msra.mxu0 0.0
        %2362 = vmatpush.msra.mxu0 0.0
        %2363 = vmatpush.msra.mxu0 0.0
        %2364 = vmatpush.msra.mxu0 0.0
        %2365 = vmatpush.msra.mxu0 0.0
        %2366 = vmatpush.msra.mxu0 %v2165
        %2367 = vmatpush.msra.mxu0 %v2164
        %2368 = vmatpush.msra.mxu0 %v2163
        %2369 = vmatpush.msra.mxu0 %v2162
        %2370 = vmatmul.f32.gmra.mxu0 %v2352
        %v2371 = vpop.f32.mrf.mxu0
        %v2372 = vadd.f32 %v2277, %v2371
        %2373 = vdwg.mxu0
        %v2374 = vsub.f32 %v2303, %v376
        %v2375 = vsub.f32 %v2326, %v377
        %v2376 = vsub.f32 %v2349, %v378
        %v2377 = vsub.f32 %v2372, %v379
        %v2378 = vmul.f32 %v2374, 0.0625
        %v2379 = vmul.f32 %v2375, 0.0625
        %v2380 = vmul.f32 %v2376, 0.0625
        %v2381 = vmul.f32 %v2377, 0.0625
        %2382 = vxpose.xlu0.b32.start [1/16] %v2266, 128
        %2383 = vxpose.xlu0.b32.cont [2/16] 0.0, 128
        %2384 = vxpose.xlu0.b32.cont [3/16] 0.0, 128
        %2385 = vxpose.xlu0.b32.cont [4/16] 0.0, 128
        %2386 = vxpose.xlu0.b32.cont [5/16] 0.0, 128
        %2387 = vxpose.xlu0.b32.cont [6/16] 0.0, 128
        %2388 = vxpose.xlu0.b32.cont [7/16] 0.0, 128
        %2389 = vxpose.xlu0.b32.cont [8/16] 0.0, 128
        %2390 = vxpose.xlu0.b32.cont [9/16] 0.0, 128
        %2391 = vxpose.xlu0.b32.cont [10/16] 0.0, 128
        %2392 = vxpose.xlu0.b32.cont [11/16] 0.0, 128
        %2393 = vxpose.xlu0.b32.cont [12/16] 0.0, 128
        %2394 = vxpose.xlu0.b32.cont [13/16] 0.0, 128
        %2395 = vxpose.xlu0.b32.cont [14/16] 0.0, 128
        %2396 = vxpose.xlu0.b32.cont [15/16] 0.0, 128
        %2397 = vxpose.xlu0.b32.end [16/16] 0.0, 128
        %v2398 = vpop.trf.xlu0
        %v2399 = vpop.trf.xlu0
        %v2400 = vpop.trf.xlu0
        %v2401 = vpop.trf.xlu0
        %v2402 = vpop.trf.xlu0
        %v2403 = vpop.trf.xlu0
        %v2404 = vpop.trf.xlu0
        %v2405 = vpop.trf.xlu0
        %v2406 = vpop.trf.xlu0
        %v2407 = vpop.trf.xlu0
        %v2408 = vpop.trf.xlu0
        %v2409 = vpop.trf.xlu0
        %v2410 = vpop.trf.xlu0
        %v2411 = vpop.trf.xlu0
        %v2412 = vpop.trf.xlu0
        %v2413 = vpop.trf.xlu0
        %v2415 = vsel %vm523, %v2398, 0
        %v2418 = vsel %vm523, %v2399, 0
        %v2421 = vsel %vm523, %v2400, 0
        %v2424 = vsel %vm523, %v2401, 0
        %2426 = vmatpush.msra.mxu0 0.0
        %2427 = vmatpush.msra.mxu0 0.0
        %2428 = vmatpush.msra.mxu0 0.0
        %2429 = vmatpush.msra.mxu0 0.0
        %2430 = vmatpush.msra.mxu0 0.0
        %2431 = vmatpush.msra.mxu0 0.0
        %2432 = vmatpush.msra.mxu0 0.0
        %2433 = vmatpush.msra.mxu0 0.0
        %2434 = vmatpush.msra.mxu0 0.0
        %2435 = vmatpush.msra.mxu0 0.0
        %2436 = vmatpush.msra.mxu0 0.0
        %2437 = vmatpush.msra.mxu0 0.0
        %2438 = vmatpush.msra.mxu0 0.0
        %2439 = vmatpush.msra.mxu0 0.0
        %2440 = vmatpush.msra.mxu0 0.0
        %2441 = vmatpush.msra.mxu0 %v2378
        %2442 = vmatmul.f32.gmra.mxu0 %v2415
        %v2443 = vpop.f32.mrf.mxu0
        %v2444 = vadd.f32 0.0, %v2443
        %2445 = vmatmul.f32.gmra.mxu0 %v2418
        %v2446 = vpop.f32.mrf.mxu0
        %v2447 = vadd.f32 0.0, %v2446
        %2448 = vmatmul.f32.gmra.mxu0 %v2421
        %v2449 = vpop.f32.mrf.mxu0
        %v2450 = vadd.f32 0.0, %v2449
        %2451 = vmatmul.f32.gmra.mxu0 %v2424
        %v2452 = vpop.f32.mrf.mxu0
        %v2453 = vadd.f32 0.0, %v2452
        %2454 = vdwg.mxu0
        %2455 = vxpose.xlu0.b32.start [1/16] %v2267, 128
        %2456 = vxpose.xlu0.b32.cont [2/16] 0.0, 128
        %2457 = vxpose.xlu0.b32.cont [3/16] 0.0, 128
        %2458 = vxpose.xlu0.b32.cont [4/16] 0.0, 128
        %2459 = vxpose.xlu0.b32.cont [5/16] 0.0, 128
        %2460 = vxpose.xlu0.b32.cont [6/16] 0.0, 128
        %2461 = vxpose.xlu0.b32.cont [7/16] 0.0, 128
        %2462 = vxpose.xlu0.b32.cont [8/16] 0.0, 128
        %2463 = vxpose.xlu0.b32.cont [9/16] 0.0, 128
        %2464 = vxpose.xlu0.b32.cont [10/16] 0.0, 128
        %2465 = vxpose.xlu0.b32.cont [11/16] 0.0, 128
        %2466 = vxpose.xlu0.b32.cont [12/16] 0.0, 128
        %2467 = vxpose.xlu0.b32.cont [13/16] 0.0, 128
        %2468 = vxpose.xlu0.b32.cont [14/16] 0.0, 128
        %2469 = vxpose.xlu0.b32.cont [15/16] 0.0, 128
        %2470 = vxpose.xlu0.b32.end [16/16] 0.0, 128
        %v2471 = vpop.trf.xlu0
        %v2472 = vpop.trf.xlu0
        %v2473 = vpop.trf.xlu0
        %v2474 = vpop.trf.xlu0
        %v2475 = vpop.trf.xlu0
        %v2476 = vpop.trf.xlu0
        %v2477 = vpop.trf.xlu0
        %v2478 = vpop.trf.xlu0
        %v2479 = vpop.trf.xlu0
        %v2480 = vpop.trf.xlu0
        %v2481 = vpop.trf.xlu0
        %v2482 = vpop.trf.xlu0
        %v2483 = vpop.trf.xlu0
        %v2484 = vpop.trf.xlu0
        %v2485 = vpop.trf.xlu0
        %v2486 = vpop.trf.xlu0
        %v2488 = vsel %vm523, %v2471, 0
        %v2491 = vsel %vm523, %v2472, 0
        %v2494 = vsel %vm523, %v2473, 0
        %v2497 = vsel %vm523, %v2474, 0
        %2499 = vmatpush.msra.mxu0 0.0
        %2500 = vmatpush.msra.mxu0 0.0
        %2501 = vmatpush.msra.mxu0 0.0
        %2502 = vmatpush.msra.mxu0 0.0
        %2503 = vmatpush.msra.mxu0 0.0
        %2504 = vmatpush.msra.mxu0 0.0
        %2505 = vmatpush.msra.mxu0 0.0
        %2506 = vmatpush.msra.mxu0 0.0
        %2507 = vmatpush.msra.mxu0 0.0
        %2508 = vmatpush.msra.mxu0 0.0
        %2509 = vmatpush.msra.mxu0 0.0
        %2510 = vmatpush.msra.mxu0 0.0
        %2511 = vmatpush.msra.mxu0 0.0
        %2512 = vmatpush.msra.mxu0 0.0
        %2513 = vmatpush.msra.mxu0 0.0
        %2514 = vmatpush.msra.mxu0 %v2379
        %2515 = vmatmul.f32.gmra.mxu0 %v2488
        %v2516 = vpop.f32.mrf.mxu0
        %v2517 = vadd.f32 0.0, %v2516
        %2518 = vmatmul.f32.gmra.mxu0 %v2491
        %v2519 = vpop.f32.mrf.mxu0
        %v2520 = vadd.f32 0.0, %v2519
        %2521 = vmatmul.f32.gmra.mxu0 %v2494
        %v2522 = vpop.f32.mrf.mxu0
        %v2523 = vadd.f32 0.0, %v2522
        %2524 = vmatmul.f32.gmra.mxu0 %v2497
        %v2525 = vpop.f32.mrf.mxu0
        %v2526 = vadd.f32 0.0, %v2525
        %2527 = vdwg.mxu0
        %2528 = vxpose.xlu0.b32.start [1/16] %v2268, 128
        %2529 = vxpose.xlu0.b32.cont [2/16] 0.0, 128
        %2530 = vxpose.xlu0.b32.cont [3/16] 0.0, 128
        %2531 = vxpose.xlu0.b32.cont [4/16] 0.0, 128
        %2532 = vxpose.xlu0.b32.cont [5/16] 0.0, 128
        %2533 = vxpose.xlu0.b32.cont [6/16] 0.0, 128
        %2534 = vxpose.xlu0.b32.cont [7/16] 0.0, 128
        %2535 = vxpose.xlu0.b32.cont [8/16] 0.0, 128
        %2536 = vxpose.xlu0.b32.cont [9/16] 0.0, 128
        %2537 = vxpose.xlu0.b32.cont [10/16] 0.0, 128
        %2538 = vxpose.xlu0.b32.cont [11/16] 0.0, 128
        %2539 = vxpose.xlu0.b32.cont [12/16] 0.0, 128
        %2540 = vxpose.xlu0.b32.cont [13/16] 0.0, 128
        %2541 = vxpose.xlu0.b32.cont [14/16] 0.0, 128
        %2542 = vxpose.xlu0.b32.cont [15/16] 0.0, 128
        %2543 = vxpose.xlu0.b32.end [16/16] 0.0, 128
        %v2544 = vpop.trf.xlu0
        %v2545 = vpop.trf.xlu0
        %v2546 = vpop.trf.xlu0
        %v2547 = vpop.trf.xlu0
        %v2548 = vpop.trf.xlu0
        %v2549 = vpop.trf.xlu0
        %v2550 = vpop.trf.xlu0
        %v2551 = vpop.trf.xlu0
        %v2552 = vpop.trf.xlu0
        %v2553 = vpop.trf.xlu0
        %v2554 = vpop.trf.xlu0
        %v2555 = vpop.trf.xlu0
        %v2556 = vpop.trf.xlu0
        %v2557 = vpop.trf.xlu0
        %v2558 = vpop.trf.xlu0
        %v2559 = vpop.trf.xlu0
        %v2561 = vsel %vm523, %v2544, 0
        %v2564 = vsel %vm523, %v2545, 0
        %v2567 = vsel %vm523, %v2546, 0
        %v2570 = vsel %vm523, %v2547, 0
        %2572 = vmatpush.msra.mxu0 0.0
        %2573 = vmatpush.msra.mxu0 0.0
        %2574 = vmatpush.msra.mxu0 0.0
        %2575 = vmatpush.msra.mxu0 0.0
        %2576 = vmatpush.msra.mxu0 0.0
        %2577 = vmatpush.msra.mxu0 0.0
        %2578 = vmatpush.msra.mxu0 0.0
        %2579 = vmatpush.msra.mxu0 0.0
        %2580 = vmatpush.msra.mxu0 0.0
        %2581 = vmatpush.msra.mxu0 0.0
        %2582 = vmatpush.msra.mxu0 0.0
        %2583 = vmatpush.msra.mxu0 0.0
        %2584 = vmatpush.msra.mxu0 0.0
        %2585 = vmatpush.msra.mxu0 0.0
        %2586 = vmatpush.msra.mxu0 0.0
        %2587 = vmatpush.msra.mxu0 %v2380
        %2588 = vmatmul.f32.gmra.mxu0 %v2561
        %v2589 = vpop.f32.mrf.mxu0
        %v2590 = vadd.f32 0.0, %v2589
        %2591 = vmatmul.f32.gmra.mxu0 %v2564
        %v2592 = vpop.f32.mrf.mxu0
        %v2593 = vadd.f32 0.0, %v2592
        %2594 = vmatmul.f32.gmra.mxu0 %v2567
        %v2595 = vpop.f32.mrf.mxu0
        %v2596 = vadd.f32 0.0, %v2595
        %2597 = vmatmul.f32.gmra.mxu0 %v2570
        %v2598 = vpop.f32.mrf.mxu0
        %v2599 = vadd.f32 0.0, %v2598
        %2600 = vdwg.mxu0
        %2601 = vxpose.xlu0.b32.start [1/16] %v2269, 128
        %2602 = vxpose.xlu0.b32.cont [2/16] 0.0, 128
        %2603 = vxpose.xlu0.b32.cont [3/16] 0.0, 128
        %2604 = vxpose.xlu0.b32.cont [4/16] 0.0, 128
        %2605 = vxpose.xlu0.b32.cont [5/16] 0.0, 128
        %2606 = vxpose.xlu0.b32.cont [6/16] 0.0, 128
        %2607 = vxpose.xlu0.b32.cont [7/16] 0.0, 128
        %2608 = vxpose.xlu0.b32.cont [8/16] 0.0, 128
        %2609 = vxpose.xlu0.b32.cont [9/16] 0.0, 128
        %2610 = vxpose.xlu0.b32.cont [10/16] 0.0, 128
        %2611 = vxpose.xlu0.b32.cont [11/16] 0.0, 128
        %2612 = vxpose.xlu0.b32.cont [12/16] 0.0, 128
        %2613 = vxpose.xlu0.b32.cont [13/16] 0.0, 128
        %2614 = vxpose.xlu0.b32.cont [14/16] 0.0, 128
        %2615 = vxpose.xlu0.b32.cont [15/16] 0.0, 128
        %2616 = vxpose.xlu0.b32.end [16/16] 0.0, 128
        %v2617 = vpop.trf.xlu0
        %v2618 = vpop.trf.xlu0
        %v2619 = vpop.trf.xlu0
        %v2620 = vpop.trf.xlu0
        %v2621 = vpop.trf.xlu0
        %v2622 = vpop.trf.xlu0
        %v2623 = vpop.trf.xlu0
        %v2624 = vpop.trf.xlu0
        %v2625 = vpop.trf.xlu0
        %v2626 = vpop.trf.xlu0
        %v2627 = vpop.trf.xlu0
        %v2628 = vpop.trf.xlu0
        %v2629 = vpop.trf.xlu0
        %v2630 = vpop.trf.xlu0
        %v2631 = vpop.trf.xlu0
        %v2632 = vpop.trf.xlu0
        %v2634 = vsel %vm523, %v2617, 0
        %v2637 = vsel %vm523, %v2618, 0
        %v2640 = vsel %vm523, %v2619, 0
        %v2643 = vsel %vm523, %v2620, 0
        %2645 = vmatpush.msra.mxu0 0.0
        %2646 = vmatpush.msra.mxu0 0.0
        %2647 = vmatpush.msra.mxu0 0.0
        %2648 = vmatpush.msra.mxu0 0.0
        %2649 = vmatpush.msra.mxu0 0.0
        %2650 = vmatpush.msra.mxu0 0.0
        %2651 = vmatpush.msra.mxu0 0.0
        %2652 = vmatpush.msra.mxu0 0.0
        %2653 = vmatpush.msra.mxu0 0.0
        %2654 = vmatpush.msra.mxu0 0.0
        %2655 = vmatpush.msra.mxu0 0.0
        %2656 = vmatpush.msra.mxu0 0.0
        %2657 = vmatpush.msra.mxu0 0.0
        %2658 = vmatpush.msra.mxu0 0.0
        %2659 = vmatpush.msra.mxu0 0.0
        %2660 = vmatpush.msra.mxu0 %v2381
        %2661 = vmatmul.f32.gmra.mxu0 %v2634
        %v2662 = vpop.f32.mrf.mxu0
        %v2663 = vadd.f32 0.0, %v2662
        %2664 = vmatmul.f32.gmra.mxu0 %v2637
        %v2665 = vpop.f32.mrf.mxu0
        %v2666 = vadd.f32 0.0, %v2665
        %2667 = vmatmul.f32.gmra.mxu0 %v2640
        %v2668 = vpop.f32.mrf.mxu0
        %v2669 = vadd.f32 0.0, %v2668
        %2670 = vmatmul.f32.gmra.mxu0 %v2643
        %v2671 = vpop.f32.mrf.mxu0
        %v2672 = vadd.f32 0.0, %v2671
        %2673 = vdwg.mxu0
        %v2674 = vsel %vm784, %v2378, 0.0
        %v2675 = vrot.slane %v2674, 4
        %v2676 = vadd.f32 %v2674, %v2675
        %v2677 = vrot.slane %v2676, 2
        %v2678 = vadd.f32 %v2676, %v2677
        %v2679 = vrot.slane %v2678, 1
        %v2680 = vadd.f32 %v2678, %v2679
        %v2681 = vsel %vm784, %v2379, 0.0
        %v2682 = vrot.slane %v2681, 4
        %v2683 = vadd.f32 %v2681, %v2682
        %v2684 = vrot.slane %v2683, 2
        %v2685 = vadd.f32 %v2683, %v2684
        %v2686 = vrot.slane %v2685, 1
        %v2687 = vadd.f32 %v2685, %v2686
        %v2688 = vsel %vm784, %v2380, 0.0
        %v2689 = vrot.slane %v2688, 4
        %v2690 = vadd.f32 %v2688, %v2689
        %v2691 = vrot.slane %v2690, 2
        %v2692 = vadd.f32 %v2690, %v2691
        %v2693 = vrot.slane %v2692, 1
        %v2694 = vadd.f32 %v2692, %v2693
        %v2695 = vsel %vm784, %v2381, 0.0
        %v2696 = vrot.slane %v2695, 4
        %v2697 = vadd.f32 %v2695, %v2696
        %v2698 = vrot.slane %v2697, 2
        %v2699 = vadd.f32 %v2697, %v2698
        %v2700 = vrot.slane %v2699, 1
        %v2701 = vadd.f32 %v2699, %v2700
        %v2703 = vsel %vm784, %v2378, 0
        %v2706 = vsel %vm784, %v2150, 0
        %v2709 = vsel %vm784, %v2151, 0
        %v2712 = vsel %vm784, %v2152, 0
        %v2715 = vsel %vm784, %v2153, 0
        %2717 = vmatpush.xpose.msra.mxu0 0.0
        %2718 = vmatpush.xpose.msra.mxu0 0.0
        %2719 = vmatpush.xpose.msra.mxu0 0.0
        %2720 = vmatpush.xpose.msra.mxu0 0.0
        %2721 = vmatpush.xpose.msra.mxu0 0.0
        %2722 = vmatpush.xpose.msra.mxu0 0.0
        %2723 = vmatpush.xpose.msra.mxu0 0.0
        %2724 = vmatpush.xpose.msra.mxu0 0.0
        %2725 = vmatpush.xpose.msra.mxu0 0.0
        %2726 = vmatpush.xpose.msra.mxu0 0.0
        %2727 = vmatpush.xpose.msra.mxu0 0.0
        %2728 = vmatpush.xpose.msra.mxu0 0.0
        %2729 = vmatpush.xpose.msra.mxu0 %v2715
        %2730 = vmatpush.xpose.msra.mxu0 %v2712
        %2731 = vmatpush.xpose.msra.mxu0 %v2709
        %2732 = vmatpush.xpose.msra.mxu0 %v2706
        %2733 = vmatmul.f32.gmra.mxu0 %v2703
        %v2734 = vpop.f32.mrf.mxu0
        %v2735 = vadd.f32 0.0, %v2734
        %2736 = vdwg.mxu0
        %v2738 = vsel %vm784, %v2379, 0
        %v2741 = vsel %vm784, %v2154, 0
        %v2744 = vsel %vm784, %v2155, 0
        %v2747 = vsel %vm784, %v2156, 0
        %v2750 = vsel %vm784, %v2157, 0
        %2752 = vmatpush.xpose.msra.mxu0 0.0
        %2753 = vmatpush.xpose.msra.mxu0 0.0
        %2754 = vmatpush.xpose.msra.mxu0 0.0
        %2755 = vmatpush.xpose.msra.mxu0 0.0
        %2756 = vmatpush.xpose.msra.mxu0 0.0
        %2757 = vmatpush.xpose.msra.mxu0 0.0
        %2758 = vmatpush.xpose.msra.mxu0 0.0
        %2759 = vmatpush.xpose.msra.mxu0 0.0
        %2760 = vmatpush.xpose.msra.mxu0 0.0
        %2761 = vmatpush.xpose.msra.mxu0 0.0
        %2762 = vmatpush.xpose.msra.mxu0 0.0
        %2763 = vmatpush.xpose.msra.mxu0 0.0
        %2764 = vmatpush.xpose.msra.mxu0 %v2750
        %2765 = vmatpush.xpose.msra.mxu0 %v2747
        %2766 = vmatpush.xpose.msra.mxu0 %v2744
        %2767 = vmatpush.xpose.msra.mxu0 %v2741
        %2768 = vmatmul.f32.gmra.mxu0 %v2738
        %v2769 = vpop.f32.mrf.mxu0
        %v2770 = vadd.f32 0.0, %v2769
        %2771 = vdwg.mxu0
        %v2773 = vsel %vm784, %v2380, 0
        %v2776 = vsel %vm784, %v2158, 0
        %v2779 = vsel %vm784, %v2159, 0
        %v2782 = vsel %vm784, %v2160, 0
        %v2785 = vsel %vm784, %v2161, 0
        %2787 = vmatpush.xpose.msra.mxu0 0.0
        %2788 = vmatpush.xpose.msra.mxu0 0.0
        %2789 = vmatpush.xpose.msra.mxu0 0.0
        %2790 = vmatpush.xpose.msra.mxu0 0.0
        %2791 = vmatpush.xpose.msra.mxu0 0.0
        %2792 = vmatpush.xpose.msra.mxu0 0.0
        %2793 = vmatpush.xpose.msra.mxu0 0.0
        %2794 = vmatpush.xpose.msra.mxu0 0.0
        %2795 = vmatpush.xpose.msra.mxu0 0.0
        %2796 = vmatpush.xpose.msra.mxu0 0.0
        %2797 = vmatpush.xpose.msra.mxu0 0.0
        %2798 = vmatpush.xpose.msra.mxu0 0.0
        %2799 = vmatpush.xpose.msra.mxu0 %v2785
        %2800 = vmatpush.xpose.msra.mxu0 %v2782
        %2801 = vmatpush.xpose.msra.mxu0 %v2779
        %2802 = vmatpush.xpose.msra.mxu0 %v2776
        %2803 = vmatmul.f32.gmra.mxu0 %v2773
        %v2804 = vpop.f32.mrf.mxu0
        %v2805 = vadd.f32 0.0, %v2804
        %2806 = vdwg.mxu0
        %v2808 = vsel %vm784, %v2381, 0
        %v2811 = vsel %vm784, %v2162, 0
        %v2814 = vsel %vm784, %v2163, 0
        %v2817 = vsel %vm784, %v2164, 0
        %v2820 = vsel %vm784, %v2165, 0
        %2822 = vmatpush.xpose.msra.mxu0 0.0
        %2823 = vmatpush.xpose.msra.mxu0 0.0
        %2824 = vmatpush.xpose.msra.mxu0 0.0
        %2825 = vmatpush.xpose.msra.mxu0 0.0
        %2826 = vmatpush.xpose.msra.mxu0 0.0
        %2827 = vmatpush.xpose.msra.mxu0 0.0
        %2828 = vmatpush.xpose.msra.mxu0 0.0
        %2829 = vmatpush.xpose.msra.mxu0 0.0
        %2830 = vmatpush.xpose.msra.mxu0 0.0
        %2831 = vmatpush.xpose.msra.mxu0 0.0
        %2832 = vmatpush.xpose.msra.mxu0 0.0
        %2833 = vmatpush.xpose.msra.mxu0 0.0
        %2834 = vmatpush.xpose.msra.mxu0 %v2820
        %2835 = vmatpush.xpose.msra.mxu0 %v2817
        %2836 = vmatpush.xpose.msra.mxu0 %v2814
        %2837 = vmatpush.xpose.msra.mxu0 %v2811
        %2838 = vmatmul.f32.gmra.mxu0 %v2808
        %v2839 = vpop.f32.mrf.mxu0
        %v2840 = vadd.f32 0.0, %v2839
        %2841 = vdwg.mxu0
        %vm2842 = vcmp.gt.f32.partialorder %v2204, 0.0
        %vm2843 = vcmp.gt.f32.partialorder %v2224, 0.0
        %vm2844 = vcmp.gt.f32.partialorder %v2244, 0.0
        %vm2845 = vcmp.gt.f32.partialorder %v2264, 0.0
        %v2846 = vsel %vm2842, %v2735, 0.0
        %v2847 = vsel %vm2843, %v2770, 0.0
        %v2848 = vsel %vm2844, %v2805, 0.0
        %v2849 = vsel %vm2845, %v2840, 0.0
        %2850 = vmatpush.msra.mxu0 0.0
        %2851 = vmatpush.msra.mxu0 0.0
        %2852 = vmatpush.msra.mxu0 0.0
        %2853 = vmatpush.msra.mxu0 0.0
        %2854 = vmatpush.msra.mxu0 0.0
        %2855 = vmatpush.msra.mxu0 0.0
        %2856 = vmatpush.msra.mxu0 0.0
        %2857 = vmatpush.msra.mxu0 0.0
        %2858 = vmatpush.msra.mxu0 0.0
        %2859 = vmatpush.msra.mxu0 0.0
        %2860 = vmatpush.msra.mxu0 0.0
        %2861 = vmatpush.msra.mxu0 0.0
        %2862 = vmatpush.msra.mxu0 0.0
        %2863 = vmatpush.msra.mxu0 0.0
        %2864 = vmatpush.msra.mxu0 0.0
        %2865 = vmatpush.msra.mxu0 %v2846
        %2866 = vmatmul.f32.gmra.mxu0 %v907
        %v2867 = vpop.f32.mrf.mxu0
        %v2868 = vadd.f32 0.0, %v2867
        %2869 = vmatmul.f32.gmra.mxu0 %v910
        %v2870 = vpop.f32.mrf.mxu0
        %v2871 = vadd.f32 0.0, %v2870
        %2872 = vmatmul.f32.gmra.mxu0 %v913
        %v2873 = vpop.f32.mrf.mxu0
        %v2874 = vadd.f32 0.0, %v2873
        %2875 = vmatmul.f32.gmra.mxu0 %v916
        %v2876 = vpop.f32.mrf.mxu0
        %v2877 = vadd.f32 0.0, %v2876
        %2878 = vdwg.mxu0
        %2879 = vmatpush.msra.mxu0 0.0
        %2880 = vmatpush.msra.mxu0 0.0
        %2881 = vmatpush.msra.mxu0 0.0
        %2882 = vmatpush.msra.mxu0 0.0
        %2883 = vmatpush.msra.mxu0 0.0
        %2884 = vmatpush.msra.mxu0 0.0
        %2885 = vmatpush.msra.mxu0 0.0
        %2886 = vmatpush.msra.mxu0 0.0
        %2887 = vmatpush.msra.mxu0 0.0
        %2888 = vmatpush.msra.mxu0 0.0
        %2889 = vmatpush.msra.mxu0 0.0
        %2890 = vmatpush.msra.mxu0 0.0
        %2891 = vmatpush.msra.mxu0 0.0
        %2892 = vmatpush.msra.mxu0 0.0
        %2893 = vmatpush.msra.mxu0 0.0
        %2894 = vmatpush.msra.mxu0 %v2847
        %2895 = vmatmul.f32.gmra.mxu0 %v980
        %v2896 = vpop.f32.mrf.mxu0
        %v2897 = vadd.f32 0.0, %v2896
        %2898 = vmatmul.f32.gmra.mxu0 %v983
        %v2899 = vpop.f32.mrf.mxu0
        %v2900 = vadd.f32 0.0, %v2899
        %2901 = vmatmul.f32.gmra.mxu0 %v986
        %v2902 = vpop.f32.mrf.mxu0
        %v2903 = vadd.f32 0.0, %v2902
        %2904 = vmatmul.f32.gmra.mxu0 %v989
        %v2905 = vpop.f32.mrf.mxu0
        %v2906 = vadd.f32 0.0, %v2905
        %2907 = vdwg.mxu0
        %2908 = vmatpush.msra.mxu0 0.0
        %2909 = vmatpush.msra.mxu0 0.0
        %2910 = vmatpush.msra.mxu0 0.0
        %2911 = vmatpush.msra.mxu0 0.0
        %2912 = vmatpush.msra.mxu0 0.0
        %2913 = vmatpush.msra.mxu0 0.0
        %2914 = vmatpush.msra.mxu0 0.0
        %2915 = vmatpush.msra.mxu0 0.0
        %2916 = vmatpush.msra.mxu0 0.0
        %2917 = vmatpush.msra.mxu0 0.0
        %2918 = vmatpush.msra.mxu0 0.0
        %2919 = vmatpush.msra.mxu0 0.0
        %2920 = vmatpush.msra.mxu0 0.0
        %2921 = vmatpush.msra.mxu0 0.0
        %2922 = vmatpush.msra.mxu0 0.0
        %2923 = vmatpush.msra.mxu0 %v2848
        %2924 = vmatmul.f32.gmra.mxu0 %v1053
        %v2925 = vpop.f32.mrf.mxu0
        %v2926 = vadd.f32 0.0, %v2925
        %2927 = vmatmul.f32.gmra.mxu0 %v1056
        %v2928 = vpop.f32.mrf.mxu0
        %v2929 = vadd.f32 0.0, %v2928
        %2930 = vmatmul.f32.gmra.mxu0 %v1059
        %v2931 = vpop.f32.mrf.mxu0
        %v2932 = vadd.f32 0.0, %v2931
        %2933 = vmatmul.f32.gmra.mxu0 %v1062
        %v2934 = vpop.f32.mrf.mxu0
        %v2935 = vadd.f32 0.0, %v2934
        %2936 = vdwg.mxu0
        %2937 = vmatpush.msra.mxu0 0.0
        %2938 = vmatpush.msra.mxu0 0.0
        %2939 = vmatpush.msra.mxu0 0.0
        %2940 = vmatpush.msra.mxu0 0.0
        %2941 = vmatpush.msra.mxu0 0.0
        %2942 = vmatpush.msra.mxu0 0.0
        %2943 = vmatpush.msra.mxu0 0.0
        %2944 = vmatpush.msra.mxu0 0.0
        %2945 = vmatpush.msra.mxu0 0.0
        %2946 = vmatpush.msra.mxu0 0.0
        %2947 = vmatpush.msra.mxu0 0.0
        %2948 = vmatpush.msra.mxu0 0.0
        %2949 = vmatpush.msra.mxu0 0.0
        %2950 = vmatpush.msra.mxu0 0.0
        %2951 = vmatpush.msra.mxu0 0.0
        %2952 = vmatpush.msra.mxu0 %v2849
        %2953 = vmatmul.f32.gmra.mxu0 %v1126
        %v2954 = vpop.f32.mrf.mxu0
        %v2955 = vadd.f32 0.0, %v2954
        %2956 = vmatmul.f32.gmra.mxu0 %v1129
        %v2957 = vpop.f32.mrf.mxu0
        %v2958 = vadd.f32 0.0, %v2957
        %2959 = vmatmul.f32.gmra.mxu0 %v1132
        %v2960 = vpop.f32.mrf.mxu0
        %v2961 = vadd.f32 0.0, %v2960
        %2962 = vmatmul.f32.gmra.mxu0 %v1135
        %v2963 = vpop.f32.mrf.mxu0
        %v2964 = vadd.f32 0.0, %v2963
        %2965 = vdwg.mxu0
        %v2966 = vsel %vm393, %v2846, 0.0
        %v2967 = vrot.slane %v2966, 4
        %v2968 = vadd.f32 %v2966, %v2967
        %v2969 = vrot.slane %v2968, 2
        %v2970 = vadd.f32 %v2968, %v2969
        %v2971 = vrot.slane %v2970, 1
        %v2972 = vadd.f32 %v2970, %v2971
        %v2973 = vsel %vm393, %v2847, 0.0
        %v2974 = vrot.slane %v2973, 4
        %v2975 = vadd.f32 %v2973, %v2974
        %v2976 = vrot.slane %v2975, 2
        %v2977 = vadd.f32 %v2975, %v2976
        %v2978 = vrot.slane %v2977, 1
        %v2979 = vadd.f32 %v2977, %v2978
        %v2980 = vsel %vm393, %v2848, 0.0
        %v2981 = vrot.slane %v2980, 4
        %v2982 = vadd.f32 %v2980, %v2981
        %v2983 = vrot.slane %v2982, 2
        %v2984 = vadd.f32 %v2982, %v2983
        %v2985 = vrot.slane %v2984, 1
        %v2986 = vadd.f32 %v2984, %v2985
        %v2987 = vsel %vm393, %v2849, 0.0
        %v2988 = vrot.slane %v2987, 4
        %v2989 = vadd.f32 %v2987, %v2988
        %v2990 = vrot.slane %v2989, 2
        %v2991 = vadd.f32 %v2989, %v2990
        %v2992 = vrot.slane %v2991, 1
        %v2993 = vadd.f32 %v2991, %v2992
        %v2994 = vmul.f32 %v2868, 0.01
        %v2995 = vmul.f32 %v2871, 0.01
        %v2996 = vmul.f32 %v2874, 0.01
        %v2997 = vmul.f32 %v2877, 0.01
        %v2998 = vmul.f32 %v2897, 0.01
        %v2999 = vmul.f32 %v2900, 0.01
        %v3000 = vmul.f32 %v2903, 0.01
        %v3001 = vmul.f32 %v2906, 0.01
        %v3002 = vmul.f32 %v2926, 0.01
        %v3003 = vmul.f32 %v2929, 0.01
        %v3004 = vmul.f32 %v2932, 0.01
        %v3005 = vmul.f32 %v2935, 0.01
        %v3006 = vmul.f32 %v2955, 0.01
        %v3007 = vmul.f32 %v2958, 0.01
        %v3008 = vmul.f32 %v2961, 0.01
        %v3009 = vmul.f32 %v2964, 0.01
        %v3010 = vsub.f32 %v2110, %v2994
        %v3011 = vsub.f32 %v2111, %v2995
        %v3012 = vsub.f32 %v2112, %v2996
        %v3013 = vsub.f32 %v2113, %v2997
        %v3014 = vsub.f32 %v2114, %v2998
        %v3015 = vsub.f32 %v2115, %v2999
        %v3016 = vsub.f32 %v2116, %v3000
        %v3017 = vsub.f32 %v2117, %v3001
        %v3018 = vsub.f32 %v2118, %v3002
        %v3019 = vsub.f32 %v2119, %v3003
        %v3020 = vsub.f32 %v2120, %v3004
        %v3021 = vsub.f32 %v2121, %v3005
        %v3022 = vsub.f32 %v2122, %v3006
        %v3023 = vsub.f32 %v2123, %v3007
        %v3024 = vsub.f32 %v2124, %v3008
        %v3025 = vsub.f32 %v2125, %v3009
        %v3026 = vmul.f32 %v2972, 0.01
        %v3027 = vmul.f32 %v2979, 0.01
        %v3028 = vmul.f32 %v2986, 0.01
        %v3029 = vmul.f32 %v2993, 0.01
        %v3030 = vsub.f32 %v2130, %v3026
        %v3031 = vsub.f32 %v2131, %v3027
        %v3032 = vsub.f32 %v2132, %v3028
        %v3033 = vsub.f32 %v2133, %v3029
        %v3034 = vmul.f32 %v2444, 0.01
        %v3035 = vmul.f32 %v2447, 0.01
        %v3036 = vmul.f32 %v2450, 0.01
        %v3037 = vmul.f32 %v2453, 0.01
        %v3038 = vmul.f32 %v2517, 0.01
        %v3039 = vmul.f32 %v2520, 0.01
        %v3040 = vmul.f32 %v2523, 0.01
        %v3041 = vmul.f32 %v2526, 0.01
        %v3042 = vmul.f32 %v2590, 0.01
        %v3043 = vmul.f32 %v2593, 0.01
        %v3044 = vmul.f32 %v2596, 0.01
        %v3045 = vmul.f32 %v2599, 0.01
        %v3046 = vmul.f32 %v2663, 0.01
        %v3047 = vmul.f32 %v2666, 0.01
        %v3048 = vmul.f32 %v2669, 0.01
        %v3049 = vmul.f32 %v2672, 0.01
        %v3050 = vsub.f32 %v2150, %v3034
        %v3051 = vsub.f32 %v2151, %v3035
        %v3052 = vsub.f32 %v2152, %v3036
        %v3053 = vsub.f32 %v2153, %v3037
        %v3054 = vsub.f32 %v2154, %v3038
        %v3055 = vsub.f32 %v2155, %v3039
        %v3056 = vsub.f32 %v2156, %v3040
        %v3057 = vsub.f32 %v2157, %v3041
        %v3058 = vsub.f32 %v2158, %v3042
        %v3059 = vsub.f32 %v2159, %v3043
        %v3060 = vsub.f32 %v2160, %v3044
        %v3061 = vsub.f32 %v2161, %v3045
        %v3062 = vsub.f32 %v2162, %v3046
        %v3063 = vsub.f32 %v2163, %v3047
        %v3064 = vsub.f32 %v2164, %v3048
        %v3065 = vsub.f32 %v2165, %v3049
        %v3066 = vmul.f32 %v2680, 0.01
        %v3067 = vmul.f32 %v2687, 0.01
        %v3068 = vmul.f32 %v2694, 0.01
        %v3069 = vmul.f32 %v2701, 0.01
        %v3070 = vsub.f32 %v2170, %v3066
        %v3071 = vsub.f32 %v2171, %v3067
        %v3072 = vsub.f32 %v2172, %v3068
        %v3073 = vsub.f32 %v2173, %v3069
        %v3074 = vld [vmem:[%s364] sm:$0xff]
        %v3075 = vld [vmem:[%s364 + $0x8] sm:$0xff]
        %v3076 = vld [vmem:[%s364 + $0x10] sm:$0xff]
        %v3077 = vld [vmem:[%s364 + $0x18] sm:$0xff]
        %v3078 = vld [vmem:[%s370] sm:$0xff]
        %v3079 = vld [vmem:[%s370 + $0x8] sm:$0xff]
        %v3080 = vld [vmem:[%s370 + $0x10] sm:$0xff]
        %v3081 = vld [vmem:[%s370 + $0x18] sm:$0xff]
        %v3086 = vperm.slane %v3030, 0
        %v3087 = vperm.slane %v3031, 0
        %v3088 = vperm.slane %v3032, 0
        %v3089 = vperm.slane %v3033, 0
        %v3095 = vsel %vm393, %v3074, 0
        %3097 = vmatpush.msra.mxu0 0.0
        %3098 = vmatpush.msra.mxu0 0.0
        %3099 = vmatpush.msra.mxu0 0.0
        %3100 = vmatpush.msra.mxu0 0.0
        %3101 = vmatpush.msra.mxu0 0.0
        %3102 = vmatpush.msra.mxu0 0.0
        %3103 = vmatpush.msra.mxu0 0.0
        %3104 = vmatpush.msra.mxu0 0.0
        %3105 = vmatpush.msra.mxu0 0.0
        %3106 = vmatpush.msra.mxu0 0.0
        %3107 = vmatpush.msra.mxu0 0.0
        %3108 = vmatpush.msra.mxu0 0.0
        %3109 = vmatpush.msra.mxu0 %v3013
        %3110 = vmatpush.msra.mxu0 %v3012
        %3111 = vmatpush.msra.mxu0 %v3011
        %3112 = vmatpush.msra.mxu0 %v3010
        %3113 = vmatmul.f32.gmra.mxu0 %v3095
        %v3114 = vpop.f32.mrf.mxu0
        %v3115 = vadd.f32 %v3086, %v3114
        %3116 = vdwg.mxu0
        %v3118 = vsel %vm393, %v3075, 0
        %3120 = vmatpush.msra.mxu0 0.0
        %3121 = vmatpush.msra.mxu0 0.0
        %3122 = vmatpush.msra.mxu0 0.0
        %3123 = vmatpush.msra.mxu0 0.0
        %3124 = vmatpush.msra.mxu0 0.0
        %3125 = vmatpush.msra.mxu0 0.0
        %3126 = vmatpush.msra.mxu0 0.0
        %3127 = vmatpush.msra.mxu0 0.0
        %3128 = vmatpush.msra.mxu0 0.0
        %3129 = vmatpush.msra.mxu0 0.0
        %3130 = vmatpush.msra.mxu0 0.0
        %3131 = vmatpush.msra.mxu0 0.0
        %3132 = vmatpush.msra.mxu0 %v3017
        %3133 = vmatpush.msra.mxu0 %v3016
        %3134 = vmatpush.msra.mxu0 %v3015
        %3135 = vmatpush.msra.mxu0 %v3014
        %3136 = vmatmul.f32.gmra.mxu0 %v3118
        %v3137 = vpop.f32.mrf.mxu0
        %v3138 = vadd.f32 %v3087, %v3137
        %3139 = vdwg.mxu0
        %v3141 = vsel %vm393, %v3076, 0
        %3143 = vmatpush.msra.mxu0 0.0
        %3144 = vmatpush.msra.mxu0 0.0
        %3145 = vmatpush.msra.mxu0 0.0
        %3146 = vmatpush.msra.mxu0 0.0
        %3147 = vmatpush.msra.mxu0 0.0
        %3148 = vmatpush.msra.mxu0 0.0
        %3149 = vmatpush.msra.mxu0 0.0
        %3150 = vmatpush.msra.mxu0 0.0
        %3151 = vmatpush.msra.mxu0 0.0
        %3152 = vmatpush.msra.mxu0 0.0
        %3153 = vmatpush.msra.mxu0 0.0
        %3154 = vmatpush.msra.mxu0 0.0
        %3155 = vmatpush.msra.mxu0 %v3021
        %3156 = vmatpush.msra.mxu0 %v3020
        %3157 = vmatpush.msra.mxu0 %v3019
        %3158 = vmatpush.msra.mxu0 %v3018
        %3159 = vmatmul.f32.gmra.mxu0 %v3141
        %v3160 = vpop.f32.mrf.mxu0
        %v3161 = vadd.f32 %v3088, %v3160
        %3162 = vdwg.mxu0
        %v3164 = vsel %vm393, %v3077, 0
        %3166 = vmatpush.msra.mxu0 0.0
        %3167 = vmatpush.msra.mxu0 0.0
        %3168 = vmatpush.msra.mxu0 0.0
        %3169 = vmatpush.msra.mxu0 0.0
        %3170 = vmatpush.msra.mxu0 0.0
        %3171 = vmatpush.msra.mxu0 0.0
        %3172 = vmatpush.msra.mxu0 0.0
        %3173 = vmatpush.msra.mxu0 0.0
        %3174 = vmatpush.msra.mxu0 0.0
        %3175 = vmatpush.msra.mxu0 0.0
        %3176 = vmatpush.msra.mxu0 0.0
        %3177 = vmatpush.msra.mxu0 0.0
        %3178 = vmatpush.msra.mxu0 %v3025
        %3179 = vmatpush.msra.mxu0 %v3024
        %3180 = vmatpush.msra.mxu0 %v3023
        %3181 = vmatpush.msra.mxu0 %v3022
        %3182 = vmatmul.f32.gmra.mxu0 %v3164
        %v3183 = vpop.f32.mrf.mxu0
        %v3184 = vadd.f32 %v3089, %v3183
        %3185 = vdwg.mxu0
        %v3186 = vmax.f32 %v3115, 0.0
        %v3187 = vmax.f32 %v3138, 0.0
        %v3188 = vmax.f32 %v3161, 0.0
        %v3189 = vmax.f32 %v3184, 0.0
        %v3194 = vperm.slane %v3070, 0
        %v3195 = vperm.slane %v3071, 0
        %v3196 = vperm.slane %v3072, 0
        %v3197 = vperm.slane %v3073, 0
        %v3203 = vsel %vm393, %v3186, 0
        %3205 = vmatpush.msra.mxu0 0.0
        %3206 = vmatpush.msra.mxu0 0.0
        %3207 = vmatpush.msra.mxu0 0.0
        %3208 = vmatpush.msra.mxu0 0.0
        %3209 = vmatpush.msra.mxu0 0.0
        %3210 = vmatpush.msra.mxu0 0.0
        %3211 = vmatpush.msra.mxu0 0.0
        %3212 = vmatpush.msra.mxu0 0.0
        %3213 = vmatpush.msra.mxu0 0.0
        %3214 = vmatpush.msra.mxu0 0.0
        %3215 = vmatpush.msra.mxu0 0.0
        %3216 = vmatpush.msra.mxu0 0.0
        %3217 = vmatpush.msra.mxu0 %v3053
        %3218 = vmatpush.msra.mxu0 %v3052
        %3219 = vmatpush.msra.mxu0 %v3051
        %3220 = vmatpush.msra.mxu0 %v3050
        %3221 = vmatmul.f32.gmra.mxu0 %v3203
        %v3222 = vpop.f32.mrf.mxu0
        %v3223 = vadd.f32 %v3194, %v3222
        %3224 = vdwg.mxu0
        %v3226 = vsel %vm393, %v3187, 0
        %3228 = vmatpush.msra.mxu0 0.0
        %3229 = vmatpush.msra.mxu0 0.0
        %3230 = vmatpush.msra.mxu0 0.0
        %3231 = vmatpush.msra.mxu0 0.0
        %3232 = vmatpush.msra.mxu0 0.0
        %3233 = vmatpush.msra.mxu0 0.0
        %3234 = vmatpush.msra.mxu0 0.0
        %3235 = vmatpush.msra.mxu0 0.0
        %3236 = vmatpush.msra.mxu0 0.0
        %3237 = vmatpush.msra.mxu0 0.0
        %3238 = vmatpush.msra.mxu0 0.0
        %3239 = vmatpush.msra.mxu0 0.0
        %3240 = vmatpush.msra.mxu0 %v3057
        %3241 = vmatpush.msra.mxu0 %v3056
        %3242 = vmatpush.msra.mxu0 %v3055
        %3243 = vmatpush.msra.mxu0 %v3054
        %3244 = vmatmul.f32.gmra.mxu0 %v3226
        %v3245 = vpop.f32.mrf.mxu0
        %v3246 = vadd.f32 %v3195, %v3245
        %3247 = vdwg.mxu0
        %v3249 = vsel %vm393, %v3188, 0
        %3251 = vmatpush.msra.mxu0 0.0
        %3252 = vmatpush.msra.mxu0 0.0
        %3253 = vmatpush.msra.mxu0 0.0
        %3254 = vmatpush.msra.mxu0 0.0
        %3255 = vmatpush.msra.mxu0 0.0
        %3256 = vmatpush.msra.mxu0 0.0
        %3257 = vmatpush.msra.mxu0 0.0
        %3258 = vmatpush.msra.mxu0 0.0
        %3259 = vmatpush.msra.mxu0 0.0
        %3260 = vmatpush.msra.mxu0 0.0
        %3261 = vmatpush.msra.mxu0 0.0
        %3262 = vmatpush.msra.mxu0 0.0
        %3263 = vmatpush.msra.mxu0 %v3061
        %3264 = vmatpush.msra.mxu0 %v3060
        %3265 = vmatpush.msra.mxu0 %v3059
        %3266 = vmatpush.msra.mxu0 %v3058
        %3267 = vmatmul.f32.gmra.mxu0 %v3249
        %v3268 = vpop.f32.mrf.mxu0
        %v3269 = vadd.f32 %v3196, %v3268
        %3270 = vdwg.mxu0
        %v3272 = vsel %vm393, %v3189, 0
        %3274 = vmatpush.msra.mxu0 0.0
        %3275 = vmatpush.msra.mxu0 0.0
        %3276 = vmatpush.msra.mxu0 0.0
        %3277 = vmatpush.msra.mxu0 0.0
        %3278 = vmatpush.msra.mxu0 0.0
        %3279 = vmatpush.msra.mxu0 0.0
        %3280 = vmatpush.msra.mxu0 0.0
        %3281 = vmatpush.msra.mxu0 0.0
        %3282 = vmatpush.msra.mxu0 0.0
        %3283 = vmatpush.msra.mxu0 0.0
        %3284 = vmatpush.msra.mxu0 0.0
        %3285 = vmatpush.msra.mxu0 0.0
        %3286 = vmatpush.msra.mxu0 %v3065
        %3287 = vmatpush.msra.mxu0 %v3064
        %3288 = vmatpush.msra.mxu0 %v3063
        %3289 = vmatpush.msra.mxu0 %v3062
        %3290 = vmatmul.f32.gmra.mxu0 %v3272
        %v3291 = vpop.f32.mrf.mxu0
        %v3292 = vadd.f32 %v3197, %v3291
        %3293 = vdwg.mxu0
        %v3294 = vsub.f32 %v3223, %v3078
        %v3295 = vsub.f32 %v3246, %v3079
        %v3296 = vsub.f32 %v3269, %v3080
        %v3297 = vsub.f32 %v3292, %v3081
        %v3298 = vmul.f32 %v3294, %v3294
        %v3299 = vmul.f32 %v3295, %v3295
        %v3300 = vmul.f32 %v3296, %v3296
        %v3301 = vmul.f32 %v3297, %v3297
        %v3302 = vsel %vm784, %v3298, 0.0
        %3303 = vadd.xlane.f32.xlu0 %v3302
        %v3304 = vpop.xlane.xlu0 %3303
        %v3305 = vsel %vm784, %v3299, 0.0
        %3306 = vadd.xlane.f32.xlu0 %v3305
        %v3307 = vpop.xlane.xlu0 %3306
        %v3308 = vsel %vm784, %v3300, 0.0
        %3309 = vadd.xlane.f32.xlu0 %v3308
        %v3310 = vpop.xlane.xlu0 %3309
        %v3311 = vsel %vm784, %v3301, 0.0
        %3312 = vadd.xlane.f32.xlu0 %v3311
        %v3313 = vpop.xlane.xlu0 %3312
        %v3318 = vlaneseq
        %v3319 = vand.u32 %v3318, 127
        %v3320 = vperm.slane %v3304, %v3319
        %v3321 = vperm.slane %v3307, %v3319
        %v3322 = vperm.slane %v3310, %v3319
        %v3323 = vperm.slane %v3313, %v3319
        %vm3324 = vcmask 1041409
        %v3325 = vsel %vm3324, %v3321, %v3320
        %vm3326 = vcmask 1042434
        %v3327 = vsel %vm3326, %v3322, %v3325
        %vm3328 = vcmask 1043459
        %v3329 = vsel %vm3328, %v3323, %v3327
        %vm3331 = vcmask 60416
        %v3332 = vsel %vm3331, %v3329, 0.0
        %3333 = vadd.xlane.f32.xlu0 %v3332
        %v3334 = vpop.xlane.xlu0 %3333
        %v3335 = vand.u32 2147483647, %v3294
        %v3336 = vand.u32 2147483647, %v3295
        %v3337 = vand.u32 2147483647, %v3296
        %v3338 = vand.u32 2147483647, %v3297
        %v3339 = vsel %vm784, %v3335, 0.0
        %3340 = vadd.xlane.f32.xlu0 %v3339
        %v3341 = vpop.xlane.xlu0 %3340
        %v3342 = vsel %vm784, %v3336, 0.0
        %3343 = vadd.xlane.f32.xlu0 %v3342
        %v3344 = vpop.xlane.xlu0 %3343
        %v3345 = vsel %vm784, %v3337, 0.0
        %3346 = vadd.xlane.f32.xlu0 %v3345
        %v3347 = vpop.xlane.xlu0 %3346
        %v3348 = vsel %vm784, %v3338, 0.0
        %3349 = vadd.xlane.f32.xlu0 %v3348
        %v3350 = vpop.xlane.xlu0 %3349
        %v3355 = vperm.slane %v3341, %v3319
        %v3356 = vperm.slane %v3344, %v3319
        %v3357 = vperm.slane %v3347, %v3319
        %v3358 = vperm.slane %v3350, %v3319
        %v3359 = vsel %vm3324, %v3356, %v3355
        %v3360 = vsel %vm3326, %v3357, %v3359
        %v3361 = vsel %vm3328, %v3358, %v3360
        %v3363 = vsel %vm3331, %v3361, 0.0
        %3364 = vadd.xlane.f32.xlu0 %v3363
        %v3365 = vpop.xlane.xlu0 %3364
        %v3366 = vlaneseq
        %v3367 = vshrl.u32 %v3366, 7
        %vm3368 = vcmp.eq.s32.totalorder %v3319, %v3367
        %v3369 = vmul.f32 %v3334, 0.03125
        %v3370 = vsel %vm3368, %v3369, 0.0
        %vm3371 = vcmask 1043456
        %v3372 = vsel %vm3371, %v3370, 0.0
        %v3373 = vrot.slane %v3372, 4
        %v3374 = vadd.f32 %v3372, %v3373
        %v3375 = vrot.slane %v3374, 2
        %v3376 = vadd.f32 %v3374, %v3375
        %v3377 = vrot.slane %v3376, 1
        %v3378 = vadd.f32 %v3376, %v3377
        %v3379 = vmul.f32 %v3365, 0.03125
        %v3380 = vsel %vm3368, %v3379, 0.0
        %v3381 = vsel %vm3371, %v3380, 0.0
        %v3382 = vrot.slane %v3381, 4
        %v3383 = vadd.f32 %v3381, %v3382
        %v3384 = vrot.slane %v3383, 2
        %v3385 = vadd.f32 %v3383, %v3384
        %v3386 = vrot.slane %v3385, 1
        %v3387 = vadd.f32 %v3385, %v3386
        %vm3388 = vcmask 1040384
        %v3389 = vsel %vm3388, %v3378, %v3387
        %3390 = vst [vmem:[%s347] sm:$0x3] %v3389
        %s3391 = sand.u32 %s218, 1
        %s3392 = scalar_lea.sflag [#allocation3], %s3391
        %s3393 = sand.u32 %s218, 1
        %s3394 = smul.addr %s3393, 2
        %s3395 = scalar_lea.vmem [#allocation2], %s3394
        // Predicated region
        $region53: #{tpu_custom_call.1} parent=51 // pred_check
          %p3396 = pneg %p228
        $region54: #{tpu_custom_call.1} parent=51 // pred_check_branch
          %3398 = sbr.rel (%p3396) target = $region56
        $region55: #{tpu_custom_call.1} parent=51 // pred_region
          %3400 = vsyncadd %s3392, 0
          %s3401 = smul.addr %s22, 2
          %s3402 = scalar_lea.hbm %s8, %s3401
          %s3404 = sshll.u32 %s3395, 4
          %s3405 = int_to_ptr.vmem [resolvable:$true] %s3404
          %s3406 = sshll.u32 %s3402, 4
          %s3407 = int_to_ptr.hbm [resolvable:$true] %s3406
          %3409 = dma.vmem_to_hbm [thread:$0]  %s3405, 32, %s3407, %s3392
        $region56: #{tpu_custom_call.1} parent=51 // pred_fallthru
          _
      $region52: #{tpu_custom_call.1} parent=5 // pred_fallthru
        _
      %p3410 = scmp.le.s32.totalorder 2, %s17
      // Predicated region
      $region57: #{tpu_custom_call.1} parent=5 // pred_check
        %p3411 = pneg %p3410
      $region58: #{tpu_custom_call.1} parent=5 // pred_check_branch
        %3413 = sbr.rel (%p3411) target = $region60
      $region59: #{tpu_custom_call.1} parent=5 // pred_region
        %s3414 = ssub.s32 %s17, 2
        // Predicated region
        $region61: #{tpu_custom_call.1} parent=59 // pred_check
          %p3415 = pneg %p234
        $region62: #{tpu_custom_call.1} parent=59 // pred_check_branch
          %3417 = sbr.rel (%p3415) target = $region64
        $region63: #{tpu_custom_call.1} parent=59 // pred_region
          %s3418 = sand.u32 %s219, 1
          %s3419 = scalar_lea.sflag [#allocation3], %s3418
          %s3420 = sand.u32 %s219, 1
          %s3421 = smul.addr %s3420, 2
          %s3422 = scalar_lea.vmem [#allocation2], %s3421
          %3424 = dma.done %s3419, 32
        $region64: #{tpu_custom_call.1} parent=59 // pred_fallthru
          _
      $region60: #{tpu_custom_call.1} parent=5 // pred_fallthru
        _
    $region6: #{tpu_custom_call.1} parent=1 // loop_footer
      %s21 = sadd.s32 1, %s17
    $region7: #{tpu_custom_call.1} parent=1 // loop_footer_branch
      %16 = sbr.rel target = $region3
    $region8: #{tpu_custom_call.1} parent=1 // loop_exit
      _
    %3425 = vsyncpa [#allocation3], 1
    %s3426 = scalar_lea.sflag [#allocation3], 1
    %3427 = vsyncpa %s3426, 1

</llo_original>
